<compile_context>
chip_gen: v6e
topology: v6e:2x2x1
jax: 0.10.0
libtpu: 0.0.40
codegen_flags: <defaults>
</compile_context>

<pallas_src>
import functools

import jax
import jax.numpy as jnp
from jax.experimental import pallas as pl
from jax.experimental.pallas import tpu as pltpu

EPS = 1e-5                       # PyTorch BatchNorm default eps
VMEM_LIMIT = 32 * 1024 * 1024    # safe on v5e/v6e (128 MiB) and v7x (64 MiB)

# tap order (dh, dw) shared by weight packing, masks and the in-kernel im2col
_TAPS = [(dh, dw) for dh in range(3) for dw in range(3)]


# ----------------------------- Pallas kernels -----------------------------

def _linear_bn_relu_kernel(x_ref, w_ref, g_ref, b_ref, o_ref):
    # x: (B, Din) bf16, w: (Din, tn) bf16, g/b: (1, tn) f32 -> o: (B, tn) bf16
    y = jnp.dot(x_ref[...], w_ref[...], preferred_element_type=jnp.float32)
    inv_n = 1.0 / y.shape[0]
    mean = jnp.sum(y, axis=0, keepdims=True) * inv_n
    var = jnp.maximum(jnp.sum(y * y, axis=0, keepdims=True) * inv_n - mean * mean, 0.0)
    scale = g_ref[...] * jax.lax.rsqrt(var + EPS)
    shift = b_ref[...] - mean * scale
    o_ref[...] = jnp.maximum(y * scale + shift, 0.0).astype(o_ref.dtype)


def _dconv_bn_relu_kernel(x_ref, w_ref, m_ref, g_ref, b_ref, o_ref, xcol_ref, *, N, W):
    # x:    (Cin, N + 2*(W+1)) bf16  -- spatially flattened (b*H*W + q*W + r), lane padded
    # w:    (1, 4*tc, 9*Cin)   bf16  -- phase-stacked transposed-conv taps, this channel block
    # m:    (9, 1, N)          bf16  -- per-tap boundary masks
    # g/b:  (1, tc, 1)         f32   -- BatchNorm affine for this channel block
    # o:    (1, 4, tc, N)      bf16  -- lane-dense: rows = channels, lanes = B*H*W
    # xcol: (9*Cin, N)         bf16  -- im2col scratch (built once, reused per block)
    Cin = x_ref.shape[0]
    tc = g_ref.shape[1]

    @pl.when(pl.program_id(0) == 0)
    def _build_im2col():
        for t, (dh, dw) in enumerate(_TAPS):
            start = (W + 1) + (dh - 1) * W + (dw - 1)
            xcol_ref[t * Cin:(t + 1) * Cin, :] = x_ref[:, start:start + N] * m_ref[t]

    # one MXU matmul per channel block: (4*tc, 9*Cin) @ (9*Cin, N) -> f32
    acc = jnp.dot(w_ref[0], xcol_ref[...], preferred_element_type=jnp.float32)

    # BatchNorm2d (training mode): per-channel one-pass stats over all 4 output
    # phases and all B*H*W positions (biased variance).
    s = jnp.zeros((tc, 1), jnp.float32)
    sq = jnp.zeros((tc, 1), jnp.float32)
    phases = []
    for p in range(4):
        a = acc[p * tc:(p + 1) * tc, :]
        phases.append(a)
        s = s + jnp.sum(a, axis=1, keepdims=True)
        sq = sq + jnp.sum(a * a, axis=1, keepdims=True)
    inv_cnt = 1.0 / (4.0 * N)
    mean = s * inv_cnt
    var = jnp.maximum(sq * inv_cnt - mean * mean, 0.0)
    scale = g_ref[0] * jax.lax.rsqrt(var + EPS)
    shift = b_ref[0] - mean * scale
    for p in range(4):
        o_ref[0, p] = jnp.maximum(phases[p] * scale + shift, 0.0).astype(o_ref.dtype)


def _dconv_bias_sigmoid_kernel(x_ref, w_ref, m_ref, bias_ref, o_ref, xcol_ref, *, N, W):
    # Per-batch-element block (grid over batch, "parallel"):
    # x: (1, Cin, N + 2*(W+1)) bf16, w: (4*Cout, 9*Cin) bf16, m: (9, 1, N) bf16,
    # bias: (4*Cout, 1) f32 (phase-tiled), o: (1, 4*Cout, N) f32, xcol: (9*Cin, N) bf16
    Cin = x_ref.shape[1]
    for t, (dh, dw) in enumerate(_TAPS):
        start = (W + 1) + (dh - 1) * W + (dw - 1)
        xcol_ref[t * Cin:(t + 1) * Cin, :] = x_ref[0, :, start:start + N] * m_ref[t]
    acc = jnp.dot(w_ref[...], xcol_ref[...], preferred_element_type=jnp.float32)
    o_ref[0] = jax.nn.sigmoid(acc + bias_ref[...])


# ------------------------------ pallas_call wrappers ------------------------------

def _pick_feature_tile(total):
    for t in (512, 256, 128):
        if total % t == 0:
            return t
    return total


def _pick_channel_tile(cout):
    if cout <= 64:
        return cout
    for t in (64, 32, 16, 8):
        if cout % t == 0:
            return t
    return cout


def linear_bn_relu(x, w, gamma, beta):
    B, Din = x.shape
    Dout = w.shape[1]
    tn = _pick_feature_tile(Dout)
    return pl.pallas_call(
        _linear_bn_relu_kernel,
        out_shape=jax.ShapeDtypeStruct((B, Dout), jnp.bfloat16),
        grid_spec=pltpu.PrefetchScalarGridSpec(
            num_scalar_prefetch=0,
            grid=(Dout // tn,),
            in_specs=[
                pl.BlockSpec((B, Din), lambda j: (0, 0)),
                pl.BlockSpec((Din, tn), lambda j: (0, j)),
                pl.BlockSpec((1, tn), lambda j: (0, j)),
                pl.BlockSpec((1, tn), lambda j: (0, j)),
            ],
            out_specs=pl.BlockSpec((B, tn), lambda j: (0, j)),
        ),
        compiler_params=pltpu.CompilerParams(
            dimension_semantics=("parallel",), vmem_limit_bytes=VMEM_LIMIT),
    )(x, w, gamma, beta)


def dconv_bn_relu(x_flat, w_pack, masks, gamma, beta, *, W):
    Cin, Npad = x_flat.shape
    N = Npad - 2 * (W + 1)
    nb, four_tc, K = w_pack.shape
    tc = four_tc // 4
    kernel = functools.partial(_dconv_bn_relu_kernel, N=N, W=W)
    return pl.pallas_call(
        kernel,
        out_shape=jax.ShapeDtypeStruct((nb, 4, tc, N), jnp.bfloat16),
        grid_spec=pltpu.PrefetchScalarGridSpec(
            num_scalar_prefetch=0,
            grid=(nb,),
            in_specs=[
                pl.BlockSpec((Cin, Npad), lambda b: (0, 0)),
                pl.BlockSpec((1, four_tc, K), lambda b: (b, 0, 0)),
                pl.BlockSpec((9, 1, N), lambda b: (0, 0, 0)),
                pl.BlockSpec((1, tc, 1), lambda b: (b, 0, 0)),
                pl.BlockSpec((1, tc, 1), lambda b: (b, 0, 0)),
            ],
            out_specs=pl.BlockSpec((1, 4, tc, N), lambda b: (b, 0, 0, 0)),
            scratch_shapes=[pltpu.VMEM((K, N), x_flat.dtype)],
        ),
        # "arbitrary": the im2col scratch is filled on the first grid step and
        # reused by the following output-channel blocks (must run sequentially).
        compiler_params=pltpu.CompilerParams(
            dimension_semantics=("arbitrary",), vmem_limit_bytes=VMEM_LIMIT),
    )(x_flat, w_pack, masks, gamma, beta)


def dconv_bias_sigmoid(x_flat, w_pack, masks, bias, *, W):
    B, Cin, Npad = x_flat.shape
    N = Npad - 2 * (W + 1)
    four_c, K = w_pack.shape
    kernel = functools.partial(_dconv_bias_sigmoid_kernel, N=N, W=W)
    return pl.pallas_call(
        kernel,
        out_shape=jax.ShapeDtypeStruct((B, four_c, N), jnp.float32),
        grid_spec=pltpu.PrefetchScalarGridSpec(
            num_scalar_prefetch=0,
            grid=(B,),
            in_specs=[
                pl.BlockSpec((1, Cin, Npad), lambda n: (n, 0, 0)),
                pl.BlockSpec((four_c, K), lambda n: (0, 0)),
                pl.BlockSpec((9, 1, N), lambda n: (0, 0, 0)),
                pl.BlockSpec((four_c, 1), lambda n: (0, 0)),
            ],
            out_specs=pl.BlockSpec((1, four_c, N), lambda n: (n, 0, 0)),
            scratch_shapes=[pltpu.VMEM((K, N), x_flat.dtype)],
        ),
        compiler_params=pltpu.CompilerParams(
            dimension_semantics=("parallel",), vmem_limit_bytes=VMEM_LIMIT),
    )(x_flat, w_pack, masks, bias)


# --------------------------- layout plumbing (wrapper side) ---------------------------

def _tap_masks(H, W, reps, dtype=jnp.bfloat16):
    """(9, 1, reps*H*W) 0/1 masks: mask[t, 0, b*H*W + q*W + r] = 1 iff tap
    t = (dh*3+dw) of phase position (q, r) reads inside the un-padded input,
    i.e. q+dh-1 in [0,H) and r+dw-1 in [0,W)."""
    q = jnp.arange(H)
    r = jnp.arange(W)
    rows = []
    for dh, dw in _TAPS:
        mq = ((q + dh - 1 >= 0) & (q + dh - 1 < H)).astype(dtype)
        mr = ((r + dw - 1 >= 0) & (r + dw - 1 < W)).astype(dtype)
        m = (mq[:, None] * mr[None, :]).reshape(1, H * W)
        rows.append(jnp.tile(m, (1, reps)))
    return jnp.stack(rows, axis=0)


def _phases_to_spatial(out, B, H, W):
    """(nb, 4, tc, B*H*W) kernel output -> (Cout, B, 2H, 2W) channel-major."""
    nb, _, tc, _ = out.shape
    o = out.reshape(nb, 2, 2, tc, B, H, W)
    o = jnp.transpose(o, (0, 3, 4, 5, 1, 6, 2))     # (nb, tc, B, H, ph, W, pw)
    return o.reshape(nb * tc, B, 2 * H, 2 * W)


def _flatten_pad_all(act):
    """(C, B, H, W) -> (C, B*H*W + 2*(W+1)) flattened + lane padded."""
    C, B, H, W = act.shape
    flat = act.reshape(C, B * H * W)
    return jnp.pad(flat, ((0, 0), (W + 1, W + 1)))


def _flatten_pad_per_batch(act):
    """(C, B, H, W) -> (B, C, H*W + 2*(W+1)) for the batch-gridded final layer."""
    C, B, H, W = act.shape
    flat = jnp.transpose(act, (1, 0, 2, 3)).reshape(B, C, H * W)
    return jnp.pad(flat, ((0, 0), (0, 0), (W + 1, W + 1)))


# --------------------------- parameters ---------------------------

def _pack_convT_weight(w_pt, tc):
    """PyTorch ConvTranspose2d weight (Cin, Cout, 5, 5) -> phase-stacked taps
    (nb, 4*tc, 9*Cin).  Row p*tc + c_local (p = ph*2+pw) is output channel
    b*tc + c_local of output position (2q+ph, 2r+pw); column (dh*3+dw)*Cin + cin
    multiplies input sample x[cin, q+dh-1, r+dw-1]."""
    Cin, Cout = w_pt.shape[0], w_pt.shape[1]
    wf = jnp.zeros((2, 2, 3, 3, Cin, Cout), w_pt.dtype)
    for ph in range(2):
        for pw in range(2):
            for dh in range(3):
                for dw in range(3):
                    kh = 4 + ph - 2 * dh
                    kw = 4 + pw - 2 * dw
                    if 0 <= kh <= 4 and 0 <= kw <= 4:
                        wf = wf.at[ph, pw, dh, dw].set(w_pt[:, :, kh, kw])
    wf = jnp.transpose(wf, (5, 0, 1, 2, 3, 4)).reshape(Cout, 4, 9 * Cin)
    nb = Cout // tc
    wf = wf.reshape(nb, tc, 4, 9 * Cin)
    return jnp.transpose(wf, (0, 2, 1, 3)).reshape(nb, 4 * tc, 9 * Cin)


def init_params(key, z_dim, y_dim, dim):
    """Parameters in the PyTorch module's native layouts."""
    ks = jax.random.split(key, 6)
    d_in = z_dim + y_dim
    d_l1 = dim * 8 * 4 * 4
    p = {}
    p["w_l1"] = jax.random.normal(ks[0], (d_l1, d_in), jnp.float32) / jnp.sqrt(d_in)
    p["g_l1"] = jnp.ones((d_l1,), jnp.float32)
    p["b_l1"] = jnp.zeros((d_l1,), jnp.float32)
    chans = [dim * 8, dim * 4, dim * 2, dim, 3]
    for i in range(4):
        cin = chans[i]
        p[f"w_d{i}"] = (jax.random.normal(ks[1 + i], (cin, chans[i + 1], 5, 5), jnp.float32)
                        / jnp.sqrt(cin * 25.0))
    for i in range(3):
        p[f"g_d{i}"] = jnp.ones((chans[i + 1],), jnp.float32)
        p[f"b_d{i}"] = jnp.zeros((chans[i + 1],), jnp.float32)
    p["bias_out"] = 0.01 * jax.random.normal(ks[5], (3,), jnp.float32)
    return p


def pack_params(params, dim):
    """One-time repack into kernel-ready layouts (hoisted out of the forward)."""
    pk = {}
    pk["w_l1"] = params["w_l1"].T.astype(jnp.bfloat16)          # (Din, Dout)
    pk["g_l1"] = params["g_l1"][None, :]                         # (1, Dout)
    pk["b_l1"] = params["b_l1"][None, :]
    chans = [dim * 8, dim * 4, dim * 2, dim, 3]
    for i in range(3):
        cout = chans[i + 1]
        tc = _pick_channel_tile(cout)
        nb = cout // tc
        pk[f"w_d{i}"] = _pack_convT_weight(params[f"w_d{i}"], tc).astype(jnp.bfloat16)
        pk[f"g_d{i}"] = params[f"g_d{i}"].reshape(nb, tc, 1)
        pk[f"b_d{i}"] = params[f"b_d{i}"].reshape(nb, tc, 1)
    pk["w_d3"] = _pack_convT_weight(params["w_d3"], 3)[0].astype(jnp.bfloat16)   # (12, 9*dim)
    pk["bias_out"] = jnp.tile(params["bias_out"][None, :], (4, 1)).reshape(12, 1)
    return pk


# ------------------------------ forward ------------------------------

@functools.partial(jax.jit, static_argnames=("dim",))
def gan_generator(packed, z, cond, dim):
    B = z.shape[0]
    x = jnp.concatenate([z, cond], axis=1).astype(jnp.bfloat16)
    # l1: Linear(bias=False) + BatchNorm1d + ReLU, tiled over output features
    y = linear_bn_relu(x, packed["w_l1"], packed["g_l1"], packed["b_l1"])     # (B, dim*128)

    # view(B, C0, 4, 4) -> channel-major (C0, B, 4, 4)
    c0 = dim * 8
    act = jnp.transpose(y.reshape(B, c0, 4, 4), (1, 0, 2, 3))
    H = W = 4
    # three ConvTranspose2d + BN2d + ReLU blocks (4-phase sub-pixel kernels)
    for i in range(3):
        x_flat = _flatten_pad_all(act)
        masks = _tap_masks(H, W, B)
        out = dconv_bn_relu(x_flat, packed[f"w_d{i}"], masks,
                            packed[f"g_d{i}"], packed[f"b_d{i}"], W=W)
        act = _phases_to_spatial(out, B, H, W)       # (Cout, B, 2H, 2W) bf16
        H, W = 2 * H, 2 * W

    # final ConvTranspose2d (with bias) + Sigmoid, gridded over batch
    x_flat = _flatten_pad_per_batch(act)
    masks = _tap_masks(H, W, 1)
    out = dconv_bias_sigmoid(x_flat, packed["w_d3"], masks, packed["bias_out"], W=W)
    # (B, 12, H*W) with row p*3 + c  ->  NCHW (B, 3, 2H, 2W)
    o = out.reshape(B, 2, 2, 3, H, W)
    o = jnp.transpose(o, (0, 3, 4, 1, 5, 2)).reshape(B, 3, 2 * H, 2 * W)
    return o


# ------------------------------- main -------------------------------

if __name__ == "__main__":
    # small, module-consistent shapes: batch=2, z_dim=16, y_dim=4, dim=8
    B, Z_DIM, Y_DIM, DIM = 2, 16, 4, 8

    key = jax.random.PRNGKey(0)
    kp, kz, kc = jax.random.split(key, 3)
    params = init_params(kp, Z_DIM, Y_DIM, DIM)
    packed = pack_params(params, DIM)
    z = jax.random.normal(kz, (B, Z_DIM), jnp.float32)
    cond = jax.random.normal(kc, (B, Y_DIM), jnp.float32)

    out = gan_generator(packed, z, cond, DIM)
    out = jax.block_until_ready(out)

    expected_shape = (B, 3, 64, 64)   # 4 -> 8 -> 16 -> 32 -> 64 spatial, 3 channels
    assert out.shape == expected_shape, out.shape
    assert bool(jnp.all(jnp.isfinite(out)))
    assert bool(jnp.all((out >= 0.0) & (out <= 1.0)))  # sigmoid output range
    print("KERNEL_OK")
</pallas_src>

<mosaic_0001>
module attributes {stable_mosaic.version = 11 : i64} {
  func.func @_linear_bn_relu_kernel(%arg0: i32, %arg1: memref<2x20xbf16, #tpu.memory_space<vmem>>, %arg2: memref<20x512xbf16, #tpu.memory_space<vmem>>, %arg3: memref<1x512xf32, #tpu.memory_space<vmem>>, %arg4: memref<1x512xf32, #tpu.memory_space<vmem>>, %arg5: memref<2x512xbf16, #tpu.memory_space<vmem>>) attributes {dimension_semantics = [#tpu.dimension_semantics<parallel>], iteration_bounds = array<i64: 2>, scalar_prefetch = 0 : i64, scratch_operands = 0 : i64, tpu.core_type = #tpu.core_type<tc>, window_params = [{pipeline_mode = #tpu.pipeline_mode<synchronous>, transform_indices = @transform_0, window_bounds = array<i64: 2, 20>}, {transform_indices = @transform_1, window_bounds = array<i64: 20, 512>}, {transform_indices = @transform_2, window_bounds = array<i64: 1, 512>}, {transform_indices = @transform_3, window_bounds = array<i64: 1, 512>}, {transform_indices = @transform_4, window_bounds = array<i64: 2, 512>}]} {
    %c0 = arith.constant 0 : index
    %c0_0 = arith.constant 0 : index
    %0 = vector.load %arg1[%c0, %c0_0] : memref<2x20xbf16, #tpu.memory_space<vmem>>, vector<2x20xbf16>
    %c0_1 = arith.constant 0 : index
    %c0_2 = arith.constant 0 : index
    %1 = vector.load %arg2[%c0_1, %c0_2] : memref<20x512xbf16, #tpu.memory_space<vmem>>, vector<20x512xbf16>
    %cst = arith.constant dense<0.000000e+00> : vector<2x512xf32>
    %2 = tpu.matmul %0, %1, %cst {dimension_numbers = #tpu.dot_dimension_numbers<[1], [0], [0], [1], [0, 0, 1, 1], [], []>} : vector<2x20xbf16>, vector<20x512xbf16>, vector<2x512xf32> -> vector<2x512xf32>
    %cst_3 = arith.constant dense<0.000000e+00> : vector<512xf32>
    %3 = vector.multi_reduction <add>, %2, %cst_3 [0] : vector<2x512xf32> to vector<512xf32>
    %4 = vector.shape_cast %3 : vector<512xf32> to vector<1x512xf32>
    %cst_4 = arith.constant 5.000000e-01 : f32
    %5 = vector.broadcast %cst_4 : f32 to vector<1x512xf32>
    %6 = arith.mulf %4, %5 : vector<1x512xf32>
    %7 = arith.mulf %2, %2 : vector<2x512xf32>
    %cst_5 = arith.constant dense<0.000000e+00> : vector<512xf32>
    %8 = vector.multi_reduction <add>, %7, %cst_5 [0] : vector<2x512xf32> to vector<512xf32>
    %9 = vector.shape_cast %8 : vector<512xf32> to vector<1x512xf32>
    %cst_6 = arith.constant 5.000000e-01 : f32
    %10 = vector.broadcast %cst_6 : f32 to vector<1x512xf32>
    %11 = arith.mulf %9, %10 : vector<1x512xf32>
    %12 = arith.mulf %6, %6 : vector<1x512xf32>
    %13 = arith.subf %11, %12 : vector<1x512xf32>
    %cst_7 = arith.constant 0.000000e+00 : f32
    %14 = vector.broadcast %cst_7 : f32 to vector<1x512xf32>
    %15 = arith.maximumf %13, %14 : vector<1x512xf32>
    %c0_8 = arith.constant 0 : index
    %c0_9 = arith.constant 0 : index
    %16 = vector.load %arg3[%c0_8, %c0_9] : memref<1x512xf32, #tpu.memory_space<vmem>>, vector<1x512xf32>
    %cst_10 = arith.constant 9.99999974E-6 : f32
    %17 = vector.broadcast %cst_10 : f32 to vector<1x512xf32>
    %18 = arith.addf %15, %17 : vector<1x512xf32>
    %19 = math.rsqrt %18 : vector<1x512xf32>
    %20 = arith.mulf %16, %19 : vector<1x512xf32>
    %c0_11 = arith.constant 0 : index
    %c0_12 = arith.constant 0 : index
    %21 = vector.load %arg4[%c0_11, %c0_12] : memref<1x512xf32, #tpu.memory_space<vmem>>, vector<1x512xf32>
    %22 = arith.mulf %6, %20 : vector<1x512xf32>
    %23 = arith.subf %21, %22 : vector<1x512xf32>
    %24 = vector.broadcast %20 : vector<1x512xf32> to vector<2x512xf32>
    %25 = arith.mulf %2, %24 : vector<2x512xf32>
    %26 = vector.broadcast %23 : vector<1x512xf32> to vector<2x512xf32>
    %27 = arith.addf %25, %26 : vector<2x512xf32>
    %cst_13 = arith.constant 0.000000e+00 : f32
    %28 = vector.broadcast %cst_13 : f32 to vector<2x512xf32>
    %29 = arith.maximumf %27, %28 : vector<2x512xf32>
    %30 = arith.truncf %29 : vector<2x512xf32> to vector<2x512xbf16>
    %c0_14 = arith.constant 0 : index
    %c0_15 = arith.constant 0 : index
    %31 = vector.load %arg5[%c0_14, %c0_15] : memref<2x512xbf16, #tpu.memory_space<vmem>>, vector<2x512xbf16>
    tpu.vector_store %arg5[%c0_14, %c0_15], %30 {strides = array<i32>} : memref<2x512xbf16, #tpu.memory_space<vmem>>, vector<2x512xbf16>,
    return
  }
  func.func @transform_0(%arg0: i32) -> (i32, i32) {
    %c0_i32 = arith.constant 0 : i32
    %c0_i32_0 = arith.constant 0 : i32
    %c0_i32_1 = arith.constant 0 : i32
    return %c0_i32, %c0_i32_0 : i32, i32
  }
  func.func @transform_1(%arg0: i32) -> (i32, i32) {
    %c0_i32 = arith.constant 0 : i32
    %c0_i32_0 = arith.constant 0 : i32
    return %c0_i32, %arg0 : i32, i32
  }
  func.func @transform_2(%arg0: i32) -> (i32, i32) {
    %c0_i32 = arith.constant 0 : i32
    %c0_i32_0 = arith.constant 0 : i32
    return %c0_i32, %arg0 : i32, i32
  }
  func.func @transform_3(%arg0: i32) -> (i32, i32) {
    %c0_i32 = arith.constant 0 : i32
    %c0_i32_0 = arith.constant 0 : i32
    return %c0_i32, %arg0 : i32, i32
  }
  func.func @transform_4(%arg0: i32) -> (i32, i32) {
    %c0_i32 = arith.constant 0 : i32
    %c0_i32_0 = arith.constant 0 : i32
    return %c0_i32, %arg0 : i32, i32
  }
}

module attributes {stable_mosaic.version = 11 : i64} {
  func.func @_dconv_bn_relu_kernel(%arg0: i32, %arg1: memref<64x42xbf16, #tpu.memory_space<vmem>>, %arg2: memref<1x128x576xbf16, #tpu.memory_space<vmem>>, %arg3: memref<9x1x32xbf16, #tpu.memory_space<vmem>>, %arg4: memref<1x32x1xf32, #tpu.memory_space<vmem>>, %arg5: memref<1x32x1xf32, #tpu.memory_space<vmem>>, %arg6: memref<1x4x32x32xbf16, #tpu.memory_space<vmem>>, %arg7: memref<576x32xbf16, #tpu.memory_space<vmem>>) attributes {dimension_semantics = [#tpu.dimension_semantics<arbitrary>], iteration_bounds = array<i64: 1>, scalar_prefetch = 0 : i64, scratch_operands = 1 : i64, tpu.core_type = #tpu.core_type<tc>, window_params = [{pipeline_mode = #tpu.pipeline_mode<synchronous>, transform_indices = @transform_0, window_bounds = array<i64: 64, 42>}, {transform_indices = @transform_1, window_bounds = array<i64: 1, 128, 576>}, {pipeline_mode = #tpu.pipeline_mode<synchronous>, transform_indices = @transform_2, window_bounds = array<i64: 9, 1, 32>}, {transform_indices = @transform_3, window_bounds = array<i64: 1, 32, 1>}, {transform_indices = @transform_4, window_bounds = array<i64: 1, 32, 1>}, {transform_indices = @transform_5, window_bounds = array<i64: 1, 4, 32, 32>}]} {
    %c0_i32 = arith.constant 0 : i32
    %0 = arith.cmpi eq, %arg0, %c0_i32 : i32
    %1 = arith.extui %0 : i1 to i32
    %c0_i32_0 = arith.constant 0 : i32
    %2 = arith.cmpi ne, %1, %c0_i32_0 : i32
    scf.if %2 {
      %c0_42 = arith.constant 0 : index
      %c0_43 = arith.constant 0 : index
      %99 = vector.load %arg1[%c0_42, %c0_43] : memref<64x42xbf16, #tpu.memory_space<vmem>>, vector<64x32xbf16>
      %c0_44 = arith.constant 0 : index
      %c0_45 = arith.constant 0 : index
      %c0_46 = arith.constant 0 : index
      %100 = vector.load %arg3[%c0_44, %c0_45, %c0_46] : memref<9x1x32xbf16, #tpu.memory_space<vmem>>, vector<1x1x32xbf16>
      %101 = vector.shape_cast %100 : vector<1x1x32xbf16> to vector<1x32xbf16>
      %102 = vector.broadcast %101 : vector<1x32xbf16> to vector<64x32xbf16>
      %103 = arith.mulf %99, %102 : vector<64x32xbf16>
      %c0_47 = arith.constant 0 : index
      %c0_48 = arith.constant 0 : index
      %104 = vector.load %arg7[%c0_47, %c0_48] : memref<576x32xbf16, #tpu.memory_space<vmem>>, vector<64x32xbf16>
      tpu.vector_store %arg7[%c0_47, %c0_48], %103 {strides = array<i32>} : memref<576x32xbf16, #tpu.memory_space<vmem>>, vector<64x32xbf16>,
      %c0_49 = arith.constant 0 : index
      %c1_50 = arith.constant 1 : index
      %105 = vector.load %arg1[%c0_49, %c1_50] : memref<64x42xbf16, #tpu.memory_space<vmem>>, vector<64x32xbf16>
      %c1_51 = arith.constant 1 : index
      %c0_52 = arith.constant 0 : index
      %c0_53 = arith.constant 0 : index
      %106 = vector.load %arg3[%c1_51, %c0_52, %c0_53] : memref<9x1x32xbf16, #tpu.memory_space<vmem>>, vector<1x1x32xbf16>
      %107 = vector.shape_cast %106 : vector<1x1x32xbf16> to vector<1x32xbf16>
      %108 = vector.broadcast %107 : vector<1x32xbf16> to vector<64x32xbf16>
      %109 = arith.mulf %105, %108 : vector<64x32xbf16>
      %c64 = arith.constant 64 : index
      %c0_54 = arith.constant 0 : index
      %110 = vector.load %arg7[%c64, %c0_54] : memref<576x32xbf16, #tpu.memory_space<vmem>>, vector<64x32xbf16>
      tpu.vector_store %arg7[%c64, %c0_54], %109 {strides = array<i32>} : memref<576x32xbf16, #tpu.memory_space<vmem>>, vector<64x32xbf16>,
      %c0_55 = arith.constant 0 : index
      %c2_56 = arith.constant 2 : index
      %111 = vector.load %arg1[%c0_55, %c2_56] : memref<64x42xbf16, #tpu.memory_space<vmem>>, vector<64x32xbf16>
      %c2_57 = arith.constant 2 : index
      %c0_58 = arith.constant 0 : index
      %c0_59 = arith.constant 0 : index
      %112 = vector.load %arg3[%c2_57, %c0_58, %c0_59] : memref<9x1x32xbf16, #tpu.memory_space<vmem>>, vector<1x1x32xbf16>
      %113 = vector.shape_cast %112 : vector<1x1x32xbf16> to vector<1x32xbf16>
      %114 = vector.broadcast %113 : vector<1x32xbf16> to vector<64x32xbf16>
      %115 = arith.mulf %111, %114 : vector<64x32xbf16>
      %c128 = arith.constant 128 : index
      %c0_60 = arith.constant 0 : index
      %116 = vector.load %arg7[%c128, %c0_60] : memref<576x32xbf16, #tpu.memory_space<vmem>>, vector<64x32xbf16>
      tpu.vector_store %arg7[%c128, %c0_60], %115 {strides = array<i32>} : memref<576x32xbf16, #tpu.memory_space<vmem>>, vector<64x32xbf16>,
      %c0_61 = arith.constant 0 : index
      %c4 = arith.constant 4 : index
      %117 = vector.load %arg1[%c0_61, %c4] : memref<64x42xbf16, #tpu.memory_space<vmem>>, vector<64x32xbf16>
      %c3_62 = arith.constant 3 : index
      %c0_63 = arith.constant 0 : index
      %c0_64 = arith.constant 0 : index
      %118 = vector.load %arg3[%c3_62, %c0_63, %c0_64] : memref<9x1x32xbf16, #tpu.memory_space<vmem>>, vector<1x1x32xbf16>
      %119 = vector.shape_cast %118 : vector<1x1x32xbf16> to vector<1x32xbf16>
      %120 = vector.broadcast %119 : vector<1x32xbf16> to vector<64x32xbf16>
      %121 = arith.mulf %117, %120 : vector<64x32xbf16>
      %c192 = arith.constant 192 : index
      %c0_65 = arith.constant 0 : index
      %122 = vector.load %arg7[%c192, %c0_65] : memref<576x32xbf16, #tpu.memory_space<vmem>>, vector<64x32xbf16>
      tpu.vector_store %arg7[%c192, %c0_65], %121 {strides = array<i32>} : memref<576x32xbf16, #tpu.memory_space<vmem>>, vector<64x32xbf16>,
      %c0_66 = arith.constant 0 : index
      %c5 = arith.constant 5 : index
      %123 = vector.load %arg1[%c0_66, %c5] : memref<64x42xbf16, #tpu.memory_space<vmem>>, vector<64x32xbf16>
      %c4_67 = arith.constant 4 : index
      %c0_68 = arith.constant 0 : index
      %c0_69 = arith.constant 0 : index
      %124 = vector.load %arg3[%c4_67, %c0_68, %c0_69] : memref<9x1x32xbf16, #tpu.memory_space<vmem>>, vector<1x1x32xbf16>
      %125 = vector.shape_cast %124 : vector<1x1x32xbf16> to vector<1x32xbf16>
      %126 = vector.broadcast %125 : vector<1x32xbf16> to vector<64x32xbf16>
      %127 = arith.mulf %123, %126 : vector<64x32xbf16>
      %c256 = arith.constant 256 : index
      %c0_70 = arith.constant 0 : index
      %128 = vector.load %arg7[%c256, %c0_70] : memref<576x32xbf16, #tpu.memory_space<vmem>>, vector<64x32xbf16>
      tpu.vector_store %arg7[%c256, %c0_70], %127 {strides = array<i32>} : memref<576x32xbf16, #tpu.memory_space<vmem>>, vector<64x32xbf16>,
      %c0_71 = arith.constant 0 : index
      %c6 = arith.constant 6 : index
      %129 = vector.load %arg1[%c0_71, %c6] : memref<64x42xbf16, #tpu.memory_space<vmem>>, vector<64x32xbf16>
      %c5_72 = arith.constant 5 : index
      %c0_73 = arith.constant 0 : index
      %c0_74 = arith.constant 0 : index
      %130 = vector.load %arg3[%c5_72, %c0_73, %c0_74] : memref<9x1x32xbf16, #tpu.memory_space<vmem>>, vector<1x1x32xbf16>
      %131 = vector.shape_cast %130 : vector<1x1x32xbf16> to vector<1x32xbf16>
      %132 = vector.broadcast %131 : vector<1x32xbf16> to vector<64x32xbf16>
      %133 = arith.mulf %129, %132 : vector<64x32xbf16>
      %c320 = arith.constant 320 : index
      %c0_75 = arith.constant 0 : index
      %134 = vector.load %arg7[%c320, %c0_75] : memref<576x32xbf16, #tpu.memory_space<vmem>>, vector<64x32xbf16>
      tpu.vector_store %arg7[%c320, %c0_75], %133 {strides = array<i32>} : memref<576x32xbf16, #tpu.memory_space<vmem>>, vector<64x32xbf16>,
      %c0_76 = arith.constant 0 : index
      %c8 = arith.constant 8 : index
      %135 = vector.load %arg1[%c0_76, %c8] : memref<64x42xbf16, #tpu.memory_space<vmem>>, vector<64x32xbf16>
      %c6_77 = arith.constant 6 : index
      %c0_78 = arith.constant 0 : index
      %c0_79 = arith.constant 0 : index
      %136 = vector.load %arg3[%c6_77, %c0_78, %c0_79] : memref<9x1x32xbf16, #tpu.memory_space<vmem>>, vector<1x1x32xbf16>
      %137 = vector.shape_cast %136 : vector<1x1x32xbf16> to vector<1x32xbf16>
      %138 = vector.broadcast %137 : vector<1x32xbf16> to vector<64x32xbf16>
      %139 = arith.mulf %135, %138 : vector<64x32xbf16>
      %c384 = arith.constant 384 : index
      %c0_80 = arith.constant 0 : index
      %140 = vector.load %arg7[%c384, %c0_80] : memref<576x32xbf16, #tpu.memory_space<vmem>>, vector<64x32xbf16>
      tpu.vector_store %arg7[%c384, %c0_80], %139 {strides = array<i32>} : memref<576x32xbf16, #tpu.memory_space<vmem>>, vector<64x32xbf16>,
      %c0_81 = arith.constant 0 : index
      %c9 = arith.constant 9 : index
      %141 = vector.load %arg1[%c0_81, %c9] : memref<64x42xbf16, #tpu.memory_space<vmem>>, vector<64x32xbf16>
      %c7 = arith.constant 7 : index
      %c0_82 = arith.constant 0 : index
      %c0_83 = arith.constant 0 : index
      %142 = vector.load %arg3[%c7, %c0_82, %c0_83] : memref<9x1x32xbf16, #tpu.memory_space<vmem>>, vector<1x1x32xbf16>
      %143 = vector.shape_cast %142 : vector<1x1x32xbf16> to vector<1x32xbf16>
      %144 = vector.broadcast %143 : vector<1x32xbf16> to vector<64x32xbf16>
      %145 = arith.mulf %141, %144 : vector<64x32xbf16>
      %c448 = arith.constant 448 : index
      %c0_84 = arith.constant 0 : index
      %146 = vector.load %arg7[%c448, %c0_84] : memref<576x32xbf16, #tpu.memory_space<vmem>>, vector<64x32xbf16>
      tpu.vector_store %arg7[%c448, %c0_84], %145 {strides = array<i32>} : memref<576x32xbf16, #tpu.memory_space<vmem>>, vector<64x32xbf16>,
      %c0_85 = arith.constant 0 : index
      %c10 = arith.constant 10 : index
      %147 = vector.load %arg1[%c0_85, %c10] : memref<64x42xbf16, #tpu.memory_space<vmem>>, vector<64x32xbf16>
      %c8_86 = arith.constant 8 : index
      %c0_87 = arith.constant 0 : index
      %c0_88 = arith.constant 0 : index
      %148 = vector.load %arg3[%c8_86, %c0_87, %c0_88] : memref<9x1x32xbf16, #tpu.memory_space<vmem>>, vector<1x1x32xbf16>
      %149 = vector.shape_cast %148 : vector<1x1x32xbf16> to vector<1x32xbf16>
      %150 = vector.broadcast %149 : vector<1x32xbf16> to vector<64x32xbf16>
      %151 = arith.mulf %147, %150 : vector<64x32xbf16>
      %c512 = arith.constant 512 : index
      %c0_89 = arith.constant 0 : index
      %152 = vector.load %arg7[%c512, %c0_89] : memref<576x32xbf16, #tpu.memory_space<vmem>>, vector<64x32xbf16>
      tpu.vector_store %arg7[%c512, %c0_89], %151 {strides = array<i32>} : memref<576x32xbf16, #tpu.memory_space<vmem>>, vector<64x32xbf16>,
    } else {
    }
    %c0 = arith.constant 0 : index
    %c0_1 = arith.constant 0 : index
    %c0_2 = arith.constant 0 : index
    %3 = vector.load %arg2[%c0, %c0_1, %c0_2] : memref<1x128x576xbf16, #tpu.memory_space<vmem>>, vector<1x128x576xbf16>
    %4 = vector.shape_cast %3 : vector<1x128x576xbf16> to vector<128x576xbf16>
    %c0_3 = arith.constant 0 : index
    %c0_4 = arith.constant 0 : index
    %5 = vector.load %arg7[%c0_3, %c0_4] : memref<576x32xbf16, #tpu.memory_space<vmem>>, vector<576x32xbf16>
    %cst = arith.constant dense<0.000000e+00> : vector<128x32xf32>
    %6 = tpu.matmul %4, %5, %cst {dimension_numbers = #tpu.dot_dimension_numbers<[1], [0], [0], [1], [0, 0, 1, 1], [], []>} : vector<128x576xbf16>, vector<576x32xbf16>, vector<128x32xf32> -> vector<128x32xf32>
    %cst_5 = arith.constant 0.000000e+00 : f32
    %7 = vector.broadcast %cst_5 : f32 to vector<32x1xf32>
    %cst_6 = arith.constant 0.000000e+00 : f32
    %8 = vector.broadcast %cst_6 : f32 to vector<32x1xf32>
    %9 = vector.extract_strided_slice %6 {offsets = [0, 0], sizes = [32, 32], strides = [1, 1]} : vector<128x32xf32> to vector<32x32xf32>
    %cst_7 = arith.constant dense<0.000000e+00> : vector<32xf32>
    %10 = vector.multi_reduction <add>, %9, %cst_7 [1] : vector<32x32xf32> to vector<32xf32>
    %11 = vector.shape_cast %10 : vector<32xf32> to vector<32x1xf32>
    %12 = arith.addf %7, %11 : vector<32x1xf32>
    %13 = arith.mulf %9, %9 : vector<32x32xf32>
    %cst_8 = arith.constant dense<0.000000e+00> : vector<32xf32>
    %14 = vector.multi_reduction <add>, %13, %cst_8 [1] : vector<32x32xf32> to vector<32xf32>
    %15 = vector.shape_cast %14 : vector<32xf32> to vector<32x1xf32>
    %16 = arith.addf %8, %15 : vector<32x1xf32>
    %17 = vector.extract_strided_slice %6 {offsets = [32, 0], sizes = [32, 32], strides = [1, 1]} : vector<128x32xf32> to vector<32x32xf32>
    %cst_9 = arith.constant dense<0.000000e+00> : vector<32xf32>
    %18 = vector.multi_reduction <add>, %17, %cst_9 [1] : vector<32x32xf32> to vector<32xf32>
    %19 = vector.shape_cast %18 : vector<32xf32> to vector<32x1xf32>
    %20 = arith.addf %12, %19 : vector<32x1xf32>
    %21 = arith.mulf %17, %17 : vector<32x32xf32>
    %cst_10 = arith.constant dense<0.000000e+00> : vector<32xf32>
    %22 = vector.multi_reduction <add>, %21, %cst_10 [1] : vector<32x32xf32> to vector<32xf32>
    %23 = vector.shape_cast %22 : vector<32xf32> to vector<32x1xf32>
    %24 = arith.addf %16, %23 : vector<32x1xf32>
    %25 = vector.extract_strided_slice %6 {offsets = [64, 0], sizes = [32, 32], strides = [1, 1]} : vector<128x32xf32> to vector<32x32xf32>
    %cst_11 = arith.constant dense<0.000000e+00> : vector<32xf32>
    %26 = vector.multi_reduction <add>, %25, %cst_11 [1] : vector<32x32xf32> to vector<32xf32>
    %27 = vector.shape_cast %26 : vector<32xf32> to vector<32x1xf32>
    %28 = arith.addf %20, %27 : vector<32x1xf32>
    %29 = arith.mulf %25, %25 : vector<32x32xf32>
    %cst_12 = arith.constant dense<0.000000e+00> : vector<32xf32>
    %30 = vector.multi_reduction <add>, %29, %cst_12 [1] : vector<32x32xf32> to vector<32xf32>
    %31 = vector.shape_cast %30 : vector<32xf32> to vector<32x1xf32>
    %32 = arith.addf %24, %31 : vector<32x1xf32>
    %33 = vector.extract_strided_slice %6 {offsets = [96, 0], sizes = [32, 32], strides = [1, 1]} : vector<128x32xf32> to vector<32x32xf32>
    %cst_13 = arith.constant dense<0.000000e+00> : vector<32xf32>
    %34 = vector.multi_reduction <add>, %33, %cst_13 [1] : vector<32x32xf32> to vector<32xf32>
    %35 = vector.shape_cast %34 : vector<32xf32> to vector<32x1xf32>
    %36 = arith.addf %28, %35 : vector<32x1xf32>
    %37 = arith.mulf %33, %33 : vector<32x32xf32>
    %cst_14 = arith.constant dense<0.000000e+00> : vector<32xf32>
    %38 = vector.multi_reduction <add>, %37, %cst_14 [1] : vector<32x32xf32> to vector<32xf32>
    %39 = vector.shape_cast %38 : vector<32xf32> to vector<32x1xf32>
    %40 = arith.addf %32, %39 : vector<32x1xf32>
    %cst_15 = arith.constant 7.812500e-03 : f32
    %41 = vector.broadcast %cst_15 : f32 to vector<32x1xf32>
    %42 = arith.mulf %36, %41 : vector<32x1xf32>
    %cst_16 = arith.constant 7.812500e-03 : f32
    %43 = vector.broadcast %cst_16 : f32 to vector<32x1xf32>
    %44 = arith.mulf %40, %43 : vector<32x1xf32>
    %45 = arith.mulf %42, %42 : vector<32x1xf32>
    %46 = arith.subf %44, %45 : vector<32x1xf32>
    %cst_17 = arith.constant 0.000000e+00 : f32
    %47 = vector.broadcast %cst_17 : f32 to vector<32x1xf32>
    %48 = arith.maximumf %46, %47 : vector<32x1xf32>
    %c0_18 = arith.constant 0 : index
    %c0_19 = arith.constant 0 : index
    %c0_20 = arith.constant 0 : index
    %49 = vector.load %arg4[%c0_18, %c0_19, %c0_20] : memref<1x32x1xf32, #tpu.memory_space<vmem>>, vector<1x32x1xf32>
    %50 = vector.shape_cast %49 : vector<1x32x1xf32> to vector<32x1xf32>
    %cst_21 = arith.constant 9.99999974E-6 : f32
    %51 = vector.broadcast %cst_21 : f32 to vector<32x1xf32>
    %52 = arith.addf %48, %51 : vector<32x1xf32>
    %53 = math.rsqrt %52 : vector<32x1xf32>
    %54 = arith.mulf %50, %53 : vector<32x1xf32>
    %c0_22 = arith.constant 0 : index
    %c0_23 = arith.constant 0 : index
    %c0_24 = arith.constant 0 : index
    %55 = vector.load %arg5[%c0_22, %c0_23, %c0_24] : memref<1x32x1xf32, #tpu.memory_space<vmem>>, vector<1x32x1xf32>
    %56 = vector.shape_cast %55 : vector<1x32x1xf32> to vector<32x1xf32>
    %57 = arith.mulf %42, %54 : vector<32x1xf32>
    %58 = arith.subf %56, %57 : vector<32x1xf32>
    %59 = vector.broadcast %54 : vector<32x1xf32> to vector<32x32xf32>
    %60 = arith.mulf %9, %59 : vector<32x32xf32>
    %61 = vector.broadcast %58 : vector<32x1xf32> to vector<32x32xf32>
    %62 = arith.addf %60, %61 : vector<32x32xf32>
    %cst_25 = arith.constant 0.000000e+00 : f32
    %63 = vector.broadcast %cst_25 : f32 to vector<32x32xf32>
    %64 = arith.maximumf %62, %63 : vector<32x32xf32>
    %65 = arith.truncf %64 : vector<32x32xf32> to vector<32x32xbf16>
    %c0_26 = arith.constant 0 : index
    %c0_27 = arith.constant 0 : index
    %c0_28 = arith.constant 0 : index
    %c0_29 = arith.constant 0 : index
    %66 = vector.load %arg6[%c0_26, %c0_27, %c0_28, %c0_29] : memref<1x4x32x32xbf16, #tpu.memory_space<vmem>>, vector<1x1x32x32xbf16>
    %67 = vector.shape_cast %66 : vector<1x1x32x32xbf16> to vector<32x32xbf16>
    %68 = vector.shape_cast %65 : vector<32x32xbf16> to vector<1x1x32x32xbf16>
    tpu.vector_store %arg6[%c0_26, %c0_27, %c0_28, %c0_29], %68 {strides = array<i32>} : memref<1x4x32x32xbf16, #tpu.memory_space<vmem>>, vector<1x1x32x32xbf16>,
    %69 = vector.broadcast %54 : vector<32x1xf32> to vector<32x32xf32>
    %70 = arith.mulf %17, %69 : vector<32x32xf32>
    %71 = vector.broadcast %58 : vector<32x1xf32> to vector<32x32xf32>
    %72 = arith.addf %70, %71 : vector<32x32xf32>
    %cst_30 = arith.constant 0.000000e+00 : f32
    %73 = vector.broadcast %cst_30 : f32 to vector<32x32xf32>
    %74 = arith.maximumf %72, %73 : vector<32x32xf32>
    %75 = arith.truncf %74 : vector<32x32xf32> to vector<32x32xbf16>
    %c0_31 = arith.constant 0 : index
    %c1 = arith.constant 1 : index
    %c0_32 = arith.constant 0 : index
    %c0_33 = arith.constant 0 : index
    %76 = vector.load %arg6[%c0_31, %c1, %c0_32, %c0_33] : memref<1x4x32x32xbf16, #tpu.memory_space<vmem>>, vector<1x1x32x32xbf16>
    %77 = vector.shape_cast %76 : vector<1x1x32x32xbf16> to vector<32x32xbf16>
    %78 = vector.shape_cast %75 : vector<32x32xbf16> to vector<1x1x32x32xbf16>
    tpu.vector_store %arg6[%c0_31, %c1, %c0_32, %c0_33], %78 {strides = array<i32>} : memref<1x4x32x32xbf16, #tpu.memory_space<vmem>>, vector<1x1x32x32xbf16>,
    %79 = vector.broadcast %54 : vector<32x1xf32> to vector<32x32xf32>
    %80 = arith.mulf %25, %79 : vector<32x32xf32>
    %81 = vector.broadcast %58 : vector<32x1xf32> to vector<32x32xf32>
    %82 = arith.addf %80, %81 : vector<32x32xf32>
    %cst_34 = arith.constant 0.000000e+00 : f32
    %83 = vector.broadcast %cst_34 : f32 to vector<32x32xf32>
    %84 = arith.maximumf %82, %83 : vector<32x32xf32>
    %85 = arith.truncf %84 : vector<32x32xf32> to vector<32x32xbf16>
    %c0_35 = arith.constant 0 : index
    %c2 = arith.constant 2 : index
    %c0_36 = arith.constant 0 : index
    %c0_37 = arith.constant 0 : index
    %86 = vector.load %arg6[%c0_35, %c2, %c0_36, %c0_37] : memref<1x4x32x32xbf16, #tpu.memory_space<vmem>>, vector<1x1x32x32xbf16>
    %87 = vector.shape_cast %86 : vector<1x1x32x32xbf16> to vector<32x32xbf16>
    %88 = vector.shape_cast %85 : vector<32x32xbf16> to vector<1x1x32x32xbf16>
    tpu.vector_store %arg6[%c0_35, %c2, %c0_36, %c0_37], %88 {strides = array<i32>} : memref<1x4x32x32xbf16, #tpu.memory_space<vmem>>, vector<1x1x32x32xbf16>,
    %89 = vector.broadcast %54 : vector<32x1xf32> to vector<32x32xf32>
    %90 = arith.mulf %33, %89 : vector<32x32xf32>
    %91 = vector.broadcast %58 : vector<32x1xf32> to vector<32x32xf32>
    %92 = arith.addf %90, %91 : vector<32x32xf32>
    %cst_38 = arith.constant 0.000000e+00 : f32
    %93 = vector.broadcast %cst_38 : f32 to vector<32x32xf32>
    %94 = arith.maximumf %92, %93 : vector<32x32xf32>
    %95 = arith.truncf %94 : vector<32x32xf32> to vector<32x32xbf16>
    %c0_39 = arith.constant 0 : index
    %c3 = arith.constant 3 : index
    %c0_40 = arith.constant 0 : index
    %c0_41 = arith.constant 0 : index
    %96 = vector.load %arg6[%c0_39, %c3, %c0_40, %c0_41] : memref<1x4x32x32xbf16, #tpu.memory_space<vmem>>, vector<1x1x32x32xbf16>
    %97 = vector.shape_cast %96 : vector<1x1x32x32xbf16> to vector<32x32xbf16>
    %98 = vector.shape_cast %95 : vector<32x32xbf16> to vector<1x1x32x32xbf16>
    tpu.vector_store %arg6[%c0_39, %c3, %c0_40, %c0_41], %98 {strides = array<i32>} : memref<1x4x32x32xbf16, #tpu.memory_space<vmem>>, vector<1x1x32x32xbf16>,
    return
  }
  func.func @transform_0(%arg0: i32) -> (i32, i32) {
    %c0_i32 = arith.constant 0 : i32
    %c0_i32_0 = arith.constant 0 : i32
    %c0_i32_1 = arith.constant 0 : i32
    return %c0_i32, %c0_i32_0 : i32, i32
  }
  func.func @transform_1(%arg0: i32) -> (i32, i32, i32) {
    %c0_i32 = arith.constant 0 : i32
    %c0_i32_0 = arith.constant 0 : i32
    %c0_i32_1 = arith.constant 0 : i32
    return %arg0, %c0_i32, %c0_i32_0 : i32, i32, i32
  }
  func.func @transform_2(%arg0: i32) -> (i32, i32, i32) {
    %c0_i32 = arith.constant 0 : i32
    %c0_i32_0 = arith.constant 0 : i32
    %c0_i32_1 = arith.constant 0 : i32
    %c0_i32_2 = arith.constant 0 : i32
    return %c0_i32, %c0_i32_0, %c0_i32_1 : i32, i32, i32
  }
  func.func @transform_3(%arg0: i32) -> (i32, i32, i32) {
    %c0_i32 = arith.constant 0 : i32
    %c0_i32_0 = arith.constant 0 : i32
    %c0_i32_1 = arith.constant 0 : i32
    return %arg0, %c0_i32, %c0_i32_0 : i32, i32, i32
  }
  func.func @transform_4(%arg0: i32) -> (i32, i32, i32) {
    %c0_i32 = arith.constant 0 : i32
    %c0_i32_0 = arith.constant 0 : i32
    %c0_i32_1 = arith.constant 0 : i32
    return %arg0, %c0_i32, %c0_i32_0 : i32, i32, i32
  }
  func.func @transform_5(%arg0: i32) -> (i32, i32, i32, i32) {
    %c0_i32 = arith.constant 0 : i32
    %c0_i32_0 = arith.constant 0 : i32
    %c0_i32_1 = arith.constant 0 : i32
    %c0_i32_2 = arith.constant 0 : i32
    return %arg0, %c0_i32, %c0_i32_0, %c0_i32_1 : i32, i32, i32, i32
  }
}

module attributes {stable_mosaic.version = 11 : i64} {
  func.func @_dconv_bn_relu_kernel(%arg0: i32, %arg1: memref<32x146xbf16, #tpu.memory_space<vmem>>, %arg2: memref<1x64x288xbf16, #tpu.memory_space<vmem>>, %arg3: memref<9x1x128xbf16, #tpu.memory_space<vmem>>, %arg4: memref<1x16x1xf32, #tpu.memory_space<vmem>>, %arg5: memref<1x16x1xf32, #tpu.memory_space<vmem>>, %arg6: memref<1x4x16x128xbf16, #tpu.memory_space<vmem>>, %arg7: memref<288x128xbf16, #tpu.memory_space<vmem>>) attributes {dimension_semantics = [#tpu.dimension_semantics<arbitrary>], iteration_bounds = array<i64: 1>, scalar_prefetch = 0 : i64, scratch_operands = 1 : i64, tpu.core_type = #tpu.core_type<tc>, window_params = [{pipeline_mode = #tpu.pipeline_mode<synchronous>, transform_indices = @transform_0, window_bounds = array<i64: 32, 146>}, {transform_indices = @transform_1, window_bounds = array<i64: 1, 64, 288>}, {pipeline_mode = #tpu.pipeline_mode<synchronous>, transform_indices = @transform_2, window_bounds = array<i64: 9, 1, 128>}, {transform_indices = @transform_3, window_bounds = array<i64: 1, 16, 1>}, {transform_indices = @transform_4, window_bounds = array<i64: 1, 16, 1>}, {transform_indices = @transform_5, window_bounds = array<i64: 1, 4, 16, 128>}]} {
    %c0_i32 = arith.constant 0 : i32
    %0 = arith.cmpi eq, %arg0, %c0_i32 : i32
    %1 = arith.extui %0 : i1 to i32
    %c0_i32_0 = arith.constant 0 : i32
    %2 = arith.cmpi ne, %1, %c0_i32_0 : i32
    scf.if %2 {
      %c0_42 = arith.constant 0 : index
      %c0_43 = arith.constant 0 : index
      %99 = vector.load %arg1[%c0_42, %c0_43] : memref<32x146xbf16, #tpu.memory_space<vmem>>, vector<32x128xbf16>
      %c0_44 = arith.constant 0 : index
      %c0_45 = arith.constant 0 : index
      %c0_46 = arith.constant 0 : index
      %100 = vector.load %arg3[%c0_44, %c0_45, %c0_46] : memref<9x1x128xbf16, #tpu.memory_space<vmem>>, vector<1x1x128xbf16>
      %101 = vector.shape_cast %100 : vector<1x1x128xbf16> to vector<1x128xbf16>
      %102 = vector.broadcast %101 : vector<1x128xbf16> to vector<32x128xbf16>
      %103 = arith.mulf %99, %102 : vector<32x128xbf16>
      %c0_47 = arith.constant 0 : index
      %c0_48 = arith.constant 0 : index
      %104 = vector.load %arg7[%c0_47, %c0_48] : memref<288x128xbf16, #tpu.memory_space<vmem>>, vector<32x128xbf16>
      tpu.vector_store %arg7[%c0_47, %c0_48], %103 {strides = array<i32>} : memref<288x128xbf16, #tpu.memory_space<vmem>>, vector<32x128xbf16>,
      %c0_49 = arith.constant 0 : index
      %c1_50 = arith.constant 1 : index
      %105 = vector.load %arg1[%c0_49, %c1_50] : memref<32x146xbf16, #tpu.memory_space<vmem>>, vector<32x128xbf16>
      %c1_51 = arith.constant 1 : index
      %c0_52 = arith.constant 0 : index
      %c0_53 = arith.constant 0 : index
      %106 = vector.load %arg3[%c1_51, %c0_52, %c0_53] : memref<9x1x128xbf16, #tpu.memory_space<vmem>>, vector<1x1x128xbf16>
      %107 = vector.shape_cast %106 : vector<1x1x128xbf16> to vector<1x128xbf16>
      %108 = vector.broadcast %107 : vector<1x128xbf16> to vector<32x128xbf16>
      %109 = arith.mulf %105, %108 : vector<32x128xbf16>
      %c32 = arith.constant 32 : index
      %c0_54 = arith.constant 0 : index
      %110 = vector.load %arg7[%c32, %c0_54] : memref<288x128xbf16, #tpu.memory_space<vmem>>, vector<32x128xbf16>
      tpu.vector_store %arg7[%c32, %c0_54], %109 {strides = array<i32>} : memref<288x128xbf16, #tpu.memory_space<vmem>>, vector<32x128xbf16>,
      %c0_55 = arith.constant 0 : index
      %c2_56 = arith.constant 2 : index
      %111 = vector.load %arg1[%c0_55, %c2_56] : memref<32x146xbf16, #tpu.memory_space<vmem>>, vector<32x128xbf16>
      %c2_57 = arith.constant 2 : index
      %c0_58 = arith.constant 0 : index
      %c0_59 = arith.constant 0 : index
      %112 = vector.load %arg3[%c2_57, %c0_58, %c0_59] : memref<9x1x128xbf16, #tpu.memory_space<vmem>>, vector<1x1x128xbf16>
      %113 = vector.shape_cast %112 : vector<1x1x128xbf16> to vector<1x128xbf16>
      %114 = vector.broadcast %113 : vector<1x128xbf16> to vector<32x128xbf16>
      %115 = arith.mulf %111, %114 : vector<32x128xbf16>
      %c64 = arith.constant 64 : index
      %c0_60 = arith.constant 0 : index
      %116 = vector.load %arg7[%c64, %c0_60] : memref<288x128xbf16, #tpu.memory_space<vmem>>, vector<32x128xbf16>
      tpu.vector_store %arg7[%c64, %c0_60], %115 {strides = array<i32>} : memref<288x128xbf16, #tpu.memory_space<vmem>>, vector<32x128xbf16>,
      %c0_61 = arith.constant 0 : index
      %c8 = arith.constant 8 : index
      %117 = vector.load %arg1[%c0_61, %c8] : memref<32x146xbf16, #tpu.memory_space<vmem>>, vector<32x128xbf16>
      %c3_62 = arith.constant 3 : index
      %c0_63 = arith.constant 0 : index
      %c0_64 = arith.constant 0 : index
      %118 = vector.load %arg3[%c3_62, %c0_63, %c0_64] : memref<9x1x128xbf16, #tpu.memory_space<vmem>>, vector<1x1x128xbf16>
      %119 = vector.shape_cast %118 : vector<1x1x128xbf16> to vector<1x128xbf16>
      %120 = vector.broadcast %119 : vector<1x128xbf16> to vector<32x128xbf16>
      %121 = arith.mulf %117, %120 : vector<32x128xbf16>
      %c96 = arith.constant 96 : index
      %c0_65 = arith.constant 0 : index
      %122 = vector.load %arg7[%c96, %c0_65] : memref<288x128xbf16, #tpu.memory_space<vmem>>, vector<32x128xbf16>
      tpu.vector_store %arg7[%c96, %c0_65], %121 {strides = array<i32>} : memref<288x128xbf16, #tpu.memory_space<vmem>>, vector<32x128xbf16>,
      %c0_66 = arith.constant 0 : index
      %c9 = arith.constant 9 : index
      %123 = vector.load %arg1[%c0_66, %c9] : memref<32x146xbf16, #tpu.memory_space<vmem>>, vector<32x128xbf16>
      %c4 = arith.constant 4 : index
      %c0_67 = arith.constant 0 : index
      %c0_68 = arith.constant 0 : index
      %124 = vector.load %arg3[%c4, %c0_67, %c0_68] : memref<9x1x128xbf16, #tpu.memory_space<vmem>>, vector<1x1x128xbf16>
      %125 = vector.shape_cast %124 : vector<1x1x128xbf16> to vector<1x128xbf16>
      %126 = vector.broadcast %125 : vector<1x128xbf16> to vector<32x128xbf16>
      %127 = arith.mulf %123, %126 : vector<32x128xbf16>
      %c128 = arith.constant 128 : index
      %c0_69 = arith.constant 0 : index
      %128 = vector.load %arg7[%c128, %c0_69] : memref<288x128xbf16, #tpu.memory_space<vmem>>, vector<32x128xbf16>
      tpu.vector_store %arg7[%c128, %c0_69], %127 {strides = array<i32>} : memref<288x128xbf16, #tpu.memory_space<vmem>>, vector<32x128xbf16>,
      %c0_70 = arith.constant 0 : index
      %c10 = arith.constant 10 : index
      %129 = vector.load %arg1[%c0_70, %c10] : memref<32x146xbf16, #tpu.memory_space<vmem>>, vector<32x128xbf16>
      %c5 = arith.constant 5 : index
      %c0_71 = arith.constant 0 : index
      %c0_72 = arith.constant 0 : index
      %130 = vector.load %arg3[%c5, %c0_71, %c0_72] : memref<9x1x128xbf16, #tpu.memory_space<vmem>>, vector<1x1x128xbf16>
      %131 = vector.shape_cast %130 : vector<1x1x128xbf16> to vector<1x128xbf16>
      %132 = vector.broadcast %131 : vector<1x128xbf16> to vector<32x128xbf16>
      %133 = arith.mulf %129, %132 : vector<32x128xbf16>
      %c160 = arith.constant 160 : index
      %c0_73 = arith.constant 0 : index
      %134 = vector.load %arg7[%c160, %c0_73] : memref<288x128xbf16, #tpu.memory_space<vmem>>, vector<32x128xbf16>
      tpu.vector_store %arg7[%c160, %c0_73], %133 {strides = array<i32>} : memref<288x128xbf16, #tpu.memory_space<vmem>>, vector<32x128xbf16>,
      %c0_74 = arith.constant 0 : index
      %c16 = arith.constant 16 : index
      %135 = vector.load %arg1[%c0_74, %c16] : memref<32x146xbf16, #tpu.memory_space<vmem>>, vector<32x128xbf16>
      %c6 = arith.constant 6 : index
      %c0_75 = arith.constant 0 : index
      %c0_76 = arith.constant 0 : index
      %136 = vector.load %arg3[%c6, %c0_75, %c0_76] : memref<9x1x128xbf16, #tpu.memory_space<vmem>>, vector<1x1x128xbf16>
      %137 = vector.shape_cast %136 : vector<1x1x128xbf16> to vector<1x128xbf16>
      %138 = vector.broadcast %137 : vector<1x128xbf16> to vector<32x128xbf16>
      %139 = arith.mulf %135, %138 : vector<32x128xbf16>
      %c192 = arith.constant 192 : index
      %c0_77 = arith.constant 0 : index
      %140 = vector.load %arg7[%c192, %c0_77] : memref<288x128xbf16, #tpu.memory_space<vmem>>, vector<32x128xbf16>
      tpu.vector_store %arg7[%c192, %c0_77], %139 {strides = array<i32>} : memref<288x128xbf16, #tpu.memory_space<vmem>>, vector<32x128xbf16>,
      %c0_78 = arith.constant 0 : index
      %c17 = arith.constant 17 : index
      %141 = vector.load %arg1[%c0_78, %c17] : memref<32x146xbf16, #tpu.memory_space<vmem>>, vector<32x128xbf16>
      %c7 = arith.constant 7 : index
      %c0_79 = arith.constant 0 : index
      %c0_80 = arith.constant 0 : index
      %142 = vector.load %arg3[%c7, %c0_79, %c0_80] : memref<9x1x128xbf16, #tpu.memory_space<vmem>>, vector<1x1x128xbf16>
      %143 = vector.shape_cast %142 : vector<1x1x128xbf16> to vector<1x128xbf16>
      %144 = vector.broadcast %143 : vector<1x128xbf16> to vector<32x128xbf16>
      %145 = arith.mulf %141, %144 : vector<32x128xbf16>
      %c224 = arith.constant 224 : index
      %c0_81 = arith.constant 0 : index
      %146 = vector.load %arg7[%c224, %c0_81] : memref<288x128xbf16, #tpu.memory_space<vmem>>, vector<32x128xbf16>
      tpu.vector_store %arg7[%c224, %c0_81], %145 {strides = array<i32>} : memref<288x128xbf16, #tpu.memory_space<vmem>>, vector<32x128xbf16>,
      %c0_82 = arith.constant 0 : index
      %c18 = arith.constant 18 : index
      %147 = vector.load %arg1[%c0_82, %c18] : memref<32x146xbf16, #tpu.memory_space<vmem>>, vector<32x128xbf16>
      %c8_83 = arith.constant 8 : index
      %c0_84 = arith.constant 0 : index
      %c0_85 = arith.constant 0 : index
      %148 = vector.load %arg3[%c8_83, %c0_84, %c0_85] : memref<9x1x128xbf16, #tpu.memory_space<vmem>>, vector<1x1x128xbf16>
      %149 = vector.shape_cast %148 : vector<1x1x128xbf16> to vector<1x128xbf16>
      %150 = vector.broadcast %149 : vector<1x128xbf16> to vector<32x128xbf16>
      %151 = arith.mulf %147, %150 : vector<32x128xbf16>
      %c256 = arith.constant 256 : index
      %c0_86 = arith.constant 0 : index
      %152 = vector.load %arg7[%c256, %c0_86] : memref<288x128xbf16, #tpu.memory_space<vmem>>, vector<32x128xbf16>
      tpu.vector_store %arg7[%c256, %c0_86], %151 {strides = array<i32>} : memref<288x128xbf16, #tpu.memory_space<vmem>>, vector<32x128xbf16>,
    } else {
    }
    %c0 = arith.constant 0 : index
    %c0_1 = arith.constant 0 : index
    %c0_2 = arith.constant 0 : index
    %3 = vector.load %arg2[%c0, %c0_1, %c0_2] : memref<1x64x288xbf16, #tpu.memory_space<vmem>>, vector<1x64x288xbf16>
    %4 = vector.shape_cast %3 : vector<1x64x288xbf16> to vector<64x288xbf16>
    %c0_3 = arith.constant 0 : index
    %c0_4 = arith.constant 0 : index
    %5 = vector.load %arg7[%c0_3, %c0_4] : memref<288x128xbf16, #tpu.memory_space<vmem>>, vector<288x128xbf16>
    %cst = arith.constant dense<0.000000e+00> : vector<64x128xf32>
    %6 = tpu.matmul %4, %5, %cst {dimension_numbers = #tpu.dot_dimension_numbers<[1], [0], [0], [1], [0, 0, 1, 1], [], []>} : vector<64x288xbf16>, vector<288x128xbf16>, vector<64x128xf32> -> vector<64x128xf32>
    %cst_5 = arith.constant 0.000000e+00 : f32
    %7 = vector.broadcast %cst_5 : f32 to vector<16x1xf32>
    %cst_6 = arith.constant 0.000000e+00 : f32
    %8 = vector.broadcast %cst_6 : f32 to vector<16x1xf32>
    %9 = vector.extract_strided_slice %6 {offsets = [0, 0], sizes = [16, 128], strides = [1, 1]} : vector<64x128xf32> to vector<16x128xf32>
    %cst_7 = arith.constant dense<0.000000e+00> : vector<16xf32>
    %10 = vector.multi_reduction <add>, %9, %cst_7 [1] : vector<16x128xf32> to vector<16xf32>
    %11 = vector.shape_cast %10 : vector<16xf32> to vector<16x1xf32>
    %12 = arith.addf %7, %11 : vector<16x1xf32>
    %13 = arith.mulf %9, %9 : vector<16x128xf32>
    %cst_8 = arith.constant dense<0.000000e+00> : vector<16xf32>
    %14 = vector.multi_reduction <add>, %13, %cst_8 [1] : vector<16x128xf32> to vector<16xf32>
    %15 = vector.shape_cast %14 : vector<16xf32> to vector<16x1xf32>
    %16 = arith.addf %8, %15 : vector<16x1xf32>
    %17 = vector.extract_strided_slice %6 {offsets = [16, 0], sizes = [16, 128], strides = [1, 1]} : vector<64x128xf32> to vector<16x128xf32>
    %cst_9 = arith.constant dense<0.000000e+00> : vector<16xf32>
    %18 = vector.multi_reduction <add>, %17, %cst_9 [1] : vector<16x128xf32> to vector<16xf32>
    %19 = vector.shape_cast %18 : vector<16xf32> to vector<16x1xf32>
    %20 = arith.addf %12, %19 : vector<16x1xf32>
    %21 = arith.mulf %17, %17 : vector<16x128xf32>
    %cst_10 = arith.constant dense<0.000000e+00> : vector<16xf32>
    %22 = vector.multi_reduction <add>, %21, %cst_10 [1] : vector<16x128xf32> to vector<16xf32>
    %23 = vector.shape_cast %22 : vector<16xf32> to vector<16x1xf32>
    %24 = arith.addf %16, %23 : vector<16x1xf32>
    %25 = vector.extract_strided_slice %6 {offsets = [32, 0], sizes = [16, 128], strides = [1, 1]} : vector<64x128xf32> to vector<16x128xf32>
    %cst_11 = arith.constant dense<0.000000e+00> : vector<16xf32>
    %26 = vector.multi_reduction <add>, %25, %cst_11 [1] : vector<16x128xf32> to vector<16xf32>
    %27 = vector.shape_cast %26 : vector<16xf32> to vector<16x1xf32>
    %28 = arith.addf %20, %27 : vector<16x1xf32>
    %29 = arith.mulf %25, %25 : vector<16x128xf32>
    %cst_12 = arith.constant dense<0.000000e+00> : vector<16xf32>
    %30 = vector.multi_reduction <add>, %29, %cst_12 [1] : vector<16x128xf32> to vector<16xf32>
    %31 = vector.shape_cast %30 : vector<16xf32> to vector<16x1xf32>
    %32 = arith.addf %24, %31 : vector<16x1xf32>
    %33 = vector.extract_strided_slice %6 {offsets = [48, 0], sizes = [16, 128], strides = [1, 1]} : vector<64x128xf32> to vector<16x128xf32>
    %cst_13 = arith.constant dense<0.000000e+00> : vector<16xf32>
    %34 = vector.multi_reduction <add>, %33, %cst_13 [1] : vector<16x128xf32> to vector<16xf32>
    %35 = vector.shape_cast %34 : vector<16xf32> to vector<16x1xf32>
    %36 = arith.addf %28, %35 : vector<16x1xf32>
    %37 = arith.mulf %33, %33 : vector<16x128xf32>
    %cst_14 = arith.constant dense<0.000000e+00> : vector<16xf32>
    %38 = vector.multi_reduction <add>, %37, %cst_14 [1] : vector<16x128xf32> to vector<16xf32>
    %39 = vector.shape_cast %38 : vector<16xf32> to vector<16x1xf32>
    %40 = arith.addf %32, %39 : vector<16x1xf32>
    %cst_15 = arith.constant 0.001953125 : f32
    %41 = vector.broadcast %cst_15 : f32 to vector<16x1xf32>
    %42 = arith.mulf %36, %41 : vector<16x1xf32>
    %cst_16 = arith.constant 0.001953125 : f32
    %43 = vector.broadcast %cst_16 : f32 to vector<16x1xf32>
    %44 = arith.mulf %40, %43 : vector<16x1xf32>
    %45 = arith.mulf %42, %42 : vector<16x1xf32>
    %46 = arith.subf %44, %45 : vector<16x1xf32>
    %cst_17 = arith.constant 0.000000e+00 : f32
    %47 = vector.broadcast %cst_17 : f32 to vector<16x1xf32>
    %48 = arith.maximumf %46, %47 : vector<16x1xf32>
    %c0_18 = arith.constant 0 : index
    %c0_19 = arith.constant 0 : index
    %c0_20 = arith.constant 0 : index
    %49 = vector.load %arg4[%c0_18, %c0_19, %c0_20] : memref<1x16x1xf32, #tpu.memory_space<vmem>>, vector<1x16x1xf32>
    %50 = vector.shape_cast %49 : vector<1x16x1xf32> to vector<16x1xf32>
    %cst_21 = arith.constant 9.99999974E-6 : f32
    %51 = vector.broadcast %cst_21 : f32 to vector<16x1xf32>
    %52 = arith.addf %48, %51 : vector<16x1xf32>
    %53 = math.rsqrt %52 : vector<16x1xf32>
    %54 = arith.mulf %50, %53 : vector<16x1xf32>
    %c0_22 = arith.constant 0 : index
    %c0_23 = arith.constant 0 : index
    %c0_24 = arith.constant 0 : index
    %55 = vector.load %arg5[%c0_22, %c0_23, %c0_24] : memref<1x16x1xf32, #tpu.memory_space<vmem>>, vector<1x16x1xf32>
    %56 = vector.shape_cast %55 : vector<1x16x1xf32> to vector<16x1xf32>
    %57 = arith.mulf %42, %54 : vector<16x1xf32>
    %58 = arith.subf %56, %57 : vector<16x1xf32>
    %59 = vector.broadcast %54 : vector<16x1xf32> to vector<16x128xf32>
    %60 = arith.mulf %9, %59 : vector<16x128xf32>
    %61 = vector.broadcast %58 : vector<16x1xf32> to vector<16x128xf32>
    %62 = arith.addf %60, %61 : vector<16x128xf32>
    %cst_25 = arith.constant 0.000000e+00 : f32
    %63 = vector.broadcast %cst_25 : f32 to vector<16x128xf32>
    %64 = arith.maximumf %62, %63 : vector<16x128xf32>
    %65 = arith.truncf %64 : vector<16x128xf32> to vector<16x128xbf16>
    %c0_26 = arith.constant 0 : index
    %c0_27 = arith.constant 0 : index
    %c0_28 = arith.constant 0 : index
    %c0_29 = arith.constant 0 : index
    %66 = vector.load %arg6[%c0_26, %c0_27, %c0_28, %c0_29] : memref<1x4x16x128xbf16, #tpu.memory_space<vmem>>, vector<1x1x16x128xbf16>
    %67 = vector.shape_cast %66 : vector<1x1x16x128xbf16> to vector<16x128xbf16>
    %68 = vector.shape_cast %65 : vector<16x128xbf16> to vector<1x1x16x128xbf16>
    tpu.vector_store %arg6[%c0_26, %c0_27, %c0_28, %c0_29], %68 {strides = array<i32>} : memref<1x4x16x128xbf16, #tpu.memory_space<vmem>>, vector<1x1x16x128xbf16>,
    %69 = vector.broadcast %54 : vector<16x1xf32> to vector<16x128xf32>
    %70 = arith.mulf %17, %69 : vector<16x128xf32>
    %71 = vector.broadcast %58 : vector<16x1xf32> to vector<16x128xf32>
    %72 = arith.addf %70, %71 : vector<16x128xf32>
    %cst_30 = arith.constant 0.000000e+00 : f32
    %73 = vector.broadcast %cst_30 : f32 to vector<16x128xf32>
    %74 = arith.maximumf %72, %73 : vector<16x128xf32>
    %75 = arith.truncf %74 : vector<16x128xf32> to vector<16x128xbf16>
    %c0_31 = arith.constant 0 : index
    %c1 = arith.constant 1 : index
    %c0_32 = arith.constant 0 : index
    %c0_33 = arith.constant 0 : index
    %76 = vector.load %arg6[%c0_31, %c1, %c0_32, %c0_33] : memref<1x4x16x128xbf16, #tpu.memory_space<vmem>>, vector<1x1x16x128xbf16>
    %77 = vector.shape_cast %76 : vector<1x1x16x128xbf16> to vector<16x128xbf16>
    %78 = vector.shape_cast %75 : vector<16x128xbf16> to vector<1x1x16x128xbf16>
    tpu.vector_store %arg6[%c0_31, %c1, %c0_32, %c0_33], %78 {strides = array<i32>} : memref<1x4x16x128xbf16, #tpu.memory_space<vmem>>, vector<1x1x16x128xbf16>,
    %79 = vector.broadcast %54 : vector<16x1xf32> to vector<16x128xf32>
    %80 = arith.mulf %25, %79 : vector<16x128xf32>
    %81 = vector.broadcast %58 : vector<16x1xf32> to vector<16x128xf32>
    %82 = arith.addf %80, %81 : vector<16x128xf32>
    %cst_34 = arith.constant 0.000000e+00 : f32
    %83 = vector.broadcast %cst_34 : f32 to vector<16x128xf32>
    %84 = arith.maximumf %82, %83 : vector<16x128xf32>
    %85 = arith.truncf %84 : vector<16x128xf32> to vector<16x128xbf16>
    %c0_35 = arith.constant 0 : index
    %c2 = arith.constant 2 : index
    %c0_36 = arith.constant 0 : index
    %c0_37 = arith.constant 0 : index
    %86 = vector.load %arg6[%c0_35, %c2, %c0_36, %c0_37] : memref<1x4x16x128xbf16, #tpu.memory_space<vmem>>, vector<1x1x16x128xbf16>
    %87 = vector.shape_cast %86 : vector<1x1x16x128xbf16> to vector<16x128xbf16>
    %88 = vector.shape_cast %85 : vector<16x128xbf16> to vector<1x1x16x128xbf16>
    tpu.vector_store %arg6[%c0_35, %c2, %c0_36, %c0_37], %88 {strides = array<i32>} : memref<1x4x16x128xbf16, #tpu.memory_space<vmem>>, vector<1x1x16x128xbf16>,
    %89 = vector.broadcast %54 : vector<16x1xf32> to vector<16x128xf32>
    %90 = arith.mulf %33, %89 : vector<16x128xf32>
    %91 = vector.broadcast %58 : vector<16x1xf32> to vector<16x128xf32>
    %92 = arith.addf %90, %91 : vector<16x128xf32>
    %cst_38 = arith.constant 0.000000e+00 : f32
    %93 = vector.broadcast %cst_38 : f32 to vector<16x128xf32>
    %94 = arith.maximumf %92, %93 : vector<16x128xf32>
    %95 = arith.truncf %94 : vector<16x128xf32> to vector<16x128xbf16>
    %c0_39 = arith.constant 0 : index
    %c3 = arith.constant 3 : index
    %c0_40 = arith.constant 0 : index
    %c0_41 = arith.constant 0 : index
    %96 = vector.load %arg6[%c0_39, %c3, %c0_40, %c0_41] : memref<1x4x16x128xbf16, #tpu.memory_space<vmem>>, vector<1x1x16x128xbf16>
    %97 = vector.shape_cast %96 : vector<1x1x16x128xbf16> to vector<16x128xbf16>
    %98 = vector.shape_cast %95 : vector<16x128xbf16> to vector<1x1x16x128xbf16>
    tpu.vector_store %arg6[%c0_39, %c3, %c0_40, %c0_41], %98 {strides = array<i32>} : memref<1x4x16x128xbf16, #tpu.memory_space<vmem>>, vector<1x1x16x128xbf16>,
    return
  }
  func.func @transform_0(%arg0: i32) -> (i32, i32) {
    %c0_i32 = arith.constant 0 : i32
    %c0_i32_0 = arith.constant 0 : i32
    %c0_i32_1 = arith.constant 0 : i32
    return %c0_i32, %c0_i32_0 : i32, i32
  }
  func.func @transform_1(%arg0: i32) -> (i32, i32, i32) {
    %c0_i32 = arith.constant 0 : i32
    %c0_i32_0 = arith.constant 0 : i32
    %c0_i32_1 = arith.constant 0 : i32
    return %arg0, %c0_i32, %c0_i32_0 : i32, i32, i32
  }
  func.func @transform_2(%arg0: i32) -> (i32, i32, i32) {
    %c0_i32 = arith.constant 0 : i32
    %c0_i32_0 = arith.constant 0 : i32
    %c0_i32_1 = arith.constant 0 : i32
    %c0_i32_2 = arith.constant 0 : i32
    return %c0_i32, %c0_i32_0, %c0_i32_1 : i32, i32, i32
  }
  func.func @transform_3(%arg0: i32) -> (i32, i32, i32) {
    %c0_i32 = arith.constant 0 : i32
    %c0_i32_0 = arith.constant 0 : i32
    %c0_i32_1 = arith.constant 0 : i32
    return %arg0, %c0_i32, %c0_i32_0 : i32, i32, i32
  }
  func.func @transform_4(%arg0: i32) -> (i32, i32, i32) {
    %c0_i32 = arith.constant 0 : i32
    %c0_i32_0 = arith.constant 0 : i32
    %c0_i32_1 = arith.constant 0 : i32
    return %arg0, %c0_i32, %c0_i32_0 : i32, i32, i32
  }
  func.func @transform_5(%arg0: i32) -> (i32, i32, i32, i32) {
    %c0_i32 = arith.constant 0 : i32
    %c0_i32_0 = arith.constant 0 : i32
    %c0_i32_1 = arith.constant 0 : i32
    %c0_i32_2 = arith.constant 0 : i32
    return %arg0, %c0_i32, %c0_i32_0, %c0_i32_1 : i32, i32, i32, i32
  }
}

module attributes {stable_mosaic.version = 11 : i64} {
  func.func @_dconv_bn_relu_kernel(%arg0: i32, %arg1: memref<16x546xbf16, #tpu.memory_space<vmem>>, %arg2: memref<1x32x144xbf16, #tpu.memory_space<vmem>>, %arg3: memref<9x1x512xbf16, #tpu.memory_space<vmem>>, %arg4: memref<1x8x1xf32, #tpu.memory_space<vmem>>, %arg5: memref<1x8x1xf32, #tpu.memory_space<vmem>>, %arg6: memref<1x4x8x512xbf16, #tpu.memory_space<vmem>>, %arg7: memref<144x512xbf16, #tpu.memory_space<vmem>>) attributes {dimension_semantics = [#tpu.dimension_semantics<arbitrary>], iteration_bounds = array<i64: 1>, scalar_prefetch = 0 : i64, scratch_operands = 1 : i64, tpu.core_type = #tpu.core_type<tc>, window_params = [{pipeline_mode = #tpu.pipeline_mode<synchronous>, transform_indices = @transform_0, window_bounds = array<i64: 16, 546>}, {transform_indices = @transform_1, window_bounds = array<i64: 1, 32, 144>}, {pipeline_mode = #tpu.pipeline_mode<synchronous>, transform_indices = @transform_2, window_bounds = array<i64: 9, 1, 512>}, {transform_indices = @transform_3, window_bounds = array<i64: 1, 8, 1>}, {transform_indices = @transform_4, window_bounds = array<i64: 1, 8, 1>}, {transform_indices = @transform_5, window_bounds = array<i64: 1, 4, 8, 512>}]} {
    %c0_i32 = arith.constant 0 : i32
    %0 = arith.cmpi eq, %arg0, %c0_i32 : i32
    %1 = arith.extui %0 : i1 to i32
    %c0_i32_0 = arith.constant 0 : i32
    %2 = arith.cmpi ne, %1, %c0_i32_0 : i32
    scf.if %2 {
      %c0_42 = arith.constant 0 : index
      %c0_43 = arith.constant 0 : index
      %99 = vector.load %arg1[%c0_42, %c0_43] : memref<16x546xbf16, #tpu.memory_space<vmem>>, vector<16x512xbf16>
      %c0_44 = arith.constant 0 : index
      %c0_45 = arith.constant 0 : index
      %c0_46 = arith.constant 0 : index
      %100 = vector.load %arg3[%c0_44, %c0_45, %c0_46] : memref<9x1x512xbf16, #tpu.memory_space<vmem>>, vector<1x1x512xbf16>
      %101 = vector.shape_cast %100 : vector<1x1x512xbf16> to vector<1x512xbf16>
      %102 = vector.broadcast %101 : vector<1x512xbf16> to vector<16x512xbf16>
      %103 = arith.mulf %99, %102 : vector<16x512xbf16>
      %c0_47 = arith.constant 0 : index
      %c0_48 = arith.constant 0 : index
      %104 = vector.load %arg7[%c0_47, %c0_48] : memref<144x512xbf16, #tpu.memory_space<vmem>>, vector<16x512xbf16>
      tpu.vector_store %arg7[%c0_47, %c0_48], %103 {strides = array<i32>} : memref<144x512xbf16, #tpu.memory_space<vmem>>, vector<16x512xbf16>,
      %c0_49 = arith.constant 0 : index
      %c1_50 = arith.constant 1 : index
      %105 = vector.load %arg1[%c0_49, %c1_50] : memref<16x546xbf16, #tpu.memory_space<vmem>>, vector<16x512xbf16>
      %c1_51 = arith.constant 1 : index
      %c0_52 = arith.constant 0 : index
      %c0_53 = arith.constant 0 : index
      %106 = vector.load %arg3[%c1_51, %c0_52, %c0_53] : memref<9x1x512xbf16, #tpu.memory_space<vmem>>, vector<1x1x512xbf16>
      %107 = vector.shape_cast %106 : vector<1x1x512xbf16> to vector<1x512xbf16>
      %108 = vector.broadcast %107 : vector<1x512xbf16> to vector<16x512xbf16>
      %109 = arith.mulf %105, %108 : vector<16x512xbf16>
      %c16 = arith.constant 16 : index
      %c0_54 = arith.constant 0 : index
      %110 = vector.load %arg7[%c16, %c0_54] : memref<144x512xbf16, #tpu.memory_space<vmem>>, vector<16x512xbf16>
      tpu.vector_store %arg7[%c16, %c0_54], %109 {strides = array<i32>} : memref<144x512xbf16, #tpu.memory_space<vmem>>, vector<16x512xbf16>,
      %c0_55 = arith.constant 0 : index
      %c2_56 = arith.constant 2 : index
      %111 = vector.load %arg1[%c0_55, %c2_56] : memref<16x546xbf16, #tpu.memory_space<vmem>>, vector<16x512xbf16>
      %c2_57 = arith.constant 2 : index
      %c0_58 = arith.constant 0 : index
      %c0_59 = arith.constant 0 : index
      %112 = vector.load %arg3[%c2_57, %c0_58, %c0_59] : memref<9x1x512xbf16, #tpu.memory_space<vmem>>, vector<1x1x512xbf16>
      %113 = vector.shape_cast %112 : vector<1x1x512xbf16> to vector<1x512xbf16>
      %114 = vector.broadcast %113 : vector<1x512xbf16> to vector<16x512xbf16>
      %115 = arith.mulf %111, %114 : vector<16x512xbf16>
      %c32 = arith.constant 32 : index
      %c0_60 = arith.constant 0 : index
      %116 = vector.load %arg7[%c32, %c0_60] : memref<144x512xbf16, #tpu.memory_space<vmem>>, vector<16x512xbf16>
      tpu.vector_store %arg7[%c32, %c0_60], %115 {strides = array<i32>} : memref<144x512xbf16, #tpu.memory_space<vmem>>, vector<16x512xbf16>,
      %c0_61 = arith.constant 0 : index
      %c16_62 = arith.constant 16 : index
      %117 = vector.load %arg1[%c0_61, %c16_62] : memref<16x546xbf16, #tpu.memory_space<vmem>>, vector<16x512xbf16>
      %c3_63 = arith.constant 3 : index
      %c0_64 = arith.constant 0 : index
      %c0_65 = arith.constant 0 : index
      %118 = vector.load %arg3[%c3_63, %c0_64, %c0_65] : memref<9x1x512xbf16, #tpu.memory_space<vmem>>, vector<1x1x512xbf16>
      %119 = vector.shape_cast %118 : vector<1x1x512xbf16> to vector<1x512xbf16>
      %120 = vector.broadcast %119 : vector<1x512xbf16> to vector<16x512xbf16>
      %121 = arith.mulf %117, %120 : vector<16x512xbf16>
      %c48 = arith.constant 48 : index
      %c0_66 = arith.constant 0 : index
      %122 = vector.load %arg7[%c48, %c0_66] : memref<144x512xbf16, #tpu.memory_space<vmem>>, vector<16x512xbf16>
      tpu.vector_store %arg7[%c48, %c0_66], %121 {strides = array<i32>} : memref<144x512xbf16, #tpu.memory_space<vmem>>, vector<16x512xbf16>,
      %c0_67 = arith.constant 0 : index
      %c17 = arith.constant 17 : index
      %123 = vector.load %arg1[%c0_67, %c17] : memref<16x546xbf16, #tpu.memory_space<vmem>>, vector<16x512xbf16>
      %c4 = arith.constant 4 : index
      %c0_68 = arith.constant 0 : index
      %c0_69 = arith.constant 0 : index
      %124 = vector.load %arg3[%c4, %c0_68, %c0_69] : memref<9x1x512xbf16, #tpu.memory_space<vmem>>, vector<1x1x512xbf16>
      %125 = vector.shape_cast %124 : vector<1x1x512xbf16> to vector<1x512xbf16>
      %126 = vector.broadcast %125 : vector<1x512xbf16> to vector<16x512xbf16>
      %127 = arith.mulf %123, %126 : vector<16x512xbf16>
      %c64 = arith.constant 64 : index
      %c0_70 = arith.constant 0 : index
      %128 = vector.load %arg7[%c64, %c0_70] : memref<144x512xbf16, #tpu.memory_space<vmem>>, vector<16x512xbf16>
      tpu.vector_store %arg7[%c64, %c0_70], %127 {strides = array<i32>} : memref<144x512xbf16, #tpu.memory_space<vmem>>, vector<16x512xbf16>,
      %c0_71 = arith.constant 0 : index
      %c18 = arith.constant 18 : index
      %129 = vector.load %arg1[%c0_71, %c18] : memref<16x546xbf16, #tpu.memory_space<vmem>>, vector<16x512xbf16>
      %c5 = arith.constant 5 : index
      %c0_72 = arith.constant 0 : index
      %c0_73 = arith.constant 0 : index
      %130 = vector.load %arg3[%c5, %c0_72, %c0_73] : memref<9x1x512xbf16, #tpu.memory_space<vmem>>, vector<1x1x512xbf16>
      %131 = vector.shape_cast %130 : vector<1x1x512xbf16> to vector<1x512xbf16>
      %132 = vector.broadcast %131 : vector<1x512xbf16> to vector<16x512xbf16>
      %133 = arith.mulf %129, %132 : vector<16x512xbf16>
      %c80 = arith.constant 80 : index
      %c0_74 = arith.constant 0 : index
      %134 = vector.load %arg7[%c80, %c0_74] : memref<144x512xbf16, #tpu.memory_space<vmem>>, vector<16x512xbf16>
      tpu.vector_store %arg7[%c80, %c0_74], %133 {strides = array<i32>} : memref<144x512xbf16, #tpu.memory_space<vmem>>, vector<16x512xbf16>,
      %c0_75 = arith.constant 0 : index
      %c32_76 = arith.constant 32 : index
      %135 = vector.load %arg1[%c0_75, %c32_76] : memref<16x546xbf16, #tpu.memory_space<vmem>>, vector<16x512xbf16>
      %c6 = arith.constant 6 : index
      %c0_77 = arith.constant 0 : index
      %c0_78 = arith.constant 0 : index
      %136 = vector.load %arg3[%c6, %c0_77, %c0_78] : memref<9x1x512xbf16, #tpu.memory_space<vmem>>, vector<1x1x512xbf16>
      %137 = vector.shape_cast %136 : vector<1x1x512xbf16> to vector<1x512xbf16>
      %138 = vector.broadcast %137 : vector<1x512xbf16> to vector<16x512xbf16>
      %139 = arith.mulf %135, %138 : vector<16x512xbf16>
      %c96 = arith.constant 96 : index
      %c0_79 = arith.constant 0 : index
      %140 = vector.load %arg7[%c96, %c0_79] : memref<144x512xbf16, #tpu.memory_space<vmem>>, vector<16x512xbf16>
      tpu.vector_store %arg7[%c96, %c0_79], %139 {strides = array<i32>} : memref<144x512xbf16, #tpu.memory_space<vmem>>, vector<16x512xbf16>,
      %c0_80 = arith.constant 0 : index
      %c33 = arith.constant 33 : index
      %141 = vector.load %arg1[%c0_80, %c33] : memref<16x546xbf16, #tpu.memory_space<vmem>>, vector<16x512xbf16>
      %c7 = arith.constant 7 : index
      %c0_81 = arith.constant 0 : index
      %c0_82 = arith.constant 0 : index
      %142 = vector.load %arg3[%c7, %c0_81, %c0_82] : memref<9x1x512xbf16, #tpu.memory_space<vmem>>, vector<1x1x512xbf16>
      %143 = vector.shape_cast %142 : vector<1x1x512xbf16> to vector<1x512xbf16>
      %144 = vector.broadcast %143 : vector<1x512xbf16> to vector<16x512xbf16>
      %145 = arith.mulf %141, %144 : vector<16x512xbf16>
      %c112 = arith.constant 112 : index
      %c0_83 = arith.constant 0 : index
      %146 = vector.load %arg7[%c112, %c0_83] : memref<144x512xbf16, #tpu.memory_space<vmem>>, vector<16x512xbf16>
      tpu.vector_store %arg7[%c112, %c0_83], %145 {strides = array<i32>} : memref<144x512xbf16, #tpu.memory_space<vmem>>, vector<16x512xbf16>,
      %c0_84 = arith.constant 0 : index
      %c34 = arith.constant 34 : index
      %147 = vector.load %arg1[%c0_84, %c34] : memref<16x546xbf16, #tpu.memory_space<vmem>>, vector<16x512xbf16>
      %c8 = arith.constant 8 : index
      %c0_85 = arith.constant 0 : index
      %c0_86 = arith.constant 0 : index
      %148 = vector.load %arg3[%c8, %c0_85, %c0_86] : memref<9x1x512xbf16, #tpu.memory_space<vmem>>, vector<1x1x512xbf16>
      %149 = vector.shape_cast %148 : vector<1x1x512xbf16> to vector<1x512xbf16>
      %150 = vector.broadcast %149 : vector<1x512xbf16> to vector<16x512xbf16>
      %151 = arith.mulf %147, %150 : vector<16x512xbf16>
      %c128 = arith.constant 128 : index
      %c0_87 = arith.constant 0 : index
      %152 = vector.load %arg7[%c128, %c0_87] : memref<144x512xbf16, #tpu.memory_space<vmem>>, vector<16x512xbf16>
      tpu.vector_store %arg7[%c128, %c0_87], %151 {strides = array<i32>} : memref<144x512xbf16, #tpu.memory_space<vmem>>, vector<16x512xbf16>,
    } else {
    }
    %c0 = arith.constant 0 : index
    %c0_1 = arith.constant 0 : index
    %c0_2 = arith.constant 0 : index
    %3 = vector.load %arg2[%c0, %c0_1, %c0_2] : memref<1x32x144xbf16, #tpu.memory_space<vmem>>, vector<1x32x144xbf16>
    %4 = vector.shape_cast %3 : vector<1x32x144xbf16> to vector<32x144xbf16>
    %c0_3 = arith.constant 0 : index
    %c0_4 = arith.constant 0 : index
    %5 = vector.load %arg7[%c0_3, %c0_4] : memref<144x512xbf16, #tpu.memory_space<vmem>>, vector<144x512xbf16>
    %cst = arith.constant dense<0.000000e+00> : vector<32x512xf32>
    %6 = tpu.matmul %4, %5, %cst {dimension_numbers = #tpu.dot_dimension_numbers<[1], [0], [0], [1], [0, 0, 1, 1], [], []>} : vector<32x144xbf16>, vector<144x512xbf16>, vector<32x512xf32> -> vector<32x512xf32>
    %cst_5 = arith.constant 0.000000e+00 : f32
    %7 = vector.broadcast %cst_5 : f32 to vector<8x1xf32>
    %cst_6 = arith.constant 0.000000e+00 : f32
    %8 = vector.broadcast %cst_6 : f32 to vector<8x1xf32>
    %9 = vector.extract_strided_slice %6 {offsets = [0, 0], sizes = [8, 512], strides = [1, 1]} : vector<32x512xf32> to vector<8x512xf32>
    %cst_7 = arith.constant dense<0.000000e+00> : vector<8xf32>
    %10 = vector.multi_reduction <add>, %9, %cst_7 [1] : vector<8x512xf32> to vector<8xf32>
    %11 = vector.shape_cast %10 : vector<8xf32> to vector<8x1xf32>
    %12 = arith.addf %7, %11 : vector<8x1xf32>
    %13 = arith.mulf %9, %9 : vector<8x512xf32>
    %cst_8 = arith.constant dense<0.000000e+00> : vector<8xf32>
    %14 = vector.multi_reduction <add>, %13, %cst_8 [1] : vector<8x512xf32> to vector<8xf32>
    %15 = vector.shape_cast %14 : vector<8xf32> to vector<8x1xf32>
    %16 = arith.addf %8, %15 : vector<8x1xf32>
    %17 = vector.extract_strided_slice %6 {offsets = [8, 0], sizes = [8, 512], strides = [1, 1]} : vector<32x512xf32> to vector<8x512xf32>
    %cst_9 = arith.constant dense<0.000000e+00> : vector<8xf32>
    %18 = vector.multi_reduction <add>, %17, %cst_9 [1] : vector<8x512xf32> to vector<8xf32>
    %19 = vector.shape_cast %18 : vector<8xf32> to vector<8x1xf32>
    %20 = arith.addf %12, %19 : vector<8x1xf32>
    %21 = arith.mulf %17, %17 : vector<8x512xf32>
    %cst_10 = arith.constant dense<0.000000e+00> : vector<8xf32>
    %22 = vector.multi_reduction <add>, %21, %cst_10 [1] : vector<8x512xf32> to vector<8xf32>
    %23 = vector.shape_cast %22 : vector<8xf32> to vector<8x1xf32>
    %24 = arith.addf %16, %23 : vector<8x1xf32>
    %25 = vector.extract_strided_slice %6 {offsets = [16, 0], sizes = [8, 512], strides = [1, 1]} : vector<32x512xf32> to vector<8x512xf32>
    %cst_11 = arith.constant dense<0.000000e+00> : vector<8xf32>
    %26 = vector.multi_reduction <add>, %25, %cst_11 [1] : vector<8x512xf32> to vector<8xf32>
    %27 = vector.shape_cast %26 : vector<8xf32> to vector<8x1xf32>
    %28 = arith.addf %20, %27 : vector<8x1xf32>
    %29 = arith.mulf %25, %25 : vector<8x512xf32>
    %cst_12 = arith.constant dense<0.000000e+00> : vector<8xf32>
    %30 = vector.multi_reduction <add>, %29, %cst_12 [1] : vector<8x512xf32> to vector<8xf32>
    %31 = vector.shape_cast %30 : vector<8xf32> to vector<8x1xf32>
    %32 = arith.addf %24, %31 : vector<8x1xf32>
    %33 = vector.extract_strided_slice %6 {offsets = [24, 0], sizes = [8, 512], strides = [1, 1]} : vector<32x512xf32> to vector<8x512xf32>
    %cst_13 = arith.constant dense<0.000000e+00> : vector<8xf32>
    %34 = vector.multi_reduction <add>, %33, %cst_13 [1] : vector<8x512xf32> to vector<8xf32>
    %35 = vector.shape_cast %34 : vector<8xf32> to vector<8x1xf32>
    %36 = arith.addf %28, %35 : vector<8x1xf32>
    %37 = arith.mulf %33, %33 : vector<8x512xf32>
    %cst_14 = arith.constant dense<0.000000e+00> : vector<8xf32>
    %38 = vector.multi_reduction <add>, %37, %cst_14 [1] : vector<8x512xf32> to vector<8xf32>
    %39 = vector.shape_cast %38 : vector<8xf32> to vector<8x1xf32>
    %40 = arith.addf %32, %39 : vector<8x1xf32>
    %cst_15 = arith.constant 4.8828125E-4 : f32
    %41 = vector.broadcast %cst_15 : f32 to vector<8x1xf32>
    %42 = arith.mulf %36, %41 : vector<8x1xf32>
    %cst_16 = arith.constant 4.8828125E-4 : f32
    %43 = vector.broadcast %cst_16 : f32 to vector<8x1xf32>
    %44 = arith.mulf %40, %43 : vector<8x1xf32>
    %45 = arith.mulf %42, %42 : vector<8x1xf32>
    %46 = arith.subf %44, %45 : vector<8x1xf32>
    %cst_17 = arith.constant 0.000000e+00 : f32
    %47 = vector.broadcast %cst_17 : f32 to vector<8x1xf32>
    %48 = arith.maximumf %46, %47 : vector<8x1xf32>
    %c0_18 = arith.constant 0 : index
    %c0_19 = arith.constant 0 : index
    %c0_20 = arith.constant 0 : index
    %49 = vector.load %arg4[%c0_18, %c0_19, %c0_20] : memref<1x8x1xf32, #tpu.memory_space<vmem>>, vector<1x8x1xf32>
    %50 = vector.shape_cast %49 : vector<1x8x1xf32> to vector<8x1xf32>
    %cst_21 = arith.constant 9.99999974E-6 : f32
    %51 = vector.broadcast %cst_21 : f32 to vector<8x1xf32>
    %52 = arith.addf %48, %51 : vector<8x1xf32>
    %53 = math.rsqrt %52 : vector<8x1xf32>
    %54 = arith.mulf %50, %53 : vector<8x1xf32>
    %c0_22 = arith.constant 0 : index
    %c0_23 = arith.constant 0 : index
    %c0_24 = arith.constant 0 : index
    %55 = vector.load %arg5[%c0_22, %c0_23, %c0_24] : memref<1x8x1xf32, #tpu.memory_space<vmem>>, vector<1x8x1xf32>
    %56 = vector.shape_cast %55 : vector<1x8x1xf32> to vector<8x1xf32>
    %57 = arith.mulf %42, %54 : vector<8x1xf32>
    %58 = arith.subf %56, %57 : vector<8x1xf32>
    %59 = vector.broadcast %54 : vector<8x1xf32> to vector<8x512xf32>
    %60 = arith.mulf %9, %59 : vector<8x512xf32>
    %61 = vector.broadcast %58 : vector<8x1xf32> to vector<8x512xf32>
    %62 = arith.addf %60, %61 : vector<8x512xf32>
    %cst_25 = arith.constant 0.000000e+00 : f32
    %63 = vector.broadcast %cst_25 : f32 to vector<8x512xf32>
    %64 = arith.maximumf %62, %63 : vector<8x512xf32>
    %65 = arith.truncf %64 : vector<8x512xf32> to vector<8x512xbf16>
    %c0_26 = arith.constant 0 : index
    %c0_27 = arith.constant 0 : index
    %c0_28 = arith.constant 0 : index
    %c0_29 = arith.constant 0 : index
    %66 = vector.load %arg6[%c0_26, %c0_27, %c0_28, %c0_29] : memref<1x4x8x512xbf16, #tpu.memory_space<vmem>>, vector<1x1x8x512xbf16>
    %67 = vector.shape_cast %66 : vector<1x1x8x512xbf16> to vector<8x512xbf16>
    %68 = vector.shape_cast %65 : vector<8x512xbf16> to vector<1x1x8x512xbf16>
    tpu.vector_store %arg6[%c0_26, %c0_27, %c0_28, %c0_29], %68 {strides = array<i32>} : memref<1x4x8x512xbf16, #tpu.memory_space<vmem>>, vector<1x1x8x512xbf16>,
    %69 = vector.broadcast %54 : vector<8x1xf32> to vector<8x512xf32>
    %70 = arith.mulf %17, %69 : vector<8x512xf32>
    %71 = vector.broadcast %58 : vector<8x1xf32> to vector<8x512xf32>
    %72 = arith.addf %70, %71 : vector<8x512xf32>
    %cst_30 = arith.constant 0.000000e+00 : f32
    %73 = vector.broadcast %cst_30 : f32 to vector<8x512xf32>
    %74 = arith.maximumf %72, %73 : vector<8x512xf32>
    %75 = arith.truncf %74 : vector<8x512xf32> to vector<8x512xbf16>
    %c0_31 = arith.constant 0 : index
    %c1 = arith.constant 1 : index
    %c0_32 = arith.constant 0 : index
    %c0_33 = arith.constant 0 : index
    %76 = vector.load %arg6[%c0_31, %c1, %c0_32, %c0_33] : memref<1x4x8x512xbf16, #tpu.memory_space<vmem>>, vector<1x1x8x512xbf16>
    %77 = vector.shape_cast %76 : vector<1x1x8x512xbf16> to vector<8x512xbf16>
    %78 = vector.shape_cast %75 : vector<8x512xbf16> to vector<1x1x8x512xbf16>
    tpu.vector_store %arg6[%c0_31, %c1, %c0_32, %c0_33], %78 {strides = array<i32>} : memref<1x4x8x512xbf16, #tpu.memory_space<vmem>>, vector<1x1x8x512xbf16>,
    %79 = vector.broadcast %54 : vector<8x1xf32> to vector<8x512xf32>
    %80 = arith.mulf %25, %79 : vector<8x512xf32>
    %81 = vector.broadcast %58 : vector<8x1xf32> to vector<8x512xf32>
    %82 = arith.addf %80, %81 : vector<8x512xf32>
    %cst_34 = arith.constant 0.000000e+00 : f32
    %83 = vector.broadcast %cst_34 : f32 to vector<8x512xf32>
    %84 = arith.maximumf %82, %83 : vector<8x512xf32>
    %85 = arith.truncf %84 : vector<8x512xf32> to vector<8x512xbf16>
    %c0_35 = arith.constant 0 : index
    %c2 = arith.constant 2 : index
    %c0_36 = arith.constant 0 : index
    %c0_37 = arith.constant 0 : index
    %86 = vector.load %arg6[%c0_35, %c2, %c0_36, %c0_37] : memref<1x4x8x512xbf16, #tpu.memory_space<vmem>>, vector<1x1x8x512xbf16>
    %87 = vector.shape_cast %86 : vector<1x1x8x512xbf16> to vector<8x512xbf16>
    %88 = vector.shape_cast %85 : vector<8x512xbf16> to vector<1x1x8x512xbf16>
    tpu.vector_store %arg6[%c0_35, %c2, %c0_36, %c0_37], %88 {strides = array<i32>} : memref<1x4x8x512xbf16, #tpu.memory_space<vmem>>, vector<1x1x8x512xbf16>,
    %89 = vector.broadcast %54 : vector<8x1xf32> to vector<8x512xf32>
    %90 = arith.mulf %33, %89 : vector<8x512xf32>
    %91 = vector.broadcast %58 : vector<8x1xf32> to vector<8x512xf32>
    %92 = arith.addf %90, %91 : vector<8x512xf32>
    %cst_38 = arith.constant 0.000000e+00 : f32
    %93 = vector.broadcast %cst_38 : f32 to vector<8x512xf32>
    %94 = arith.maximumf %92, %93 : vector<8x512xf32>
    %95 = arith.truncf %94 : vector<8x512xf32> to vector<8x512xbf16>
    %c0_39 = arith.constant 0 : index
    %c3 = arith.constant 3 : index
    %c0_40 = arith.constant 0 : index
    %c0_41 = arith.constant 0 : index
    %96 = vector.load %arg6[%c0_39, %c3, %c0_40, %c0_41] : memref<1x4x8x512xbf16, #tpu.memory_space<vmem>>, vector<1x1x8x512xbf16>
    %97 = vector.shape_cast %96 : vector<1x1x8x512xbf16> to vector<8x512xbf16>
    %98 = vector.shape_cast %95 : vector<8x512xbf16> to vector<1x1x8x512xbf16>
    tpu.vector_store %arg6[%c0_39, %c3, %c0_40, %c0_41], %98 {strides = array<i32>} : memref<1x4x8x512xbf16, #tpu.memory_space<vmem>>, vector<1x1x8x512xbf16>,
    return
  }
  func.func @transform_0(%arg0: i32) -> (i32, i32) {
    %c0_i32 = arith.constant 0 : i32
    %c0_i32_0 = arith.constant 0 : i32
    %c0_i32_1 = arith.constant 0 : i32
    return %c0_i32, %c0_i32_0 : i32, i32
  }
  func.func @transform_1(%arg0: i32) -> (i32, i32, i32) {
    %c0_i32 = arith.constant 0 : i32
    %c0_i32_0 = arith.constant 0 : i32
    %c0_i32_1 = arith.constant 0 : i32
    return %arg0, %c0_i32, %c0_i32_0 : i32, i32, i32
  }
  func.func @transform_2(%arg0: i32) -> (i32, i32, i32) {
    %c0_i32 = arith.constant 0 : i32
    %c0_i32_0 = arith.constant 0 : i32
    %c0_i32_1 = arith.constant 0 : i32
    %c0_i32_2 = arith.constant 0 : i32
    return %c0_i32, %c0_i32_0, %c0_i32_1 : i32, i32, i32
  }
  func.func @transform_3(%arg0: i32) -> (i32, i32, i32) {
    %c0_i32 = arith.constant 0 : i32
    %c0_i32_0 = arith.constant 0 : i32
    %c0_i32_1 = arith.constant 0 : i32
    return %arg0, %c0_i32, %c0_i32_0 : i32, i32, i32
  }
  func.func @transform_4(%arg0: i32) -> (i32, i32, i32) {
    %c0_i32 = arith.constant 0 : i32
    %c0_i32_0 = arith.constant 0 : i32
    %c0_i32_1 = arith.constant 0 : i32
    return %arg0, %c0_i32, %c0_i32_0 : i32, i32, i32
  }
  func.func @transform_5(%arg0: i32) -> (i32, i32, i32, i32) {
    %c0_i32 = arith.constant 0 : i32
    %c0_i32_0 = arith.constant 0 : i32
    %c0_i32_1 = arith.constant 0 : i32
    %c0_i32_2 = arith.constant 0 : i32
    return %arg0, %c0_i32, %c0_i32_0, %c0_i32_1 : i32, i32, i32, i32
  }
}

module attributes {stable_mosaic.version = 11 : i64} {
  func.func @_dconv_bias_sigmoid_kernel(%arg0: i32, %arg1: memref<1x8x1090xbf16, #tpu.memory_space<vmem>>, %arg2: memref<12x72xbf16, #tpu.memory_space<vmem>>, %arg3: memref<9x1x1024xbf16, #tpu.memory_space<vmem>>, %arg4: memref<12x1xf32, #tpu.memory_space<vmem>>, %arg5: memref<1x12x1024xf32, #tpu.memory_space<vmem>>, %arg6: memref<72x1024xbf16, #tpu.memory_space<vmem>>) attributes {dimension_semantics = [#tpu.dimension_semantics<parallel>], iteration_bounds = array<i64: 2>, scalar_prefetch = 0 : i64, scratch_operands = 1 : i64, tpu.core_type = #tpu.core_type<tc>, window_params = [{transform_indices = @transform_0, window_bounds = array<i64: 1, 8, 1090>}, {pipeline_mode = #tpu.pipeline_mode<synchronous>, transform_indices = @transform_1, window_bounds = array<i64: 12, 72>}, {pipeline_mode = #tpu.pipeline_mode<synchronous>, transform_indices = @transform_2, window_bounds = array<i64: 9, 1, 1024>}, {pipeline_mode = #tpu.pipeline_mode<synchronous>, transform_indices = @transform_3, window_bounds = array<i64: 12, 1>}, {transform_indices = @transform_4, window_bounds = array<i64: 1, 12, 1024>}]} {
    %c0 = arith.constant 0 : index
    %c0_0 = arith.constant 0 : index
    %c0_1 = arith.constant 0 : index
    %0 = vector.load %arg1[%c0, %c0_0, %c0_1] : memref<1x8x1090xbf16, #tpu.memory_space<vmem>>, vector<1x8x1024xbf16>
    %1 = vector.shape_cast %0 : vector<1x8x1024xbf16> to vector<8x1024xbf16>
    %c0_2 = arith.constant 0 : index
    %c0_3 = arith.constant 0 : index
    %c0_4 = arith.constant 0 : index
    %2 = vector.load %arg3[%c0_2, %c0_3, %c0_4] : memref<9x1x1024xbf16, #tpu.memory_space<vmem>>, vector<1x1x1024xbf16>
    %3 = vector.shape_cast %2 : vector<1x1x1024xbf16> to vector<1x1024xbf16>
    %4 = vector.broadcast %3 : vector<1x1024xbf16> to vector<8x1024xbf16>
    %5 = arith.mulf %1, %4 : vector<8x1024xbf16>
    %c0_5 = arith.constant 0 : index
    %c0_6 = arith.constant 0 : index
    %6 = vector.load %arg6[%c0_5, %c0_6] : memref<72x1024xbf16, #tpu.memory_space<vmem>>, vector<8x1024xbf16>
    tpu.vector_store %arg6[%c0_5, %c0_6], %5 {strides = array<i32>} : memref<72x1024xbf16, #tpu.memory_space<vmem>>, vector<8x1024xbf16>,
    %c0_7 = arith.constant 0 : index
    %c0_8 = arith.constant 0 : index
    %c1 = arith.constant 1 : index
    %7 = vector.load %arg1[%c0_7, %c0_8, %c1] : memref<1x8x1090xbf16, #tpu.memory_space<vmem>>, vector<1x8x1024xbf16>
    %8 = vector.shape_cast %7 : vector<1x8x1024xbf16> to vector<8x1024xbf16>
    %c1_9 = arith.constant 1 : index
    %c0_10 = arith.constant 0 : index
    %c0_11 = arith.constant 0 : index
    %9 = vector.load %arg3[%c1_9, %c0_10, %c0_11] : memref<9x1x1024xbf16, #tpu.memory_space<vmem>>, vector<1x1x1024xbf16>
    %10 = vector.shape_cast %9 : vector<1x1x1024xbf16> to vector<1x1024xbf16>
    %11 = vector.broadcast %10 : vector<1x1024xbf16> to vector<8x1024xbf16>
    %12 = arith.mulf %8, %11 : vector<8x1024xbf16>
    %c8 = arith.constant 8 : index
    %c0_12 = arith.constant 0 : index
    %13 = vector.load %arg6[%c8, %c0_12] : memref<72x1024xbf16, #tpu.memory_space<vmem>>, vector<8x1024xbf16>
    tpu.vector_store %arg6[%c8, %c0_12], %12 {strides = array<i32>} : memref<72x1024xbf16, #tpu.memory_space<vmem>>, vector<8x1024xbf16>,
    %c0_13 = arith.constant 0 : index
    %c0_14 = arith.constant 0 : index
    %c2 = arith.constant 2 : index
    %14 = vector.load %arg1[%c0_13, %c0_14, %c2] : memref<1x8x1090xbf16, #tpu.memory_space<vmem>>, vector<1x8x1024xbf16>
    %15 = vector.shape_cast %14 : vector<1x8x1024xbf16> to vector<8x1024xbf16>
    %c2_15 = arith.constant 2 : index
    %c0_16 = arith.constant 0 : index
    %c0_17 = arith.constant 0 : index
    %16 = vector.load %arg3[%c2_15, %c0_16, %c0_17] : memref<9x1x1024xbf16, #tpu.memory_space<vmem>>, vector<1x1x1024xbf16>
    %17 = vector.shape_cast %16 : vector<1x1x1024xbf16> to vector<1x1024xbf16>
    %18 = vector.broadcast %17 : vector<1x1024xbf16> to vector<8x1024xbf16>
    %19 = arith.mulf %15, %18 : vector<8x1024xbf16>
    %c16 = arith.constant 16 : index
    %c0_18 = arith.constant 0 : index
    %20 = vector.load %arg6[%c16, %c0_18] : memref<72x1024xbf16, #tpu.memory_space<vmem>>, vector<8x1024xbf16>
    tpu.vector_store %arg6[%c16, %c0_18], %19 {strides = array<i32>} : memref<72x1024xbf16, #tpu.memory_space<vmem>>, vector<8x1024xbf16>,
    %c0_19 = arith.constant 0 : index
    %c0_20 = arith.constant 0 : index
    %c32 = arith.constant 32 : index
    %21 = vector.load %arg1[%c0_19, %c0_20, %c32] : memref<1x8x1090xbf16, #tpu.memory_space<vmem>>, vector<1x8x1024xbf16>
    %22 = vector.shape_cast %21 : vector<1x8x1024xbf16> to vector<8x1024xbf16>
    %c3 = arith.constant 3 : index
    %c0_21 = arith.constant 0 : index
    %c0_22 = arith.constant 0 : index
    %23 = vector.load %arg3[%c3, %c0_21, %c0_22] : memref<9x1x1024xbf16, #tpu.memory_space<vmem>>, vector<1x1x1024xbf16>
    %24 = vector.shape_cast %23 : vector<1x1x1024xbf16> to vector<1x1024xbf16>
    %25 = vector.broadcast %24 : vector<1x1024xbf16> to vector<8x1024xbf16>
    %26 = arith.mulf %22, %25 : vector<8x1024xbf16>
    %c24 = arith.constant 24 : index
    %c0_23 = arith.constant 0 : index
    %27 = vector.load %arg6[%c24, %c0_23] : memref<72x1024xbf16, #tpu.memory_space<vmem>>, vector<8x1024xbf16>
    tpu.vector_store %arg6[%c24, %c0_23], %26 {strides = array<i32>} : memref<72x1024xbf16, #tpu.memory_space<vmem>>, vector<8x1024xbf16>,
    %c0_24 = arith.constant 0 : index
    %c0_25 = arith.constant 0 : index
    %c33 = arith.constant 33 : index
    %28 = vector.load %arg1[%c0_24, %c0_25, %c33] : memref<1x8x1090xbf16, #tpu.memory_space<vmem>>, vector<1x8x1024xbf16>
    %29 = vector.shape_cast %28 : vector<1x8x1024xbf16> to vector<8x1024xbf16>
    %c4 = arith.constant 4 : index
    %c0_26 = arith.constant 0 : index
    %c0_27 = arith.constant 0 : index
    %30 = vector.load %arg3[%c4, %c0_26, %c0_27] : memref<9x1x1024xbf16, #tpu.memory_space<vmem>>, vector<1x1x1024xbf16>
    %31 = vector.shape_cast %30 : vector<1x1x1024xbf16> to vector<1x1024xbf16>
    %32 = vector.broadcast %31 : vector<1x1024xbf16> to vector<8x1024xbf16>
    %33 = arith.mulf %29, %32 : vector<8x1024xbf16>
    %c32_28 = arith.constant 32 : index
    %c0_29 = arith.constant 0 : index
    %34 = vector.load %arg6[%c32_28, %c0_29] : memref<72x1024xbf16, #tpu.memory_space<vmem>>, vector<8x1024xbf16>
    tpu.vector_store %arg6[%c32_28, %c0_29], %33 {strides = array<i32>} : memref<72x1024xbf16, #tpu.memory_space<vmem>>, vector<8x1024xbf16>,
    %c0_30 = arith.constant 0 : index
    %c0_31 = arith.constant 0 : index
    %c34 = arith.constant 34 : index
    %35 = vector.load %arg1[%c0_30, %c0_31, %c34] : memref<1x8x1090xbf16, #tpu.memory_space<vmem>>, vector<1x8x1024xbf16>
    %36 = vector.shape_cast %35 : vector<1x8x1024xbf16> to vector<8x1024xbf16>
    %c5 = arith.constant 5 : index
    %c0_32 = arith.constant 0 : index
    %c0_33 = arith.constant 0 : index
    %37 = vector.load %arg3[%c5, %c0_32, %c0_33] : memref<9x1x1024xbf16, #tpu.memory_space<vmem>>, vector<1x1x1024xbf16>
    %38 = vector.shape_cast %37 : vector<1x1x1024xbf16> to vector<1x1024xbf16>
    %39 = vector.broadcast %38 : vector<1x1024xbf16> to vector<8x1024xbf16>
    %40 = arith.mulf %36, %39 : vector<8x1024xbf16>
    %c40 = arith.constant 40 : index
    %c0_34 = arith.constant 0 : index
    %41 = vector.load %arg6[%c40, %c0_34] : memref<72x1024xbf16, #tpu.memory_space<vmem>>, vector<8x1024xbf16>
    tpu.vector_store %arg6[%c40, %c0_34], %40 {strides = array<i32>} : memref<72x1024xbf16, #tpu.memory_space<vmem>>, vector<8x1024xbf16>,
    %c0_35 = arith.constant 0 : index
    %c0_36 = arith.constant 0 : index
    %c64 = arith.constant 64 : index
    %42 = vector.load %arg1[%c0_35, %c0_36, %c64] : memref<1x8x1090xbf16, #tpu.memory_space<vmem>>, vector<1x8x1024xbf16>
    %43 = vector.shape_cast %42 : vector<1x8x1024xbf16> to vector<8x1024xbf16>
    %c6 = arith.constant 6 : index
    %c0_37 = arith.constant 0 : index
    %c0_38 = arith.constant 0 : index
    %44 = vector.load %arg3[%c6, %c0_37, %c0_38] : memref<9x1x1024xbf16, #tpu.memory_space<vmem>>, vector<1x1x1024xbf16>
    %45 = vector.shape_cast %44 : vector<1x1x1024xbf16> to vector<1x1024xbf16>
    %46 = vector.broadcast %45 : vector<1x1024xbf16> to vector<8x1024xbf16>
    %47 = arith.mulf %43, %46 : vector<8x1024xbf16>
    %c48 = arith.constant 48 : index
    %c0_39 = arith.constant 0 : index
    %48 = vector.load %arg6[%c48, %c0_39] : memref<72x1024xbf16, #tpu.memory_space<vmem>>, vector<8x1024xbf16>
    tpu.vector_store %arg6[%c48, %c0_39], %47 {strides = array<i32>} : memref<72x1024xbf16, #tpu.memory_space<vmem>>, vector<8x1024xbf16>,
    %c0_40 = arith.constant 0 : index
    %c0_41 = arith.constant 0 : index
    %c65 = arith.constant 65 : index
    %49 = vector.load %arg1[%c0_40, %c0_41, %c65] : memref<1x8x1090xbf16, #tpu.memory_space<vmem>>, vector<1x8x1024xbf16>
    %50 = vector.shape_cast %49 : vector<1x8x1024xbf16> to vector<8x1024xbf16>
    %c7 = arith.constant 7 : index
    %c0_42 = arith.constant 0 : index
    %c0_43 = arith.constant 0 : index
    %51 = vector.load %arg3[%c7, %c0_42, %c0_43] : memref<9x1x1024xbf16, #tpu.memory_space<vmem>>, vector<1x1x1024xbf16>
    %52 = vector.shape_cast %51 : vector<1x1x1024xbf16> to vector<1x1024xbf16>
    %53 = vector.broadcast %52 : vector<1x1024xbf16> to vector<8x1024xbf16>
    %54 = arith.mulf %50, %53 : vector<8x1024xbf16>
    %c56 = arith.constant 56 : index
    %c0_44 = arith.constant 0 : index
    %55 = vector.load %arg6[%c56, %c0_44] : memref<72x1024xbf16, #tpu.memory_space<vmem>>, vector<8x1024xbf16>
    tpu.vector_store %arg6[%c56, %c0_44], %54 {strides = array<i32>} : memref<72x1024xbf16, #tpu.memory_space<vmem>>, vector<8x1024xbf16>,
    %c0_45 = arith.constant 0 : index
    %c0_46 = arith.constant 0 : index
    %c66 = arith.constant 66 : index
    %56 = vector.load %arg1[%c0_45, %c0_46, %c66] : memref<1x8x1090xbf16, #tpu.memory_space<vmem>>, vector<1x8x1024xbf16>
    %57 = vector.shape_cast %56 : vector<1x8x1024xbf16> to vector<8x1024xbf16>
    %c8_47 = arith.constant 8 : index
    %c0_48 = arith.constant 0 : index
    %c0_49 = arith.constant 0 : index
    %58 = vector.load %arg3[%c8_47, %c0_48, %c0_49] : memref<9x1x1024xbf16, #tpu.memory_space<vmem>>, vector<1x1x1024xbf16>
    %59 = vector.shape_cast %58 : vector<1x1x1024xbf16> to vector<1x1024xbf16>
    %60 = vector.broadcast %59 : vector<1x1024xbf16> to vector<8x1024xbf16>
    %61 = arith.mulf %57, %60 : vector<8x1024xbf16>
    %c64_50 = arith.constant 64 : index
    %c0_51 = arith.constant 0 : index
    %62 = vector.load %arg6[%c64_50, %c0_51] : memref<72x1024xbf16, #tpu.memory_space<vmem>>, vector<8x1024xbf16>
    tpu.vector_store %arg6[%c64_50, %c0_51], %61 {strides = array<i32>} : memref<72x1024xbf16, #tpu.memory_space<vmem>>, vector<8x1024xbf16>,
    %c0_52 = arith.constant 0 : index
    %c0_53 = arith.constant 0 : index
    %63 = vector.load %arg2[%c0_52, %c0_53] : memref<12x72xbf16, #tpu.memory_space<vmem>>, vector<12x72xbf16>
    %c0_54 = arith.constant 0 : index
    %c0_55 = arith.constant 0 : index
    %64 = vector.load %arg6[%c0_54, %c0_55] : memref<72x1024xbf16, #tpu.memory_space<vmem>>, vector<72x1024xbf16>
    %cst = arith.constant dense<0.000000e+00> : vector<12x1024xf32>
    %65 = tpu.matmul %63, %64, %cst {dimension_numbers = #tpu.dot_dimension_numbers<[1], [0], [0], [1], [0, 0, 1, 1], [], []>} : vector<12x72xbf16>, vector<72x1024xbf16>, vector<12x1024xf32> -> vector<12x1024xf32>
    %c0_56 = arith.constant 0 : index
    %c0_57 = arith.constant 0 : index
    %66 = vector.load %arg4[%c0_56, %c0_57] : memref<12x1xf32, #tpu.memory_space<vmem>>, vector<12x1xf32>
    %67 = vector.broadcast %66 : vector<12x1xf32> to vector<12x1024xf32>
    %68 = arith.addf %65, %67 : vector<12x1024xf32>
    %69 = arith.negf %68 : vector<12x1024xf32>
    %70 = math.exp %69 : vector<12x1024xf32>
    %cst_58 = arith.constant 1.000000e+00 : f32
    %71 = vector.broadcast %cst_58 : f32 to vector<12x1024xf32>
    %72 = arith.addf %71, %70 : vector<12x1024xf32>
    %73 = arith.divf %71, %72 : vector<12x1024xf32>
    %c0_59 = arith.constant 0 : index
    %c0_60 = arith.constant 0 : index
    %c0_61 = arith.constant 0 : index
    %74 = vector.load %arg5[%c0_59, %c0_60, %c0_61] : memref<1x12x1024xf32, #tpu.memory_space<vmem>>, vector<1x12x1024xf32>
    %75 = vector.shape_cast %74 : vector<1x12x1024xf32> to vector<12x1024xf32>
    %76 = vector.shape_cast %73 : vector<12x1024xf32> to vector<1x12x1024xf32>
    tpu.vector_store %arg5[%c0_59, %c0_60, %c0_61], %76 {strides = array<i32>} : memref<1x12x1024xf32, #tpu.memory_space<vmem>>, vector<1x12x1024xf32>,
    return
  }
  func.func @transform_0(%arg0: i32) -> (i32, i32, i32) {
    %c0_i32 = arith.constant 0 : i32
    %c0_i32_0 = arith.constant 0 : i32
    %c0_i32_1 = arith.constant 0 : i32
    return %arg0, %c0_i32, %c0_i32_0 : i32, i32, i32
  }
  func.func @transform_1(%arg0: i32) -> (i32, i32) {
    %c0_i32 = arith.constant 0 : i32
    %c0_i32_0 = arith.constant 0 : i32
    %c0_i32_1 = arith.constant 0 : i32
    return %c0_i32, %c0_i32_0 : i32, i32
  }
  func.func @transform_2(%arg0: i32) -> (i32, i32, i32) {
    %c0_i32 = arith.constant 0 : i32
    %c0_i32_0 = arith.constant 0 : i32
    %c0_i32_1 = arith.constant 0 : i32
    %c0_i32_2 = arith.constant 0 : i32
    return %c0_i32, %c0_i32_0, %c0_i32_1 : i32, i32, i32
  }
  func.func @transform_3(%arg0: i32) -> (i32, i32) {
    %c0_i32 = arith.constant 0 : i32
    %c0_i32_0 = arith.constant 0 : i32
    %c0_i32_1 = arith.constant 0 : i32
    return %c0_i32, %c0_i32_0 : i32, i32
  }
  func.func @transform_4(%arg0: i32) -> (i32, i32, i32) {
    %c0_i32 = arith.constant 0 : i32
    %c0_i32_0 = arith.constant 0 : i32
    %c0_i32_1 = arith.constant 0 : i32
    return %arg0, %c0_i32, %c0_i32_0 : i32, i32, i32
  }
}

</mosaic_0001>

<llo_original>
// kernel: gan_generator.5
$region0: #{gan_generator.5}
  #allocation0 [shape = 'u32[]', space=smem, size = 0x4, offset = 0x4, fixed_abs, tag = 'smem constant byte address 0x4 - core index']
  #allocation1 [shape = 'u32[144,128]{1,0:T(1,128)}', space=vmem, size = 0x12000, scoped, tag = 'internal scratch']
  %s0 = inlined_call_operand.vmem [shape: bf16[2,20], index: 0, kind: input, shape index: {}]
  %s1 = inlined_call_operand.hbm [shape: bf16[20,1024], index: 1, kind: input, shape index: {}]
  %s2 = inlined_call_operand.hbm [shape: f32[1,1024], index: 2, kind: input, shape index: {}]
  %s3 = inlined_call_operand.hbm [shape: f32[1,1024], index: 3, kind: input, shape index: {}]
  %s4 = inlined_call_operand.vmem [shape: bf16[2,1024], index: 4, kind: output, shape index: {}]
  %s5 = sld [smem:[#allocation0]]
  $region61: #{gan_generator.5} parent=0
    _
  %s7 = ssub.s32 1, %s5
  %s8 = scalar_select 0, %s7, %s5
  $region1: #{gan_generator.5} parent=0
    #allocation2 [shape = 'u8[49152]{0}', space=vmem, size = 0xc000, scoped, tag = 'input window, operand 1']
    #allocation3 [shape = 's32[2]{0}', space=sflag, size = 0x8, scoped, tag = 'scoped memory for gan_generator.5']
    #allocation4 [shape = 'u8[4096]{0}', space=vmem, size = 0x1000, scoped, tag = 'input window, operand 2']
    #allocation5 [shape = 's32[2]{0}', space=sflag, size = 0x8, scoped, tag = 'scoped memory for gan_generator.5']
    #allocation6 [shape = 'u8[4096]{0}', space=vmem, size = 0x1000, scoped, tag = 'input window, operand 3']
    %9 = vsyncpa [#allocation3], 0
    %s10 = scalar_lea.sflag [#allocation3], 1
    %11 = vsyncpa %s10, 0
    %12 = vsyncpa [#allocation5], 0
    %s13 = scalar_lea.sflag [#allocation5], 1
    %14 = vsyncpa %s13, 0
    loop: start=0, step=1, limit=4
    $region2: #{gan_generator.5} parent=1 // loop_pre_header
      _
    $region3: #{gan_generator.5} parent=1 // loop_header
      %s16 = sphi 0, %s20
      %p17 = scmp.ge.s32.totalorder %s16, 4
      %s24 = sphi 0, %s24
      %s26 = sphi 0, %s24
      %s27 = sphi 0, %s26
      %s41 = sphi 0, %s27
      %s47 = sphi 0, %s49
      %s50 = sphi 0, %s47
      %s51 = sphi 0, %s50
      %s67 = sphi 0, %s51
      %s73 = sphi 0, %s75
      %s76 = sphi 0, %s73
      %s77 = sphi 0, %s76
      %s93 = sphi 0, %s77
      %s99 = sphi 0, %s101
      %s102 = sphi 0, %s99
      %s103 = sphi 0, %s102
      %s119 = sphi 0, %s103
      %s125 = sphi 0, %s127
      %s128 = sphi 0, %s125
      %s129 = sphi 0, %s128
      %s145 = sphi 0, %s129
    $region4: #{gan_generator.5} parent=1 // loop_header_branch
      %19 = sbr.rel (%p17) target = $region8
    $region5: #{gan_generator.5} parent=1 // loop_body
      %s21 = ssub.s32 %s16, 1
      %s22 = ssub.s32 %s16, 2
      %s23 = sadd.s32 %s16, 1
      %s25 = sadd.s32 %s24, 1
      %p28 = scmp.eq.s32.totalorder %s16, 1
      %p29 = scmp.ne.s32.totalorder %s24, %s26
      %p30 = scmp.eq.s32.totalorder %s16, 0
      %p31 = por %p29, %p30
      %p32 = scmp.ne.s32.totalorder %s24, %s26
      %p33 = scmp.eq.s32.totalorder %s21, 1
      %p34 = por %p32, %p33
      %p35 = scmp.ne.s32.totalorder %s26, %s27
      %p36 = scmp.eq.s32.totalorder %s21, 0
      %p37 = por %p35, %p36
      %p38 = scmp.ne.s32.totalorder %s26, %s27
      %p39 = scmp.eq.s32.totalorder %s22, 1
      %p40 = por %p38, %p39
      %p42 = scmp.ne.s32.totalorder %s27, %s41
      %p43 = scmp.eq.s32.totalorder %s22, 0
      %p44 = por %p42, %p43
      %s45 = ssub.s32 %s16, %s23
      %p46 = scmp.eq.s32.totalorder %s45, 0
      %s48 = sadd.s32 %s47, 1
      %s49 = scalar_select %p46, %s47, %s48
      %p52 = pneg %p46
      %p53 = scmp.eq.s32.totalorder %s16, 1
      %p54 = por %p52, %p53
      %p55 = scmp.ne.s32.totalorder %s47, %s50
      %p56 = scmp.eq.s32.totalorder %s16, 0
      %p57 = por %p55, %p56
      %p58 = scmp.ne.s32.totalorder %s47, %s50
      %p59 = scmp.eq.s32.totalorder %s21, 1
      %p60 = por %p58, %p59
      %p61 = scmp.ne.s32.totalorder %s50, %s51
      %p62 = scmp.eq.s32.totalorder %s21, 0
      %p63 = por %p61, %p62
      %p64 = scmp.ne.s32.totalorder %s50, %s51
      %p65 = scmp.eq.s32.totalorder %s22, 1
      %p66 = por %p64, %p65
      %p68 = scmp.ne.s32.totalorder %s51, %s67
      %p69 = scmp.eq.s32.totalorder %s22, 0
      %p70 = por %p68, %p69
      %s71 = ssub.s32 %s16, %s23
      %p72 = scmp.eq.s32.totalorder %s71, 0
      %s74 = sadd.s32 %s73, 1
      %s75 = scalar_select %p72, %s73, %s74
      %p78 = pneg %p72
      %p79 = scmp.eq.s32.totalorder %s16, 1
      %p80 = por %p78, %p79
      %p81 = scmp.ne.s32.totalorder %s73, %s76
      %p82 = scmp.eq.s32.totalorder %s16, 0
      %p83 = por %p81, %p82
      %p84 = scmp.ne.s32.totalorder %s73, %s76
      %p85 = scmp.eq.s32.totalorder %s21, 1
      %p86 = por %p84, %p85
      %p87 = scmp.ne.s32.totalorder %s76, %s77
      %p88 = scmp.eq.s32.totalorder %s21, 0
      %p89 = por %p87, %p88
      %p90 = scmp.ne.s32.totalorder %s76, %s77
      %p91 = scmp.eq.s32.totalorder %s22, 1
      %p92 = por %p90, %p91
      %p94 = scmp.ne.s32.totalorder %s77, %s93
      %p95 = scmp.eq.s32.totalorder %s22, 0
      %p96 = por %p94, %p95
      %s97 = ssub.s32 %s16, %s23
      %p98 = scmp.eq.s32.totalorder %s97, 0
      %s100 = sadd.s32 %s99, 1
      %s101 = scalar_select %p98, %s99, %s100
      %p104 = pneg %p98
      %p105 = scmp.eq.s32.totalorder %s16, 1
      %p106 = por %p104, %p105
      %p107 = scmp.ne.s32.totalorder %s99, %s102
      %p108 = scmp.eq.s32.totalorder %s16, 0
      %p109 = por %p107, %p108
      %p110 = scmp.ne.s32.totalorder %s99, %s102
      %p111 = scmp.eq.s32.totalorder %s21, 1
      %p112 = por %p110, %p111
      %p113 = scmp.ne.s32.totalorder %s102, %s103
      %p114 = scmp.eq.s32.totalorder %s21, 0
      %p115 = por %p113, %p114
      %p116 = scmp.ne.s32.totalorder %s102, %s103
      %p117 = scmp.eq.s32.totalorder %s22, 1
      %p118 = por %p116, %p117
      %p120 = scmp.ne.s32.totalorder %s103, %s119
      %p121 = scmp.eq.s32.totalorder %s22, 0
      %p122 = por %p120, %p121
      %s123 = ssub.s32 %s16, %s23
      %p124 = scmp.eq.s32.totalorder %s123, 0
      %s126 = sadd.s32 %s125, 1
      %s127 = scalar_select %p124, %s125, %s126
      %p130 = pneg %p124
      %p131 = scmp.eq.s32.totalorder %s16, 1
      %p132 = por %p130, %p131
      %p133 = scmp.ne.s32.totalorder %s125, %s128
      %p134 = scmp.eq.s32.totalorder %s16, 0
      %p135 = por %p133, %p134
      %p136 = scmp.ne.s32.totalorder %s125, %s128
      %p137 = scmp.eq.s32.totalorder %s21, 1
      %p138 = por %p136, %p137
      %p139 = scmp.ne.s32.totalorder %s128, %s129
      %p140 = scmp.eq.s32.totalorder %s21, 0
      %p141 = por %p139, %p140
      %p142 = scmp.ne.s32.totalorder %s128, %s129
      %p143 = scmp.eq.s32.totalorder %s22, 1
      %p144 = por %p142, %p143
      %p146 = scmp.ne.s32.totalorder %s129, %s145
      %p147 = scmp.eq.s32.totalorder %s22, 0
      %p148 = por %p146, %p147
      %p149 = scmp.le.s32.totalorder 1, %s16
      %p150 = scmp.lt.s32.totalorder %s16, 3
      %p151 = pnand %p149, %p150
      %p152 = pneg %p151
      // Predicated region
      $region9: #{gan_generator.5} parent=5 // pred_check
        _
      $region10: #{gan_generator.5} parent=5 // pred_check_branch
        %154 = sbr.rel (%p151) target = $region12
      $region11: #{gan_generator.5} parent=5 // pred_region
        %s155 = ssub.s32 %s16, 1
        // Predicated region
        $region13: #{gan_generator.5} parent=11 // pred_check
          %p156 = pneg %p37
        $region14: #{gan_generator.5} parent=11 // pred_check_branch
          %158 = sbr.rel (%p156) target = $region16
        $region15: #{gan_generator.5} parent=11 // pred_region
          _
        $region16: #{gan_generator.5} parent=11 // pred_fallthru
          _
      $region12: #{gan_generator.5} parent=5 // pred_fallthru
        _
      %p159 = scmp.lt.s32.totalorder %s16, 2
      // Predicated region
      $region17: #{gan_generator.5} parent=5 // pred_check
        %p160 = pneg %p159
      $region18: #{gan_generator.5} parent=5 // pred_check_branch
        %162 = sbr.rel (%p160) target = $region20
      $region19: #{gan_generator.5} parent=5 // pred_region
        // Predicated region
        $region21: #{gan_generator.5} parent=19 // pred_check
          %p163 = pneg %p57
        $region22: #{gan_generator.5} parent=19 // pred_check_branch
          %165 = sbr.rel (%p163) target = $region24
        $region23: #{gan_generator.5} parent=19 // pred_region
          %s166 = sand.u32 %s47, 1
          %s167 = scalar_lea.sflag [#allocation3], %s166
          %s168 = sand.u32 %s47, 1
          %s169 = smul.addr %s168, 48
          %s170 = scalar_lea.vmem [#allocation2], %s169
          %s171 = smul.u32 4, %s16
          %s173 = ssub.s32 768, 768
          %174 = vsyncadd %s167, %s173
          %s175 = smul.addr %s171, 64
          %s176 = scalar_lea.hbm %s1, %s175
          %s177 = sshll.u32 %s170, 4
          %s178 = int_to_ptr.vmem [resolvable:$true] %s177
          %183 = dma.hbm_to_vmem [thread:$0]  %s176, 768, %s178, %s167, 512, 256, 16
        $region24: #{gan_generator.5} parent=19 // pred_fallthru
          _
        // Predicated region
        $region25: #{gan_generator.5} parent=19 // pred_check
          %p184 = pneg %p83
        $region26: #{gan_generator.5} parent=19 // pred_check_branch
          %186 = sbr.rel (%p184) target = $region28
        $region27: #{gan_generator.5} parent=19 // pred_region
          %s187 = sand.u32 %s16, 1
          %s188 = scalar_lea.sflag [#allocation5], %s187
          %s189 = sand.u32 %s73, 1
          %s190 = smul.addr %s189, 4
          %s191 = scalar_lea.vmem [#allocation4], %s190
          %s192 = smul.u32 4, %s16
          %s194 = ssub.s32 64, 64
          %195 = vsyncadd %s188, %s194
          %s196 = smul.addr %s192, 16
          %s197 = scalar_lea.hbm %s2, %s196
          %s199 = sshll.u32 %s191, 4
          %s200 = int_to_ptr.vmem [resolvable:$true] %s199
          %202 = dma.hbm_to_vmem [thread:$0]  %s197, 64, %s200, %s188
        $region28: #{gan_generator.5} parent=19 // pred_fallthru
          _
        // Predicated region
        $region29: #{gan_generator.5} parent=19 // pred_check
          %p203 = pneg %p109
        $region30: #{gan_generator.5} parent=19 // pred_check_branch
          %205 = sbr.rel (%p203) target = $region32
        $region31: #{gan_generator.5} parent=19 // pred_region
          %s206 = sand.u32 %s16, 1
          %s207 = scalar_lea.sflag [#allocation5], %s206
          %s208 = sand.u32 %s99, 1
          %s209 = smul.addr %s208, 4
          %s210 = scalar_lea.vmem [#allocation6], %s209
          %s211 = smul.u32 4, %s16
          %s213 = ssub.s32 64, 64
          %214 = vsyncadd %s207, %s213
          %s215 = smul.addr %s211, 16
          %s216 = scalar_lea.hbm %s3, %s215
          %s218 = sshll.u32 %s210, 4
          %s219 = int_to_ptr.vmem [resolvable:$true] %s218
          %221 = dma.hbm_to_vmem [thread:$0]  %s216, 64, %s219, %s207
        $region32: #{gan_generator.5} parent=19 // pred_fallthru
          _
      $region20: #{gan_generator.5} parent=5 // pred_fallthru
        _
      %p222 = scmp.le.s32.totalorder 1, %s16
      %p223 = scmp.lt.s32.totalorder %s16, 3
      %p224 = pnand %p222, %p223
      %p225 = pneg %p224
      // Predicated region
      $region33: #{gan_generator.5} parent=5 // pred_check
        _
      $region34: #{gan_generator.5} parent=5 // pred_check_branch
        %227 = sbr.rel (%p224) target = $region36
      $region35: #{gan_generator.5} parent=5 // pred_region
        %s228 = ssub.s32 %s16, 1
        %s229 = sand.u32 %s50, 1
        %s230 = scalar_lea.sflag [#allocation3], %s229
        %s231 = sand.u32 %s50, 1
        %s232 = smul.addr %s231, 48
        %s233 = scalar_lea.vmem [#allocation2], %s232
        // Predicated region
        $region37: #{gan_generator.5} parent=35 // pred_check
          %p234 = pneg %p63
        $region38: #{gan_generator.5} parent=35 // pred_check_branch
          %236 = sbr.rel (%p234) target = $region40
        $region39: #{gan_generator.5} parent=35 // pred_region
          %237 = dma.done %s230, 768
        $region40: #{gan_generator.5} parent=35 // pred_fallthru
          _
        %s238 = sand.u32 %s21, 1
        %s239 = scalar_lea.sflag [#allocation5], %s238
        %s240 = sand.u32 %s76, 1
        %s241 = smul.addr %s240, 4
        %s242 = scalar_lea.vmem [#allocation4], %s241
        // Predicated region
        $region41: #{gan_generator.5} parent=35 // pred_check
          %p243 = pneg %p89
        $region42: #{gan_generator.5} parent=35 // pred_check_branch
          %245 = sbr.rel (%p243) target = $region44
        $region43: #{gan_generator.5} parent=35 // pred_region
          %246 = dma.done %s239, 64
        $region44: #{gan_generator.5} parent=35 // pred_fallthru
          _
        %s247 = sand.u32 %s21, 1
        %s248 = scalar_lea.sflag [#allocation5], %s247
        %s249 = sand.u32 %s102, 1
        %s250 = smul.addr %s249, 4
        %s251 = scalar_lea.vmem [#allocation6], %s250
        // Predicated region
        $region45: #{gan_generator.5} parent=35 // pred_check
          %p252 = pneg %p115
        $region46: #{gan_generator.5} parent=35 // pred_check_branch
          %254 = sbr.rel (%p252) target = $region48
        $region47: #{gan_generator.5} parent=35 // pred_region
          %255 = dma.done %s248, 64
        $region48: #{gan_generator.5} parent=35 // pred_fallthru
          _
        %p256 = pneg %p37
        %p257 = pneg %p34
        %s258 = sand.u32 %s50, 1
        %s259 = scalar_lea.sflag [#allocation3], %s258
        %s260 = sand.u32 %s50, 1
        %s261 = smul.addr %s260, 48
        %s262 = scalar_lea.vmem [#allocation2], %s261
        %p263 = pneg %p63
        %p264 = pneg %p60
        %s265 = sand.u32 %s21, 1
        %s266 = scalar_lea.sflag [#allocation5], %s265
        %s267 = sand.u32 %s76, 1
        %s268 = smul.addr %s267, 4
        %s269 = scalar_lea.vmem [#allocation4], %s268
        %p270 = pneg %p89
        %p271 = pneg %p86
        %s272 = sand.u32 %s21, 1
        %s273 = scalar_lea.sflag [#allocation5], %s272
        %s274 = sand.u32 %s102, 1
        %s275 = smul.addr %s274, 4
        %s276 = scalar_lea.vmem [#allocation6], %s275
        %p277 = pneg %p115
        %p278 = pneg %p112
        %p279 = pneg %p141
        %p280 = pneg %p138
        %s281 = smul.u32 4, %s21
        %p282 = scmp.lt.s32.totalorder %s281, 7
        %s283 = scalar_select %p282, %s281, 7
        %s284 = scalar_lea.vmem %s4, %s283
        %s285 = smul.u32 4, %s21
        %s286 = smul.u32 4, %s21
        %s287 = smul.u32 4, %s21
        %s288 = smul.u32 4, %s21
        %p289 = scmp.lt.s32.totalorder %s288, 7
        %s290 = scalar_select %p289, %s288, 7
        %s291 = scalar_lea.vmem %s4, %s290
        %s292 = smul.u32 4, %s21
        %v294 = vld [vmem:[%s0] sm:$0x1]
        %v295 = vld [vmem:[%s233] sm:$0xff]
        %v296 = vld [vmem:[%s233 + $0x8] sm:$0xff]
        %v297 = vld [vmem:[%s233 + $0x10] sm:$0xff]
        %v298 = vld [vmem:[%s233 + $0x18] sm:$0xff]
        %v299 = vld [vmem:[%s233 + $0x20] sm:$0x33]
        %v300 = vld [vmem:[%s233 + $0x28] sm:$0x33]
        %v307 = vunpack.c.l.b16 %v295
        %v308 = vunpack.c.h.b16 %v295
        %v309 = vunpack.c.l.b16 %v296
        %v310 = vunpack.c.h.b16 %v296
        %v311 = vunpack.c.l.b16 %v297
        %v312 = vunpack.c.h.b16 %v297
        %v313 = vunpack.c.l.b16 %v298
        %v314 = vunpack.c.h.b16 %v298
        %v315 = vunpack.c.l.b16 %v299
        %v316 = vunpack.c.h.b16 %v299
        %v317 = vunpack.c.l.b16 %v300
        %v318 = vunpack.c.h.b16 %v300
        %v319 = vpack.c.b16 %v311, %v307
        %v320 = vpack.c.b16 %v312, %v308
        %v321 = vpack.c.b16 %v313, %v309
        %v322 = vpack.c.b16 %v314, %v310
        %v323 = vpack.c.b16 %v315, %v315
        %v324 = vpack.c.b16 %v316, %v316
        %v325 = vpack.c.b16 %v317, %v317
        %v326 = vpack.c.b16 %v318, %v318
        %vm331 = vcmask 162816
        %v333 = vsel %vm331, %v294, 0
        %vm335 = vcmask 1041408
        %v337 = vsel %vm335, %v323, 0
        %v340 = vsel %vm335, %v324, 0
        %v343 = vsel %vm335, %v325, 0
        %v346 = vsel %vm335, %v326, 0
        %348 = vmatprep.subr.bf16.mxu0 0
        %349 = vmatpush1.bf16.msra.mxu0 0
        %350 = vmatprep.subr.bf16.mxu0 0
        %351 = vmatpush1.bf16.msra.mxu0 0
        %352 = vmatprep.subr.bf16.mxu0 0
        %353 = vmatpush1.bf16.msra.mxu0 0
        %354 = vmatprep.subr.bf16.mxu0 0
        %355 = vmatpush1.bf16.msra.mxu0 0
        %356 = vmatprep.subr.bf16.mxu0 0
        %357 = vmatpush1.bf16.msra.mxu0 0
        %358 = vmatprep.subr.bf16.mxu0 0
        %359 = vmatpush1.bf16.msra.mxu0 0
        %360 = vmatprep.subr.bf16.mxu0 %v340
        %361 = vmatpush1.bf16.msra.mxu0 %v337
        %362 = vmatprep.subr.bf16.mxu0 %v320
        %363 = vmatpush1.bf16.msra.mxu0 %v319
        %364 = vmatprep.subr.bf16.mxu0 0
        %365 = vmatpush2.bf16.msra.mxu0 0
        %366 = vmatprep.subr.bf16.mxu0 0
        %367 = vmatpush2.bf16.msra.mxu0 0
        %368 = vmatprep.subr.bf16.mxu0 0
        %369 = vmatpush2.bf16.msra.mxu0 0
        %370 = vmatprep.subr.bf16.mxu0 0
        %371 = vmatpush2.bf16.msra.mxu0 0
        %372 = vmatprep.subr.bf16.mxu0 0
        %373 = vmatpush2.bf16.msra.mxu0 0
        %374 = vmatprep.subr.bf16.mxu0 0
        %375 = vmatpush2.bf16.msra.mxu0 0
        %376 = vmatprep.subr.bf16.mxu0 0
        %377 = vmatpush2.bf16.msra.mxu0 0
        %378 = vmatprep.subr.bf16.mxu0 0
        %379 = vmatpush2.bf16.msra.mxu0 0
        %380 = vmatprep.mubr.bf16.mxu0 0
        %381 = vmatmul.mubr.bf16.gmra.mxu0 %v333
        %v382 = vpop.f32.mrf.mxu0
        %v383 = vadd.f32 0.0, %v382
        %v384 = vpop.f32.mrf.mxu0
        %v385 = vadd.f32 0.0, %v384
        %v386 = vpop.f32.mrf.mxu0
        %v387 = vpop.f32.mrf.mxu0
        %388 = vdwg.mxu0
        %389 = vmatprep.subr.bf16.mxu0 0
        %390 = vmatpush1.bf16.msra.mxu0 0
        %391 = vmatprep.subr.bf16.mxu0 0
        %392 = vmatpush1.bf16.msra.mxu0 0
        %393 = vmatprep.subr.bf16.mxu0 0
        %394 = vmatpush1.bf16.msra.mxu0 0
        %395 = vmatprep.subr.bf16.mxu0 0
        %396 = vmatpush1.bf16.msra.mxu0 0
        %397 = vmatprep.subr.bf16.mxu0 0
        %398 = vmatpush1.bf16.msra.mxu0 0
        %399 = vmatprep.subr.bf16.mxu0 0
        %400 = vmatpush1.bf16.msra.mxu0 0
        %401 = vmatprep.subr.bf16.mxu0 %v346
        %402 = vmatpush1.bf16.msra.mxu0 %v343
        %403 = vmatprep.subr.bf16.mxu0 %v322
        %404 = vmatpush1.bf16.msra.mxu0 %v321
        %405 = vmatprep.subr.bf16.mxu0 0
        %406 = vmatpush2.bf16.msra.mxu0 0
        %407 = vmatprep.subr.bf16.mxu0 0
        %408 = vmatpush2.bf16.msra.mxu0 0
        %409 = vmatprep.subr.bf16.mxu0 0
        %410 = vmatpush2.bf16.msra.mxu0 0
        %411 = vmatprep.subr.bf16.mxu0 0
        %412 = vmatpush2.bf16.msra.mxu0 0
        %413 = vmatprep.subr.bf16.mxu0 0
        %414 = vmatpush2.bf16.msra.mxu0 0
        %415 = vmatprep.subr.bf16.mxu0 0
        %416 = vmatpush2.bf16.msra.mxu0 0
        %417 = vmatprep.subr.bf16.mxu0 0
        %418 = vmatpush2.bf16.msra.mxu0 0
        %419 = vmatprep.subr.bf16.mxu0 0
        %420 = vmatpush2.bf16.msra.mxu0 0
        %421 = vmatprep.mubr.bf16.mxu0 0
        %422 = vmatmul.mubr.bf16.gmra.mxu0 %v333
        %v423 = vpop.f32.mrf.mxu0
        %v424 = vadd.f32 0.0, %v423
        %v425 = vpop.f32.mrf.mxu0
        %v426 = vadd.f32 0.0, %v425
        %v427 = vpop.f32.mrf.mxu0
        %v428 = vpop.f32.mrf.mxu0
        %429 = vdwg.mxu0
        %v430 = vsel %vm335, %v383, 0.0
        %v431 = vrot.slane %v430, 4
        %v432 = vadd.f32 %v430, %v431
        %v433 = vrot.slane %v432, 2
        %v434 = vadd.f32 %v432, %v433
        %v435 = vrot.slane %v434, 1
        %v436 = vadd.f32 %v434, %v435
        %v437 = vsel %vm335, %v385, 0.0
        %v438 = vrot.slane %v437, 4
        %v439 = vadd.f32 %v437, %v438
        %v440 = vrot.slane %v439, 2
        %v441 = vadd.f32 %v439, %v440
        %v442 = vrot.slane %v441, 1
        %v443 = vadd.f32 %v441, %v442
        %v444 = vsel %vm335, %v424, 0.0
        %v445 = vrot.slane %v444, 4
        %v446 = vadd.f32 %v444, %v445
        %v447 = vrot.slane %v446, 2
        %v448 = vadd.f32 %v446, %v447
        %v449 = vrot.slane %v448, 1
        %v450 = vadd.f32 %v448, %v449
        %v451 = vsel %vm335, %v426, 0.0
        %v452 = vrot.slane %v451, 4
        %v453 = vadd.f32 %v451, %v452
        %v454 = vrot.slane %v453, 2
        %v455 = vadd.f32 %v453, %v454
        %v456 = vrot.slane %v455, 1
        %v457 = vadd.f32 %v455, %v456
        %v458 = vmul.f32 %v436, 0.5
        %v459 = vmul.f32 %v443, 0.5
        %v460 = vmul.f32 %v450, 0.5
        %v461 = vmul.f32 %v457, 0.5
        %v462 = vmul.f32 %v383, %v383
        %v463 = vmul.f32 %v385, %v385
        %v464 = vmul.f32 %v424, %v424
        %v465 = vmul.f32 %v426, %v426
        %v466 = vsel %vm335, %v462, 0.0
        %v467 = vrot.slane %v466, 4
        %v468 = vadd.f32 %v466, %v467
        %v469 = vrot.slane %v468, 2
        %v470 = vadd.f32 %v468, %v469
        %v471 = vrot.slane %v470, 1
        %v472 = vadd.f32 %v470, %v471
        %v473 = vsel %vm335, %v463, 0.0
        %v474 = vrot.slane %v473, 4
        %v475 = vadd.f32 %v473, %v474
        %v476 = vrot.slane %v475, 2
        %v477 = vadd.f32 %v475, %v476
        %v478 = vrot.slane %v477, 1
        %v479 = vadd.f32 %v477, %v478
        %v480 = vsel %vm335, %v464, 0.0
        %v481 = vrot.slane %v480, 4
        %v482 = vadd.f32 %v480, %v481
        %v483 = vrot.slane %v482, 2
        %v484 = vadd.f32 %v482, %v483
        %v485 = vrot.slane %v484, 1
        %v486 = vadd.f32 %v484, %v485
        %v487 = vsel %vm335, %v465, 0.0
        %v488 = vrot.slane %v487, 4
        %v489 = vadd.f32 %v487, %v488
        %v490 = vrot.slane %v489, 2
        %v491 = vadd.f32 %v489, %v490
        %v492 = vrot.slane %v491, 1
        %v493 = vadd.f32 %v491, %v492
        %v494 = vmul.f32 %v472, 0.5
        %v495 = vmul.f32 %v479, 0.5
        %v496 = vmul.f32 %v486, 0.5
        %v497 = vmul.f32 %v493, 0.5
        %v498 = vmul.f32 %v458, %v458
        %v499 = vmul.f32 %v459, %v459
        %v500 = vmul.f32 %v460, %v460
        %v501 = vmul.f32 %v461, %v461
        %v502 = vsub.f32 %v494, %v498
        %v503 = vsub.f32 %v495, %v499
        %v504 = vsub.f32 %v496, %v500
        %v505 = vsub.f32 %v497, %v501
        %v506 = vmax.f32 %v502, 0.0
        %v507 = vmax.f32 %v503, 0.0
        %v508 = vmax.f32 %v504, 0.0
        %v509 = vmax.f32 %v505, 0.0
        %v510 = vld [vmem:[%s242] sm:$0xf]
        %v511 = vadd.f32 %v506, 1e-05
        %v512 = vadd.f32 %v507, 1e-05
        %v513 = vadd.f32 %v508, 1e-05
        %v514 = vadd.f32 %v509, 1e-05
        %v515 = vrsqrt.pop %v511
        %v516 = vrsqrt.pop %v512
        %v517 = vrsqrt.pop %v513
        %v518 = vrsqrt.pop %v514
        %v523 = vcombine.low %v515, %v516
        %v524 = vcombine.low %v517, %v518
        %v526 = vunpack.c.l.s4 1966171168
        %v527 = vunpack.c.0.s8 %v526
        %v528 = vlaneseq
        %v529 = vshrl.u32 %v528, 7
        %v530 = vsub.s32 %v527, %v529
        %v531 = vrot.slane %v523, %v530
        %v533 = vunpack.c.l.s4 1966171168
        %v534 = vunpack.c.0.s8 %v533
        %v535 = vlaneseq
        %v536 = vshrl.u32 %v535, 7
        %v537 = vsub.s32 %v534, %v536
        %v538 = vrot.slane %v524, %v537
        %v539 = vcombine.low %v531, %v538
        %v541 = vunpack.c.l.s4 1966171168
        %v542 = vunpack.c.0.s8 %v541
        %v543 = vlaneseq
        %v544 = vshrl.u32 %v543, 7
        %v545 = vsub.s32 %v542, %v544
        %v546 = vrot.slane %v539, %v545
        %v548 = vmul.f32 %v510, %v546
        %v549 = vld [vmem:[%s251] sm:$0xf]
        %v551 = vlaneseq
        %v552 = vshrl.u32 %v551, 7
        %v553 = vsub.s32 0, %v552
        %v554 = vrot.slane %v548, %v553
        %v555 = vlaneseq
        %v556 = vshrl.u32 %v555, 7
        %v557 = vsub.s32 1, %v556
        %v558 = vrot.slane %v548, %v557
        %v559 = vlaneseq
        %v560 = vshrl.u32 %v559, 7
        %v561 = vsub.s32 2, %v560
        %v562 = vrot.slane %v548, %v561
        %v563 = vlaneseq
        %v564 = vshrl.u32 %v563, 7
        %v565 = vsub.s32 3, %v564
        %v566 = vrot.slane %v548, %v565
        %v571 = vmul.f32 %v458, %v554
        %v572 = vmul.f32 %v459, %v558
        %v573 = vmul.f32 %v460, %v562
        %v574 = vmul.f32 %v461, %v566
        %v579 = vcombine.low %v571, %v572
        %v580 = vcombine.low %v573, %v574
        %v582 = vunpack.c.l.s4 1966171168
        %v583 = vunpack.c.0.s8 %v582
        %v584 = vlaneseq
        %v585 = vshrl.u32 %v584, 7
        %v586 = vsub.s32 %v583, %v585
        %v587 = vrot.slane %v579, %v586
        %v589 = vunpack.c.l.s4 1966171168
        %v590 = vunpack.c.0.s8 %v589
        %v591 = vlaneseq
        %v592 = vshrl.u32 %v591, 7
        %v593 = vsub.s32 %v590, %v592
        %v594 = vrot.slane %v580, %v593
        %v595 = vcombine.low %v587, %v594
        %v597 = vunpack.c.l.s4 1966171168
        %v598 = vunpack.c.0.s8 %v597
        %v599 = vlaneseq
        %v600 = vshrl.u32 %v599, 7
        %v601 = vsub.s32 %v598, %v600
        %v602 = vrot.slane %v595, %v601
        %v604 = vsub.f32 %v549, %v602
        %v605 = vmul.f32 %v383, %v554
        %v606 = vmul.f32 %v385, %v558
        %v607 = vmul.f32 %v424, %v562
        %v608 = vmul.f32 %v426, %v566
        %v610 = vlaneseq
        %v611 = vshrl.u32 %v610, 7
        %v612 = vsub.s32 0, %v611
        %v613 = vrot.slane %v604, %v612
        %v614 = vlaneseq
        %v615 = vshrl.u32 %v614, 7
        %v616 = vsub.s32 1, %v615
        %v617 = vrot.slane %v604, %v616
        %v618 = vlaneseq
        %v619 = vshrl.u32 %v618, 7
        %v620 = vsub.s32 2, %v619
        %v621 = vrot.slane %v604, %v620
        %v622 = vlaneseq
        %v623 = vshrl.u32 %v622, 7
        %v624 = vsub.s32 3, %v623
        %v625 = vrot.slane %v604, %v624
        %v630 = vadd.f32 %v605, %v613
        %v631 = vadd.f32 %v606, %v617
        %v632 = vadd.f32 %v607, %v621
        %v633 = vadd.f32 %v608, %v625
        %v634 = vmax.f32 %v630, 0.0
        %v635 = vmax.f32 %v631, 0.0
        %v636 = vmax.f32 %v632, 0.0
        %v637 = vmax.f32 %v633, 0.0
        %v638 = vpack.c.bf16 %v634, %v634
        %v639 = vpack.c.bf16 %v635, %v635
        %v640 = vpack.c.bf16 %v636, %v636
        %v641 = vpack.c.bf16 %v637, %v637
        %v646 = vcombine.low %v638, %v639
        %v647 = vcombine.low %v640, %v641
        %v649 = vunpack.c.l.s4 1966171168
        %v650 = vunpack.c.0.s8 %v649
        %v651 = vlaneseq
        %v652 = vshrl.u32 %v651, 7
        %v653 = vsub.s32 %v650, %v652
        %v654 = vrot.slane %v646, %v653
        %v656 = vunpack.c.l.s4 1966171168
        %v657 = vunpack.c.0.s8 %v656
        %v658 = vlaneseq
        %v659 = vshrl.u32 %v658, 7
        %v660 = vsub.s32 %v657, %v659
        %v661 = vrot.slane %v647, %v660
        %v662 = vcombine.low %v654, %v661
        %v664 = vunpack.c.l.s4 1966171168
        %v665 = vunpack.c.0.s8 %v664
        %v666 = vlaneseq
        %v667 = vshrl.u32 %v666, 7
        %v668 = vsub.s32 %v665, %v667
        %v669 = vrot.slane %v662, %v668
        %671 = vst [vmem:[%s291] sm:$0xf] %v669
        %s672 = smul.u32 4, %s21
        %p673 = scmp.lt.s32.totalorder %s672, 7
        %s674 = scalar_select %p673, %s672, 7
        %s675 = scalar_lea.vmem %s4, %s674
        // Predicated region
        $region49: #{gan_generator.5} parent=35 // pred_check
          %p676 = pneg %p138
        $region50: #{gan_generator.5} parent=35 // pred_check_branch
          %678 = sbr.rel (%p676) target = $region52
        $region51: #{gan_generator.5} parent=35 // pred_region
          %s679 = smul.u32 4, %s21
        $region52: #{gan_generator.5} parent=35 // pred_fallthru
          _
      $region36: #{gan_generator.5} parent=5 // pred_fallthru
        _
      %p680 = scmp.le.s32.totalorder 2, %s16
      // Predicated region
      $region53: #{gan_generator.5} parent=5 // pred_check
        %p681 = pneg %p680
      $region54: #{gan_generator.5} parent=5 // pred_check_branch
        %683 = sbr.rel (%p681) target = $region56
      $region55: #{gan_generator.5} parent=5 // pred_region
        %s684 = ssub.s32 %s16, 2
        // Predicated region
        $region57: #{gan_generator.5} parent=55 // pred_check
          %p685 = pneg %p144
        $region58: #{gan_generator.5} parent=55 // pred_check_branch
          %687 = sbr.rel (%p685) target = $region60
        $region59: #{gan_generator.5} parent=55 // pred_region
          %s688 = smul.u32 4, %s22
          %p689 = scmp.lt.s32.totalorder %s688, 7
          %s690 = scalar_select %p689, %s688, 7
          %s691 = scalar_lea.vmem %s4, %s690
        $region60: #{gan_generator.5} parent=55 // pred_fallthru
          _
      $region56: #{gan_generator.5} parent=5 // pred_fallthru
        _
    $region6: #{gan_generator.5} parent=1 // loop_footer
      %s20 = sadd.s32 1, %s16
    $region7: #{gan_generator.5} parent=1 // loop_footer_branch
      %15 = sbr.rel target = $region3
    $region8: #{gan_generator.5} parent=1 // loop_exit
      _
    %692 = vsyncpa [#allocation3], 1
    %s693 = scalar_lea.sflag [#allocation3], 1
    %694 = vsyncpa %s693, 1
    %695 = vsyncpa [#allocation5], 1
    %s696 = scalar_lea.sflag [#allocation5], 1
    %697 = vsyncpa %s696, 1

// kernel: gan_generator.6
$region0: #{gan_generator.6}
  #allocation0 [shape = 'u32[]', space=smem, size = 0x4, offset = 0x4, fixed_abs, tag = 'smem constant byte address 0x4 - core index']
  #allocation1 [shape = 'u32[144,128]{1,0:T(1,128)}', space=vmem, size = 0x12000, scoped, tag = 'internal scratch']
  #allocation2 [shape = 'bf16[576,32]{1,0:T(8,128)(2,1)}', space=vmem, size = 0x24000, scoped, tag = 'scratch operand']
  %s0 = inlined_call_operand.vmem [shape: bf16[64,42], index: 0, kind: input, shape index: {}]
  %s1 = inlined_call_operand.vmem [shape: bf16[1,128,576], index: 1, kind: input, shape index: {}]
  %s2 = inlined_call_operand.vmem [shape: bf16[9,1,32], index: 2, kind: input, shape index: {}]
  %s3 = inlined_call_operand.vmem [shape: f32[1,32,1], index: 3, kind: input, shape index: {}]
  %s4 = inlined_call_operand.vmem [shape: f32[1,32,1], index: 4, kind: input, shape index: {}]
  %s5 = inlined_call_operand.vmem [shape: bf16[1,4,32,32], index: 5, kind: output, shape index: {}]
  %s6 = sld [smem:[#allocation0]]
  $region34: #{gan_generator.6} parent=0
    _
  %s8 = ssub.s32 1, %s6
  %s9 = scalar_select 0, %s8, %s6
  // Predicated region
  $region2: #{gan_generator.6} parent=0 // pred_check
    _
  $region3: #{gan_generator.6} parent=0 // pred_check_branch
    %11 = sbr.rel (0) target = $region5
  $region4: #{gan_generator.6} parent=0 // pred_region
    _
  $region5: #{gan_generator.6} parent=0 // pred_fallthru
    _
  // Predicated region
  $region6: #{gan_generator.6} parent=0 // pred_check
    _
  $region7: #{gan_generator.6} parent=0 // pred_check_branch
    %13 = sbr.rel (0) target = $region9
  $region8: #{gan_generator.6} parent=0 // pred_region
    _
  $region9: #{gan_generator.6} parent=0 // pred_fallthru
    _
  // Predicated region
  $region10: #{gan_generator.6} parent=0 // pred_check
    _
  $region11: #{gan_generator.6} parent=0 // pred_check_branch
    %15 = sbr.rel (0) target = $region13
  $region12: #{gan_generator.6} parent=0 // pred_region
    _
  $region13: #{gan_generator.6} parent=0 // pred_fallthru
    _
  // Predicated region
  $region14: #{gan_generator.6} parent=0 // pred_check
    _
  $region15: #{gan_generator.6} parent=0 // pred_check_branch
    %17 = sbr.rel (0) target = $region17
  $region16: #{gan_generator.6} parent=0 // pred_region
    _
  $region17: #{gan_generator.6} parent=0 // pred_fallthru
    _
  // Predicated region
  $region18: #{gan_generator.6} parent=0 // pred_check
    _
  $region19: #{gan_generator.6} parent=0 // pred_check_branch
    %19 = sbr.rel (0) target = $region21
  $region20: #{gan_generator.6} parent=0 // pred_region
    _
  $region21: #{gan_generator.6} parent=0 // pred_fallthru
    _
  %p21 = scmp.eq.s32.totalorder 0, 0
  // Predicated region
  $region22: #{gan_generator.6} parent=0 // pred_check
    %p22 = pneg %p21
  $region23: #{gan_generator.6} parent=0 // pred_check_branch
    %24 = sbr.rel (%p22) target = $region25
  $region24: #{gan_generator.6} parent=0 // pred_region
    %v25 = vld [vmem:[%s0] sm:$0xf]
    %v26 = vld [vmem:[%s0 + $0x4] sm:$0xf]
    %v27 = vld [vmem:[%s0 + $0x8] sm:$0xf]
    %v28 = vld [vmem:[%s0 + $0xc] sm:$0xf]
    %v29 = vld [vmem:[%s0 + $0x10] sm:$0xf]
    %v30 = vld [vmem:[%s0 + $0x14] sm:$0xf]
    %v31 = vld [vmem:[%s0 + $0x18] sm:$0xf]
    %v32 = vld [vmem:[%s0 + $0x1c] sm:$0xf]
    %v33 = vld [vmem:[%s2] sm:$0x1]
    %v35 = vpack.i.b16 %v33, %v33
    %v37 = vlaneseq
    %v38 = vshrl.u32 %v37, 7
    %v39 = vsub.s32 0, %v38
    %v40 = vrot.slane %v35, %v39
    %v42 = vunpack.c.l.b16 %v40
    %v43 = vpack.c.b16 %v42, %v42
    %v45 = vmul.bf16 %v25, %v43
    %v46 = vmul.bf16 %v26, %v43
    %v47 = vmul.bf16 %v27, %v43
    %v48 = vmul.bf16 %v28, %v43
    %v49 = vmul.bf16 %v29, %v43
    %v50 = vmul.bf16 %v30, %v43
    %v51 = vmul.bf16 %v31, %v43
    %v52 = vmul.bf16 %v32, %v43
    %vm53 = vcmask 257024
    %54 = vst.msk [vmem:[#allocation2] sm:$0xf] %vm53, %v45
    %55 = vst.msk [vmem:[#allocation2 + $0x4] sm:$0xf] %vm53, %v46
    %56 = vst.msk [vmem:[#allocation2 + $0x8] sm:$0xf] %vm53, %v47
    %57 = vst.msk [vmem:[#allocation2 + $0xc] sm:$0xf] %vm53, %v48
    %58 = vst.msk [vmem:[#allocation2 + $0x10] sm:$0xf] %vm53, %v49
    %59 = vst.msk [vmem:[#allocation2 + $0x14] sm:$0xf] %vm53, %v50
    %60 = vst.msk [vmem:[#allocation2 + $0x18] sm:$0xf] %vm53, %v51
    %61 = vst.msk [vmem:[#allocation2 + $0x1c] sm:$0xf] %vm53, %v52
    %v62 = vld [vmem:[%s0] sm:$0xf]
    %v63 = vld [vmem:[%s0 + $0x4] sm:$0xf]
    %v64 = vld [vmem:[%s0 + $0x8] sm:$0xf]
    %v65 = vld [vmem:[%s0 + $0xc] sm:$0xf]
    %v66 = vld [vmem:[%s0 + $0x10] sm:$0xf]
    %v67 = vld [vmem:[%s0 + $0x14] sm:$0xf]
    %v68 = vld [vmem:[%s0 + $0x18] sm:$0xf]
    %v69 = vld [vmem:[%s0 + $0x1c] sm:$0xf]
    %s70 = scalar_lea.vmem %s2, 1
    %v71 = vld [vmem:[%s70] sm:$0x1]
    %v73 = vpack.i.b16 %v71, %v71
    %v75 = vlaneseq
    %v76 = vshrl.u32 %v75, 7
    %v77 = vsub.s32 0, %v76
    %v78 = vrot.slane %v73, %v77
    %v80 = vunpack.c.l.b16 %v78
    %v81 = vpack.c.b16 %v80, %v80
    %82 = vrot.lane.b32.xlu0 %v81, 1
    %v83 = vpop.permute.xlu0 %82
    %v85 = vmul.bf16 %v62, %v83
    %v86 = vmul.bf16 %v63, %v83
    %v87 = vmul.bf16 %v64, %v83
    %v88 = vmul.bf16 %v65, %v83
    %v89 = vmul.bf16 %v66, %v83
    %v90 = vmul.bf16 %v67, %v83
    %v91 = vmul.bf16 %v68, %v83
    %v92 = vmul.bf16 %v69, %v83
    %101 = vrot.lane.b32.xlu0 %v85, 127
    %v102 = vpop.permute.xlu0 %101
    %103 = vrot.lane.b32.xlu0 %v86, 127
    %v104 = vpop.permute.xlu0 %103
    %105 = vrot.lane.b32.xlu0 %v87, 127
    %v106 = vpop.permute.xlu0 %105
    %107 = vrot.lane.b32.xlu0 %v88, 127
    %v108 = vpop.permute.xlu0 %107
    %109 = vrot.lane.b32.xlu0 %v89, 127
    %v110 = vpop.permute.xlu0 %109
    %111 = vrot.lane.b32.xlu0 %v90, 127
    %v112 = vpop.permute.xlu0 %111
    %113 = vrot.lane.b32.xlu0 %v91, 127
    %v114 = vpop.permute.xlu0 %113
    %115 = vrot.lane.b32.xlu0 %v92, 127
    %v116 = vpop.permute.xlu0 %115
    %125 = vst.msk [vmem:[#allocation2 + $0x20] sm:$0xf] %vm53, %v102
    %126 = vst.msk [vmem:[#allocation2 + $0x24] sm:$0xf] %vm53, %v104
    %127 = vst.msk [vmem:[#allocation2 + $0x28] sm:$0xf] %vm53, %v106
    %128 = vst.msk [vmem:[#allocation2 + $0x2c] sm:$0xf] %vm53, %v108
    %129 = vst.msk [vmem:[#allocation2 + $0x30] sm:$0xf] %vm53, %v110
    %130 = vst.msk [vmem:[#allocation2 + $0x34] sm:$0xf] %vm53, %v112
    %131 = vst.msk [vmem:[#allocation2 + $0x38] sm:$0xf] %vm53, %v114
    %132 = vst.msk [vmem:[#allocation2 + $0x3c] sm:$0xf] %vm53, %v116
    %v133 = vld [vmem:[%s0] sm:$0xf]
    %v134 = vld [vmem:[%s0 + $0x4] sm:$0xf]
    %v135 = vld [vmem:[%s0 + $0x8] sm:$0xf]
    %v136 = vld [vmem:[%s0 + $0xc] sm:$0xf]
    %v137 = vld [vmem:[%s0 + $0x10] sm:$0xf]
    %v138 = vld [vmem:[%s0 + $0x14] sm:$0xf]
    %v139 = vld [vmem:[%s0 + $0x18] sm:$0xf]
    %v140 = vld [vmem:[%s0 + $0x1c] sm:$0xf]
    %s141 = scalar_lea.vmem %s2, 2
    %v142 = vld [vmem:[%s141] sm:$0x1]
    %v144 = vpack.i.b16 %v142, %v142
    %v146 = vlaneseq
    %v147 = vshrl.u32 %v146, 7
    %v148 = vsub.s32 0, %v147
    %v149 = vrot.slane %v144, %v148
    %v151 = vunpack.c.l.b16 %v149
    %v152 = vpack.c.b16 %v151, %v151
    %153 = vrot.lane.b32.xlu0 %v152, 2
    %v154 = vpop.permute.xlu0 %153
    %v156 = vmul.bf16 %v133, %v154
    %v157 = vmul.bf16 %v134, %v154
    %v158 = vmul.bf16 %v135, %v154
    %v159 = vmul.bf16 %v136, %v154
    %v160 = vmul.bf16 %v137, %v154
    %v161 = vmul.bf16 %v138, %v154
    %v162 = vmul.bf16 %v139, %v154
    %v163 = vmul.bf16 %v140, %v154
    %172 = vrot.lane.b32.xlu0 %v156, 126
    %v173 = vpop.permute.xlu0 %172
    %174 = vrot.lane.b32.xlu0 %v157, 126
    %v175 = vpop.permute.xlu0 %174
    %176 = vrot.lane.b32.xlu0 %v158, 126
    %v177 = vpop.permute.xlu0 %176
    %178 = vrot.lane.b32.xlu0 %v159, 126
    %v179 = vpop.permute.xlu0 %178
    %180 = vrot.lane.b32.xlu0 %v160, 126
    %v181 = vpop.permute.xlu0 %180
    %182 = vrot.lane.b32.xlu0 %v161, 126
    %v183 = vpop.permute.xlu0 %182
    %184 = vrot.lane.b32.xlu0 %v162, 126
    %v185 = vpop.permute.xlu0 %184
    %186 = vrot.lane.b32.xlu0 %v163, 126
    %v187 = vpop.permute.xlu0 %186
    %196 = vst.msk [vmem:[#allocation2 + $0x40] sm:$0xf] %vm53, %v173
    %197 = vst.msk [vmem:[#allocation2 + $0x44] sm:$0xf] %vm53, %v175
    %198 = vst.msk [vmem:[#allocation2 + $0x48] sm:$0xf] %vm53, %v177
    %199 = vst.msk [vmem:[#allocation2 + $0x4c] sm:$0xf] %vm53, %v179
    %200 = vst.msk [vmem:[#allocation2 + $0x50] sm:$0xf] %vm53, %v181
    %201 = vst.msk [vmem:[#allocation2 + $0x54] sm:$0xf] %vm53, %v183
    %202 = vst.msk [vmem:[#allocation2 + $0x58] sm:$0xf] %vm53, %v185
    %203 = vst.msk [vmem:[#allocation2 + $0x5c] sm:$0xf] %vm53, %v187
    %v204 = vld [vmem:[%s0] sm:$0xf]
    %v205 = vld [vmem:[%s0 + $0x4] sm:$0xf]
    %v206 = vld [vmem:[%s0 + $0x8] sm:$0xf]
    %v207 = vld [vmem:[%s0 + $0xc] sm:$0xf]
    %v208 = vld [vmem:[%s0 + $0x10] sm:$0xf]
    %v209 = vld [vmem:[%s0 + $0x14] sm:$0xf]
    %v210 = vld [vmem:[%s0 + $0x18] sm:$0xf]
    %v211 = vld [vmem:[%s0 + $0x1c] sm:$0xf]
    %s212 = scalar_lea.vmem %s2, 3
    %v213 = vld [vmem:[%s212] sm:$0x1]
    %v215 = vpack.i.b16 %v213, %v213
    %v217 = vlaneseq
    %v218 = vshrl.u32 %v217, 7
    %v219 = vsub.s32 0, %v218
    %v220 = vrot.slane %v215, %v219
    %v222 = vunpack.c.l.b16 %v220
    %v223 = vpack.c.b16 %v222, %v222
    %224 = vrot.lane.b32.xlu0 %v223, 4
    %v225 = vpop.permute.xlu0 %224
    %v227 = vmul.bf16 %v204, %v225
    %v228 = vmul.bf16 %v205, %v225
    %v229 = vmul.bf16 %v206, %v225
    %v230 = vmul.bf16 %v207, %v225
    %v231 = vmul.bf16 %v208, %v225
    %v232 = vmul.bf16 %v209, %v225
    %v233 = vmul.bf16 %v210, %v225
    %v234 = vmul.bf16 %v211, %v225
    %243 = vrot.lane.b32.xlu0 %v227, 124
    %v244 = vpop.permute.xlu0 %243
    %245 = vrot.lane.b32.xlu0 %v228, 124
    %v246 = vpop.permute.xlu0 %245
    %247 = vrot.lane.b32.xlu0 %v229, 124
    %v248 = vpop.permute.xlu0 %247
    %249 = vrot.lane.b32.xlu0 %v230, 124
    %v250 = vpop.permute.xlu0 %249
    %251 = vrot.lane.b32.xlu0 %v231, 124
    %v252 = vpop.permute.xlu0 %251
    %253 = vrot.lane.b32.xlu0 %v232, 124
    %v254 = vpop.permute.xlu0 %253
    %255 = vrot.lane.b32.xlu0 %v233, 124
    %v256 = vpop.permute.xlu0 %255
    %257 = vrot.lane.b32.xlu0 %v234, 124
    %v258 = vpop.permute.xlu0 %257
    %267 = vst.msk [vmem:[#allocation2 + $0x60] sm:$0xf] %vm53, %v244
    %268 = vst.msk [vmem:[#allocation2 + $0x64] sm:$0xf] %vm53, %v246
    %269 = vst.msk [vmem:[#allocation2 + $0x68] sm:$0xf] %vm53, %v248
    %270 = vst.msk [vmem:[#allocation2 + $0x6c] sm:$0xf] %vm53, %v250
    %271 = vst.msk [vmem:[#allocation2 + $0x70] sm:$0xf] %vm53, %v252
    %272 = vst.msk [vmem:[#allocation2 + $0x74] sm:$0xf] %vm53, %v254
    %273 = vst.msk [vmem:[#allocation2 + $0x78] sm:$0xf] %vm53, %v256
    %274 = vst.msk [vmem:[#allocation2 + $0x7c] sm:$0xf] %vm53, %v258
    %v275 = vld [vmem:[%s0] sm:$0xf]
    %v276 = vld [vmem:[%s0 + $0x4] sm:$0xf]
    %v277 = vld [vmem:[%s0 + $0x8] sm:$0xf]
    %v278 = vld [vmem:[%s0 + $0xc] sm:$0xf]
    %v279 = vld [vmem:[%s0 + $0x10] sm:$0xf]
    %v280 = vld [vmem:[%s0 + $0x14] sm:$0xf]
    %v281 = vld [vmem:[%s0 + $0x18] sm:$0xf]
    %v282 = vld [vmem:[%s0 + $0x1c] sm:$0xf]
    %s283 = scalar_lea.vmem %s2, 4
    %v284 = vld [vmem:[%s283] sm:$0x1]
    %v286 = vpack.i.b16 %v284, %v284
    %v288 = vlaneseq
    %v289 = vshrl.u32 %v288, 7
    %v290 = vsub.s32 0, %v289
    %v291 = vrot.slane %v286, %v290
    %v293 = vunpack.c.l.b16 %v291
    %v294 = vpack.c.b16 %v293, %v293
    %295 = vrot.lane.b32.xlu0 %v294, 5
    %v296 = vpop.permute.xlu0 %295
    %v298 = vmul.bf16 %v275, %v296
    %v299 = vmul.bf16 %v276, %v296
    %v300 = vmul.bf16 %v277, %v296
    %v301 = vmul.bf16 %v278, %v296
    %v302 = vmul.bf16 %v279, %v296
    %v303 = vmul.bf16 %v280, %v296
    %v304 = vmul.bf16 %v281, %v296
    %v305 = vmul.bf16 %v282, %v296
    %314 = vrot.lane.b32.xlu0 %v298, 123
    %v315 = vpop.permute.xlu0 %314
    %316 = vrot.lane.b32.xlu0 %v299, 123
    %v317 = vpop.permute.xlu0 %316
    %318 = vrot.lane.b32.xlu0 %v300, 123
    %v319 = vpop.permute.xlu0 %318
    %320 = vrot.lane.b32.xlu0 %v301, 123
    %v321 = vpop.permute.xlu0 %320
    %322 = vrot.lane.b32.xlu0 %v302, 123
    %v323 = vpop.permute.xlu0 %322
    %324 = vrot.lane.b32.xlu0 %v303, 123
    %v325 = vpop.permute.xlu0 %324
    %326 = vrot.lane.b32.xlu0 %v304, 123
    %v327 = vpop.permute.xlu0 %326
    %328 = vrot.lane.b32.xlu0 %v305, 123
    %v329 = vpop.permute.xlu0 %328
    %338 = vst.msk [vmem:[#allocation2 + $0x80] sm:$0xf] %vm53, %v315
    %339 = vst.msk [vmem:[#allocation2 + $0x84] sm:$0xf] %vm53, %v317
    %340 = vst.msk [vmem:[#allocation2 + $0x88] sm:$0xf] %vm53, %v319
    %341 = vst.msk [vmem:[#allocation2 + $0x8c] sm:$0xf] %vm53, %v321
    %342 = vst.msk [vmem:[#allocation2 + $0x90] sm:$0xf] %vm53, %v323
    %343 = vst.msk [vmem:[#allocation2 + $0x94] sm:$0xf] %vm53, %v325
    %344 = vst.msk [vmem:[#allocation2 + $0x98] sm:$0xf] %vm53, %v327
    %345 = vst.msk [vmem:[#allocation2 + $0x9c] sm:$0xf] %vm53, %v329
    %v346 = vld [vmem:[%s0] sm:$0xf]
    %v347 = vld [vmem:[%s0 + $0x4] sm:$0xf]
    %v348 = vld [vmem:[%s0 + $0x8] sm:$0xf]
    %v349 = vld [vmem:[%s0 + $0xc] sm:$0xf]
    %v350 = vld [vmem:[%s0 + $0x10] sm:$0xf]
    %v351 = vld [vmem:[%s0 + $0x14] sm:$0xf]
    %v352 = vld [vmem:[%s0 + $0x18] sm:$0xf]
    %v353 = vld [vmem:[%s0 + $0x1c] sm:$0xf]
    %s354 = scalar_lea.vmem %s2, 5
    %v355 = vld [vmem:[%s354] sm:$0x1]
    %v357 = vpack.i.b16 %v355, %v355
    %v359 = vlaneseq
    %v360 = vshrl.u32 %v359, 7
    %v361 = vsub.s32 0, %v360
    %v362 = vrot.slane %v357, %v361
    %v364 = vunpack.c.l.b16 %v362
    %v365 = vpack.c.b16 %v364, %v364
    %366 = vrot.lane.b32.xlu0 %v365, 6
    %v367 = vpop.permute.xlu0 %366
    %v369 = vmul.bf16 %v346, %v367
    %v370 = vmul.bf16 %v347, %v367
    %v371 = vmul.bf16 %v348, %v367
    %v372 = vmul.bf16 %v349, %v367
    %v373 = vmul.bf16 %v350, %v367
    %v374 = vmul.bf16 %v351, %v367
    %v375 = vmul.bf16 %v352, %v367
    %v376 = vmul.bf16 %v353, %v367
    %385 = vrot.lane.b32.xlu0 %v369, 122
    %v386 = vpop.permute.xlu0 %385
    %387 = vrot.lane.b32.xlu0 %v370, 122
    %v388 = vpop.permute.xlu0 %387
    %389 = vrot.lane.b32.xlu0 %v371, 122
    %v390 = vpop.permute.xlu0 %389
    %391 = vrot.lane.b32.xlu0 %v372, 122
    %v392 = vpop.permute.xlu0 %391
    %393 = vrot.lane.b32.xlu0 %v373, 122
    %v394 = vpop.permute.xlu0 %393
    %395 = vrot.lane.b32.xlu0 %v374, 122
    %v396 = vpop.permute.xlu0 %395
    %397 = vrot.lane.b32.xlu0 %v375, 122
    %v398 = vpop.permute.xlu0 %397
    %399 = vrot.lane.b32.xlu0 %v376, 122
    %v400 = vpop.permute.xlu0 %399
    %409 = vst.msk [vmem:[#allocation2 + $0xa0] sm:$0xf] %vm53, %v386
    %410 = vst.msk [vmem:[#allocation2 + $0xa4] sm:$0xf] %vm53, %v388
    %411 = vst.msk [vmem:[#allocation2 + $0xa8] sm:$0xf] %vm53, %v390
    %412 = vst.msk [vmem:[#allocation2 + $0xac] sm:$0xf] %vm53, %v392
    %413 = vst.msk [vmem:[#allocation2 + $0xb0] sm:$0xf] %vm53, %v394
    %414 = vst.msk [vmem:[#allocation2 + $0xb4] sm:$0xf] %vm53, %v396
    %415 = vst.msk [vmem:[#allocation2 + $0xb8] sm:$0xf] %vm53, %v398
    %416 = vst.msk [vmem:[#allocation2 + $0xbc] sm:$0xf] %vm53, %v400
    %v417 = vld [vmem:[%s0] sm:$0xf]
    %v418 = vld [vmem:[%s0 + $0x4] sm:$0xf]
    %v419 = vld [vmem:[%s0 + $0x8] sm:$0xf]
    %v420 = vld [vmem:[%s0 + $0xc] sm:$0xf]
    %v421 = vld [vmem:[%s0 + $0x10] sm:$0xf]
    %v422 = vld [vmem:[%s0 + $0x14] sm:$0xf]
    %v423 = vld [vmem:[%s0 + $0x18] sm:$0xf]
    %v424 = vld [vmem:[%s0 + $0x1c] sm:$0xf]
    %s425 = scalar_lea.vmem %s2, 6
    %v426 = vld [vmem:[%s425] sm:$0x1]
    %v428 = vpack.i.b16 %v426, %v426
    %v430 = vlaneseq
    %v431 = vshrl.u32 %v430, 7
    %v432 = vsub.s32 0, %v431
    %v433 = vrot.slane %v428, %v432
    %v435 = vunpack.c.l.b16 %v433
    %v436 = vpack.c.b16 %v435, %v435
    %437 = vrot.lane.b32.xlu0 %v436, 8
    %v438 = vpop.permute.xlu0 %437
    %v440 = vmul.bf16 %v417, %v438
    %v441 = vmul.bf16 %v418, %v438
    %v442 = vmul.bf16 %v419, %v438
    %v443 = vmul.bf16 %v420, %v438
    %v444 = vmul.bf16 %v421, %v438
    %v445 = vmul.bf16 %v422, %v438
    %v446 = vmul.bf16 %v423, %v438
    %v447 = vmul.bf16 %v424, %v438
    %456 = vrot.lane.b32.xlu0 %v440, 120
    %v457 = vpop.permute.xlu0 %456
    %458 = vrot.lane.b32.xlu0 %v441, 120
    %v459 = vpop.permute.xlu0 %458
    %460 = vrot.lane.b32.xlu0 %v442, 120
    %v461 = vpop.permute.xlu0 %460
    %462 = vrot.lane.b32.xlu0 %v443, 120
    %v463 = vpop.permute.xlu0 %462
    %464 = vrot.lane.b32.xlu0 %v444, 120
    %v465 = vpop.permute.xlu0 %464
    %466 = vrot.lane.b32.xlu0 %v445, 120
    %v467 = vpop.permute.xlu0 %466
    %468 = vrot.lane.b32.xlu0 %v446, 120
    %v469 = vpop.permute.xlu0 %468
    %470 = vrot.lane.b32.xlu0 %v447, 120
    %v471 = vpop.permute.xlu0 %470
    %480 = vst.msk [vmem:[#allocation2 + $0xc0] sm:$0xf] %vm53, %v457
    %481 = vst.msk [vmem:[#allocation2 + $0xc4] sm:$0xf] %vm53, %v459
    %482 = vst.msk [vmem:[#allocation2 + $0xc8] sm:$0xf] %vm53, %v461
    %483 = vst.msk [vmem:[#allocation2 + $0xcc] sm:$0xf] %vm53, %v463
    %484 = vst.msk [vmem:[#allocation2 + $0xd0] sm:$0xf] %vm53, %v465
    %485 = vst.msk [vmem:[#allocation2 + $0xd4] sm:$0xf] %vm53, %v467
    %486 = vst.msk [vmem:[#allocation2 + $0xd8] sm:$0xf] %vm53, %v469
    %487 = vst.msk [vmem:[#allocation2 + $0xdc] sm:$0xf] %vm53, %v471
    %v488 = vld [vmem:[%s0] sm:$0xf]
    %v489 = vld [vmem:[%s0 + $0x4] sm:$0xf]
    %v490 = vld [vmem:[%s0 + $0x8] sm:$0xf]
    %v491 = vld [vmem:[%s0 + $0xc] sm:$0xf]
    %v492 = vld [vmem:[%s0 + $0x10] sm:$0xf]
    %v493 = vld [vmem:[%s0 + $0x14] sm:$0xf]
    %v494 = vld [vmem:[%s0 + $0x18] sm:$0xf]
    %v495 = vld [vmem:[%s0 + $0x1c] sm:$0xf]
    %s496 = scalar_lea.vmem %s2, 7
    %v497 = vld [vmem:[%s496] sm:$0x1]
    %v499 = vpack.i.b16 %v497, %v497
    %v501 = vlaneseq
    %v502 = vshrl.u32 %v501, 7
    %v503 = vsub.s32 0, %v502
    %v504 = vrot.slane %v499, %v503
    %v506 = vunpack.c.l.b16 %v504
    %v507 = vpack.c.b16 %v506, %v506
    %508 = vrot.lane.b32.xlu0 %v507, 9
    %v509 = vpop.permute.xlu0 %508
    %v511 = vmul.bf16 %v488, %v509
    %v512 = vmul.bf16 %v489, %v509
    %v513 = vmul.bf16 %v490, %v509
    %v514 = vmul.bf16 %v491, %v509
    %v515 = vmul.bf16 %v492, %v509
    %v516 = vmul.bf16 %v493, %v509
    %v517 = vmul.bf16 %v494, %v509
    %v518 = vmul.bf16 %v495, %v509
    %527 = vrot.lane.b32.xlu0 %v511, 119
    %v528 = vpop.permute.xlu0 %527
    %529 = vrot.lane.b32.xlu0 %v512, 119
    %v530 = vpop.permute.xlu0 %529
    %531 = vrot.lane.b32.xlu0 %v513, 119
    %v532 = vpop.permute.xlu0 %531
    %533 = vrot.lane.b32.xlu0 %v514, 119
    %v534 = vpop.permute.xlu0 %533
    %535 = vrot.lane.b32.xlu0 %v515, 119
    %v536 = vpop.permute.xlu0 %535
    %537 = vrot.lane.b32.xlu0 %v516, 119
    %v538 = vpop.permute.xlu0 %537
    %539 = vrot.lane.b32.xlu0 %v517, 119
    %v540 = vpop.permute.xlu0 %539
    %541 = vrot.lane.b32.xlu0 %v518, 119
    %v542 = vpop.permute.xlu0 %541
    %551 = vst.msk [vmem:[#allocation2 + $0xe0] sm:$0xf] %vm53, %v528
    %552 = vst.msk [vmem:[#allocation2 + $0xe4] sm:$0xf] %vm53, %v530
    %553 = vst.msk [vmem:[#allocation2 + $0xe8] sm:$0xf] %vm53, %v532
    %554 = vst.msk [vmem:[#allocation2 + $0xec] sm:$0xf] %vm53, %v534
    %555 = vst.msk [vmem:[#allocation2 + $0xf0] sm:$0xf] %vm53, %v536
    %556 = vst.msk [vmem:[#allocation2 + $0xf4] sm:$0xf] %vm53, %v538
    %557 = vst.msk [vmem:[#allocation2 + $0xf8] sm:$0xf] %vm53, %v540
    %558 = vst.msk [vmem:[#allocation2 + $0xfc] sm:$0xf] %vm53, %v542
    %v559 = vld [vmem:[%s0] sm:$0xf]
    %v560 = vld [vmem:[%s0 + $0x4] sm:$0xf]
    %v561 = vld [vmem:[%s0 + $0x8] sm:$0xf]
    %v562 = vld [vmem:[%s0 + $0xc] sm:$0xf]
    %v563 = vld [vmem:[%s0 + $0x10] sm:$0xf]
    %v564 = vld [vmem:[%s0 + $0x14] sm:$0xf]
    %v565 = vld [vmem:[%s0 + $0x18] sm:$0xf]
    %v566 = vld [vmem:[%s0 + $0x1c] sm:$0xf]
    %s567 = scalar_lea.vmem %s2, 8
    %v568 = vld [vmem:[%s567] sm:$0x1]
    %v570 = vpack.i.b16 %v568, %v568
    %v572 = vlaneseq
    %v573 = vshrl.u32 %v572, 7
    %v574 = vsub.s32 0, %v573
    %v575 = vrot.slane %v570, %v574
    %v577 = vunpack.c.l.b16 %v575
    %v578 = vpack.c.b16 %v577, %v577
    %579 = vrot.lane.b32.xlu0 %v578, 10
    %v580 = vpop.permute.xlu0 %579
    %v582 = vmul.bf16 %v559, %v580
    %v583 = vmul.bf16 %v560, %v580
    %v584 = vmul.bf16 %v561, %v580
    %v585 = vmul.bf16 %v562, %v580
    %v586 = vmul.bf16 %v563, %v580
    %v587 = vmul.bf16 %v564, %v580
    %v588 = vmul.bf16 %v565, %v580
    %v589 = vmul.bf16 %v566, %v580
    %598 = vrot.lane.b32.xlu0 %v582, 118
    %v599 = vpop.permute.xlu0 %598
    %600 = vrot.lane.b32.xlu0 %v583, 118
    %v601 = vpop.permute.xlu0 %600
    %602 = vrot.lane.b32.xlu0 %v584, 118
    %v603 = vpop.permute.xlu0 %602
    %604 = vrot.lane.b32.xlu0 %v585, 118
    %v605 = vpop.permute.xlu0 %604
    %606 = vrot.lane.b32.xlu0 %v586, 118
    %v607 = vpop.permute.xlu0 %606
    %608 = vrot.lane.b32.xlu0 %v587, 118
    %v609 = vpop.permute.xlu0 %608
    %610 = vrot.lane.b32.xlu0 %v588, 118
    %v611 = vpop.permute.xlu0 %610
    %612 = vrot.lane.b32.xlu0 %v589, 118
    %v613 = vpop.permute.xlu0 %612
    %622 = vst.msk [vmem:[#allocation2 + $0x100] sm:$0xf] %vm53, %v599
    %623 = vst.msk [vmem:[#allocation2 + $0x104] sm:$0xf] %vm53, %v601
    %624 = vst.msk [vmem:[#allocation2 + $0x108] sm:$0xf] %vm53, %v603
    %625 = vst.msk [vmem:[#allocation2 + $0x10c] sm:$0xf] %vm53, %v605
    %626 = vst.msk [vmem:[#allocation2 + $0x110] sm:$0xf] %vm53, %v607
    %627 = vst.msk [vmem:[#allocation2 + $0x114] sm:$0xf] %vm53, %v609
    %628 = vst.msk [vmem:[#allocation2 + $0x118] sm:$0xf] %vm53, %v611
    %629 = vst.msk [vmem:[#allocation2 + $0x11c] sm:$0xf] %vm53, %v613
  $region25: #{gan_generator.6} parent=0 // pred_fallthru
    _
  %v630 = vld [vmem:[%s1] sm:$0xff]
  %v631 = vld [vmem:[%s1 + $0x8] sm:$0xff]
  %v632 = vld [vmem:[%s1 + $0x10] sm:$0xf]
  %v633 = vld [vmem:[%s1 + $0x14] sm:$0xff]
  %v634 = vld [vmem:[%s1 + $0x1c] sm:$0xff]
  %v635 = vld [vmem:[%s1 + $0x24] sm:$0xf]
  %v636 = vld [vmem:[%s1 + $0x28] sm:$0xff]
  %v637 = vld [vmem:[%s1 + $0x30] sm:$0xff]
  %v638 = vld [vmem:[%s1 + $0x38] sm:$0xf]
  %v639 = vld [vmem:[%s1 + $0x3c] sm:$0xff]
  %v640 = vld [vmem:[%s1 + $0x44] sm:$0xff]
  %v641 = vld [vmem:[%s1 + $0x4c] sm:$0xf]
  %v642 = vld [vmem:[%s1 + $0x50] sm:$0xff]
  %v643 = vld [vmem:[%s1 + $0x58] sm:$0xff]
  %v644 = vld [vmem:[%s1 + $0x60] sm:$0xf]
  %v645 = vld [vmem:[%s1 + $0x64] sm:$0xff]
  %v646 = vld [vmem:[%s1 + $0x6c] sm:$0xff]
  %v647 = vld [vmem:[%s1 + $0x74] sm:$0xf]
  %v648 = vld [vmem:[%s1 + $0x78] sm:$0xff]
  %v649 = vld [vmem:[%s1 + $0x80] sm:$0xff]
  %v650 = vld [vmem:[%s1 + $0x88] sm:$0xf]
  %v651 = vld [vmem:[%s1 + $0x8c] sm:$0xff]
  %v652 = vld [vmem:[%s1 + $0x94] sm:$0xff]
  %v653 = vld [vmem:[%s1 + $0x9c] sm:$0xf]
  %v654 = vld [vmem:[%s1 + $0xa0] sm:$0xff]
  %v655 = vld [vmem:[%s1 + $0xa8] sm:$0xff]
  %v656 = vld [vmem:[%s1 + $0xb0] sm:$0xf]
  %v657 = vld [vmem:[%s1 + $0xb4] sm:$0xff]
  %v658 = vld [vmem:[%s1 + $0xbc] sm:$0xff]
  %v659 = vld [vmem:[%s1 + $0xc4] sm:$0xf]
  %v660 = vld [vmem:[%s1 + $0xc8] sm:$0xff]
  %v661 = vld [vmem:[%s1 + $0xd0] sm:$0xff]
  %v662 = vld [vmem:[%s1 + $0xd8] sm:$0xf]
  %v663 = vld [vmem:[%s1 + $0xdc] sm:$0xff]
  %v664 = vld [vmem:[%s1 + $0xe4] sm:$0xff]
  %v665 = vld [vmem:[%s1 + $0xec] sm:$0xf]
  %v666 = vld [vmem:[%s1 + $0xf0] sm:$0xff]
  %v667 = vld [vmem:[%s1 + $0xf8] sm:$0xff]
  %v668 = vld [vmem:[%s1 + $0x100] sm:$0xf]
  %v669 = vld [vmem:[%s1 + $0x104] sm:$0xff]
  %v670 = vld [vmem:[%s1 + $0x10c] sm:$0xff]
  %v671 = vld [vmem:[%s1 + $0x114] sm:$0xf]
  %v672 = vld [vmem:[%s1 + $0x118] sm:$0xff]
  %v673 = vld [vmem:[%s1 + $0x120] sm:$0xff]
  %v674 = vld [vmem:[%s1 + $0x128] sm:$0xf]
  %v675 = vld [vmem:[%s1 + $0x12c] sm:$0xff]
  %v676 = vld [vmem:[%s1 + $0x134] sm:$0xff]
  %v677 = vld [vmem:[%s1 + $0x13c] sm:$0xf]
  %v678 = vld [vmem:[#allocation2] sm:$0xf]
  %v679 = vld [vmem:[#allocation2 + $0x4] sm:$0xf]
  %v680 = vld [vmem:[#allocation2 + $0x8] sm:$0xf]
  %v681 = vld [vmem:[#allocation2 + $0xc] sm:$0xf]
  %v682 = vld [vmem:[#allocation2 + $0x10] sm:$0xf]
  %v683 = vld [vmem:[#allocation2 + $0x14] sm:$0xf]
  %v684 = vld [vmem:[#allocation2 + $0x18] sm:$0xf]
  %v685 = vld [vmem:[#allocation2 + $0x1c] sm:$0xf]
  %v686 = vld [vmem:[#allocation2 + $0x20] sm:$0xf]
  %v687 = vld [vmem:[#allocation2 + $0x24] sm:$0xf]
  %v688 = vld [vmem:[#allocation2 + $0x28] sm:$0xf]
  %v689 = vld [vmem:[#allocation2 + $0x2c] sm:$0xf]
  %v690 = vld [vmem:[#allocation2 + $0x30] sm:$0xf]
  %v691 = vld [vmem:[#allocation2 + $0x34] sm:$0xf]
  %v692 = vld [vmem:[#allocation2 + $0x38] sm:$0xf]
  %v693 = vld [vmem:[#allocation2 + $0x3c] sm:$0xf]
  %v694 = vld [vmem:[#allocation2 + $0x40] sm:$0xf]
  %v695 = vld [vmem:[#allocation2 + $0x44] sm:$0xf]
  %v696 = vld [vmem:[#allocation2 + $0x48] sm:$0xf]
  %v697 = vld [vmem:[#allocation2 + $0x4c] sm:$0xf]
  %v698 = vld [vmem:[#allocation2 + $0x50] sm:$0xf]
  %v699 = vld [vmem:[#allocation2 + $0x54] sm:$0xf]
  %v700 = vld [vmem:[#allocation2 + $0x58] sm:$0xf]
  %v701 = vld [vmem:[#allocation2 + $0x5c] sm:$0xf]
  %v702 = vld [vmem:[#allocation2 + $0x60] sm:$0xf]
  %v703 = vld [vmem:[#allocation2 + $0x64] sm:$0xf]
  %v704 = vld [vmem:[#allocation2 + $0x68] sm:$0xf]
  %v705 = vld [vmem:[#allocation2 + $0x6c] sm:$0xf]
  %v706 = vld [vmem:[#allocation2 + $0x70] sm:$0xf]
  %v707 = vld [vmem:[#allocation2 + $0x74] sm:$0xf]
  %v708 = vld [vmem:[#allocation2 + $0x78] sm:$0xf]
  %v709 = vld [vmem:[#allocation2 + $0x7c] sm:$0xf]
  %v710 = vld [vmem:[#allocation2 + $0x80] sm:$0xf]
  %v711 = vld [vmem:[#allocation2 + $0x84] sm:$0xf]
  %v712 = vld [vmem:[#allocation2 + $0x88] sm:$0xf]
  %v713 = vld [vmem:[#allocation2 + $0x8c] sm:$0xf]
  %v714 = vld [vmem:[#allocation2 + $0x90] sm:$0xf]
  %v715 = vld [vmem:[#allocation2 + $0x94] sm:$0xf]
  %v716 = vld [vmem:[#allocation2 + $0x98] sm:$0xf]
  %v717 = vld [vmem:[#allocation2 + $0x9c] sm:$0xf]
  %v718 = vld [vmem:[#allocation2 + $0xa0] sm:$0xf]
  %v719 = vld [vmem:[#allocation2 + $0xa4] sm:$0xf]
  %v720 = vld [vmem:[#allocation2 + $0xa8] sm:$0xf]
  %v721 = vld [vmem:[#allocation2 + $0xac] sm:$0xf]
  %v722 = vld [vmem:[#allocation2 + $0xb0] sm:$0xf]
  %v723 = vld [vmem:[#allocation2 + $0xb4] sm:$0xf]
  %v724 = vld [vmem:[#allocation2 + $0xb8] sm:$0xf]
  %v725 = vld [vmem:[#allocation2 + $0xbc] sm:$0xf]
  %v726 = vld [vmem:[#allocation2 + $0xc0] sm:$0xf]
  %v727 = vld [vmem:[#allocation2 + $0xc4] sm:$0xf]
  %v728 = vld [vmem:[#allocation2 + $0xc8] sm:$0xf]
  %v729 = vld [vmem:[#allocation2 + $0xcc] sm:$0xf]
  %v730 = vld [vmem:[#allocation2 + $0xd0] sm:$0xf]
  %v731 = vld [vmem:[#allocation2 + $0xd4] sm:$0xf]
  %v732 = vld [vmem:[#allocation2 + $0xd8] sm:$0xf]
  %v733 = vld [vmem:[#allocation2 + $0xdc] sm:$0xf]
  %v734 = vld [vmem:[#allocation2 + $0xe0] sm:$0xf]
  %v735 = vld [vmem:[#allocation2 + $0xe4] sm:$0xf]
  %v736 = vld [vmem:[#allocation2 + $0xe8] sm:$0xf]
  %v737 = vld [vmem:[#allocation2 + $0xec] sm:$0xf]
  %v738 = vld [vmem:[#allocation2 + $0xf0] sm:$0xf]
  %v739 = vld [vmem:[#allocation2 + $0xf4] sm:$0xf]
  %v740 = vld [vmem:[#allocation2 + $0xf8] sm:$0xf]
  %v741 = vld [vmem:[#allocation2 + $0xfc] sm:$0xf]
  %v742 = vld [vmem:[#allocation2 + $0x100] sm:$0xf]
  %v743 = vld [vmem:[#allocation2 + $0x104] sm:$0xf]
  %v744 = vld [vmem:[#allocation2 + $0x108] sm:$0xf]
  %v745 = vld [vmem:[#allocation2 + $0x10c] sm:$0xf]
  %v746 = vld [vmem:[#allocation2 + $0x110] sm:$0xf]
  %v747 = vld [vmem:[#allocation2 + $0x114] sm:$0xf]
  %v748 = vld [vmem:[#allocation2 + $0x118] sm:$0xf]
  %v749 = vld [vmem:[#allocation2 + $0x11c] sm:$0xf]
  %v798 = vunpack.c.l.b16 %v630
  %v799 = vunpack.c.h.b16 %v630
  %v800 = vunpack.c.l.b16 %v631
  %v801 = vunpack.c.h.b16 %v631
  %v802 = vunpack.c.l.b16 %v632
  %v803 = vunpack.c.l.b16 %v633
  %v804 = vunpack.c.h.b16 %v633
  %v805 = vunpack.c.l.b16 %v634
  %v806 = vunpack.c.h.b16 %v634
  %v807 = vunpack.c.l.b16 %v635
  %v808 = vunpack.c.l.b16 %v636
  %v809 = vunpack.c.h.b16 %v636
  %v810 = vunpack.c.l.b16 %v637
  %v811 = vunpack.c.h.b16 %v637
  %v812 = vunpack.c.l.b16 %v638
  %v813 = vunpack.c.l.b16 %v639
  %v814 = vunpack.c.h.b16 %v639
  %v815 = vunpack.c.l.b16 %v640
  %v816 = vunpack.c.h.b16 %v640
  %v817 = vunpack.c.l.b16 %v641
  %v818 = vunpack.c.l.b16 %v642
  %v819 = vunpack.c.h.b16 %v642
  %v820 = vunpack.c.l.b16 %v643
  %v821 = vunpack.c.h.b16 %v643
  %v822 = vunpack.c.l.b16 %v644
  %v823 = vunpack.c.l.b16 %v645
  %v824 = vunpack.c.h.b16 %v645
  %v825 = vunpack.c.l.b16 %v646
  %v826 = vunpack.c.h.b16 %v646
  %v827 = vunpack.c.l.b16 %v647
  %v828 = vunpack.c.l.b16 %v648
  %v829 = vunpack.c.h.b16 %v648
  %v830 = vunpack.c.l.b16 %v649
  %v831 = vunpack.c.h.b16 %v649
  %v832 = vunpack.c.l.b16 %v650
  %v833 = vunpack.c.l.b16 %v651
  %v834 = vunpack.c.h.b16 %v651
  %v835 = vunpack.c.l.b16 %v652
  %v836 = vunpack.c.h.b16 %v652
  %v837 = vunpack.c.l.b16 %v653
  %v838 = vunpack.c.l.b16 %v654
  %v839 = vunpack.c.h.b16 %v654
  %v840 = vunpack.c.l.b16 %v655
  %v841 = vunpack.c.h.b16 %v655
  %v842 = vunpack.c.l.b16 %v656
  %v843 = vunpack.c.l.b16 %v657
  %v844 = vunpack.c.h.b16 %v657
  %v845 = vunpack.c.l.b16 %v658
  %v846 = vunpack.c.h.b16 %v658
  %v847 = vunpack.c.l.b16 %v659
  %v848 = vunpack.c.l.b16 %v660
  %v849 = vunpack.c.h.b16 %v660
  %v850 = vunpack.c.l.b16 %v661
  %v851 = vunpack.c.h.b16 %v661
  %v852 = vunpack.c.l.b16 %v662
  %v853 = vunpack.c.l.b16 %v663
  %v854 = vunpack.c.h.b16 %v663
  %v855 = vunpack.c.l.b16 %v664
  %v856 = vunpack.c.h.b16 %v664
  %v857 = vunpack.c.l.b16 %v665
  %v858 = vunpack.c.l.b16 %v666
  %v859 = vunpack.c.h.b16 %v666
  %v860 = vunpack.c.l.b16 %v667
  %v861 = vunpack.c.h.b16 %v667
  %v862 = vunpack.c.l.b16 %v668
  %v863 = vunpack.c.l.b16 %v669
  %v864 = vunpack.c.h.b16 %v669
  %v865 = vunpack.c.l.b16 %v670
  %v866 = vunpack.c.h.b16 %v670
  %v867 = vunpack.c.l.b16 %v671
  %v868 = vunpack.c.l.b16 %v672
  %v869 = vunpack.c.h.b16 %v672
  %v870 = vunpack.c.l.b16 %v673
  %v871 = vunpack.c.h.b16 %v673
  %v872 = vunpack.c.l.b16 %v674
  %v873 = vunpack.c.l.b16 %v675
  %v874 = vunpack.c.h.b16 %v675
  %v875 = vunpack.c.l.b16 %v676
  %v876 = vunpack.c.h.b16 %v676
  %v877 = vunpack.c.l.b16 %v677
  %v878 = vpack.c.b16 %v803, %v798
  %v879 = vpack.c.b16 %v804, %v799
  %v880 = vpack.c.b16 %v805, %v800
  %v881 = vpack.c.b16 %v806, %v801
  %v882 = vpack.c.b16 %v807, %v802
  %v883 = vpack.c.b16 %v813, %v808
  %v884 = vpack.c.b16 %v814, %v809
  %v885 = vpack.c.b16 %v815, %v810
  %v886 = vpack.c.b16 %v816, %v811
  %v887 = vpack.c.b16 %v817, %v812
  %v888 = vpack.c.b16 %v823, %v818
  %v889 = vpack.c.b16 %v824, %v819
  %v890 = vpack.c.b16 %v825, %v820
  %v891 = vpack.c.b16 %v826, %v821
  %v892 = vpack.c.b16 %v827, %v822
  %v893 = vpack.c.b16 %v833, %v828
  %v894 = vpack.c.b16 %v834, %v829
  %v895 = vpack.c.b16 %v835, %v830
  %v896 = vpack.c.b16 %v836, %v831
  %v897 = vpack.c.b16 %v837, %v832
  %v898 = vpack.c.b16 %v843, %v838
  %v899 = vpack.c.b16 %v844, %v839
  %v900 = vpack.c.b16 %v845, %v840
  %v901 = vpack.c.b16 %v846, %v841
  %v902 = vpack.c.b16 %v847, %v842
  %v903 = vpack.c.b16 %v853, %v848
  %v904 = vpack.c.b16 %v854, %v849
  %v905 = vpack.c.b16 %v855, %v850
  %v906 = vpack.c.b16 %v856, %v851
  %v907 = vpack.c.b16 %v857, %v852
  %v908 = vpack.c.b16 %v863, %v858
  %v909 = vpack.c.b16 %v864, %v859
  %v910 = vpack.c.b16 %v865, %v860
  %v911 = vpack.c.b16 %v866, %v861
  %v912 = vpack.c.b16 %v867, %v862
  %v913 = vpack.c.b16 %v873, %v868
  %v914 = vpack.c.b16 %v874, %v869
  %v915 = vpack.c.b16 %v875, %v870
  %v916 = vpack.c.b16 %v876, %v871
  %v917 = vpack.c.b16 %v877, %v872
  %v1022 = vunpack.c.l.b16 %v678
  %v1023 = vunpack.c.l.b16 %v679
  %v1024 = vunpack.c.l.b16 %v680
  %v1025 = vunpack.c.l.b16 %v681
  %v1026 = vunpack.c.l.b16 %v682
  %v1027 = vunpack.c.l.b16 %v683
  %v1028 = vunpack.c.l.b16 %v684
  %v1029 = vunpack.c.l.b16 %v685
  %v1030 = vunpack.c.l.b16 %v686
  %v1031 = vunpack.c.l.b16 %v687
  %v1032 = vunpack.c.l.b16 %v688
  %v1033 = vunpack.c.l.b16 %v689
  %v1034 = vunpack.c.l.b16 %v690
  %v1035 = vunpack.c.l.b16 %v691
  %v1036 = vunpack.c.l.b16 %v692
  %v1037 = vunpack.c.l.b16 %v693
  %v1038 = vunpack.c.l.b16 %v694
  %v1039 = vunpack.c.l.b16 %v695
  %v1040 = vunpack.c.l.b16 %v696
  %v1041 = vunpack.c.l.b16 %v697
  %v1042 = vunpack.c.l.b16 %v698
  %v1043 = vunpack.c.l.b16 %v699
  %v1044 = vunpack.c.l.b16 %v700
  %v1045 = vunpack.c.l.b16 %v701
  %v1046 = vunpack.c.l.b16 %v702
  %v1047 = vunpack.c.l.b16 %v703
  %v1048 = vunpack.c.l.b16 %v704
  %v1049 = vunpack.c.l.b16 %v705
  %v1050 = vunpack.c.l.b16 %v706
  %v1051 = vunpack.c.l.b16 %v707
  %v1052 = vunpack.c.l.b16 %v708
  %v1053 = vunpack.c.l.b16 %v709
  %v1054 = vunpack.c.l.b16 %v710
  %v1055 = vunpack.c.l.b16 %v711
  %v1056 = vunpack.c.l.b16 %v712
  %v1057 = vunpack.c.l.b16 %v713
  %v1058 = vunpack.c.l.b16 %v714
  %v1059 = vunpack.c.l.b16 %v715
  %v1060 = vunpack.c.l.b16 %v716
  %v1061 = vunpack.c.l.b16 %v717
  %v1062 = vunpack.c.l.b16 %v718
  %v1063 = vunpack.c.l.b16 %v719
  %v1064 = vunpack.c.l.b16 %v720
  %v1065 = vunpack.c.l.b16 %v721
  %v1066 = vunpack.c.l.b16 %v722
  %v1067 = vunpack.c.l.b16 %v723
  %v1068 = vunpack.c.l.b16 %v724
  %v1069 = vunpack.c.l.b16 %v725
  %v1070 = vunpack.c.l.b16 %v726
  %v1071 = vunpack.c.l.b16 %v727
  %v1072 = vunpack.c.l.b16 %v728
  %v1073 = vunpack.c.l.b16 %v729
  %v1074 = vunpack.c.l.b16 %v730
  %v1075 = vunpack.c.l.b16 %v731
  %v1076 = vunpack.c.l.b16 %v732
  %v1077 = vunpack.c.l.b16 %v733
  %v1078 = vunpack.c.l.b16 %v734
  %v1079 = vunpack.c.l.b16 %v735
  %v1080 = vunpack.c.l.b16 %v736
  %v1081 = vunpack.c.l.b16 %v737
  %v1082 = vunpack.c.l.b16 %v738
  %v1083 = vunpack.c.l.b16 %v739
  %v1084 = vunpack.c.l.b16 %v740
  %v1085 = vunpack.c.l.b16 %v741
  %v1086 = vunpack.c.l.b16 %v742
  %v1087 = vunpack.c.l.b16 %v743
  %v1088 = vunpack.c.l.b16 %v744
  %v1089 = vunpack.c.l.b16 %v745
  %v1090 = vunpack.c.l.b16 %v746
  %v1091 = vunpack.c.l.b16 %v747
  %v1092 = vunpack.c.l.b16 %v748
  %v1093 = vunpack.c.l.b16 %v749
  %v1094 = vpack.c.b16 %v1023, %v1022
  %v1095 = vpack.c.b16 %v1025, %v1024
  %v1096 = vpack.c.b16 %v1027, %v1026
  %v1097 = vpack.c.b16 %v1029, %v1028
  %v1098 = vpack.c.b16 %v1031, %v1030
  %v1099 = vpack.c.b16 %v1033, %v1032
  %v1100 = vpack.c.b16 %v1035, %v1034
  %v1101 = vpack.c.b16 %v1037, %v1036
  %v1102 = vpack.c.b16 %v1039, %v1038
  %v1103 = vpack.c.b16 %v1041, %v1040
  %v1104 = vpack.c.b16 %v1043, %v1042
  %v1105 = vpack.c.b16 %v1045, %v1044
  %v1106 = vpack.c.b16 %v1047, %v1046
  %v1107 = vpack.c.b16 %v1049, %v1048
  %v1108 = vpack.c.b16 %v1051, %v1050
  %v1109 = vpack.c.b16 %v1053, %v1052
  %v1110 = vpack.c.b16 %v1055, %v1054
  %v1111 = vpack.c.b16 %v1057, %v1056
  %v1112 = vpack.c.b16 %v1059, %v1058
  %v1113 = vpack.c.b16 %v1061, %v1060
  %v1114 = vpack.c.b16 %v1063, %v1062
  %v1115 = vpack.c.b16 %v1065, %v1064
  %v1116 = vpack.c.b16 %v1067, %v1066
  %v1117 = vpack.c.b16 %v1069, %v1068
  %v1118 = vpack.c.b16 %v1071, %v1070
  %v1119 = vpack.c.b16 %v1073, %v1072
  %v1120 = vpack.c.b16 %v1075, %v1074
  %v1121 = vpack.c.b16 %v1077, %v1076
  %v1122 = vpack.c.b16 %v1079, %v1078
  %v1123 = vpack.c.b16 %v1081, %v1080
  %v1124 = vpack.c.b16 %v1083, %v1082
  %v1125 = vpack.c.b16 %v1085, %v1084
  %v1126 = vpack.c.b16 %v1087, %v1086
  %v1127 = vpack.c.b16 %v1089, %v1088
  %v1128 = vpack.c.b16 %v1091, %v1090
  %v1129 = vpack.c.b16 %v1093, %v1092
  %vm1166 = vcmask 523264
  %v1168 = vsel %vm1166, %v882, 0
  %v1171 = vsel %vm1166, %v887, 0
  %v1174 = vsel %vm1166, %v892, 0
  %v1177 = vsel %vm1166, %v897, 0
  %v1180 = vsel %vm1166, %v902, 0
  %v1183 = vsel %vm1166, %v907, 0
  %v1186 = vsel %vm1166, %v912, 0
  %v1189 = vsel %vm1166, %v917, 0
  %1191 = vmatprep.subr.bf16.mxu0 0
  %1192 = vmatpush1.bf16.msra.mxu0 %v1101
  %1193 = vmatprep.subr.bf16.mxu0 0
  %1194 = vmatpush1.bf16.msra.mxu0 %v1100
  %1195 = vmatprep.subr.bf16.mxu0 0
  %1196 = vmatpush1.bf16.msra.mxu0 %v1099
  %1197 = vmatprep.subr.bf16.mxu0 0
  %1198 = vmatpush1.bf16.msra.mxu0 %v1098
  %1199 = vmatprep.subr.bf16.mxu0 0
  %1200 = vmatpush1.bf16.msra.mxu0 %v1097
  %1201 = vmatprep.subr.bf16.mxu0 0
  %1202 = vmatpush1.bf16.msra.mxu0 %v1096
  %1203 = vmatprep.subr.bf16.mxu0 0
  %1204 = vmatpush1.bf16.msra.mxu0 %v1095
  %1205 = vmatprep.subr.bf16.mxu0 0
  %1206 = vmatpush1.bf16.msra.mxu0 %v1094
  %1207 = vmatprep.subr.bf16.mxu0 0
  %1208 = vmatpush2.bf16.msra.mxu0 %v1109
  %1209 = vmatprep.subr.bf16.mxu0 0
  %1210 = vmatpush2.bf16.msra.mxu0 %v1108
  %1211 = vmatprep.subr.bf16.mxu0 0
  %1212 = vmatpush2.bf16.msra.mxu0 %v1107
  %1213 = vmatprep.subr.bf16.mxu0 0
  %1214 = vmatpush2.bf16.msra.mxu0 %v1106
  %1215 = vmatprep.subr.bf16.mxu0 0
  %1216 = vmatpush2.bf16.msra.mxu0 %v1105
  %1217 = vmatprep.subr.bf16.mxu0 0
  %1218 = vmatpush2.bf16.msra.mxu0 %v1104
  %1219 = vmatprep.subr.bf16.mxu0 0
  %1220 = vmatpush2.bf16.msra.mxu0 %v1103
  %1221 = vmatprep.subr.bf16.mxu0 0
  %1222 = vmatpush2.bf16.msra.mxu0 %v1102
  %1223 = vmatprep.mubr.bf16.mxu0 %v879
  %1224 = vmatmul.mubr.bf16.gmra.mxu0 %v878
  %v1225 = vpop.f32.mrf.mxu0
  %v1226 = vadd.f32 0.0, %v1225
  %v1227 = vpop.f32.mrf.mxu0
  %v1228 = vpop.f32.mrf.mxu0
  %v1229 = vadd.f32 0.0, %v1228
  %v1230 = vpop.f32.mrf.mxu0
  %1231 = vmatprep.mubr.bf16.mxu0 %v884
  %1232 = vmatmul.mubr.bf16.gmra.mxu0 %v883
  %v1233 = vpop.f32.mrf.mxu0
  %v1234 = vadd.f32 0.0, %v1233
  %v1235 = vpop.f32.mrf.mxu0
  %v1236 = vpop.f32.mrf.mxu0
  %v1237 = vadd.f32 0.0, %v1236
  %v1238 = vpop.f32.mrf.mxu0
  %1239 = vmatprep.mubr.bf16.mxu0 %v889
  %1240 = vmatmul.mubr.bf16.gmra.mxu0 %v888
  %v1241 = vpop.f32.mrf.mxu0
  %v1242 = vadd.f32 0.0, %v1241
  %v1243 = vpop.f32.mrf.mxu0
  %v1244 = vpop.f32.mrf.mxu0
  %v1245 = vadd.f32 0.0, %v1244
  %v1246 = vpop.f32.mrf.mxu0
  %1247 = vmatprep.mubr.bf16.mxu0 %v894
  %1248 = vmatmul.mubr.bf16.gmra.mxu0 %v893
  %v1249 = vpop.f32.mrf.mxu0
  %v1250 = vadd.f32 0.0, %v1249
  %v1251 = vpop.f32.mrf.mxu0
  %v1252 = vpop.f32.mrf.mxu0
  %v1253 = vadd.f32 0.0, %v1252
  %v1254 = vpop.f32.mrf.mxu0
  %1255 = vmatprep.mubr.bf16.mxu0 %v899
  %1256 = vmatmul.mubr.bf16.gmra.mxu0 %v898
  %v1257 = vpop.f32.mrf.mxu0
  %v1258 = vadd.f32 0.0, %v1257
  %v1259 = vpop.f32.mrf.mxu0
  %v1260 = vpop.f32.mrf.mxu0
  %v1261 = vadd.f32 0.0, %v1260
  %v1262 = vpop.f32.mrf.mxu0
  %1263 = vmatprep.mubr.bf16.mxu0 %v904
  %1264 = vmatmul.mubr.bf16.gmra.mxu0 %v903
  %v1265 = vpop.f32.mrf.mxu0
  %v1266 = vadd.f32 0.0, %v1265
  %v1267 = vpop.f32.mrf.mxu0
  %v1268 = vpop.f32.mrf.mxu0
  %v1269 = vadd.f32 0.0, %v1268
  %v1270 = vpop.f32.mrf.mxu0
  %1271 = vmatprep.mubr.bf16.mxu0 %v909
  %1272 = vmatmul.mubr.bf16.gmra.mxu0 %v908
  %v1273 = vpop.f32.mrf.mxu0
  %v1274 = vadd.f32 0.0, %v1273
  %v1275 = vpop.f32.mrf.mxu0
  %v1276 = vpop.f32.mrf.mxu0
  %v1277 = vadd.f32 0.0, %v1276
  %v1278 = vpop.f32.mrf.mxu0
  %1279 = vmatprep.mubr.bf16.mxu0 %v914
  %1280 = vmatmul.mubr.bf16.gmra.mxu0 %v913
  %v1281 = vpop.f32.mrf.mxu0
  %v1282 = vadd.f32 0.0, %v1281
  %v1283 = vpop.f32.mrf.mxu0
  %v1284 = vpop.f32.mrf.mxu0
  %v1285 = vadd.f32 0.0, %v1284
  %v1286 = vpop.f32.mrf.mxu0
  %1287 = vdwg.mxu0
  %1288 = vmatprep.subr.bf16.mxu0 0
  %1289 = vmatpush1.bf16.msra.mxu0 %v1117
  %1290 = vmatprep.subr.bf16.mxu0 0
  %1291 = vmatpush1.bf16.msra.mxu0 %v1116
  %1292 = vmatprep.subr.bf16.mxu0 0
  %1293 = vmatpush1.bf16.msra.mxu0 %v1115
  %1294 = vmatprep.subr.bf16.mxu0 0
  %1295 = vmatpush1.bf16.msra.mxu0 %v1114
  %1296 = vmatprep.subr.bf16.mxu0 0
  %1297 = vmatpush1.bf16.msra.mxu0 %v1113
  %1298 = vmatprep.subr.bf16.mxu0 0
  %1299 = vmatpush1.bf16.msra.mxu0 %v1112
  %1300 = vmatprep.subr.bf16.mxu0 0
  %1301 = vmatpush1.bf16.msra.mxu0 %v1111
  %1302 = vmatprep.subr.bf16.mxu0 0
  %1303 = vmatpush1.bf16.msra.mxu0 %v1110
  %1304 = vmatprep.subr.bf16.mxu0 0
  %1305 = vmatpush2.bf16.msra.mxu0 %v1125
  %1306 = vmatprep.subr.bf16.mxu0 0
  %1307 = vmatpush2.bf16.msra.mxu0 %v1124
  %1308 = vmatprep.subr.bf16.mxu0 0
  %1309 = vmatpush2.bf16.msra.mxu0 %v1123
  %1310 = vmatprep.subr.bf16.mxu0 0
  %1311 = vmatpush2.bf16.msra.mxu0 %v1122
  %1312 = vmatprep.subr.bf16.mxu0 0
  %1313 = vmatpush2.bf16.msra.mxu0 %v1121
  %1314 = vmatprep.subr.bf16.mxu0 0
  %1315 = vmatpush2.bf16.msra.mxu0 %v1120
  %1316 = vmatprep.subr.bf16.mxu0 0
  %1317 = vmatpush2.bf16.msra.mxu0 %v1119
  %1318 = vmatprep.subr.bf16.mxu0 0
  %1319 = vmatpush2.bf16.msra.mxu0 %v1118
  %1320 = vmatprep.mubr.bf16.mxu0 %v881
  %1321 = vmatmul.mubr.bf16.gmra.mxu0 %v880
  %v1322 = vpop.f32.mrf.mxu0
  %v1323 = vadd.f32 %v1226, %v1322
  %v1324 = vpop.f32.mrf.mxu0
  %v1325 = vpop.f32.mrf.mxu0
  %v1326 = vadd.f32 %v1229, %v1325
  %v1327 = vpop.f32.mrf.mxu0
  %1328 = vmatprep.mubr.bf16.mxu0 %v886
  %1329 = vmatmul.mubr.bf16.gmra.mxu0 %v885
  %v1330 = vpop.f32.mrf.mxu0
  %v1331 = vadd.f32 %v1234, %v1330
  %v1332 = vpop.f32.mrf.mxu0
  %v1333 = vpop.f32.mrf.mxu0
  %v1334 = vadd.f32 %v1237, %v1333
  %v1335 = vpop.f32.mrf.mxu0
  %1336 = vmatprep.mubr.bf16.mxu0 %v891
  %1337 = vmatmul.mubr.bf16.gmra.mxu0 %v890
  %v1338 = vpop.f32.mrf.mxu0
  %v1339 = vadd.f32 %v1242, %v1338
  %v1340 = vpop.f32.mrf.mxu0
  %v1341 = vpop.f32.mrf.mxu0
  %v1342 = vadd.f32 %v1245, %v1341
  %v1343 = vpop.f32.mrf.mxu0
  %1344 = vmatprep.mubr.bf16.mxu0 %v896
  %1345 = vmatmul.mubr.bf16.gmra.mxu0 %v895
  %v1346 = vpop.f32.mrf.mxu0
  %v1347 = vadd.f32 %v1250, %v1346
  %v1348 = vpop.f32.mrf.mxu0
  %v1349 = vpop.f32.mrf.mxu0
  %v1350 = vadd.f32 %v1253, %v1349
  %v1351 = vpop.f32.mrf.mxu0
  %1352 = vmatprep.mubr.bf16.mxu0 %v901
  %1353 = vmatmul.mubr.bf16.gmra.mxu0 %v900
  %v1354 = vpop.f32.mrf.mxu0
  %v1355 = vadd.f32 %v1258, %v1354
  %v1356 = vpop.f32.mrf.mxu0
  %v1357 = vpop.f32.mrf.mxu0
  %v1358 = vadd.f32 %v1261, %v1357
  %v1359 = vpop.f32.mrf.mxu0
  %1360 = vmatprep.mubr.bf16.mxu0 %v906
  %1361 = vmatmul.mubr.bf16.gmra.mxu0 %v905
  %v1362 = vpop.f32.mrf.mxu0
  %v1363 = vadd.f32 %v1266, %v1362
  %v1364 = vpop.f32.mrf.mxu0
  %v1365 = vpop.f32.mrf.mxu0
  %v1366 = vadd.f32 %v1269, %v1365
  %v1367 = vpop.f32.mrf.mxu0
  %1368 = vmatprep.mubr.bf16.mxu0 %v911
  %1369 = vmatmul.mubr.bf16.gmra.mxu0 %v910
  %v1370 = vpop.f32.mrf.mxu0
  %v1371 = vadd.f32 %v1274, %v1370
  %v1372 = vpop.f32.mrf.mxu0
  %v1373 = vpop.f32.mrf.mxu0
  %v1374 = vadd.f32 %v1277, %v1373
  %v1375 = vpop.f32.mrf.mxu0
  %1376 = vmatprep.mubr.bf16.mxu0 %v916
  %1377 = vmatmul.mubr.bf16.gmra.mxu0 %v915
  %v1378 = vpop.f32.mrf.mxu0
  %v1379 = vadd.f32 %v1282, %v1378
  %v1380 = vpop.f32.mrf.mxu0
  %v1381 = vpop.f32.mrf.mxu0
  %v1382 = vadd.f32 %v1285, %v1381
  %v1383 = vpop.f32.mrf.mxu0
  %1384 = vdwg.mxu0
  %1385 = vmatprep.subr.bf16.mxu0 0
  %1386 = vmatpush1.bf16.msra.mxu0 0
  %1387 = vmatprep.subr.bf16.mxu0 0
  %1388 = vmatpush1.bf16.msra.mxu0 0
  %1389 = vmatprep.subr.bf16.mxu0 0
  %1390 = vmatpush1.bf16.msra.mxu0 0
  %1391 = vmatprep.subr.bf16.mxu0 0
  %1392 = vmatpush1.bf16.msra.mxu0 0
  %1393 = vmatprep.subr.bf16.mxu0 0
  %1394 = vmatpush1.bf16.msra.mxu0 %v1129
  %1395 = vmatprep.subr.bf16.mxu0 0
  %1396 = vmatpush1.bf16.msra.mxu0 %v1128
  %1397 = vmatprep.subr.bf16.mxu0 0
  %1398 = vmatpush1.bf16.msra.mxu0 %v1127
  %1399 = vmatprep.subr.bf16.mxu0 0
  %1400 = vmatpush1.bf16.msra.mxu0 %v1126
  %1401 = vmatprep.subr.bf16.mxu0 0
  %1402 = vmatpush2.bf16.msra.mxu0 0
  %1403 = vmatprep.subr.bf16.mxu0 0
  %1404 = vmatpush2.bf16.msra.mxu0 0
  %1405 = vmatprep.subr.bf16.mxu0 0
  %1406 = vmatpush2.bf16.msra.mxu0 0
  %1407 = vmatprep.subr.bf16.mxu0 0
  %1408 = vmatpush2.bf16.msra.mxu0 0
  %1409 = vmatprep.subr.bf16.mxu0 0
  %1410 = vmatpush2.bf16.msra.mxu0 0
  %1411 = vmatprep.subr.bf16.mxu0 0
  %1412 = vmatpush2.bf16.msra.mxu0 0
  %1413 = vmatprep.subr.bf16.mxu0 0
  %1414 = vmatpush2.bf16.msra.mxu0 0
  %1415 = vmatprep.subr.bf16.mxu0 0
  %1416 = vmatpush2.bf16.msra.mxu0 0
  %1417 = vmatprep.mubr.bf16.mxu0 0
  %1418 = vmatmul.mubr.bf16.gmra.mxu0 %v1168
  %v1419 = vpop.f32.mrf.mxu0
  %v1420 = vadd.f32 %v1323, %v1419
  %v1421 = vpop.f32.mrf.mxu0
  %v1422 = vpop.f32.mrf.mxu0
  %v1423 = vadd.f32 %v1326, %v1422
  %v1424 = vpop.f32.mrf.mxu0
  %1425 = vmatprep.mubr.bf16.mxu0 0
  %1426 = vmatmul.mubr.bf16.gmra.mxu0 %v1171
  %v1427 = vpop.f32.mrf.mxu0
  %v1428 = vadd.f32 %v1331, %v1427
  %v1429 = vpop.f32.mrf.mxu0
  %v1430 = vpop.f32.mrf.mxu0
  %v1431 = vadd.f32 %v1334, %v1430
  %v1432 = vpop.f32.mrf.mxu0
  %1433 = vmatprep.mubr.bf16.mxu0 0
  %1434 = vmatmul.mubr.bf16.gmra.mxu0 %v1174
  %v1435 = vpop.f32.mrf.mxu0
  %v1436 = vadd.f32 %v1339, %v1435
  %v1437 = vpop.f32.mrf.mxu0
  %v1438 = vpop.f32.mrf.mxu0
  %v1439 = vadd.f32 %v1342, %v1438
  %v1440 = vpop.f32.mrf.mxu0
  %1441 = vmatprep.mubr.bf16.mxu0 0
  %1442 = vmatmul.mubr.bf16.gmra.mxu0 %v1177
  %v1443 = vpop.f32.mrf.mxu0
  %v1444 = vadd.f32 %v1347, %v1443
  %v1445 = vpop.f32.mrf.mxu0
  %v1446 = vpop.f32.mrf.mxu0
  %v1447 = vadd.f32 %v1350, %v1446
  %v1448 = vpop.f32.mrf.mxu0
  %1449 = vmatprep.mubr.bf16.mxu0 0
  %1450 = vmatmul.mubr.bf16.gmra.mxu0 %v1180
  %v1451 = vpop.f32.mrf.mxu0
  %v1452 = vadd.f32 %v1355, %v1451
  %v1453 = vpop.f32.mrf.mxu0
  %v1454 = vpop.f32.mrf.mxu0
  %v1455 = vadd.f32 %v1358, %v1454
  %v1456 = vpop.f32.mrf.mxu0
  %1457 = vmatprep.mubr.bf16.mxu0 0
  %1458 = vmatmul.mubr.bf16.gmra.mxu0 %v1183
  %v1459 = vpop.f32.mrf.mxu0
  %v1460 = vadd.f32 %v1363, %v1459
  %v1461 = vpop.f32.mrf.mxu0
  %v1462 = vpop.f32.mrf.mxu0
  %v1463 = vadd.f32 %v1366, %v1462
  %v1464 = vpop.f32.mrf.mxu0
  %1465 = vmatprep.mubr.bf16.mxu0 0
  %1466 = vmatmul.mubr.bf16.gmra.mxu0 %v1186
  %v1467 = vpop.f32.mrf.mxu0
  %v1468 = vadd.f32 %v1371, %v1467
  %v1469 = vpop.f32.mrf.mxu0
  %v1470 = vpop.f32.mrf.mxu0
  %v1471 = vadd.f32 %v1374, %v1470
  %v1472 = vpop.f32.mrf.mxu0
  %1473 = vmatprep.mubr.bf16.mxu0 0
  %1474 = vmatmul.mubr.bf16.gmra.mxu0 %v1189
  %v1475 = vpop.f32.mrf.mxu0
  %v1476 = vadd.f32 %v1379, %v1475
  %v1477 = vpop.f32.mrf.mxu0
  %v1478 = vpop.f32.mrf.mxu0
  %v1479 = vadd.f32 %v1382, %v1478
  %v1480 = vpop.f32.mrf.mxu0
  %1481 = vdwg.mxu0
  %vm1482 = vcmask 261120
  %v1483 = vsel %vm1482, %v1420, 0.0
  %1484 = vadd.xlane.f32.xlu0 %v1483
  %v1485 = vpop.xlane.xlu0 %1484
  %v1486 = vsel %vm1482, %v1423, 0.0
  %1487 = vadd.xlane.f32.xlu0 %v1486
  %v1488 = vpop.xlane.xlu0 %1487
  %v1489 = vsel %vm1482, %v1428, 0.0
  %1490 = vadd.xlane.f32.xlu0 %v1489
  %v1491 = vpop.xlane.xlu0 %1490
  %v1492 = vsel %vm1482, %v1431, 0.0
  %1493 = vadd.xlane.f32.xlu0 %v1492
  %v1494 = vpop.xlane.xlu0 %1493
  %v1495 = vadd.f32 %v1485, 0.0
  %v1496 = vadd.f32 %v1488, 0.0
  %v1497 = vadd.f32 %v1491, 0.0
  %v1498 = vadd.f32 %v1494, 0.0
  %v1499 = vmul.f32 %v1420, %v1420
  %v1500 = vmul.f32 %v1423, %v1423
  %v1501 = vmul.f32 %v1428, %v1428
  %v1502 = vmul.f32 %v1431, %v1431
  %v1503 = vsel %vm1482, %v1499, 0.0
  %1504 = vadd.xlane.f32.xlu0 %v1503
  %v1505 = vpop.xlane.xlu0 %1504
  %v1506 = vsel %vm1482, %v1500, 0.0
  %1507 = vadd.xlane.f32.xlu0 %v1506
  %v1508 = vpop.xlane.xlu0 %1507
  %v1509 = vsel %vm1482, %v1501, 0.0
  %1510 = vadd.xlane.f32.xlu0 %v1509
  %v1511 = vpop.xlane.xlu0 %1510
  %v1512 = vsel %vm1482, %v1502, 0.0
  %1513 = vadd.xlane.f32.xlu0 %v1512
  %v1514 = vpop.xlane.xlu0 %1513
  %v1515 = vadd.f32 %v1505, 0.0
  %v1516 = vadd.f32 %v1508, 0.0
  %v1517 = vadd.f32 %v1511, 0.0
  %v1518 = vadd.f32 %v1514, 0.0
  %v1519 = vsel %vm1482, %v1436, 0.0
  %1520 = vadd.xlane.f32.xlu0 %v1519
  %v1521 = vpop.xlane.xlu0 %1520
  %v1522 = vsel %vm1482, %v1439, 0.0
  %1523 = vadd.xlane.f32.xlu0 %v1522
  %v1524 = vpop.xlane.xlu0 %1523
  %v1525 = vsel %vm1482, %v1444, 0.0
  %1526 = vadd.xlane.f32.xlu0 %v1525
  %v1527 = vpop.xlane.xlu0 %1526
  %v1528 = vsel %vm1482, %v1447, 0.0
  %1529 = vadd.xlane.f32.xlu0 %v1528
  %v1530 = vpop.xlane.xlu0 %1529
  %v1531 = vadd.f32 %v1495, %v1521
  %v1532 = vadd.f32 %v1496, %v1524
  %v1533 = vadd.f32 %v1497, %v1527
  %v1534 = vadd.f32 %v1498, %v1530
  %v1535 = vmul.f32 %v1436, %v1436
  %v1536 = vmul.f32 %v1439, %v1439
  %v1537 = vmul.f32 %v1444, %v1444
  %v1538 = vmul.f32 %v1447, %v1447
  %v1539 = vsel %vm1482, %v1535, 0.0
  %1540 = vadd.xlane.f32.xlu0 %v1539
  %v1541 = vpop.xlane.xlu0 %1540
  %v1542 = vsel %vm1482, %v1536, 0.0
  %1543 = vadd.xlane.f32.xlu0 %v1542
  %v1544 = vpop.xlane.xlu0 %1543
  %v1545 = vsel %vm1482, %v1537, 0.0
  %1546 = vadd.xlane.f32.xlu0 %v1545
  %v1547 = vpop.xlane.xlu0 %1546
  %v1548 = vsel %vm1482, %v1538, 0.0
  %1549 = vadd.xlane.f32.xlu0 %v1548
  %v1550 = vpop.xlane.xlu0 %1549
  %v1551 = vadd.f32 %v1515, %v1541
  %v1552 = vadd.f32 %v1516, %v1544
  %v1553 = vadd.f32 %v1517, %v1547
  %v1554 = vadd.f32 %v1518, %v1550
  %v1555 = vsel %vm1482, %v1452, 0.0
  %1556 = vadd.xlane.f32.xlu0 %v1555
  %v1557 = vpop.xlane.xlu0 %1556
  %v1558 = vsel %vm1482, %v1455, 0.0
  %1559 = vadd.xlane.f32.xlu0 %v1558
  %v1560 = vpop.xlane.xlu0 %1559
  %v1561 = vsel %vm1482, %v1460, 0.0
  %1562 = vadd.xlane.f32.xlu0 %v1561
  %v1563 = vpop.xlane.xlu0 %1562
  %v1564 = vsel %vm1482, %v1463, 0.0
  %1565 = vadd.xlane.f32.xlu0 %v1564
  %v1566 = vpop.xlane.xlu0 %1565
  %v1567 = vadd.f32 %v1531, %v1557
  %v1568 = vadd.f32 %v1532, %v1560
  %v1569 = vadd.f32 %v1533, %v1563
  %v1570 = vadd.f32 %v1534, %v1566
  %v1571 = vmul.f32 %v1452, %v1452
  %v1572 = vmul.f32 %v1455, %v1455
  %v1573 = vmul.f32 %v1460, %v1460
  %v1574 = vmul.f32 %v1463, %v1463
  %v1575 = vsel %vm1482, %v1571, 0.0
  %1576 = vadd.xlane.f32.xlu0 %v1575
  %v1577 = vpop.xlane.xlu0 %1576
  %v1578 = vsel %vm1482, %v1572, 0.0
  %1579 = vadd.xlane.f32.xlu0 %v1578
  %v1580 = vpop.xlane.xlu0 %1579
  %v1581 = vsel %vm1482, %v1573, 0.0
  %1582 = vadd.xlane.f32.xlu0 %v1581
  %v1583 = vpop.xlane.xlu0 %1582
  %v1584 = vsel %vm1482, %v1574, 0.0
  %1585 = vadd.xlane.f32.xlu0 %v1584
  %v1586 = vpop.xlane.xlu0 %1585
  %v1587 = vadd.f32 %v1551, %v1577
  %v1588 = vadd.f32 %v1552, %v1580
  %v1589 = vadd.f32 %v1553, %v1583
  %v1590 = vadd.f32 %v1554, %v1586
  %v1591 = vsel %vm1482, %v1468, 0.0
  %1592 = vadd.xlane.f32.xlu0 %v1591
  %v1593 = vpop.xlane.xlu0 %1592
  %v1594 = vsel %vm1482, %v1471, 0.0
  %1595 = vadd.xlane.f32.xlu0 %v1594
  %v1596 = vpop.xlane.xlu0 %1595
  %v1597 = vsel %vm1482, %v1476, 0.0
  %1598 = vadd.xlane.f32.xlu0 %v1597
  %v1599 = vpop.xlane.xlu0 %1598
  %v1600 = vsel %vm1482, %v1479, 0.0
  %1601 = vadd.xlane.f32.xlu0 %v1600
  %v1602 = vpop.xlane.xlu0 %1601
  %v1603 = vadd.f32 %v1567, %v1593
  %v1604 = vadd.f32 %v1568, %v1596
  %v1605 = vadd.f32 %v1569, %v1599
  %v1606 = vadd.f32 %v1570, %v1602
  %v1607 = vmul.f32 %v1468, %v1468
  %v1608 = vmul.f32 %v1471, %v1471
  %v1609 = vmul.f32 %v1476, %v1476
  %v1610 = vmul.f32 %v1479, %v1479
  %v1611 = vsel %vm1482, %v1607, 0.0
  %1612 = vadd.xlane.f32.xlu0 %v1611
  %v1613 = vpop.xlane.xlu0 %1612
  %v1614 = vsel %vm1482, %v1608, 0.0
  %1615 = vadd.xlane.f32.xlu0 %v1614
  %v1616 = vpop.xlane.xlu0 %1615
  %v1617 = vsel %vm1482, %v1609, 0.0
  %1618 = vadd.xlane.f32.xlu0 %v1617
  %v1619 = vpop.xlane.xlu0 %1618
  %v1620 = vsel %vm1482, %v1610, 0.0
  %1621 = vadd.xlane.f32.xlu0 %v1620
  %v1622 = vpop.xlane.xlu0 %1621
  %v1623 = vadd.f32 %v1587, %v1613
  %v1624 = vadd.f32 %v1588, %v1616
  %v1625 = vadd.f32 %v1589, %v1619
  %v1626 = vadd.f32 %v1590, %v1622
  %v1627 = vmul.f32 %v1603, 0.0078125
  %v1628 = vmul.f32 %v1604, 0.0078125
  %v1629 = vmul.f32 %v1605, 0.0078125
  %v1630 = vmul.f32 %v1606, 0.0078125
  %v1631 = vmul.f32 %v1623, 0.0078125
  %v1632 = vmul.f32 %v1624, 0.0078125
  %v1633 = vmul.f32 %v1625, 0.0078125
  %v1634 = vmul.f32 %v1626, 0.0078125
  %v1635 = vmul.f32 %v1627, %v1627
  %v1636 = vmul.f32 %v1628, %v1628
  %v1637 = vmul.f32 %v1629, %v1629
  %v1638 = vmul.f32 %v1630, %v1630
  %v1639 = vsub.f32 %v1631, %v1635
  %v1640 = vsub.f32 %v1632, %v1636
  %v1641 = vsub.f32 %v1633, %v1637
  %v1642 = vsub.f32 %v1634, %v1638
  %v1643 = vmax.f32 %v1639, 0.0
  %v1644 = vmax.f32 %v1640, 0.0
  %v1645 = vmax.f32 %v1641, 0.0
  %v1646 = vmax.f32 %v1642, 0.0
  %v1647 = vld [vmem:[%s3] sm:$0xff]
  %v1648 = vld [vmem:[%s3 + $0x8] sm:$0xff]
  %v1649 = vld [vmem:[%s3 + $0x10] sm:$0xff]
  %v1650 = vld [vmem:[%s3 + $0x18] sm:$0xff]
  %v1651 = vadd.f32 %v1643, 1e-05
  %v1652 = vadd.f32 %v1644, 1e-05
  %v1653 = vadd.f32 %v1645, 1e-05
  %v1654 = vadd.f32 %v1646, 1e-05
  %v1655 = vrsqrt.pop %v1651
  %v1656 = vrsqrt.pop %v1652
  %v1657 = vrsqrt.pop %v1653
  %v1658 = vrsqrt.pop %v1654
  %v1659 = vmul.f32 %v1647, %v1655
  %v1660 = vmul.f32 %v1648, %v1656
  %v1661 = vmul.f32 %v1649, %v1657
  %v1662 = vmul.f32 %v1650, %v1658
  %v1663 = vld [vmem:[%s4] sm:$0xff]
  %v1664 = vld [vmem:[%s4 + $0x8] sm:$0xff]
  %v1665 = vld [vmem:[%s4 + $0x10] sm:$0xff]
  %v1666 = vld [vmem:[%s4 + $0x18] sm:$0xff]
  %v1667 = vmul.f32 %v1627, %v1659
  %v1668 = vmul.f32 %v1628, %v1660
  %v1669 = vmul.f32 %v1629, %v1661
  %v1670 = vmul.f32 %v1630, %v1662
  %v1671 = vsub.f32 %v1663, %v1667
  %v1672 = vsub.f32 %v1664, %v1668
  %v1673 = vsub.f32 %v1665, %v1669
  %v1674 = vsub.f32 %v1666, %v1670
  %1676 = vset.pattern.permute.xlu0 0
  %1677 = vperm.xlu0 %1676, %v1659
  %v1678 = vpop.permute.xlu0 %1677
  %1681 = vset.pattern.permute.xlu0 0
  %1682 = vperm.xlu0 %1681, %v1660
  %v1683 = vpop.permute.xlu0 %1682
  %1686 = vset.pattern.permute.xlu0 0
  %1687 = vperm.xlu0 %1686, %v1661
  %v1688 = vpop.permute.xlu0 %1687
  %1691 = vset.pattern.permute.xlu0 0
  %1692 = vperm.xlu0 %1691, %v1662
  %v1693 = vpop.permute.xlu0 %1692
  %v1695 = vmul.f32 %v1420, %v1678
  %v1696 = vmul.f32 %v1423, %v1683
  %v1697 = vmul.f32 %v1428, %v1688
  %v1698 = vmul.f32 %v1431, %v1693
  %1700 = vset.pattern.permute.xlu0 0
  %1701 = vperm.xlu0 %1700, %v1671
  %v1702 = vpop.permute.xlu0 %1701
  %1705 = vset.pattern.permute.xlu0 0
  %1706 = vperm.xlu0 %1705, %v1672
  %v1707 = vpop.permute.xlu0 %1706
  %1710 = vset.pattern.permute.xlu0 0
  %1711 = vperm.xlu0 %1710, %v1673
  %v1712 = vpop.permute.xlu0 %1711
  %1715 = vset.pattern.permute.xlu0 0
  %1716 = vperm.xlu0 %1715, %v1674
  %v1717 = vpop.permute.xlu0 %1716
  %v1719 = vadd.f32 %v1695, %v1702
  %v1720 = vadd.f32 %v1696, %v1707
  %v1721 = vadd.f32 %v1697, %v1712
  %v1722 = vadd.f32 %v1698, %v1717
  %v1723 = vmax.f32 %v1719, 0.0
  %v1724 = vmax.f32 %v1720, 0.0
  %v1725 = vmax.f32 %v1721, 0.0
  %v1726 = vmax.f32 %v1722, 0.0
  %v1727 = vpack.c.bf16 %v1724, %v1723
  %v1728 = vpack.c.bf16 %v1726, %v1725
  %v1731 = vunpack.c.l.b16 %v1727
  %v1732 = vunpack.c.h.b16 %v1727
  %v1733 = vunpack.c.l.b16 %v1728
  %v1734 = vunpack.c.h.b16 %v1728
  %v1735 = vpack.c.b16 %v1731, %v1731
  %v1736 = vpack.c.b16 %v1732, %v1732
  %v1737 = vpack.c.b16 %v1733, %v1733
  %v1738 = vpack.c.b16 %v1734, %v1734
  %vm1743 = vcmask 257024
  %1744 = vst.msk [vmem:[%s5] sm:$0xf] %vm1743, %v1735
  %1745 = vst.msk [vmem:[%s5 + $0x4] sm:$0xf] %vm1743, %v1736
  %1746 = vst.msk [vmem:[%s5 + $0x8] sm:$0xf] %vm1743, %v1737
  %1747 = vst.msk [vmem:[%s5 + $0xc] sm:$0xf] %vm1743, %v1738
  %v1748 = vmul.f32 %v1436, %v1678
  %v1749 = vmul.f32 %v1439, %v1683
  %v1750 = vmul.f32 %v1444, %v1688
  %v1751 = vmul.f32 %v1447, %v1693
  %v1752 = vadd.f32 %v1748, %v1702
  %v1753 = vadd.f32 %v1749, %v1707
  %v1754 = vadd.f32 %v1750, %v1712
  %v1755 = vadd.f32 %v1751, %v1717
  %v1756 = vmax.f32 %v1752, 0.0
  %v1757 = vmax.f32 %v1753, 0.0
  %v1758 = vmax.f32 %v1754, 0.0
  %v1759 = vmax.f32 %v1755, 0.0
  %v1760 = vpack.c.bf16 %v1757, %v1756
  %v1761 = vpack.c.bf16 %v1759, %v1758
  %v1764 = vunpack.c.l.b16 %v1760
  %v1765 = vunpack.c.h.b16 %v1760
  %v1766 = vunpack.c.l.b16 %v1761
  %v1767 = vunpack.c.h.b16 %v1761
  %v1768 = vpack.c.b16 %v1764, %v1764
  %v1769 = vpack.c.b16 %v1765, %v1765
  %v1770 = vpack.c.b16 %v1766, %v1766
  %v1771 = vpack.c.b16 %v1767, %v1767
  %s1776 = scalar_lea.vmem %s5, 16
  %1777 = vst.msk [vmem:[%s1776] sm:$0xf] %vm1743, %v1768
  %1778 = vst.msk [vmem:[%s1776 + $0x4] sm:$0xf] %vm1743, %v1769
  %1779 = vst.msk [vmem:[%s1776 + $0x8] sm:$0xf] %vm1743, %v1770
  %1780 = vst.msk [vmem:[%s1776 + $0xc] sm:$0xf] %vm1743, %v1771
  %v1781 = vmul.f32 %v1452, %v1678
  %v1782 = vmul.f32 %v1455, %v1683
  %v1783 = vmul.f32 %v1460, %v1688
  %v1784 = vmul.f32 %v1463, %v1693
  %v1785 = vadd.f32 %v1781, %v1702
  %v1786 = vadd.f32 %v1782, %v1707
  %v1787 = vadd.f32 %v1783, %v1712
  %v1788 = vadd.f32 %v1784, %v1717
  %v1789 = vmax.f32 %v1785, 0.0
  %v1790 = vmax.f32 %v1786, 0.0
  %v1791 = vmax.f32 %v1787, 0.0
  %v1792 = vmax.f32 %v1788, 0.0
  %v1793 = vpack.c.bf16 %v1790, %v1789
  %v1794 = vpack.c.bf16 %v1792, %v1791
  %v1797 = vunpack.c.l.b16 %v1793
  %v1798 = vunpack.c.h.b16 %v1793
  %v1799 = vunpack.c.l.b16 %v1794
  %v1800 = vunpack.c.h.b16 %v1794
  %v1801 = vpack.c.b16 %v1797, %v1797
  %v1802 = vpack.c.b16 %v1798, %v1798
  %v1803 = vpack.c.b16 %v1799, %v1799
  %v1804 = vpack.c.b16 %v1800, %v1800
  %s1809 = scalar_lea.vmem %s5, 32
  %1810 = vst.msk [vmem:[%s1809] sm:$0xf] %vm1743, %v1801
  %1811 = vst.msk [vmem:[%s1809 + $0x4] sm:$0xf] %vm1743, %v1802
  %1812 = vst.msk [vmem:[%s1809 + $0x8] sm:$0xf] %vm1743, %v1803
  %1813 = vst.msk [vmem:[%s1809 + $0xc] sm:$0xf] %vm1743, %v1804
  %v1814 = vmul.f32 %v1468, %v1678
  %v1815 = vmul.f32 %v1471, %v1683
  %v1816 = vmul.f32 %v1476, %v1688
  %v1817 = vmul.f32 %v1479, %v1693
  %v1818 = vadd.f32 %v1814, %v1702
  %v1819 = vadd.f32 %v1815, %v1707
  %v1820 = vadd.f32 %v1816, %v1712
  %v1821 = vadd.f32 %v1817, %v1717
  %v1822 = vmax.f32 %v1818, 0.0
  %v1823 = vmax.f32 %v1819, 0.0
  %v1824 = vmax.f32 %v1820, 0.0
  %v1825 = vmax.f32 %v1821, 0.0
  %v1826 = vpack.c.bf16 %v1823, %v1822
  %v1827 = vpack.c.bf16 %v1825, %v1824
  %v1830 = vunpack.c.l.b16 %v1826
  %v1831 = vunpack.c.h.b16 %v1826
  %v1832 = vunpack.c.l.b16 %v1827
  %v1833 = vunpack.c.h.b16 %v1827
  %v1834 = vpack.c.b16 %v1830, %v1830
  %v1835 = vpack.c.b16 %v1831, %v1831
  %v1836 = vpack.c.b16 %v1832, %v1832
  %v1837 = vpack.c.b16 %v1833, %v1833
  %s1842 = scalar_lea.vmem %s5, 48
  %1843 = vst.msk [vmem:[%s1842] sm:$0xf] %vm1743, %v1834
  %1844 = vst.msk [vmem:[%s1842 + $0x4] sm:$0xf] %vm1743, %v1835
  %1845 = vst.msk [vmem:[%s1842 + $0x8] sm:$0xf] %vm1743, %v1836
  %1846 = vst.msk [vmem:[%s1842 + $0xc] sm:$0xf] %vm1743, %v1837
  // Predicated region
  $region26: #{gan_generator.6} parent=0 // pred_check
    _
  $region27: #{gan_generator.6} parent=0 // pred_check_branch
    %1848 = sbr.rel (0) target = $region29
  $region28: #{gan_generator.6} parent=0 // pred_region
    _
  $region29: #{gan_generator.6} parent=0 // pred_fallthru
    _
  // Predicated region
  $region30: #{gan_generator.6} parent=0 // pred_check
    _
  $region31: #{gan_generator.6} parent=0 // pred_check_branch
    %1850 = sbr.rel (0) target = $region33
  $region32: #{gan_generator.6} parent=0 // pred_region
    _
  $region33: #{gan_generator.6} parent=0 // pred_fallthru
    _

// kernel: gan_generator.7
$region0: #{gan_generator.7}
  #allocation0 [shape = 'u32[]', space=smem, size = 0x4, offset = 0x4, fixed_abs, tag = 'smem constant byte address 0x4 - core index']
  #allocation1 [shape = 'u32[144,128]{1,0:T(1,128)}', space=vmem, size = 0x12000, scoped, tag = 'internal scratch']
  #allocation2 [shape = 'bf16[288,128]{1,0:T(8,128)(2,1)}', space=vmem, size = 0x12000, scoped, tag = 'scratch operand']
  %s0 = inlined_call_operand.vmem [shape: bf16[32,146], index: 0, kind: input, shape index: {}]
  %s1 = inlined_call_operand.hbm [shape: bf16[1,64,288], index: 1, kind: input, shape index: {}]
  %s2 = inlined_call_operand.vmem [shape: bf16[9,1,128], index: 2, kind: input, shape index: {}]
  %s3 = inlined_call_operand.vmem [shape: f32[1,16,1], index: 3, kind: input, shape index: {}]
  %s4 = inlined_call_operand.vmem [shape: f32[1,16,1], index: 4, kind: input, shape index: {}]
  %s5 = inlined_call_operand.vmem [shape: bf16[1,4,16,128], index: 5, kind: output, shape index: {}]
  %s6 = sld [smem:[#allocation0]]
  $region38: #{gan_generator.7} parent=0
    _
  %s8 = ssub.s32 1, %s6
  %s9 = scalar_select 0, %s8, %s6
  $region1: #{gan_generator.7} parent=0
    #allocation3 [shape = 'u8[49152]{0}', space=vmem, size = 0xc000, scoped, tag = 'input window, operand 1, single buffered']
    #allocation4 [shape = 's32[1]{0}', space=sflag, size = 0x4, scoped, tag = 'scoped memory for gan_generator.7']
    %10 = vsyncpa [#allocation4], 0
    // Predicated region
    $region2: #{gan_generator.7} parent=1 // pred_check
      _
    $region3: #{gan_generator.7} parent=1 // pred_check_branch
      %12 = sbr.rel (0) target = $region5
    $region4: #{gan_generator.7} parent=1 // pred_region
      _
    $region5: #{gan_generator.7} parent=1 // pred_fallthru
      _
    // Predicated region
    $region6: #{gan_generator.7} parent=1 // pred_check
      _
    $region7: #{gan_generator.7} parent=1 // pred_check_branch
      %14 = sbr.rel (0) target = $region9
    $region8: #{gan_generator.7} parent=1 // pred_region
      %s16 = ssub.s32 1536, 1536
      %17 = vsyncadd [#allocation4], %s16
      %s18 = sshll.u32 [#allocation3], 4
      %s19 = int_to_ptr.vmem [resolvable:$true] %s18
      %24 = dma.hbm_to_vmem [thread:$0]  %s1, 1536, %s19, [#allocation4], 192, 192, 12
    $region9: #{gan_generator.7} parent=1 // pred_fallthru
      _
    // Predicated region
    $region10: #{gan_generator.7} parent=1 // pred_check
      _
    $region11: #{gan_generator.7} parent=1 // pred_check_branch
      %26 = sbr.rel (0) target = $region13
    $region12: #{gan_generator.7} parent=1 // pred_region
      _
    $region13: #{gan_generator.7} parent=1 // pred_fallthru
      _
    // Predicated region
    $region14: #{gan_generator.7} parent=1 // pred_check
      _
    $region15: #{gan_generator.7} parent=1 // pred_check_branch
      %28 = sbr.rel (0) target = $region17
    $region16: #{gan_generator.7} parent=1 // pred_region
      _
    $region17: #{gan_generator.7} parent=1 // pred_fallthru
      _
    // Predicated region
    $region18: #{gan_generator.7} parent=1 // pred_check
      _
    $region19: #{gan_generator.7} parent=1 // pred_check_branch
      %30 = sbr.rel (0) target = $region21
    $region20: #{gan_generator.7} parent=1 // pred_region
      _
    $region21: #{gan_generator.7} parent=1 // pred_fallthru
      _
    // Predicated region
    $region22: #{gan_generator.7} parent=1 // pred_check
      _
    $region23: #{gan_generator.7} parent=1 // pred_check_branch
      %32 = sbr.rel (0) target = $region25
    $region24: #{gan_generator.7} parent=1 // pred_region
      %33 = dma.done [#allocation4], 1536
    $region25: #{gan_generator.7} parent=1 // pred_fallthru
      _
    %p35 = scmp.eq.s32.totalorder 0, 0
    // Predicated region
    $region26: #{gan_generator.7} parent=1 // pred_check
      %p36 = pneg %p35
    $region27: #{gan_generator.7} parent=1 // pred_check_branch
      %38 = sbr.rel (%p36) target = $region29
    $region28: #{gan_generator.7} parent=1 // pred_region
      %v39 = vld [vmem:[%s0] sm:$0xf]
      %v40 = vld [vmem:[%s0 + $0x8] sm:$0xf]
      %v41 = vld [vmem:[%s0 + $0x10] sm:$0xf]
      %v42 = vld [vmem:[%s0 + $0x18] sm:$0xf]
      %v43 = vld [vmem:[%s2] sm:$0x1]
      %v45 = vpack.i.b16 %v43, %v43
      %v47 = vlaneseq
      %v48 = vshrl.u32 %v47, 7
      %v49 = vsub.s32 0, %v48
      %v50 = vrot.slane %v45, %v49
      %v52 = vunpack.c.l.b16 %v50
      %v53 = vpack.c.b16 %v52, %v52
      %v55 = vmul.bf16 %v39, %v53
      %v56 = vmul.bf16 %v40, %v53
      %v57 = vmul.bf16 %v41, %v53
      %v58 = vmul.bf16 %v42, %v53
      %59 = vst [vmem:[#allocation2] sm:$0xf] %v55
      %60 = vst [vmem:[#allocation2 + $0x4] sm:$0xf] %v56
      %61 = vst [vmem:[#allocation2 + $0x8] sm:$0xf] %v57
      %62 = vst [vmem:[#allocation2 + $0xc] sm:$0xf] %v58
      %v63 = vld [vmem:[%s0] sm:$0xff]
      %v64 = vld [vmem:[%s0 + $0x8] sm:$0xff]
      %v65 = vld [vmem:[%s0 + $0x10] sm:$0xff]
      %v66 = vld [vmem:[%s0 + $0x18] sm:$0xff]
      %s67 = scalar_lea.vmem %s2, 1
      %v68 = vld [vmem:[%s67] sm:$0x1]
      %v70 = vpack.i.b16 %v68, %v68
      %v72 = vlaneseq
      %v73 = vshrl.u32 %v72, 7
      %v74 = vsub.s32 0, %v73
      %v75 = vrot.slane %v70, %v74
      %v77 = vunpack.c.l.b16 %v75
      %v78 = vpack.c.b16 %v77, %v77
      %79 = vrot.lane.b32.xlu0 %v78, 1
      %v80 = vpop.permute.xlu0 %79
      %v81 = vrot.slane %v80, 4
      %vm82 = vcmask 7168
      %v83 = vsel %vm82, %v81, %v80
      %v85 = vmul.bf16 %v63, %v83
      %v86 = vmul.bf16 %v64, %v83
      %v87 = vmul.bf16 %v65, %v83
      %v88 = vmul.bf16 %v66, %v83
      %93 = vrot.lane.b32.xlu0 %v85, 127
      %v94 = vpop.permute.xlu0 %93
      %95 = vrot.lane.b32.xlu0 %v86, 127
      %v96 = vpop.permute.xlu0 %95
      %97 = vrot.lane.b32.xlu0 %v87, 127
      %v98 = vpop.permute.xlu0 %97
      %99 = vrot.lane.b32.xlu0 %v88, 127
      %v100 = vpop.permute.xlu0 %99
      %v101 = vrot.slane %v94, 4
      %v102 = vrot.slane %v96, 4
      %v103 = vrot.slane %v98, 4
      %v104 = vrot.slane %v100, 4
      %vm105 = vcmask 1039360
      %v106 = vsel %vm105, %v94, %v101
      %v107 = vsel %vm105, %v96, %v102
      %v108 = vsel %vm105, %v98, %v103
      %v109 = vsel %vm105, %v100, %v104
      %114 = vst [vmem:[#allocation2 + $0x10] sm:$0xf] %v106
      %115 = vst [vmem:[#allocation2 + $0x14] sm:$0xf] %v107
      %116 = vst [vmem:[#allocation2 + $0x18] sm:$0xf] %v108
      %117 = vst [vmem:[#allocation2 + $0x1c] sm:$0xf] %v109
      %v118 = vld [vmem:[%s0] sm:$0xff]
      %v119 = vld [vmem:[%s0 + $0x8] sm:$0xff]
      %v120 = vld [vmem:[%s0 + $0x10] sm:$0xff]
      %v121 = vld [vmem:[%s0 + $0x18] sm:$0xff]
      %s122 = scalar_lea.vmem %s2, 2
      %v123 = vld [vmem:[%s122] sm:$0x1]
      %v125 = vpack.i.b16 %v123, %v123
      %v127 = vlaneseq
      %v128 = vshrl.u32 %v127, 7
      %v129 = vsub.s32 0, %v128
      %v130 = vrot.slane %v125, %v129
      %v132 = vunpack.c.l.b16 %v130
      %v133 = vpack.c.b16 %v132, %v132
      %134 = vrot.lane.b32.xlu0 %v133, 2
      %v135 = vpop.permute.xlu0 %134
      %v136 = vrot.slane %v135, 4
      %vm137 = vcmask 15360
      %v138 = vsel %vm137, %v136, %v135
      %v140 = vmul.bf16 %v118, %v138
      %v141 = vmul.bf16 %v119, %v138
      %v142 = vmul.bf16 %v120, %v138
      %v143 = vmul.bf16 %v121, %v138
      %148 = vrot.lane.b32.xlu0 %v140, 126
      %v149 = vpop.permute.xlu0 %148
      %150 = vrot.lane.b32.xlu0 %v141, 126
      %v151 = vpop.permute.xlu0 %150
      %152 = vrot.lane.b32.xlu0 %v142, 126
      %v153 = vpop.permute.xlu0 %152
      %154 = vrot.lane.b32.xlu0 %v143, 126
      %v155 = vpop.permute.xlu0 %154
      %v156 = vrot.slane %v149, 4
      %v157 = vrot.slane %v151, 4
      %v158 = vrot.slane %v153, 4
      %v159 = vrot.slane %v155, 4
      %vm160 = vcmask 1031168
      %v161 = vsel %vm160, %v149, %v156
      %v162 = vsel %vm160, %v151, %v157
      %v163 = vsel %vm160, %v153, %v158
      %v164 = vsel %vm160, %v155, %v159
      %169 = vst [vmem:[#allocation2 + $0x20] sm:$0xf] %v161
      %170 = vst [vmem:[#allocation2 + $0x24] sm:$0xf] %v162
      %171 = vst [vmem:[#allocation2 + $0x28] sm:$0xf] %v163
      %172 = vst [vmem:[#allocation2 + $0x2c] sm:$0xf] %v164
      %v173 = vld [vmem:[%s0] sm:$0xff]
      %v174 = vld [vmem:[%s0 + $0x8] sm:$0xff]
      %v175 = vld [vmem:[%s0 + $0x10] sm:$0xff]
      %v176 = vld [vmem:[%s0 + $0x18] sm:$0xff]
      %s177 = scalar_lea.vmem %s2, 3
      %v178 = vld [vmem:[%s177] sm:$0x1]
      %v180 = vpack.i.b16 %v178, %v178
      %v182 = vlaneseq
      %v183 = vshrl.u32 %v182, 7
      %v184 = vsub.s32 0, %v183
      %v185 = vrot.slane %v180, %v184
      %v187 = vunpack.c.l.b16 %v185
      %v188 = vpack.c.b16 %v187, %v187
      %189 = vrot.lane.b32.xlu0 %v188, 8
      %v190 = vpop.permute.xlu0 %189
      %v191 = vrot.slane %v190, 4
      %vm192 = vcmask 64512
      %v193 = vsel %vm192, %v191, %v190
      %v195 = vmul.bf16 %v173, %v193
      %v196 = vmul.bf16 %v174, %v193
      %v197 = vmul.bf16 %v175, %v193
      %v198 = vmul.bf16 %v176, %v193
      %203 = vrot.lane.b32.xlu0 %v195, 120
      %v204 = vpop.permute.xlu0 %203
      %205 = vrot.lane.b32.xlu0 %v196, 120
      %v206 = vpop.permute.xlu0 %205
      %207 = vrot.lane.b32.xlu0 %v197, 120
      %v208 = vpop.permute.xlu0 %207
      %209 = vrot.lane.b32.xlu0 %v198, 120
      %v210 = vpop.permute.xlu0 %209
      %v211 = vrot.slane %v204, 4
      %v212 = vrot.slane %v206, 4
      %v213 = vrot.slane %v208, 4
      %v214 = vrot.slane %v210, 4
      %vm215 = vcmask 982016
      %v216 = vsel %vm215, %v204, %v211
      %v217 = vsel %vm215, %v206, %v212
      %v218 = vsel %vm215, %v208, %v213
      %v219 = vsel %vm215, %v210, %v214
      %224 = vst [vmem:[#allocation2 + $0x30] sm:$0xf] %v216
      %225 = vst [vmem:[#allocation2 + $0x34] sm:$0xf] %v217
      %226 = vst [vmem:[#allocation2 + $0x38] sm:$0xf] %v218
      %227 = vst [vmem:[#allocation2 + $0x3c] sm:$0xf] %v219
      %v228 = vld [vmem:[%s0] sm:$0xff]
      %v229 = vld [vmem:[%s0 + $0x8] sm:$0xff]
      %v230 = vld [vmem:[%s0 + $0x10] sm:$0xff]
      %v231 = vld [vmem:[%s0 + $0x18] sm:$0xff]
      %s232 = scalar_lea.vmem %s2, 4
      %v233 = vld [vmem:[%s232] sm:$0x1]
      %v235 = vpack.i.b16 %v233, %v233
      %v237 = vlaneseq
      %v238 = vshrl.u32 %v237, 7
      %v239 = vsub.s32 0, %v238
      %v240 = vrot.slane %v235, %v239
      %v242 = vunpack.c.l.b16 %v240
      %v243 = vpack.c.b16 %v242, %v242
      %244 = vrot.lane.b32.xlu0 %v243, 9
      %v245 = vpop.permute.xlu0 %244
      %v246 = vrot.slane %v245, 4
      %vm247 = vcmask 72704
      %v248 = vsel %vm247, %v246, %v245
      %v250 = vmul.bf16 %v228, %v248
      %v251 = vmul.bf16 %v229, %v248
      %v252 = vmul.bf16 %v230, %v248
      %v253 = vmul.bf16 %v231, %v248
      %258 = vrot.lane.b32.xlu0 %v250, 119
      %v259 = vpop.permute.xlu0 %258
      %260 = vrot.lane.b32.xlu0 %v251, 119
      %v261 = vpop.permute.xlu0 %260
      %262 = vrot.lane.b32.xlu0 %v252, 119
      %v263 = vpop.permute.xlu0 %262
      %264 = vrot.lane.b32.xlu0 %v253, 119
      %v265 = vpop.permute.xlu0 %264
      %v266 = vrot.slane %v259, 4
      %v267 = vrot.slane %v261, 4
      %v268 = vrot.slane %v263, 4
      %v269 = vrot.slane %v265, 4
      %vm270 = vcmask 973824
      %v271 = vsel %vm270, %v259, %v266
      %v272 = vsel %vm270, %v261, %v267
      %v273 = vsel %vm270, %v263, %v268
      %v274 = vsel %vm270, %v265, %v269
      %279 = vst [vmem:[#allocation2 + $0x40] sm:$0xf] %v271
      %280 = vst [vmem:[#allocation2 + $0x44] sm:$0xf] %v272
      %281 = vst [vmem:[#allocation2 + $0x48] sm:$0xf] %v273
      %282 = vst [vmem:[#allocation2 + $0x4c] sm:$0xf] %v274
      %v283 = vld [vmem:[%s0] sm:$0xff]
      %v284 = vld [vmem:[%s0 + $0x8] sm:$0xff]
      %v285 = vld [vmem:[%s0 + $0x10] sm:$0xff]
      %v286 = vld [vmem:[%s0 + $0x18] sm:$0xff]
      %s287 = scalar_lea.vmem %s2, 5
      %v288 = vld [vmem:[%s287] sm:$0x1]
      %v290 = vpack.i.b16 %v288, %v288
      %v292 = vlaneseq
      %v293 = vshrl.u32 %v292, 7
      %v294 = vsub.s32 0, %v293
      %v295 = vrot.slane %v290, %v294
      %v297 = vunpack.c.l.b16 %v295
      %v298 = vpack.c.b16 %v297, %v297
      %299 = vrot.lane.b32.xlu0 %v298, 10
      %v300 = vpop.permute.xlu0 %299
      %v301 = vrot.slane %v300, 4
      %vm302 = vcmask 80896
      %v303 = vsel %vm302, %v301, %v300
      %v305 = vmul.bf16 %v283, %v303
      %v306 = vmul.bf16 %v284, %v303
      %v307 = vmul.bf16 %v285, %v303
      %v308 = vmul.bf16 %v286, %v303
      %313 = vrot.lane.b32.xlu0 %v305, 118
      %v314 = vpop.permute.xlu0 %313
      %315 = vrot.lane.b32.xlu0 %v306, 118
      %v316 = vpop.permute.xlu0 %315
      %317 = vrot.lane.b32.xlu0 %v307, 118
      %v318 = vpop.permute.xlu0 %317
      %319 = vrot.lane.b32.xlu0 %v308, 118
      %v320 = vpop.permute.xlu0 %319
      %v321 = vrot.slane %v314, 4
      %v322 = vrot.slane %v316, 4
      %v323 = vrot.slane %v318, 4
      %v324 = vrot.slane %v320, 4
      %vm325 = vcmask 965632
      %v326 = vsel %vm325, %v314, %v321
      %v327 = vsel %vm325, %v316, %v322
      %v328 = vsel %vm325, %v318, %v323
      %v329 = vsel %vm325, %v320, %v324
      %334 = vst [vmem:[#allocation2 + $0x50] sm:$0xf] %v326
      %335 = vst [vmem:[#allocation2 + $0x54] sm:$0xf] %v327
      %336 = vst [vmem:[#allocation2 + $0x58] sm:$0xf] %v328
      %337 = vst [vmem:[#allocation2 + $0x5c] sm:$0xf] %v329
      %v338 = vld [vmem:[%s0] sm:$0xff]
      %v339 = vld [vmem:[%s0 + $0x8] sm:$0xff]
      %v340 = vld [vmem:[%s0 + $0x10] sm:$0xff]
      %v341 = vld [vmem:[%s0 + $0x18] sm:$0xff]
      %s342 = scalar_lea.vmem %s2, 6
      %v343 = vld [vmem:[%s342] sm:$0x1]
      %v345 = vpack.i.b16 %v343, %v343
      %v347 = vlaneseq
      %v348 = vshrl.u32 %v347, 7
      %v349 = vsub.s32 0, %v348
      %v350 = vrot.slane %v345, %v349
      %v352 = vunpack.c.l.b16 %v350
      %v353 = vpack.c.b16 %v352, %v352
      %354 = vrot.lane.b32.xlu0 %v353, 16
      %v355 = vpop.permute.xlu0 %354
      %v356 = vrot.slane %v355, 4
      %vm357 = vcmask 130048
      %v358 = vsel %vm357, %v356, %v355
      %v360 = vmul.bf16 %v338, %v358
      %v361 = vmul.bf16 %v339, %v358
      %v362 = vmul.bf16 %v340, %v358
      %v363 = vmul.bf16 %v341, %v358
      %368 = vrot.lane.b32.xlu0 %v360, 112
      %v369 = vpop.permute.xlu0 %368
      %370 = vrot.lane.b32.xlu0 %v361, 112
      %v371 = vpop.permute.xlu0 %370
      %372 = vrot.lane.b32.xlu0 %v362, 112
      %v373 = vpop.permute.xlu0 %372
      %374 = vrot.lane.b32.xlu0 %v363, 112
      %v375 = vpop.permute.xlu0 %374
      %v376 = vrot.slane %v369, 4
      %v377 = vrot.slane %v371, 4
      %v378 = vrot.slane %v373, 4
      %v379 = vrot.slane %v375, 4
      %vm380 = vcmask 916480
      %v381 = vsel %vm380, %v369, %v376
      %v382 = vsel %vm380, %v371, %v377
      %v383 = vsel %vm380, %v373, %v378
      %v384 = vsel %vm380, %v375, %v379
      %389 = vst [vmem:[#allocation2 + $0x60] sm:$0xf] %v381
      %390 = vst [vmem:[#allocation2 + $0x64] sm:$0xf] %v382
      %391 = vst [vmem:[#allocation2 + $0x68] sm:$0xf] %v383
      %392 = vst [vmem:[#allocation2 + $0x6c] sm:$0xf] %v384
      %v393 = vld [vmem:[%s0] sm:$0xff]
      %v394 = vld [vmem:[%s0 + $0x8] sm:$0xff]
      %v395 = vld [vmem:[%s0 + $0x10] sm:$0xff]
      %v396 = vld [vmem:[%s0 + $0x18] sm:$0xff]
      %s397 = scalar_lea.vmem %s2, 7
      %v398 = vld [vmem:[%s397] sm:$0x1]
      %v400 = vpack.i.b16 %v398, %v398
      %v402 = vlaneseq
      %v403 = vshrl.u32 %v402, 7
      %v404 = vsub.s32 0, %v403
      %v405 = vrot.slane %v400, %v404
      %v407 = vunpack.c.l.b16 %v405
      %v408 = vpack.c.b16 %v407, %v407
      %409 = vrot.lane.b32.xlu0 %v408, 17
      %v410 = vpop.permute.xlu0 %409
      %v411 = vrot.slane %v410, 4
      %vm412 = vcmask 138240
      %v413 = vsel %vm412, %v411, %v410
      %v415 = vmul.bf16 %v393, %v413
      %v416 = vmul.bf16 %v394, %v413
      %v417 = vmul.bf16 %v395, %v413
      %v418 = vmul.bf16 %v396, %v413
      %423 = vrot.lane.b32.xlu0 %v415, 111
      %v424 = vpop.permute.xlu0 %423
      %425 = vrot.lane.b32.xlu0 %v416, 111
      %v426 = vpop.permute.xlu0 %425
      %427 = vrot.lane.b32.xlu0 %v417, 111
      %v428 = vpop.permute.xlu0 %427
      %429 = vrot.lane.b32.xlu0 %v418, 111
      %v430 = vpop.permute.xlu0 %429
      %v431 = vrot.slane %v424, 4
      %v432 = vrot.slane %v426, 4
      %v433 = vrot.slane %v428, 4
      %v434 = vrot.slane %v430, 4
      %vm435 = vcmask 908288
      %v436 = vsel %vm435, %v424, %v431
      %v437 = vsel %vm435, %v426, %v432
      %v438 = vsel %vm435, %v428, %v433
      %v439 = vsel %vm435, %v430, %v434
      %444 = vst [vmem:[#allocation2 + $0x70] sm:$0xf] %v436
      %445 = vst [vmem:[#allocation2 + $0x74] sm:$0xf] %v437
      %446 = vst [vmem:[#allocation2 + $0x78] sm:$0xf] %v438
      %447 = vst [vmem:[#allocation2 + $0x7c] sm:$0xf] %v439
      %v448 = vld [vmem:[%s0] sm:$0xff]
      %v449 = vld [vmem:[%s0 + $0x8] sm:$0xff]
      %v450 = vld [vmem:[%s0 + $0x10] sm:$0xff]
      %v451 = vld [vmem:[%s0 + $0x18] sm:$0xff]
      %s452 = scalar_lea.vmem %s2, 8
      %v453 = vld [vmem:[%s452] sm:$0x1]
      %v455 = vpack.i.b16 %v453, %v453
      %v457 = vlaneseq
      %v458 = vshrl.u32 %v457, 7
      %v459 = vsub.s32 0, %v458
      %v460 = vrot.slane %v455, %v459
      %v462 = vunpack.c.l.b16 %v460
      %v463 = vpack.c.b16 %v462, %v462
      %464 = vrot.lane.b32.xlu0 %v463, 18
      %v465 = vpop.permute.xlu0 %464
      %v466 = vrot.slane %v465, 4
      %vm467 = vcmask 146432
      %v468 = vsel %vm467, %v466, %v465
      %v470 = vmul.bf16 %v448, %v468
      %v471 = vmul.bf16 %v449, %v468
      %v472 = vmul.bf16 %v450, %v468
      %v473 = vmul.bf16 %v451, %v468
      %478 = vrot.lane.b32.xlu0 %v470, 110
      %v479 = vpop.permute.xlu0 %478
      %480 = vrot.lane.b32.xlu0 %v471, 110
      %v481 = vpop.permute.xlu0 %480
      %482 = vrot.lane.b32.xlu0 %v472, 110
      %v483 = vpop.permute.xlu0 %482
      %484 = vrot.lane.b32.xlu0 %v473, 110
      %v485 = vpop.permute.xlu0 %484
      %v486 = vrot.slane %v479, 4
      %v487 = vrot.slane %v481, 4
      %v488 = vrot.slane %v483, 4
      %v489 = vrot.slane %v485, 4
      %vm490 = vcmask 900096
      %v491 = vsel %vm490, %v479, %v486
      %v492 = vsel %vm490, %v481, %v487
      %v493 = vsel %vm490, %v483, %v488
      %v494 = vsel %vm490, %v485, %v489
      %499 = vst [vmem:[#allocation2 + $0x80] sm:$0xf] %v491
      %500 = vst [vmem:[#allocation2 + $0x84] sm:$0xf] %v492
      %501 = vst [vmem:[#allocation2 + $0x88] sm:$0xf] %v493
      %502 = vst [vmem:[#allocation2 + $0x8c] sm:$0xf] %v494
    $region29: #{gan_generator.7} parent=1 // pred_fallthru
      _
    %v503 = vld [vmem:[#allocation3] sm:$0xff]
    %v504 = vld [vmem:[#allocation3 + $0x8] sm:$0xf]
    %v505 = vld [vmem:[#allocation3 + $0xc] sm:$0xff]
    %v506 = vld [vmem:[#allocation3 + $0x14] sm:$0xf]
    %v507 = vld [vmem:[#allocation3 + $0x18] sm:$0xff]
    %v508 = vld [vmem:[#allocation3 + $0x20] sm:$0xf]
    %v509 = vld [vmem:[#allocation3 + $0x24] sm:$0xff]
    %v510 = vld [vmem:[#allocation3 + $0x2c] sm:$0xf]
    %v511 = vld [vmem:[#allocation3 + $0x30] sm:$0xff]
    %v512 = vld [vmem:[#allocation3 + $0x38] sm:$0xf]
    %v513 = vld [vmem:[#allocation3 + $0x3c] sm:$0xff]
    %v514 = vld [vmem:[#allocation3 + $0x44] sm:$0xf]
    %v515 = vld [vmem:[#allocation3 + $0x48] sm:$0xff]
    %v516 = vld [vmem:[#allocation3 + $0x50] sm:$0xf]
    %v517 = vld [vmem:[#allocation3 + $0x54] sm:$0xff]
    %v518 = vld [vmem:[#allocation3 + $0x5c] sm:$0xf]
    %v519 = vld [vmem:[#allocation2] sm:$0xf]
    %v520 = vld [vmem:[#allocation2 + $0x4] sm:$0xf]
    %v521 = vld [vmem:[#allocation2 + $0x8] sm:$0xf]
    %v522 = vld [vmem:[#allocation2 + $0xc] sm:$0xf]
    %v523 = vld [vmem:[#allocation2 + $0x10] sm:$0xf]
    %v524 = vld [vmem:[#allocation2 + $0x14] sm:$0xf]
    %v525 = vld [vmem:[#allocation2 + $0x18] sm:$0xf]
    %v526 = vld [vmem:[#allocation2 + $0x1c] sm:$0xf]
    %v527 = vld [vmem:[#allocation2 + $0x20] sm:$0xf]
    %v528 = vld [vmem:[#allocation2 + $0x24] sm:$0xf]
    %v529 = vld [vmem:[#allocation2 + $0x28] sm:$0xf]
    %v530 = vld [vmem:[#allocation2 + $0x2c] sm:$0xf]
    %v531 = vld [vmem:[#allocation2 + $0x30] sm:$0xf]
    %v532 = vld [vmem:[#allocation2 + $0x34] sm:$0xf]
    %v533 = vld [vmem:[#allocation2 + $0x38] sm:$0xf]
    %v534 = vld [vmem:[#allocation2 + $0x3c] sm:$0xf]
    %v535 = vld [vmem:[#allocation2 + $0x40] sm:$0xf]
    %v536 = vld [vmem:[#allocation2 + $0x44] sm:$0xf]
    %v537 = vld [vmem:[#allocation2 + $0x48] sm:$0xf]
    %v538 = vld [vmem:[#allocation2 + $0x4c] sm:$0xf]
    %v539 = vld [vmem:[#allocation2 + $0x50] sm:$0xf]
    %v540 = vld [vmem:[#allocation2 + $0x54] sm:$0xf]
    %v541 = vld [vmem:[#allocation2 + $0x58] sm:$0xf]
    %v542 = vld [vmem:[#allocation2 + $0x5c] sm:$0xf]
    %v543 = vld [vmem:[#allocation2 + $0x60] sm:$0xf]
    %v544 = vld [vmem:[#allocation2 + $0x64] sm:$0xf]
    %v545 = vld [vmem:[#allocation2 + $0x68] sm:$0xf]
    %v546 = vld [vmem:[#allocation2 + $0x6c] sm:$0xf]
    %v547 = vld [vmem:[#allocation2 + $0x70] sm:$0xf]
    %v548 = vld [vmem:[#allocation2 + $0x74] sm:$0xf]
    %v549 = vld [vmem:[#allocation2 + $0x78] sm:$0xf]
    %v550 = vld [vmem:[#allocation2 + $0x7c] sm:$0xf]
    %v551 = vld [vmem:[#allocation2 + $0x80] sm:$0xf]
    %v552 = vld [vmem:[#allocation2 + $0x84] sm:$0xf]
    %v553 = vld [vmem:[#allocation2 + $0x88] sm:$0xf]
    %v554 = vld [vmem:[#allocation2 + $0x8c] sm:$0xf]
    %v571 = vunpack.c.l.b16 %v503
    %v572 = vunpack.c.h.b16 %v503
    %v573 = vunpack.c.l.b16 %v504
    %v574 = vunpack.c.l.b16 %v505
    %v575 = vunpack.c.h.b16 %v505
    %v576 = vunpack.c.l.b16 %v506
    %v577 = vunpack.c.l.b16 %v507
    %v578 = vunpack.c.h.b16 %v507
    %v579 = vunpack.c.l.b16 %v508
    %v580 = vunpack.c.l.b16 %v509
    %v581 = vunpack.c.h.b16 %v509
    %v582 = vunpack.c.l.b16 %v510
    %v583 = vunpack.c.l.b16 %v511
    %v584 = vunpack.c.h.b16 %v511
    %v585 = vunpack.c.l.b16 %v512
    %v586 = vunpack.c.l.b16 %v513
    %v587 = vunpack.c.h.b16 %v513
    %v588 = vunpack.c.l.b16 %v514
    %v589 = vunpack.c.l.b16 %v515
    %v590 = vunpack.c.h.b16 %v515
    %v591 = vunpack.c.l.b16 %v516
    %v592 = vunpack.c.l.b16 %v517
    %v593 = vunpack.c.h.b16 %v517
    %v594 = vunpack.c.l.b16 %v518
    %v595 = vpack.c.b16 %v574, %v571
    %v596 = vpack.c.b16 %v575, %v572
    %v597 = vpack.c.b16 %v576, %v573
    %v598 = vpack.c.b16 %v580, %v577
    %v599 = vpack.c.b16 %v581, %v578
    %v600 = vpack.c.b16 %v582, %v579
    %v601 = vpack.c.b16 %v586, %v583
    %v602 = vpack.c.b16 %v587, %v584
    %v603 = vpack.c.b16 %v588, %v585
    %v604 = vpack.c.b16 %v592, %v589
    %v605 = vpack.c.b16 %v593, %v590
    %v606 = vpack.c.b16 %v594, %v591
    %v651 = vunpack.c.l.b16 %v519
    %v652 = vunpack.c.l.b16 %v520
    %v653 = vunpack.c.l.b16 %v521
    %v654 = vunpack.c.l.b16 %v522
    %v655 = vunpack.c.l.b16 %v523
    %v656 = vunpack.c.l.b16 %v524
    %v657 = vunpack.c.l.b16 %v525
    %v658 = vunpack.c.l.b16 %v526
    %v659 = vunpack.c.l.b16 %v527
    %v660 = vunpack.c.l.b16 %v528
    %v661 = vunpack.c.l.b16 %v529
    %v662 = vunpack.c.l.b16 %v530
    %v663 = vunpack.c.l.b16 %v531
    %v664 = vunpack.c.l.b16 %v532
    %v665 = vunpack.c.l.b16 %v533
    %v666 = vunpack.c.l.b16 %v534
    %v667 = vunpack.c.l.b16 %v535
    %v668 = vunpack.c.l.b16 %v536
    %v669 = vunpack.c.l.b16 %v537
    %v670 = vunpack.c.l.b16 %v538
    %v671 = vunpack.c.l.b16 %v539
    %v672 = vunpack.c.l.b16 %v540
    %v673 = vunpack.c.l.b16 %v541
    %v674 = vunpack.c.l.b16 %v542
    %v675 = vunpack.c.l.b16 %v543
    %v676 = vunpack.c.l.b16 %v544
    %v677 = vunpack.c.l.b16 %v545
    %v678 = vunpack.c.l.b16 %v546
    %v679 = vunpack.c.l.b16 %v547
    %v680 = vunpack.c.l.b16 %v548
    %v681 = vunpack.c.l.b16 %v549
    %v682 = vunpack.c.l.b16 %v550
    %v683 = vunpack.c.l.b16 %v551
    %v684 = vunpack.c.l.b16 %v552
    %v685 = vunpack.c.l.b16 %v553
    %v686 = vunpack.c.l.b16 %v554
    %v687 = vpack.c.b16 %v652, %v651
    %v688 = vpack.c.b16 %v654, %v653
    %v689 = vpack.c.b16 %v656, %v655
    %v690 = vpack.c.b16 %v658, %v657
    %v691 = vpack.c.b16 %v660, %v659
    %v692 = vpack.c.b16 %v662, %v661
    %v693 = vpack.c.b16 %v664, %v663
    %v694 = vpack.c.b16 %v666, %v665
    %v695 = vpack.c.b16 %v668, %v667
    %v696 = vpack.c.b16 %v670, %v669
    %v697 = vpack.c.b16 %v672, %v671
    %v698 = vpack.c.b16 %v674, %v673
    %v699 = vpack.c.b16 %v676, %v675
    %v700 = vpack.c.b16 %v678, %v677
    %v701 = vpack.c.b16 %v680, %v679
    %v702 = vpack.c.b16 %v682, %v681
    %v703 = vpack.c.b16 %v684, %v683
    %v704 = vpack.c.b16 %v686, %v685
    %vm723 = vcmask 261120
    %v725 = vsel %vm723, %v597, 0
    %v728 = vsel %vm723, %v600, 0
    %v731 = vsel %vm723, %v603, 0
    %v734 = vsel %vm723, %v606, 0
    %736 = vmatprep.subr.bf16.mxu0 0
    %737 = vmatpush1.bf16.msra.mxu0 %v694
    %738 = vmatprep.subr.bf16.mxu0 0
    %739 = vmatpush1.bf16.msra.mxu0 %v693
    %740 = vmatprep.subr.bf16.mxu0 0
    %741 = vmatpush1.bf16.msra.mxu0 %v692
    %742 = vmatprep.subr.bf16.mxu0 0
    %743 = vmatpush1.bf16.msra.mxu0 %v691
    %744 = vmatprep.subr.bf16.mxu0 0
    %745 = vmatpush1.bf16.msra.mxu0 %v690
    %746 = vmatprep.subr.bf16.mxu0 0
    %747 = vmatpush1.bf16.msra.mxu0 %v689
    %748 = vmatprep.subr.bf16.mxu0 0
    %749 = vmatpush1.bf16.msra.mxu0 %v688
    %750 = vmatprep.subr.bf16.mxu0 0
    %751 = vmatpush1.bf16.msra.mxu0 %v687
    %752 = vmatprep.subr.bf16.mxu0 0
    %753 = vmatpush2.bf16.msra.mxu0 %v702
    %754 = vmatprep.subr.bf16.mxu0 0
    %755 = vmatpush2.bf16.msra.mxu0 %v701
    %756 = vmatprep.subr.bf16.mxu0 0
    %757 = vmatpush2.bf16.msra.mxu0 %v700
    %758 = vmatprep.subr.bf16.mxu0 0
    %759 = vmatpush2.bf16.msra.mxu0 %v699
    %760 = vmatprep.subr.bf16.mxu0 0
    %761 = vmatpush2.bf16.msra.mxu0 %v698
    %762 = vmatprep.subr.bf16.mxu0 0
    %763 = vmatpush2.bf16.msra.mxu0 %v697
    %764 = vmatprep.subr.bf16.mxu0 0
    %765 = vmatpush2.bf16.msra.mxu0 %v696
    %766 = vmatprep.subr.bf16.mxu0 0
    %767 = vmatpush2.bf16.msra.mxu0 %v695
    %768 = vmatprep.mubr.bf16.mxu0 %v596
    %769 = vmatmul.mubr.bf16.gmra.mxu0 %v595
    %v770 = vpop.f32.mrf.mxu0
    %v771 = vadd.f32 0.0, %v770
    %v772 = vpop.f32.mrf.mxu0
    %v773 = vpop.f32.mrf.mxu0
    %v774 = vadd.f32 0.0, %v773
    %v775 = vpop.f32.mrf.mxu0
    %776 = vmatprep.mubr.bf16.mxu0 %v599
    %777 = vmatmul.mubr.bf16.gmra.mxu0 %v598
    %v778 = vpop.f32.mrf.mxu0
    %v779 = vadd.f32 0.0, %v778
    %v780 = vpop.f32.mrf.mxu0
    %v781 = vpop.f32.mrf.mxu0
    %v782 = vadd.f32 0.0, %v781
    %v783 = vpop.f32.mrf.mxu0
    %784 = vmatprep.mubr.bf16.mxu0 %v602
    %785 = vmatmul.mubr.bf16.gmra.mxu0 %v601
    %v786 = vpop.f32.mrf.mxu0
    %v787 = vadd.f32 0.0, %v786
    %v788 = vpop.f32.mrf.mxu0
    %v789 = vpop.f32.mrf.mxu0
    %v790 = vadd.f32 0.0, %v789
    %v791 = vpop.f32.mrf.mxu0
    %792 = vmatprep.mubr.bf16.mxu0 %v605
    %793 = vmatmul.mubr.bf16.gmra.mxu0 %v604
    %v794 = vpop.f32.mrf.mxu0
    %v795 = vadd.f32 0.0, %v794
    %v796 = vpop.f32.mrf.mxu0
    %v797 = vpop.f32.mrf.mxu0
    %v798 = vadd.f32 0.0, %v797
    %v799 = vpop.f32.mrf.mxu0
    %800 = vdwg.mxu0
    %801 = vmatprep.subr.bf16.mxu0 0
    %802 = vmatpush1.bf16.msra.mxu0 0
    %803 = vmatprep.subr.bf16.mxu0 0
    %804 = vmatpush1.bf16.msra.mxu0 0
    %805 = vmatprep.subr.bf16.mxu0 0
    %806 = vmatpush1.bf16.msra.mxu0 0
    %807 = vmatprep.subr.bf16.mxu0 0
    %808 = vmatpush1.bf16.msra.mxu0 0
    %809 = vmatprep.subr.bf16.mxu0 0
    %810 = vmatpush1.bf16.msra.mxu0 0
    %811 = vmatprep.subr.bf16.mxu0 0
    %812 = vmatpush1.bf16.msra.mxu0 0
    %813 = vmatprep.subr.bf16.mxu0 0
    %814 = vmatpush1.bf16.msra.mxu0 %v704
    %815 = vmatprep.subr.bf16.mxu0 0
    %816 = vmatpush1.bf16.msra.mxu0 %v703
    %817 = vmatprep.subr.bf16.mxu0 0
    %818 = vmatpush2.bf16.msra.mxu0 0
    %819 = vmatprep.subr.bf16.mxu0 0
    %820 = vmatpush2.bf16.msra.mxu0 0
    %821 = vmatprep.subr.bf16.mxu0 0
    %822 = vmatpush2.bf16.msra.mxu0 0
    %823 = vmatprep.subr.bf16.mxu0 0
    %824 = vmatpush2.bf16.msra.mxu0 0
    %825 = vmatprep.subr.bf16.mxu0 0
    %826 = vmatpush2.bf16.msra.mxu0 0
    %827 = vmatprep.subr.bf16.mxu0 0
    %828 = vmatpush2.bf16.msra.mxu0 0
    %829 = vmatprep.subr.bf16.mxu0 0
    %830 = vmatpush2.bf16.msra.mxu0 0
    %831 = vmatprep.subr.bf16.mxu0 0
    %832 = vmatpush2.bf16.msra.mxu0 0
    %833 = vmatprep.mubr.bf16.mxu0 0
    %834 = vmatmul.mubr.bf16.gmra.mxu0 %v725
    %v835 = vpop.f32.mrf.mxu0
    %v836 = vadd.f32 %v771, %v835
    %v837 = vpop.f32.mrf.mxu0
    %v838 = vpop.f32.mrf.mxu0
    %v839 = vadd.f32 %v774, %v838
    %v840 = vpop.f32.mrf.mxu0
    %841 = vmatprep.mubr.bf16.mxu0 0
    %842 = vmatmul.mubr.bf16.gmra.mxu0 %v728
    %v843 = vpop.f32.mrf.mxu0
    %v844 = vadd.f32 %v779, %v843
    %v845 = vpop.f32.mrf.mxu0
    %v846 = vpop.f32.mrf.mxu0
    %v847 = vadd.f32 %v782, %v846
    %v848 = vpop.f32.mrf.mxu0
    %849 = vmatprep.mubr.bf16.mxu0 0
    %850 = vmatmul.mubr.bf16.gmra.mxu0 %v731
    %v851 = vpop.f32.mrf.mxu0
    %v852 = vadd.f32 %v787, %v851
    %v853 = vpop.f32.mrf.mxu0
    %v854 = vpop.f32.mrf.mxu0
    %v855 = vadd.f32 %v790, %v854
    %v856 = vpop.f32.mrf.mxu0
    %857 = vmatprep.mubr.bf16.mxu0 0
    %858 = vmatmul.mubr.bf16.gmra.mxu0 %v734
    %v859 = vpop.f32.mrf.mxu0
    %v860 = vadd.f32 %v795, %v859
    %v861 = vpop.f32.mrf.mxu0
    %v862 = vpop.f32.mrf.mxu0
    %v863 = vadd.f32 %v798, %v862
    %v864 = vpop.f32.mrf.mxu0
    %865 = vdwg.mxu0
    %866 = vadd.xlane.f32.xlu0 %v836
    %v867 = vpop.xlane.xlu0 %866
    %868 = vadd.xlane.f32.xlu0 %v839
    %v869 = vpop.xlane.xlu0 %868
    %v870 = vadd.f32 %v867, 0.0
    %v871 = vadd.f32 %v869, 0.0
    %v872 = vmul.f32 %v836, %v836
    %v873 = vmul.f32 %v839, %v839
    %874 = vadd.xlane.f32.xlu0 %v872
    %v875 = vpop.xlane.xlu0 %874
    %876 = vadd.xlane.f32.xlu0 %v873
    %v877 = vpop.xlane.xlu0 %876
    %v878 = vadd.f32 %v875, 0.0
    %v879 = vadd.f32 %v877, 0.0
    %880 = vadd.xlane.f32.xlu0 %v844
    %v881 = vpop.xlane.xlu0 %880
    %882 = vadd.xlane.f32.xlu0 %v847
    %v883 = vpop.xlane.xlu0 %882
    %v884 = vadd.f32 %v870, %v881
    %v885 = vadd.f32 %v871, %v883
    %v886 = vmul.f32 %v844, %v844
    %v887 = vmul.f32 %v847, %v847
    %888 = vadd.xlane.f32.xlu0 %v886
    %v889 = vpop.xlane.xlu0 %888
    %890 = vadd.xlane.f32.xlu0 %v887
    %v891 = vpop.xlane.xlu0 %890
    %v892 = vadd.f32 %v878, %v889
    %v893 = vadd.f32 %v879, %v891
    %894 = vadd.xlane.f32.xlu0 %v852
    %v895 = vpop.xlane.xlu0 %894
    %896 = vadd.xlane.f32.xlu0 %v855
    %v897 = vpop.xlane.xlu0 %896
    %v898 = vadd.f32 %v884, %v895
    %v899 = vadd.f32 %v885, %v897
    %v900 = vmul.f32 %v852, %v852
    %v901 = vmul.f32 %v855, %v855
    %902 = vadd.xlane.f32.xlu0 %v900
    %v903 = vpop.xlane.xlu0 %902
    %904 = vadd.xlane.f32.xlu0 %v901
    %v905 = vpop.xlane.xlu0 %904
    %v906 = vadd.f32 %v892, %v903
    %v907 = vadd.f32 %v893, %v905
    %908 = vadd.xlane.f32.xlu0 %v860
    %v909 = vpop.xlane.xlu0 %908
    %910 = vadd.xlane.f32.xlu0 %v863
    %v911 = vpop.xlane.xlu0 %910
    %v912 = vadd.f32 %v898, %v909
    %v913 = vadd.f32 %v899, %v911
    %v914 = vmul.f32 %v860, %v860
    %v915 = vmul.f32 %v863, %v863
    %916 = vadd.xlane.f32.xlu0 %v914
    %v917 = vpop.xlane.xlu0 %916
    %918 = vadd.xlane.f32.xlu0 %v915
    %v919 = vpop.xlane.xlu0 %918
    %v920 = vadd.f32 %v906, %v917
    %v921 = vadd.f32 %v907, %v919
    %v922 = vmul.f32 %v912, 0.001953125
    %v923 = vmul.f32 %v913, 0.001953125
    %v924 = vmul.f32 %v920, 0.001953125
    %v925 = vmul.f32 %v921, 0.001953125
    %v926 = vmul.f32 %v922, %v922
    %v927 = vmul.f32 %v923, %v923
    %v928 = vsub.f32 %v924, %v926
    %v929 = vsub.f32 %v925, %v927
    %v930 = vmax.f32 %v928, 0.0
    %v931 = vmax.f32 %v929, 0.0
    %v932 = vld [vmem:[%s3] sm:$0xff]
    %v933 = vld [vmem:[%s3 + $0x8] sm:$0xff]
    %v934 = vadd.f32 %v930, 1e-05
    %v935 = vadd.f32 %v931, 1e-05
    %v936 = vrsqrt.pop %v934
    %v937 = vrsqrt.pop %v935
    %v938 = vmul.f32 %v932, %v936
    %v939 = vmul.f32 %v933, %v937
    %v940 = vld [vmem:[%s4] sm:$0xff]
    %v941 = vld [vmem:[%s4 + $0x8] sm:$0xff]
    %v942 = vmul.f32 %v922, %v938
    %v943 = vmul.f32 %v923, %v939
    %v944 = vsub.f32 %v940, %v942
    %v945 = vsub.f32 %v941, %v943
    %947 = vset.pattern.permute.xlu0 0
    %948 = vperm.xlu0 %947, %v938
    %v949 = vpop.permute.xlu0 %948
    %952 = vset.pattern.permute.xlu0 0
    %953 = vperm.xlu0 %952, %v939
    %v954 = vpop.permute.xlu0 %953
    %v956 = vmul.f32 %v836, %v949
    %v957 = vmul.f32 %v839, %v954
    %959 = vset.pattern.permute.xlu0 0
    %960 = vperm.xlu0 %959, %v944
    %v961 = vpop.permute.xlu0 %960
    %964 = vset.pattern.permute.xlu0 0
    %965 = vperm.xlu0 %964, %v945
    %v966 = vpop.permute.xlu0 %965
    %v968 = vadd.f32 %v956, %v961
    %v969 = vadd.f32 %v957, %v966
    %v970 = vmax.f32 %v968, 0.0
    %v971 = vmax.f32 %v969, 0.0
    %v972 = vpack.c.bf16 %v971, %v970
    %v974 = vunpack.c.l.b16 %v972
    %v975 = vunpack.c.h.b16 %v972
    %v976 = vpack.c.b16 %v974, %v974
    %v977 = vpack.c.b16 %v975, %v975
    %980 = vst [vmem:[%s5] sm:$0xf] %v976
    %981 = vst [vmem:[%s5 + $0x4] sm:$0xf] %v977
    %v982 = vmul.f32 %v844, %v949
    %v983 = vmul.f32 %v847, %v954
    %v984 = vadd.f32 %v982, %v961
    %v985 = vadd.f32 %v983, %v966
    %v986 = vmax.f32 %v984, 0.0
    %v987 = vmax.f32 %v985, 0.0
    %v988 = vpack.c.bf16 %v987, %v986
    %v990 = vunpack.c.l.b16 %v988
    %v991 = vunpack.c.h.b16 %v988
    %v992 = vpack.c.b16 %v990, %v990
    %v993 = vpack.c.b16 %v991, %v991
    %s996 = scalar_lea.vmem %s5, 8
    %997 = vst [vmem:[%s996] sm:$0xf] %v992
    %998 = vst [vmem:[%s996 + $0x4] sm:$0xf] %v993
    %v999 = vmul.f32 %v852, %v949
    %v1000 = vmul.f32 %v855, %v954
    %v1001 = vadd.f32 %v999, %v961
    %v1002 = vadd.f32 %v1000, %v966
    %v1003 = vmax.f32 %v1001, 0.0
    %v1004 = vmax.f32 %v1002, 0.0
    %v1005 = vpack.c.bf16 %v1004, %v1003
    %v1007 = vunpack.c.l.b16 %v1005
    %v1008 = vunpack.c.h.b16 %v1005
    %v1009 = vpack.c.b16 %v1007, %v1007
    %v1010 = vpack.c.b16 %v1008, %v1008
    %s1013 = scalar_lea.vmem %s5, 16
    %1014 = vst [vmem:[%s1013] sm:$0xf] %v1009
    %1015 = vst [vmem:[%s1013 + $0x4] sm:$0xf] %v1010
    %v1016 = vmul.f32 %v860, %v949
    %v1017 = vmul.f32 %v863, %v954
    %v1018 = vadd.f32 %v1016, %v961
    %v1019 = vadd.f32 %v1017, %v966
    %v1020 = vmax.f32 %v1018, 0.0
    %v1021 = vmax.f32 %v1019, 0.0
    %v1022 = vpack.c.bf16 %v1021, %v1020
    %v1024 = vunpack.c.l.b16 %v1022
    %v1025 = vunpack.c.h.b16 %v1022
    %v1026 = vpack.c.b16 %v1024, %v1024
    %v1027 = vpack.c.b16 %v1025, %v1025
    %s1030 = scalar_lea.vmem %s5, 24
    %1031 = vst [vmem:[%s1030] sm:$0xf] %v1026
    %1032 = vst [vmem:[%s1030 + $0x4] sm:$0xf] %v1027
    // Predicated region
    $region30: #{gan_generator.7} parent=1 // pred_check
      _
    $region31: #{gan_generator.7} parent=1 // pred_check_branch
      %1034 = sbr.rel (0) target = $region33
    $region32: #{gan_generator.7} parent=1 // pred_region
      _
    $region33: #{gan_generator.7} parent=1 // pred_fallthru
      _
    // Predicated region
    $region34: #{gan_generator.7} parent=1 // pred_check
      _
    $region35: #{gan_generator.7} parent=1 // pred_check_branch
      %1036 = sbr.rel (0) target = $region37
    $region36: #{gan_generator.7} parent=1 // pred_region
      _
    $region37: #{gan_generator.7} parent=1 // pred_fallthru
      _
    %1037 = vsyncpa [#allocation4], 1

// kernel: gan_generator.8
$region0: #{gan_generator.8}
  #allocation0 [shape = 'u32[]', space=smem, size = 0x4, offset = 0x4, fixed_abs, tag = 'smem constant byte address 0x4 - core index']
  #allocation1 [shape = 'u32[144,128]{1,0:T(1,128)}', space=vmem, size = 0x12000, scoped, tag = 'internal scratch']
  #allocation2 [shape = 'bf16[144,512]{1,0:T(8,128)(2,1)}', space=vmem, size = 0x24000, scoped, tag = 'scratch operand']
  %s0 = inlined_call_operand.vmem [shape: bf16[16,546], index: 0, kind: input, shape index: {}]
  %s1 = inlined_call_operand.hbm [shape: bf16[1,32,144], index: 1, kind: input, shape index: {}]
  %s2 = inlined_call_operand.vmem [shape: bf16[9,1,512], index: 2, kind: input, shape index: {}]
  %s3 = inlined_call_operand.vmem [shape: f32[1,8,1], index: 3, kind: input, shape index: {}]
  %s4 = inlined_call_operand.vmem [shape: f32[1,8,1], index: 4, kind: input, shape index: {}]
  %s5 = inlined_call_operand.vmem [shape: bf16[1,4,8,512], index: 5, kind: output, shape index: {}]
  %s6 = sld [smem:[#allocation0]]
  $region38: #{gan_generator.8} parent=0
    _
  %s8 = ssub.s32 1, %s6
  %s9 = scalar_select 0, %s8, %s6
  $region1: #{gan_generator.8} parent=0
    #allocation3 [shape = 'u8[16384]{0}', space=vmem, size = 0x4000, scoped, tag = 'input window, operand 1, single buffered']
    #allocation4 [shape = 's32[1]{0}', space=sflag, size = 0x4, scoped, tag = 'scoped memory for gan_generator.8']
    %10 = vsyncpa [#allocation4], 0
    // Predicated region
    $region2: #{gan_generator.8} parent=1 // pred_check
      _
    $region3: #{gan_generator.8} parent=1 // pred_check_branch
      %12 = sbr.rel (0) target = $region5
    $region4: #{gan_generator.8} parent=1 // pred_region
      _
    $region5: #{gan_generator.8} parent=1 // pred_fallthru
      _
    // Predicated region
    $region6: #{gan_generator.8} parent=1 // pred_check
      _
    $region7: #{gan_generator.8} parent=1 // pred_check_branch
      %14 = sbr.rel (0) target = $region9
    $region8: #{gan_generator.8} parent=1 // pred_region
      %s16 = ssub.s32 512, 512
      %17 = vsyncadd [#allocation4], %s16
      %s18 = sshll.u32 [#allocation3], 4
      %s19 = int_to_ptr.vmem [resolvable:$true] %s18
      %24 = dma.hbm_to_vmem [thread:$0]  %s1, 512, %s19, [#allocation4], 128, 128, 8
    $region9: #{gan_generator.8} parent=1 // pred_fallthru
      _
    // Predicated region
    $region10: #{gan_generator.8} parent=1 // pred_check
      _
    $region11: #{gan_generator.8} parent=1 // pred_check_branch
      %26 = sbr.rel (0) target = $region13
    $region12: #{gan_generator.8} parent=1 // pred_region
      _
    $region13: #{gan_generator.8} parent=1 // pred_fallthru
      _
    // Predicated region
    $region14: #{gan_generator.8} parent=1 // pred_check
      _
    $region15: #{gan_generator.8} parent=1 // pred_check_branch
      %28 = sbr.rel (0) target = $region17
    $region16: #{gan_generator.8} parent=1 // pred_region
      _
    $region17: #{gan_generator.8} parent=1 // pred_fallthru
      _
    // Predicated region
    $region18: #{gan_generator.8} parent=1 // pred_check
      _
    $region19: #{gan_generator.8} parent=1 // pred_check_branch
      %30 = sbr.rel (0) target = $region21
    $region20: #{gan_generator.8} parent=1 // pred_region
      _
    $region21: #{gan_generator.8} parent=1 // pred_fallthru
      _
    // Predicated region
    $region22: #{gan_generator.8} parent=1 // pred_check
      _
    $region23: #{gan_generator.8} parent=1 // pred_check_branch
      %32 = sbr.rel (0) target = $region25
    $region24: #{gan_generator.8} parent=1 // pred_region
      %33 = dma.done [#allocation4], 512
    $region25: #{gan_generator.8} parent=1 // pred_fallthru
      _
    %p35 = scmp.eq.s32.totalorder 0, 0
    // Predicated region
    $region26: #{gan_generator.8} parent=1 // pred_check
      %p36 = pneg %p35
    $region27: #{gan_generator.8} parent=1 // pred_check_branch
      %38 = sbr.rel (%p36) target = $region29
    $region28: #{gan_generator.8} parent=1 // pred_region
      %v39 = vld [vmem:[%s0] sm:$0xff]
      %v40 = vld [vmem:[%s0 + $0x8] sm:$0xff]
      %v41 = vld [vmem:[%s0 + $0x14] sm:$0xff]
      %v42 = vld [vmem:[%s0 + $0x1c] sm:$0xff]
      %v43 = vld [vmem:[%s2] sm:$0xf]
      %v46 = vunpack.c.l.s4 1966171168
      %v47 = vunpack.c.0.s8 %v46
      %v48 = vlaneseq
      %v49 = vshrl.u32 %v48, 7
      %v50 = vsub.s32 %v47, %v49
      %v51 = vrot.slane %v43, %v50
      %v52 = vcombine.high %v51, %v51
      %v54 = vunpack.c.l.s4 1966171168
      %v55 = vunpack.c.0.s8 %v54
      %v56 = vlaneseq
      %v57 = vshrl.u32 %v56, 7
      %v58 = vsub.s32 %v55, %v57
      %v59 = vrot.slane %v51, %v58
      %v61 = vunpack.c.l.s4 1966171168
      %v62 = vunpack.c.0.s8 %v61
      %v63 = vlaneseq
      %v64 = vshrl.u32 %v63, 7
      %v65 = vsub.s32 %v62, %v64
      %v66 = vrot.slane %v52, %v65
      %v67 = vcombine.high %v59, %v59
      %v68 = vcombine.high %v66, %v66
      %v70 = vpack.i.b16 %v59, %v59
      %v72 = vlaneseq
      %v73 = vshrl.u32 %v72, 7
      %v74 = vsub.s32 0, %v73
      %v75 = vrot.slane %v70, %v74
      %v77 = vpack.i.b16 %v66, %v66
      %v79 = vlaneseq
      %v80 = vshrl.u32 %v79, 7
      %v81 = vsub.s32 0, %v80
      %v82 = vrot.slane %v77, %v81
      %v84 = vpack.i.b16 %v67, %v67
      %v86 = vlaneseq
      %v87 = vshrl.u32 %v86, 7
      %v88 = vsub.s32 0, %v87
      %v89 = vrot.slane %v84, %v88
      %v91 = vpack.i.b16 %v68, %v68
      %v93 = vlaneseq
      %v94 = vshrl.u32 %v93, 7
      %v95 = vsub.s32 0, %v94
      %v96 = vrot.slane %v91, %v95
      %v101 = vunpack.c.l.b16 %v75
      %v102 = vunpack.c.l.b16 %v82
      %v103 = vunpack.c.l.b16 %v89
      %v104 = vunpack.c.l.b16 %v96
      %v105 = vpack.c.b16 %v102, %v101
      %v106 = vpack.c.b16 %v104, %v103
      %v109 = vmul.bf16 %v39, %v105
      %v110 = vmul.bf16 %v40, %v106
      %v111 = vmul.bf16 %v41, %v105
      %v112 = vmul.bf16 %v42, %v106
      %113 = vst [vmem:[#allocation2] sm:$0xff] %v109
      %114 = vst [vmem:[#allocation2 + $0x8] sm:$0xff] %v110
      %115 = vst [vmem:[#allocation2 + $0x10] sm:$0xff] %v111
      %116 = vst [vmem:[#allocation2 + $0x18] sm:$0xff] %v112
      %v117 = vld [vmem:[%s0] sm:$0xff]
      %v118 = vld [vmem:[%s0 + $0x8] sm:$0xff]
      %v119 = vld [vmem:[%s0 + $0x10] sm:$0xf]
      %v120 = vld [vmem:[%s0 + $0x14] sm:$0xff]
      %v121 = vld [vmem:[%s0 + $0x1c] sm:$0xff]
      %v122 = vld [vmem:[%s0 + $0x24] sm:$0xf]
      %s123 = scalar_lea.vmem %s2, 4
      %v124 = vld [vmem:[%s123] sm:$0xf]
      %v127 = vunpack.c.l.s4 1966171168
      %v128 = vunpack.c.0.s8 %v127
      %v129 = vlaneseq
      %v130 = vshrl.u32 %v129, 7
      %v131 = vsub.s32 %v128, %v130
      %v132 = vrot.slane %v124, %v131
      %v133 = vcombine.high %v132, %v132
      %v135 = vunpack.c.l.s4 1966171168
      %v136 = vunpack.c.0.s8 %v135
      %v137 = vlaneseq
      %v138 = vshrl.u32 %v137, 7
      %v139 = vsub.s32 %v136, %v138
      %v140 = vrot.slane %v132, %v139
      %v142 = vunpack.c.l.s4 1966171168
      %v143 = vunpack.c.0.s8 %v142
      %v144 = vlaneseq
      %v145 = vshrl.u32 %v144, 7
      %v146 = vsub.s32 %v143, %v145
      %v147 = vrot.slane %v133, %v146
      %v148 = vcombine.high %v140, %v140
      %v149 = vcombine.high %v147, %v147
      %v151 = vpack.i.b16 %v140, %v140
      %v153 = vlaneseq
      %v154 = vshrl.u32 %v153, 7
      %v155 = vsub.s32 0, %v154
      %v156 = vrot.slane %v151, %v155
      %v158 = vpack.i.b16 %v147, %v147
      %v160 = vlaneseq
      %v161 = vshrl.u32 %v160, 7
      %v162 = vsub.s32 0, %v161
      %v163 = vrot.slane %v158, %v162
      %v165 = vpack.i.b16 %v148, %v148
      %v167 = vlaneseq
      %v168 = vshrl.u32 %v167, 7
      %v169 = vsub.s32 0, %v168
      %v170 = vrot.slane %v165, %v169
      %v172 = vpack.i.b16 %v149, %v149
      %v174 = vlaneseq
      %v175 = vshrl.u32 %v174, 7
      %v176 = vsub.s32 0, %v175
      %v177 = vrot.slane %v172, %v176
      %v182 = vunpack.c.l.b16 %v156
      %v183 = vunpack.c.l.b16 %v163
      %v184 = vunpack.c.l.b16 %v170
      %v185 = vunpack.c.l.b16 %v177
      %v186 = vpack.c.b16 %v183, %v182
      %v187 = vpack.c.b16 %v185, %v184
      %188 = vrot.lane.b32.xlu0 %v186, 1
      %v189 = vpop.permute.xlu0 %188
      %190 = vrot.lane.b32.xlu0 %v187, 1
      %v191 = vpop.permute.xlu0 %190
      %v192 = vrot.slane %v189, 4
      %v193 = vrot.slane %v191, 4
      %vm194 = vcmask 7168
      %v195 = vsel %vm194, %v192, %v189
      %vm196 = vcmask 1043456
      %v197 = vsel %vm196, %v192, %v193
      %v198 = vsel %vm194, %v197, %v191
      %v202 = vmul.bf16 %v117, %v195
      %v203 = vmul.bf16 %v118, %v198
      %v204 = vmul.bf16 %v119, %v193
      %v205 = vmul.bf16 %v120, %v195
      %v206 = vmul.bf16 %v121, %v198
      %v207 = vmul.bf16 %v122, %v193
      %214 = vrot.lane.b32.xlu0 %v202, 127
      %v215 = vpop.permute.xlu0 %214
      %216 = vrot.lane.b32.xlu0 %v203, 127
      %v217 = vpop.permute.xlu0 %216
      %218 = vrot.lane.b32.xlu0 %v204, 127
      %v219 = vpop.permute.xlu0 %218
      %220 = vrot.lane.b32.xlu0 %v205, 127
      %v221 = vpop.permute.xlu0 %220
      %222 = vrot.lane.b32.xlu0 %v206, 127
      %v223 = vpop.permute.xlu0 %222
      %224 = vrot.lane.b32.xlu0 %v207, 127
      %v225 = vpop.permute.xlu0 %224
      %v226 = vrot.slane %v215, 4
      %v227 = vrot.slane %v217, 4
      %v228 = vrot.slane %v219, 4
      %v229 = vrot.slane %v221, 4
      %v230 = vrot.slane %v223, 4
      %v231 = vrot.slane %v225, 4
      %v232 = vsel %vm196, %v226, %v227
      %vm233 = vcmask 1039360
      %v234 = vsel %vm233, %v215, %v232
      %v235 = vsel %vm196, %v227, %v228
      %v236 = vsel %vm233, %v217, %v235
      %v237 = vsel %vm196, %v229, %v230
      %v238 = vsel %vm233, %v221, %v237
      %v239 = vsel %vm196, %v230, %v231
      %v240 = vsel %vm233, %v223, %v239
      %245 = vst [vmem:[#allocation2 + $0x20] sm:$0xff] %v234
      %246 = vst [vmem:[#allocation2 + $0x28] sm:$0xff] %v236
      %247 = vst [vmem:[#allocation2 + $0x30] sm:$0xff] %v238
      %248 = vst [vmem:[#allocation2 + $0x38] sm:$0xff] %v240
      %v249 = vld [vmem:[%s0] sm:$0xff]
      %v250 = vld [vmem:[%s0 + $0x8] sm:$0xff]
      %v251 = vld [vmem:[%s0 + $0x10] sm:$0xf]
      %v252 = vld [vmem:[%s0 + $0x14] sm:$0xff]
      %v253 = vld [vmem:[%s0 + $0x1c] sm:$0xff]
      %v254 = vld [vmem:[%s0 + $0x24] sm:$0xf]
      %s255 = scalar_lea.vmem %s2, 8
      %v256 = vld [vmem:[%s255] sm:$0xf]
      %v259 = vunpack.c.l.s4 1966171168
      %v260 = vunpack.c.0.s8 %v259
      %v261 = vlaneseq
      %v262 = vshrl.u32 %v261, 7
      %v263 = vsub.s32 %v260, %v262
      %v264 = vrot.slane %v256, %v263
      %v265 = vcombine.high %v264, %v264
      %v267 = vunpack.c.l.s4 1966171168
      %v268 = vunpack.c.0.s8 %v267
      %v269 = vlaneseq
      %v270 = vshrl.u32 %v269, 7
      %v271 = vsub.s32 %v268, %v270
      %v272 = vrot.slane %v264, %v271
      %v274 = vunpack.c.l.s4 1966171168
      %v275 = vunpack.c.0.s8 %v274
      %v276 = vlaneseq
      %v277 = vshrl.u32 %v276, 7
      %v278 = vsub.s32 %v275, %v277
      %v279 = vrot.slane %v265, %v278
      %v280 = vcombine.high %v272, %v272
      %v281 = vcombine.high %v279, %v279
      %v283 = vpack.i.b16 %v272, %v272
      %v285 = vlaneseq
      %v286 = vshrl.u32 %v285, 7
      %v287 = vsub.s32 0, %v286
      %v288 = vrot.slane %v283, %v287
      %v290 = vpack.i.b16 %v279, %v279
      %v292 = vlaneseq
      %v293 = vshrl.u32 %v292, 7
      %v294 = vsub.s32 0, %v293
      %v295 = vrot.slane %v290, %v294
      %v297 = vpack.i.b16 %v280, %v280
      %v299 = vlaneseq
      %v300 = vshrl.u32 %v299, 7
      %v301 = vsub.s32 0, %v300
      %v302 = vrot.slane %v297, %v301
      %v304 = vpack.i.b16 %v281, %v281
      %v306 = vlaneseq
      %v307 = vshrl.u32 %v306, 7
      %v308 = vsub.s32 0, %v307
      %v309 = vrot.slane %v304, %v308
      %v314 = vunpack.c.l.b16 %v288
      %v315 = vunpack.c.l.b16 %v295
      %v316 = vunpack.c.l.b16 %v302
      %v317 = vunpack.c.l.b16 %v309
      %v318 = vpack.c.b16 %v315, %v314
      %v319 = vpack.c.b16 %v317, %v316
      %320 = vrot.lane.b32.xlu0 %v318, 2
      %v321 = vpop.permute.xlu0 %320
      %322 = vrot.lane.b32.xlu0 %v319, 2
      %v323 = vpop.permute.xlu0 %322
      %v324 = vrot.slane %v321, 4
      %v325 = vrot.slane %v323, 4
      %vm326 = vcmask 15360
      %v327 = vsel %vm326, %v324, %v321
      %v328 = vsel %vm196, %v324, %v325
      %v329 = vsel %vm326, %v328, %v323
      %v333 = vmul.bf16 %v249, %v327
      %v334 = vmul.bf16 %v250, %v329
      %v335 = vmul.bf16 %v251, %v325
      %v336 = vmul.bf16 %v252, %v327
      %v337 = vmul.bf16 %v253, %v329
      %v338 = vmul.bf16 %v254, %v325
      %345 = vrot.lane.b32.xlu0 %v333, 126
      %v346 = vpop.permute.xlu0 %345
      %347 = vrot.lane.b32.xlu0 %v334, 126
      %v348 = vpop.permute.xlu0 %347
      %349 = vrot.lane.b32.xlu0 %v335, 126
      %v350 = vpop.permute.xlu0 %349
      %351 = vrot.lane.b32.xlu0 %v336, 126
      %v352 = vpop.permute.xlu0 %351
      %353 = vrot.lane.b32.xlu0 %v337, 126
      %v354 = vpop.permute.xlu0 %353
      %355 = vrot.lane.b32.xlu0 %v338, 126
      %v356 = vpop.permute.xlu0 %355
      %v357 = vrot.slane %v346, 4
      %v358 = vrot.slane %v348, 4
      %v359 = vrot.slane %v350, 4
      %v360 = vrot.slane %v352, 4
      %v361 = vrot.slane %v354, 4
      %v362 = vrot.slane %v356, 4
      %v363 = vsel %vm196, %v357, %v358
      %vm364 = vcmask 1031168
      %v365 = vsel %vm364, %v346, %v363
      %v366 = vsel %vm196, %v358, %v359
      %v367 = vsel %vm364, %v348, %v366
      %v368 = vsel %vm196, %v360, %v361
      %v369 = vsel %vm364, %v352, %v368
      %v370 = vsel %vm196, %v361, %v362
      %v371 = vsel %vm364, %v354, %v370
      %376 = vst [vmem:[#allocation2 + $0x40] sm:$0xff] %v365
      %377 = vst [vmem:[#allocation2 + $0x48] sm:$0xff] %v367
      %378 = vst [vmem:[#allocation2 + $0x50] sm:$0xff] %v369
      %379 = vst [vmem:[#allocation2 + $0x58] sm:$0xff] %v371
      %v380 = vld [vmem:[%s0] sm:$0xff]
      %v381 = vld [vmem:[%s0 + $0x8] sm:$0xff]
      %v382 = vld [vmem:[%s0 + $0x10] sm:$0xf]
      %v383 = vld [vmem:[%s0 + $0x14] sm:$0xff]
      %v384 = vld [vmem:[%s0 + $0x1c] sm:$0xff]
      %v385 = vld [vmem:[%s0 + $0x24] sm:$0xf]
      %s386 = scalar_lea.vmem %s2, 12
      %v387 = vld [vmem:[%s386] sm:$0xf]
      %v390 = vunpack.c.l.s4 1966171168
      %v391 = vunpack.c.0.s8 %v390
      %v392 = vlaneseq
      %v393 = vshrl.u32 %v392, 7
      %v394 = vsub.s32 %v391, %v393
      %v395 = vrot.slane %v387, %v394
      %v396 = vcombine.high %v395, %v395
      %v398 = vunpack.c.l.s4 1966171168
      %v399 = vunpack.c.0.s8 %v398
      %v400 = vlaneseq
      %v401 = vshrl.u32 %v400, 7
      %v402 = vsub.s32 %v399, %v401
      %v403 = vrot.slane %v395, %v402
      %v405 = vunpack.c.l.s4 1966171168
      %v406 = vunpack.c.0.s8 %v405
      %v407 = vlaneseq
      %v408 = vshrl.u32 %v407, 7
      %v409 = vsub.s32 %v406, %v408
      %v410 = vrot.slane %v396, %v409
      %v411 = vcombine.high %v403, %v403
      %v412 = vcombine.high %v410, %v410
      %v414 = vpack.i.b16 %v403, %v403
      %v416 = vlaneseq
      %v417 = vshrl.u32 %v416, 7
      %v418 = vsub.s32 0, %v417
      %v419 = vrot.slane %v414, %v418
      %v421 = vpack.i.b16 %v410, %v410
      %v423 = vlaneseq
      %v424 = vshrl.u32 %v423, 7
      %v425 = vsub.s32 0, %v424
      %v426 = vrot.slane %v421, %v425
      %v428 = vpack.i.b16 %v411, %v411
      %v430 = vlaneseq
      %v431 = vshrl.u32 %v430, 7
      %v432 = vsub.s32 0, %v431
      %v433 = vrot.slane %v428, %v432
      %v435 = vpack.i.b16 %v412, %v412
      %v437 = vlaneseq
      %v438 = vshrl.u32 %v437, 7
      %v439 = vsub.s32 0, %v438
      %v440 = vrot.slane %v435, %v439
      %v445 = vunpack.c.l.b16 %v419
      %v446 = vunpack.c.l.b16 %v426
      %v447 = vunpack.c.l.b16 %v433
      %v448 = vunpack.c.l.b16 %v440
      %v449 = vpack.c.b16 %v446, %v445
      %v450 = vpack.c.b16 %v448, %v447
      %451 = vrot.lane.b32.xlu0 %v449, 16
      %v452 = vpop.permute.xlu0 %451
      %453 = vrot.lane.b32.xlu0 %v450, 16
      %v454 = vpop.permute.xlu0 %453
      %v455 = vrot.slane %v452, 4
      %v456 = vrot.slane %v454, 4
      %vm457 = vcmask 130048
      %v458 = vsel %vm457, %v455, %v452
      %v459 = vsel %vm196, %v455, %v456
      %v460 = vsel %vm457, %v459, %v454
      %v464 = vmul.bf16 %v380, %v458
      %v465 = vmul.bf16 %v381, %v460
      %v466 = vmul.bf16 %v382, %v456
      %v467 = vmul.bf16 %v383, %v458
      %v468 = vmul.bf16 %v384, %v460
      %v469 = vmul.bf16 %v385, %v456
      %476 = vrot.lane.b32.xlu0 %v464, 112
      %v477 = vpop.permute.xlu0 %476
      %478 = vrot.lane.b32.xlu0 %v465, 112
      %v479 = vpop.permute.xlu0 %478
      %480 = vrot.lane.b32.xlu0 %v466, 112
      %v481 = vpop.permute.xlu0 %480
      %482 = vrot.lane.b32.xlu0 %v467, 112
      %v483 = vpop.permute.xlu0 %482
      %484 = vrot.lane.b32.xlu0 %v468, 112
      %v485 = vpop.permute.xlu0 %484
      %486 = vrot.lane.b32.xlu0 %v469, 112
      %v487 = vpop.permute.xlu0 %486
      %v488 = vrot.slane %v477, 4
      %v489 = vrot.slane %v479, 4
      %v490 = vrot.slane %v481, 4
      %v491 = vrot.slane %v483, 4
      %v492 = vrot.slane %v485, 4
      %v493 = vrot.slane %v487, 4
      %v494 = vsel %vm196, %v488, %v489
      %vm495 = vcmask 916480
      %v496 = vsel %vm495, %v477, %v494
      %v497 = vsel %vm196, %v489, %v490
      %v498 = vsel %vm495, %v479, %v497
      %v499 = vsel %vm196, %v491, %v492
      %v500 = vsel %vm495, %v483, %v499
      %v501 = vsel %vm196, %v492, %v493
      %v502 = vsel %vm495, %v485, %v501
      %507 = vst [vmem:[#allocation2 + $0x60] sm:$0xff] %v496
      %508 = vst [vmem:[#allocation2 + $0x68] sm:$0xff] %v498
      %509 = vst [vmem:[#allocation2 + $0x70] sm:$0xff] %v500
      %510 = vst [vmem:[#allocation2 + $0x78] sm:$0xff] %v502
      %v511 = vld [vmem:[%s0] sm:$0xff]
      %v512 = vld [vmem:[%s0 + $0x8] sm:$0xff]
      %v513 = vld [vmem:[%s0 + $0x10] sm:$0xf]
      %v514 = vld [vmem:[%s0 + $0x14] sm:$0xff]
      %v515 = vld [vmem:[%s0 + $0x1c] sm:$0xff]
      %v516 = vld [vmem:[%s0 + $0x24] sm:$0xf]
      %s517 = scalar_lea.vmem %s2, 16
      %v518 = vld [vmem:[%s517] sm:$0xf]
      %v521 = vunpack.c.l.s4 1966171168
      %v522 = vunpack.c.0.s8 %v521
      %v523 = vlaneseq
      %v524 = vshrl.u32 %v523, 7
      %v525 = vsub.s32 %v522, %v524
      %v526 = vrot.slane %v518, %v525
      %v527 = vcombine.high %v526, %v526
      %v529 = vunpack.c.l.s4 1966171168
      %v530 = vunpack.c.0.s8 %v529
      %v531 = vlaneseq
      %v532 = vshrl.u32 %v531, 7
      %v533 = vsub.s32 %v530, %v532
      %v534 = vrot.slane %v526, %v533
      %v536 = vunpack.c.l.s4 1966171168
      %v537 = vunpack.c.0.s8 %v536
      %v538 = vlaneseq
      %v539 = vshrl.u32 %v538, 7
      %v540 = vsub.s32 %v537, %v539
      %v541 = vrot.slane %v527, %v540
      %v542 = vcombine.high %v534, %v534
      %v543 = vcombine.high %v541, %v541
      %v545 = vpack.i.b16 %v534, %v534
      %v547 = vlaneseq
      %v548 = vshrl.u32 %v547, 7
      %v549 = vsub.s32 0, %v548
      %v550 = vrot.slane %v545, %v549
      %v552 = vpack.i.b16 %v541, %v541
      %v554 = vlaneseq
      %v555 = vshrl.u32 %v554, 7
      %v556 = vsub.s32 0, %v555
      %v557 = vrot.slane %v552, %v556
      %v559 = vpack.i.b16 %v542, %v542
      %v561 = vlaneseq
      %v562 = vshrl.u32 %v561, 7
      %v563 = vsub.s32 0, %v562
      %v564 = vrot.slane %v559, %v563
      %v566 = vpack.i.b16 %v543, %v543
      %v568 = vlaneseq
      %v569 = vshrl.u32 %v568, 7
      %v570 = vsub.s32 0, %v569
      %v571 = vrot.slane %v566, %v570
      %v576 = vunpack.c.l.b16 %v550
      %v577 = vunpack.c.l.b16 %v557
      %v578 = vunpack.c.l.b16 %v564
      %v579 = vunpack.c.l.b16 %v571
      %v580 = vpack.c.b16 %v577, %v576
      %v581 = vpack.c.b16 %v579, %v578
      %582 = vrot.lane.b32.xlu0 %v580, 17
      %v583 = vpop.permute.xlu0 %582
      %584 = vrot.lane.b32.xlu0 %v581, 17
      %v585 = vpop.permute.xlu0 %584
      %v586 = vrot.slane %v583, 4
      %v587 = vrot.slane %v585, 4
      %vm588 = vcmask 138240
      %v589 = vsel %vm588, %v586, %v583
      %v590 = vsel %vm196, %v586, %v587
      %v591 = vsel %vm588, %v590, %v585
      %v595 = vmul.bf16 %v511, %v589
      %v596 = vmul.bf16 %v512, %v591
      %v597 = vmul.bf16 %v513, %v587
      %v598 = vmul.bf16 %v514, %v589
      %v599 = vmul.bf16 %v515, %v591
      %v600 = vmul.bf16 %v516, %v587
      %607 = vrot.lane.b32.xlu0 %v595, 111
      %v608 = vpop.permute.xlu0 %607
      %609 = vrot.lane.b32.xlu0 %v596, 111
      %v610 = vpop.permute.xlu0 %609
      %611 = vrot.lane.b32.xlu0 %v597, 111
      %v612 = vpop.permute.xlu0 %611
      %613 = vrot.lane.b32.xlu0 %v598, 111
      %v614 = vpop.permute.xlu0 %613
      %615 = vrot.lane.b32.xlu0 %v599, 111
      %v616 = vpop.permute.xlu0 %615
      %617 = vrot.lane.b32.xlu0 %v600, 111
      %v618 = vpop.permute.xlu0 %617
      %v619 = vrot.slane %v608, 4
      %v620 = vrot.slane %v610, 4
      %v621 = vrot.slane %v612, 4
      %v622 = vrot.slane %v614, 4
      %v623 = vrot.slane %v616, 4
      %v624 = vrot.slane %v618, 4
      %v625 = vsel %vm196, %v619, %v620
      %vm626 = vcmask 908288
      %v627 = vsel %vm626, %v608, %v625
      %v628 = vsel %vm196, %v620, %v621
      %v629 = vsel %vm626, %v610, %v628
      %v630 = vsel %vm196, %v622, %v623
      %v631 = vsel %vm626, %v614, %v630
      %v632 = vsel %vm196, %v623, %v624
      %v633 = vsel %vm626, %v616, %v632
      %638 = vst [vmem:[#allocation2 + $0x80] sm:$0xff] %v627
      %639 = vst [vmem:[#allocation2 + $0x88] sm:$0xff] %v629
      %640 = vst [vmem:[#allocation2 + $0x90] sm:$0xff] %v631
      %641 = vst [vmem:[#allocation2 + $0x98] sm:$0xff] %v633
      %v642 = vld [vmem:[%s0] sm:$0xff]
      %v643 = vld [vmem:[%s0 + $0x8] sm:$0xff]
      %v644 = vld [vmem:[%s0 + $0x10] sm:$0xf]
      %v645 = vld [vmem:[%s0 + $0x14] sm:$0xff]
      %v646 = vld [vmem:[%s0 + $0x1c] sm:$0xff]
      %v647 = vld [vmem:[%s0 + $0x24] sm:$0xf]
      %s648 = scalar_lea.vmem %s2, 20
      %v649 = vld [vmem:[%s648] sm:$0xf]
      %v652 = vunpack.c.l.s4 1966171168
      %v653 = vunpack.c.0.s8 %v652
      %v654 = vlaneseq
      %v655 = vshrl.u32 %v654, 7
      %v656 = vsub.s32 %v653, %v655
      %v657 = vrot.slane %v649, %v656
      %v658 = vcombine.high %v657, %v657
      %v660 = vunpack.c.l.s4 1966171168
      %v661 = vunpack.c.0.s8 %v660
      %v662 = vlaneseq
      %v663 = vshrl.u32 %v662, 7
      %v664 = vsub.s32 %v661, %v663
      %v665 = vrot.slane %v657, %v664
      %v667 = vunpack.c.l.s4 1966171168
      %v668 = vunpack.c.0.s8 %v667
      %v669 = vlaneseq
      %v670 = vshrl.u32 %v669, 7
      %v671 = vsub.s32 %v668, %v670
      %v672 = vrot.slane %v658, %v671
      %v673 = vcombine.high %v665, %v665
      %v674 = vcombine.high %v672, %v672
      %v676 = vpack.i.b16 %v665, %v665
      %v678 = vlaneseq
      %v679 = vshrl.u32 %v678, 7
      %v680 = vsub.s32 0, %v679
      %v681 = vrot.slane %v676, %v680
      %v683 = vpack.i.b16 %v672, %v672
      %v685 = vlaneseq
      %v686 = vshrl.u32 %v685, 7
      %v687 = vsub.s32 0, %v686
      %v688 = vrot.slane %v683, %v687
      %v690 = vpack.i.b16 %v673, %v673
      %v692 = vlaneseq
      %v693 = vshrl.u32 %v692, 7
      %v694 = vsub.s32 0, %v693
      %v695 = vrot.slane %v690, %v694
      %v697 = vpack.i.b16 %v674, %v674
      %v699 = vlaneseq
      %v700 = vshrl.u32 %v699, 7
      %v701 = vsub.s32 0, %v700
      %v702 = vrot.slane %v697, %v701
      %v707 = vunpack.c.l.b16 %v681
      %v708 = vunpack.c.l.b16 %v688
      %v709 = vunpack.c.l.b16 %v695
      %v710 = vunpack.c.l.b16 %v702
      %v711 = vpack.c.b16 %v708, %v707
      %v712 = vpack.c.b16 %v710, %v709
      %713 = vrot.lane.b32.xlu0 %v711, 18
      %v714 = vpop.permute.xlu0 %713
      %715 = vrot.lane.b32.xlu0 %v712, 18
      %v716 = vpop.permute.xlu0 %715
      %v717 = vrot.slane %v714, 4
      %v718 = vrot.slane %v716, 4
      %vm719 = vcmask 146432
      %v720 = vsel %vm719, %v717, %v714
      %v721 = vsel %vm196, %v717, %v718
      %v722 = vsel %vm719, %v721, %v716
      %v726 = vmul.bf16 %v642, %v720
      %v727 = vmul.bf16 %v643, %v722
      %v728 = vmul.bf16 %v644, %v718
      %v729 = vmul.bf16 %v645, %v720
      %v730 = vmul.bf16 %v646, %v722
      %v731 = vmul.bf16 %v647, %v718
      %738 = vrot.lane.b32.xlu0 %v726, 110
      %v739 = vpop.permute.xlu0 %738
      %740 = vrot.lane.b32.xlu0 %v727, 110
      %v741 = vpop.permute.xlu0 %740
      %742 = vrot.lane.b32.xlu0 %v728, 110
      %v743 = vpop.permute.xlu0 %742
      %744 = vrot.lane.b32.xlu0 %v729, 110
      %v745 = vpop.permute.xlu0 %744
      %746 = vrot.lane.b32.xlu0 %v730, 110
      %v747 = vpop.permute.xlu0 %746
      %748 = vrot.lane.b32.xlu0 %v731, 110
      %v749 = vpop.permute.xlu0 %748
      %v750 = vrot.slane %v739, 4
      %v751 = vrot.slane %v741, 4
      %v752 = vrot.slane %v743, 4
      %v753 = vrot.slane %v745, 4
      %v754 = vrot.slane %v747, 4
      %v755 = vrot.slane %v749, 4
      %v756 = vsel %vm196, %v750, %v751
      %vm757 = vcmask 900096
      %v758 = vsel %vm757, %v739, %v756
      %v759 = vsel %vm196, %v751, %v752
      %v760 = vsel %vm757, %v741, %v759
      %v761 = vsel %vm196, %v753, %v754
      %v762 = vsel %vm757, %v745, %v761
      %v763 = vsel %vm196, %v754, %v755
      %v764 = vsel %vm757, %v747, %v763
      %769 = vst [vmem:[#allocation2 + $0xa0] sm:$0xff] %v758
      %770 = vst [vmem:[#allocation2 + $0xa8] sm:$0xff] %v760
      %771 = vst [vmem:[#allocation2 + $0xb0] sm:$0xff] %v762
      %772 = vst [vmem:[#allocation2 + $0xb8] sm:$0xff] %v764
      %v773 = vld [vmem:[%s0] sm:$0xff]
      %v774 = vld [vmem:[%s0 + $0x8] sm:$0xff]
      %v775 = vld [vmem:[%s0 + $0x10] sm:$0xf]
      %v776 = vld [vmem:[%s0 + $0x14] sm:$0xff]
      %v777 = vld [vmem:[%s0 + $0x1c] sm:$0xff]
      %v778 = vld [vmem:[%s0 + $0x24] sm:$0xf]
      %s779 = scalar_lea.vmem %s2, 24
      %v780 = vld [vmem:[%s779] sm:$0xf]
      %v783 = vunpack.c.l.s4 1966171168
      %v784 = vunpack.c.0.s8 %v783
      %v785 = vlaneseq
      %v786 = vshrl.u32 %v785, 7
      %v787 = vsub.s32 %v784, %v786
      %v788 = vrot.slane %v780, %v787
      %v789 = vcombine.high %v788, %v788
      %v791 = vunpack.c.l.s4 1966171168
      %v792 = vunpack.c.0.s8 %v791
      %v793 = vlaneseq
      %v794 = vshrl.u32 %v793, 7
      %v795 = vsub.s32 %v792, %v794
      %v796 = vrot.slane %v788, %v795
      %v798 = vunpack.c.l.s4 1966171168
      %v799 = vunpack.c.0.s8 %v798
      %v800 = vlaneseq
      %v801 = vshrl.u32 %v800, 7
      %v802 = vsub.s32 %v799, %v801
      %v803 = vrot.slane %v789, %v802
      %v804 = vcombine.high %v796, %v796
      %v805 = vcombine.high %v803, %v803
      %v807 = vpack.i.b16 %v796, %v796
      %v809 = vlaneseq
      %v810 = vshrl.u32 %v809, 7
      %v811 = vsub.s32 0, %v810
      %v812 = vrot.slane %v807, %v811
      %v814 = vpack.i.b16 %v803, %v803
      %v816 = vlaneseq
      %v817 = vshrl.u32 %v816, 7
      %v818 = vsub.s32 0, %v817
      %v819 = vrot.slane %v814, %v818
      %v821 = vpack.i.b16 %v804, %v804
      %v823 = vlaneseq
      %v824 = vshrl.u32 %v823, 7
      %v825 = vsub.s32 0, %v824
      %v826 = vrot.slane %v821, %v825
      %v828 = vpack.i.b16 %v805, %v805
      %v830 = vlaneseq
      %v831 = vshrl.u32 %v830, 7
      %v832 = vsub.s32 0, %v831
      %v833 = vrot.slane %v828, %v832
      %v838 = vunpack.c.l.b16 %v812
      %v839 = vunpack.c.l.b16 %v819
      %v840 = vunpack.c.l.b16 %v826
      %v841 = vunpack.c.l.b16 %v833
      %v842 = vpack.c.b16 %v839, %v838
      %v843 = vpack.c.b16 %v841, %v840
      %844 = vrot.lane.b32.xlu0 %v842, 32
      %v845 = vpop.permute.xlu0 %844
      %846 = vrot.lane.b32.xlu0 %v843, 32
      %v847 = vpop.permute.xlu0 %846
      %v848 = vrot.slane %v845, 4
      %v849 = vrot.slane %v847, 4
      %vm850 = vcmask 261120
      %v851 = vsel %vm850, %v848, %v845
      %v852 = vsel %vm196, %v848, %v849
      %v853 = vsel %vm850, %v852, %v847
      %v857 = vmul.bf16 %v773, %v851
      %v858 = vmul.bf16 %v774, %v853
      %v859 = vmul.bf16 %v775, %v849
      %v860 = vmul.bf16 %v776, %v851
      %v861 = vmul.bf16 %v777, %v853
      %v862 = vmul.bf16 %v778, %v849
      %869 = vrot.lane.b32.xlu0 %v857, 96
      %v870 = vpop.permute.xlu0 %869
      %871 = vrot.lane.b32.xlu0 %v858, 96
      %v872 = vpop.permute.xlu0 %871
      %873 = vrot.lane.b32.xlu0 %v859, 96
      %v874 = vpop.permute.xlu0 %873
      %875 = vrot.lane.b32.xlu0 %v860, 96
      %v876 = vpop.permute.xlu0 %875
      %877 = vrot.lane.b32.xlu0 %v861, 96
      %v878 = vpop.permute.xlu0 %877
      %879 = vrot.lane.b32.xlu0 %v862, 96
      %v880 = vpop.permute.xlu0 %879
      %v881 = vrot.slane %v870, 4
      %v882 = vrot.slane %v872, 4
      %v883 = vrot.slane %v874, 4
      %v884 = vrot.slane %v876, 4
      %v885 = vrot.slane %v878, 4
      %v886 = vrot.slane %v880, 4
      %v887 = vsel %vm196, %v881, %v882
      %vm888 = vcmask 785408
      %v889 = vsel %vm888, %v870, %v887
      %v890 = vsel %vm196, %v882, %v883
      %v891 = vsel %vm888, %v872, %v890
      %v892 = vsel %vm196, %v884, %v885
      %v893 = vsel %vm888, %v876, %v892
      %v894 = vsel %vm196, %v885, %v886
      %v895 = vsel %vm888, %v878, %v894
      %900 = vst [vmem:[#allocation2 + $0xc0] sm:$0xff] %v889
      %901 = vst [vmem:[#allocation2 + $0xc8] sm:$0xff] %v891
      %902 = vst [vmem:[#allocation2 + $0xd0] sm:$0xff] %v893
      %903 = vst [vmem:[#allocation2 + $0xd8] sm:$0xff] %v895
      %v904 = vld [vmem:[%s0] sm:$0xff]
      %v905 = vld [vmem:[%s0 + $0x8] sm:$0xff]
      %v906 = vld [vmem:[%s0 + $0x10] sm:$0xf]
      %v907 = vld [vmem:[%s0 + $0x14] sm:$0xff]
      %v908 = vld [vmem:[%s0 + $0x1c] sm:$0xff]
      %v909 = vld [vmem:[%s0 + $0x24] sm:$0xf]
      %s910 = scalar_lea.vmem %s2, 28
      %v911 = vld [vmem:[%s910] sm:$0xf]
      %v914 = vunpack.c.l.s4 1966171168
      %v915 = vunpack.c.0.s8 %v914
      %v916 = vlaneseq
      %v917 = vshrl.u32 %v916, 7
      %v918 = vsub.s32 %v915, %v917
      %v919 = vrot.slane %v911, %v918
      %v920 = vcombine.high %v919, %v919
      %v922 = vunpack.c.l.s4 1966171168
      %v923 = vunpack.c.0.s8 %v922
      %v924 = vlaneseq
      %v925 = vshrl.u32 %v924, 7
      %v926 = vsub.s32 %v923, %v925
      %v927 = vrot.slane %v919, %v926
      %v929 = vunpack.c.l.s4 1966171168
      %v930 = vunpack.c.0.s8 %v929
      %v931 = vlaneseq
      %v932 = vshrl.u32 %v931, 7
      %v933 = vsub.s32 %v930, %v932
      %v934 = vrot.slane %v920, %v933
      %v935 = vcombine.high %v927, %v927
      %v936 = vcombine.high %v934, %v934
      %v938 = vpack.i.b16 %v927, %v927
      %v940 = vlaneseq
      %v941 = vshrl.u32 %v940, 7
      %v942 = vsub.s32 0, %v941
      %v943 = vrot.slane %v938, %v942
      %v945 = vpack.i.b16 %v934, %v934
      %v947 = vlaneseq
      %v948 = vshrl.u32 %v947, 7
      %v949 = vsub.s32 0, %v948
      %v950 = vrot.slane %v945, %v949
      %v952 = vpack.i.b16 %v935, %v935
      %v954 = vlaneseq
      %v955 = vshrl.u32 %v954, 7
      %v956 = vsub.s32 0, %v955
      %v957 = vrot.slane %v952, %v956
      %v959 = vpack.i.b16 %v936, %v936
      %v961 = vlaneseq
      %v962 = vshrl.u32 %v961, 7
      %v963 = vsub.s32 0, %v962
      %v964 = vrot.slane %v959, %v963
      %v969 = vunpack.c.l.b16 %v943
      %v970 = vunpack.c.l.b16 %v950
      %v971 = vunpack.c.l.b16 %v957
      %v972 = vunpack.c.l.b16 %v964
      %v973 = vpack.c.b16 %v970, %v969
      %v974 = vpack.c.b16 %v972, %v971
      %975 = vrot.lane.b32.xlu0 %v973, 33
      %v976 = vpop.permute.xlu0 %975
      %977 = vrot.lane.b32.xlu0 %v974, 33
      %v978 = vpop.permute.xlu0 %977
      %v979 = vrot.slane %v976, 4
      %v980 = vrot.slane %v978, 4
      %vm981 = vcmask 269312
      %v982 = vsel %vm981, %v979, %v976
      %v983 = vsel %vm196, %v979, %v980
      %v984 = vsel %vm981, %v983, %v978
      %v988 = vmul.bf16 %v904, %v982
      %v989 = vmul.bf16 %v905, %v984
      %v990 = vmul.bf16 %v906, %v980
      %v991 = vmul.bf16 %v907, %v982
      %v992 = vmul.bf16 %v908, %v984
      %v993 = vmul.bf16 %v909, %v980
      %1000 = vrot.lane.b32.xlu0 %v988, 95
      %v1001 = vpop.permute.xlu0 %1000
      %1002 = vrot.lane.b32.xlu0 %v989, 95
      %v1003 = vpop.permute.xlu0 %1002
      %1004 = vrot.lane.b32.xlu0 %v990, 95
      %v1005 = vpop.permute.xlu0 %1004
      %1006 = vrot.lane.b32.xlu0 %v991, 95
      %v1007 = vpop.permute.xlu0 %1006
      %1008 = vrot.lane.b32.xlu0 %v992, 95
      %v1009 = vpop.permute.xlu0 %1008
      %1010 = vrot.lane.b32.xlu0 %v993, 95
      %v1011 = vpop.permute.xlu0 %1010
      %v1012 = vrot.slane %v1001, 4
      %v1013 = vrot.slane %v1003, 4
      %v1014 = vrot.slane %v1005, 4
      %v1015 = vrot.slane %v1007, 4
      %v1016 = vrot.slane %v1009, 4
      %v1017 = vrot.slane %v1011, 4
      %v1018 = vsel %vm196, %v1012, %v1013
      %vm1019 = vcmask 777216
      %v1020 = vsel %vm1019, %v1001, %v1018
      %v1021 = vsel %vm196, %v1013, %v1014
      %v1022 = vsel %vm1019, %v1003, %v1021
      %v1023 = vsel %vm196, %v1015, %v1016
      %v1024 = vsel %vm1019, %v1007, %v1023
      %v1025 = vsel %vm196, %v1016, %v1017
      %v1026 = vsel %vm1019, %v1009, %v1025
      %1031 = vst [vmem:[#allocation2 + $0xe0] sm:$0xff] %v1020
      %1032 = vst [vmem:[#allocation2 + $0xe8] sm:$0xff] %v1022
      %1033 = vst [vmem:[#allocation2 + $0xf0] sm:$0xff] %v1024
      %1034 = vst [vmem:[#allocation2 + $0xf8] sm:$0xff] %v1026
      %v1035 = vld [vmem:[%s0] sm:$0xff]
      %v1036 = vld [vmem:[%s0 + $0x8] sm:$0xff]
      %v1037 = vld [vmem:[%s0 + $0x10] sm:$0xf]
      %v1038 = vld [vmem:[%s0 + $0x14] sm:$0xff]
      %v1039 = vld [vmem:[%s0 + $0x1c] sm:$0xff]
      %v1040 = vld [vmem:[%s0 + $0x24] sm:$0xf]
      %s1041 = scalar_lea.vmem %s2, 32
      %v1042 = vld [vmem:[%s1041] sm:$0xf]
      %v1045 = vunpack.c.l.s4 1966171168
      %v1046 = vunpack.c.0.s8 %v1045
      %v1047 = vlaneseq
      %v1048 = vshrl.u32 %v1047, 7
      %v1049 = vsub.s32 %v1046, %v1048
      %v1050 = vrot.slane %v1042, %v1049
      %v1051 = vcombine.high %v1050, %v1050
      %v1053 = vunpack.c.l.s4 1966171168
      %v1054 = vunpack.c.0.s8 %v1053
      %v1055 = vlaneseq
      %v1056 = vshrl.u32 %v1055, 7
      %v1057 = vsub.s32 %v1054, %v1056
      %v1058 = vrot.slane %v1050, %v1057
      %v1060 = vunpack.c.l.s4 1966171168
      %v1061 = vunpack.c.0.s8 %v1060
      %v1062 = vlaneseq
      %v1063 = vshrl.u32 %v1062, 7
      %v1064 = vsub.s32 %v1061, %v1063
      %v1065 = vrot.slane %v1051, %v1064
      %v1066 = vcombine.high %v1058, %v1058
      %v1067 = vcombine.high %v1065, %v1065
      %v1069 = vpack.i.b16 %v1058, %v1058
      %v1071 = vlaneseq
      %v1072 = vshrl.u32 %v1071, 7
      %v1073 = vsub.s32 0, %v1072
      %v1074 = vrot.slane %v1069, %v1073
      %v1076 = vpack.i.b16 %v1065, %v1065
      %v1078 = vlaneseq
      %v1079 = vshrl.u32 %v1078, 7
      %v1080 = vsub.s32 0, %v1079
      %v1081 = vrot.slane %v1076, %v1080
      %v1083 = vpack.i.b16 %v1066, %v1066
      %v1085 = vlaneseq
      %v1086 = vshrl.u32 %v1085, 7
      %v1087 = vsub.s32 0, %v1086
      %v1088 = vrot.slane %v1083, %v1087
      %v1090 = vpack.i.b16 %v1067, %v1067
      %v1092 = vlaneseq
      %v1093 = vshrl.u32 %v1092, 7
      %v1094 = vsub.s32 0, %v1093
      %v1095 = vrot.slane %v1090, %v1094
      %v1100 = vunpack.c.l.b16 %v1074
      %v1101 = vunpack.c.l.b16 %v1081
      %v1102 = vunpack.c.l.b16 %v1088
      %v1103 = vunpack.c.l.b16 %v1095
      %v1104 = vpack.c.b16 %v1101, %v1100
      %v1105 = vpack.c.b16 %v1103, %v1102
      %1106 = vrot.lane.b32.xlu0 %v1104, 34
      %v1107 = vpop.permute.xlu0 %1106
      %1108 = vrot.lane.b32.xlu0 %v1105, 34
      %v1109 = vpop.permute.xlu0 %1108
      %v1110 = vrot.slane %v1107, 4
      %v1111 = vrot.slane %v1109, 4
      %vm1112 = vcmask 277504
      %v1113 = vsel %vm1112, %v1110, %v1107
      %v1114 = vsel %vm196, %v1110, %v1111
      %v1115 = vsel %vm1112, %v1114, %v1109
      %v1119 = vmul.bf16 %v1035, %v1113
      %v1120 = vmul.bf16 %v1036, %v1115
      %v1121 = vmul.bf16 %v1037, %v1111
      %v1122 = vmul.bf16 %v1038, %v1113
      %v1123 = vmul.bf16 %v1039, %v1115
      %v1124 = vmul.bf16 %v1040, %v1111
      %1131 = vrot.lane.b32.xlu0 %v1119, 94
      %v1132 = vpop.permute.xlu0 %1131
      %1133 = vrot.lane.b32.xlu0 %v1120, 94
      %v1134 = vpop.permute.xlu0 %1133
      %1135 = vrot.lane.b32.xlu0 %v1121, 94
      %v1136 = vpop.permute.xlu0 %1135
      %1137 = vrot.lane.b32.xlu0 %v1122, 94
      %v1138 = vpop.permute.xlu0 %1137
      %1139 = vrot.lane.b32.xlu0 %v1123, 94
      %v1140 = vpop.permute.xlu0 %1139
      %1141 = vrot.lane.b32.xlu0 %v1124, 94
      %v1142 = vpop.permute.xlu0 %1141
      %v1143 = vrot.slane %v1132, 4
      %v1144 = vrot.slane %v1134, 4
      %v1145 = vrot.slane %v1136, 4
      %v1146 = vrot.slane %v1138, 4
      %v1147 = vrot.slane %v1140, 4
      %v1148 = vrot.slane %v1142, 4
      %v1149 = vsel %vm196, %v1143, %v1144
      %vm1150 = vcmask 769024
      %v1151 = vsel %vm1150, %v1132, %v1149
      %v1152 = vsel %vm196, %v1144, %v1145
      %v1153 = vsel %vm1150, %v1134, %v1152
      %v1154 = vsel %vm196, %v1146, %v1147
      %v1155 = vsel %vm1150, %v1138, %v1154
      %v1156 = vsel %vm196, %v1147, %v1148
      %v1157 = vsel %vm1150, %v1140, %v1156
      %1162 = vst [vmem:[#allocation2 + $0x100] sm:$0xff] %v1151
      %1163 = vst [vmem:[#allocation2 + $0x108] sm:$0xff] %v1153
      %1164 = vst [vmem:[#allocation2 + $0x110] sm:$0xff] %v1155
      %1165 = vst [vmem:[#allocation2 + $0x118] sm:$0xff] %v1157
    $region29: #{gan_generator.8} parent=1 // pred_fallthru
      _
    %v1166 = vld [vmem:[#allocation3] sm:$0xff]
    %v1167 = vld [vmem:[#allocation3 + $0x8] sm:$0xff]
    %v1168 = vld [vmem:[#allocation3 + $0x10] sm:$0xff]
    %v1169 = vld [vmem:[#allocation3 + $0x18] sm:$0xff]
    %v1170 = vld [vmem:[#allocation2] sm:$0xff]
    %v1171 = vld [vmem:[#allocation2 + $0x8] sm:$0xff]
    %v1172 = vld [vmem:[#allocation2 + $0x10] sm:$0xff]
    %v1173 = vld [vmem:[#allocation2 + $0x18] sm:$0xff]
    %v1174 = vld [vmem:[#allocation2 + $0x20] sm:$0xff]
    %v1175 = vld [vmem:[#allocation2 + $0x28] sm:$0xff]
    %v1176 = vld [vmem:[#allocation2 + $0x30] sm:$0xff]
    %v1177 = vld [vmem:[#allocation2 + $0x38] sm:$0xff]
    %v1178 = vld [vmem:[#allocation2 + $0x40] sm:$0xff]
    %v1179 = vld [vmem:[#allocation2 + $0x48] sm:$0xff]
    %v1180 = vld [vmem:[#allocation2 + $0x50] sm:$0xff]
    %v1181 = vld [vmem:[#allocation2 + $0x58] sm:$0xff]
    %v1182 = vld [vmem:[#allocation2 + $0x60] sm:$0xff]
    %v1183 = vld [vmem:[#allocation2 + $0x68] sm:$0xff]
    %v1184 = vld [vmem:[#allocation2 + $0x70] sm:$0xff]
    %v1185 = vld [vmem:[#allocation2 + $0x78] sm:$0xff]
    %v1186 = vld [vmem:[#allocation2 + $0x80] sm:$0xff]
    %v1187 = vld [vmem:[#allocation2 + $0x88] sm:$0xff]
    %v1188 = vld [vmem:[#allocation2 + $0x90] sm:$0xff]
    %v1189 = vld [vmem:[#allocation2 + $0x98] sm:$0xff]
    %v1190 = vld [vmem:[#allocation2 + $0xa0] sm:$0xff]
    %v1191 = vld [vmem:[#allocation2 + $0xa8] sm:$0xff]
    %v1192 = vld [vmem:[#allocation2 + $0xb0] sm:$0xff]
    %v1193 = vld [vmem:[#allocation2 + $0xb8] sm:$0xff]
    %v1194 = vld [vmem:[#allocation2 + $0xc0] sm:$0xff]
    %v1195 = vld [vmem:[#allocation2 + $0xc8] sm:$0xff]
    %v1196 = vld [vmem:[#allocation2 + $0xd0] sm:$0xff]
    %v1197 = vld [vmem:[#allocation2 + $0xd8] sm:$0xff]
    %v1198 = vld [vmem:[#allocation2 + $0xe0] sm:$0xff]
    %v1199 = vld [vmem:[#allocation2 + $0xe8] sm:$0xff]
    %v1200 = vld [vmem:[#allocation2 + $0xf0] sm:$0xff]
    %v1201 = vld [vmem:[#allocation2 + $0xf8] sm:$0xff]
    %v1202 = vld [vmem:[#allocation2 + $0x100] sm:$0xff]
    %v1203 = vld [vmem:[#allocation2 + $0x108] sm:$0xff]
    %v1204 = vld [vmem:[#allocation2 + $0x110] sm:$0xff]
    %v1205 = vld [vmem:[#allocation2 + $0x118] sm:$0xff]
    %v1210 = vunpack.c.l.b16 %v1166
    %v1211 = vunpack.c.h.b16 %v1166
    %v1212 = vunpack.c.l.b16 %v1167
    %v1213 = vunpack.c.h.b16 %v1167
    %v1214 = vunpack.c.l.b16 %v1168
    %v1215 = vunpack.c.h.b16 %v1168
    %v1216 = vunpack.c.l.b16 %v1169
    %v1217 = vunpack.c.h.b16 %v1169
    %v1218 = vpack.c.b16 %v1212, %v1210
    %v1219 = vpack.c.b16 %v1213, %v1211
    %v1220 = vpack.c.b16 %v1216, %v1214
    %v1221 = vpack.c.b16 %v1217, %v1215
    %v1260 = vunpack.c.l.b16 %v1170
    %v1261 = vunpack.c.h.b16 %v1170
    %v1262 = vunpack.c.l.b16 %v1171
    %v1263 = vunpack.c.h.b16 %v1171
    %v1264 = vunpack.c.l.b16 %v1172
    %v1265 = vunpack.c.h.b16 %v1172
    %v1266 = vunpack.c.l.b16 %v1173
    %v1267 = vunpack.c.h.b16 %v1173
    %v1268 = vunpack.c.l.b16 %v1174
    %v1269 = vunpack.c.h.b16 %v1174
    %v1270 = vunpack.c.l.b16 %v1175
    %v1271 = vunpack.c.h.b16 %v1175
    %v1272 = vunpack.c.l.b16 %v1176
    %v1273 = vunpack.c.h.b16 %v1176
    %v1274 = vunpack.c.l.b16 %v1177
    %v1275 = vunpack.c.h.b16 %v1177
    %v1276 = vunpack.c.l.b16 %v1178
    %v1277 = vunpack.c.h.b16 %v1178
    %v1278 = vunpack.c.l.b16 %v1179
    %v1279 = vunpack.c.h.b16 %v1179
    %v1280 = vunpack.c.l.b16 %v1180
    %v1281 = vunpack.c.h.b16 %v1180
    %v1282 = vunpack.c.l.b16 %v1181
    %v1283 = vunpack.c.h.b16 %v1181
    %v1284 = vunpack.c.l.b16 %v1182
    %v1285 = vunpack.c.h.b16 %v1182
    %v1286 = vunpack.c.l.b16 %v1183
    %v1287 = vunpack.c.h.b16 %v1183
    %v1288 = vunpack.c.l.b16 %v1184
    %v1289 = vunpack.c.h.b16 %v1184
    %v1290 = vunpack.c.l.b16 %v1185
    %v1291 = vunpack.c.h.b16 %v1185
    %v1292 = vunpack.c.l.b16 %v1186
    %v1293 = vunpack.c.h.b16 %v1186
    %v1294 = vunpack.c.l.b16 %v1187
    %v1295 = vunpack.c.h.b16 %v1187
    %v1296 = vunpack.c.l.b16 %v1188
    %v1297 = vunpack.c.h.b16 %v1188
    %v1298 = vunpack.c.l.b16 %v1189
    %v1299 = vunpack.c.h.b16 %v1189
    %v1300 = vunpack.c.l.b16 %v1190
    %v1301 = vunpack.c.h.b16 %v1190
    %v1302 = vunpack.c.l.b16 %v1191
    %v1303 = vunpack.c.h.b16 %v1191
    %v1304 = vunpack.c.l.b16 %v1192
    %v1305 = vunpack.c.h.b16 %v1192
    %v1306 = vunpack.c.l.b16 %v1193
    %v1307 = vunpack.c.h.b16 %v1193
    %v1308 = vunpack.c.l.b16 %v1194
    %v1309 = vunpack.c.h.b16 %v1194
    %v1310 = vunpack.c.l.b16 %v1195
    %v1311 = vunpack.c.h.b16 %v1195
    %v1312 = vunpack.c.l.b16 %v1196
    %v1313 = vunpack.c.h.b16 %v1196
    %v1314 = vunpack.c.l.b16 %v1197
    %v1315 = vunpack.c.h.b16 %v1197
    %v1316 = vunpack.c.l.b16 %v1198
    %v1317 = vunpack.c.h.b16 %v1198
    %v1318 = vunpack.c.l.b16 %v1199
    %v1319 = vunpack.c.h.b16 %v1199
    %v1320 = vunpack.c.l.b16 %v1200
    %v1321 = vunpack.c.h.b16 %v1200
    %v1322 = vunpack.c.l.b16 %v1201
    %v1323 = vunpack.c.h.b16 %v1201
    %v1324 = vunpack.c.l.b16 %v1202
    %v1325 = vunpack.c.h.b16 %v1202
    %v1326 = vunpack.c.l.b16 %v1203
    %v1327 = vunpack.c.h.b16 %v1203
    %v1328 = vunpack.c.l.b16 %v1204
    %v1329 = vunpack.c.h.b16 %v1204
    %v1330 = vunpack.c.l.b16 %v1205
    %v1331 = vunpack.c.h.b16 %v1205
    %v1332 = vpack.c.b16 %v1264, %v1260
    %v1333 = vpack.c.b16 %v1265, %v1261
    %v1334 = vpack.c.b16 %v1266, %v1262
    %v1335 = vpack.c.b16 %v1267, %v1263
    %v1336 = vpack.c.b16 %v1272, %v1268
    %v1337 = vpack.c.b16 %v1273, %v1269
    %v1338 = vpack.c.b16 %v1274, %v1270
    %v1339 = vpack.c.b16 %v1275, %v1271
    %v1340 = vpack.c.b16 %v1280, %v1276
    %v1341 = vpack.c.b16 %v1281, %v1277
    %v1342 = vpack.c.b16 %v1282, %v1278
    %v1343 = vpack.c.b16 %v1283, %v1279
    %v1344 = vpack.c.b16 %v1288, %v1284
    %v1345 = vpack.c.b16 %v1289, %v1285
    %v1346 = vpack.c.b16 %v1290, %v1286
    %v1347 = vpack.c.b16 %v1291, %v1287
    %v1348 = vpack.c.b16 %v1296, %v1292
    %v1349 = vpack.c.b16 %v1297, %v1293
    %v1350 = vpack.c.b16 %v1298, %v1294
    %v1351 = vpack.c.b16 %v1299, %v1295
    %v1352 = vpack.c.b16 %v1304, %v1300
    %v1353 = vpack.c.b16 %v1305, %v1301
    %v1354 = vpack.c.b16 %v1306, %v1302
    %v1355 = vpack.c.b16 %v1307, %v1303
    %v1356 = vpack.c.b16 %v1312, %v1308
    %v1357 = vpack.c.b16 %v1313, %v1309
    %v1358 = vpack.c.b16 %v1314, %v1310
    %v1359 = vpack.c.b16 %v1315, %v1311
    %v1360 = vpack.c.b16 %v1320, %v1316
    %v1361 = vpack.c.b16 %v1321, %v1317
    %v1362 = vpack.c.b16 %v1322, %v1318
    %v1363 = vpack.c.b16 %v1323, %v1319
    %v1364 = vpack.c.b16 %v1328, %v1324
    %v1365 = vpack.c.b16 %v1329, %v1325
    %v1366 = vpack.c.b16 %v1330, %v1326
    %v1367 = vpack.c.b16 %v1331, %v1327
    %vm1404 = vcmask 130048
    %v1406 = vsel %vm1404, %v1219, 0
    %v1409 = vsel %vm1404, %v1221, 0
    %1411 = vmatprep.subr.bf16.mxu0 %v1361
    %1412 = vmatpush1.bf16.msra.mxu0 %v1360
    %1413 = vmatprep.subr.bf16.mxu0 %v1357
    %1414 = vmatpush1.bf16.msra.mxu0 %v1356
    %1415 = vmatprep.subr.bf16.mxu0 %v1353
    %1416 = vmatpush1.bf16.msra.mxu0 %v1352
    %1417 = vmatprep.subr.bf16.mxu0 %v1349
    %1418 = vmatpush1.bf16.msra.mxu0 %v1348
    %1419 = vmatprep.subr.bf16.mxu0 %v1345
    %1420 = vmatpush1.bf16.msra.mxu0 %v1344
    %1421 = vmatprep.subr.bf16.mxu0 %v1341
    %1422 = vmatpush1.bf16.msra.mxu0 %v1340
    %1423 = vmatprep.subr.bf16.mxu0 %v1337
    %1424 = vmatpush1.bf16.msra.mxu0 %v1336
    %1425 = vmatprep.subr.bf16.mxu0 %v1333
    %1426 = vmatpush1.bf16.msra.mxu0 %v1332
    %1427 = vmatprep.subr.bf16.mxu0 0
    %1428 = vmatpush2.bf16.msra.mxu0 0
    %1429 = vmatprep.subr.bf16.mxu0 0
    %1430 = vmatpush2.bf16.msra.mxu0 0
    %1431 = vmatprep.subr.bf16.mxu0 0
    %1432 = vmatpush2.bf16.msra.mxu0 0
    %1433 = vmatprep.subr.bf16.mxu0 0
    %1434 = vmatpush2.bf16.msra.mxu0 0
    %1435 = vmatprep.subr.bf16.mxu0 0
    %1436 = vmatpush2.bf16.msra.mxu0 0
    %1437 = vmatprep.subr.bf16.mxu0 0
    %1438 = vmatpush2.bf16.msra.mxu0 0
    %1439 = vmatprep.subr.bf16.mxu0 0
    %1440 = vmatpush2.bf16.msra.mxu0 0
    %1441 = vmatprep.subr.bf16.mxu0 %v1365
    %1442 = vmatpush2.bf16.msra.mxu0 %v1364
    %1443 = vmatprep.mubr.bf16.mxu0 %v1406
    %1444 = vmatmul.mubr.bf16.gmra.mxu0 %v1218
    %v1445 = vpop.f32.mrf.mxu0
    %v1446 = vadd.f32 0.0, %v1445
    %v1447 = vpop.f32.mrf.mxu0
    %v1448 = vadd.f32 0.0, %v1447
    %v1449 = vpop.f32.mrf.mxu0
    %v1450 = vadd.f32 0.0, %v1449
    %v1451 = vpop.f32.mrf.mxu0
    %v1452 = vadd.f32 0.0, %v1451
    %1453 = vmatprep.mubr.bf16.mxu0 %v1409
    %1454 = vmatmul.mubr.bf16.gmra.mxu0 %v1220
    %v1455 = vpop.f32.mrf.mxu0
    %v1456 = vadd.f32 0.0, %v1455
    %v1457 = vpop.f32.mrf.mxu0
    %v1458 = vadd.f32 0.0, %v1457
    %v1459 = vpop.f32.mrf.mxu0
    %v1460 = vadd.f32 0.0, %v1459
    %v1461 = vpop.f32.mrf.mxu0
    %v1462 = vadd.f32 0.0, %v1461
    %1463 = vdwg.mxu0
    %1464 = vmatprep.subr.bf16.mxu0 %v1363
    %1465 = vmatpush1.bf16.msra.mxu0 %v1362
    %1466 = vmatprep.subr.bf16.mxu0 %v1359
    %1467 = vmatpush1.bf16.msra.mxu0 %v1358
    %1468 = vmatprep.subr.bf16.mxu0 %v1355
    %1469 = vmatpush1.bf16.msra.mxu0 %v1354
    %1470 = vmatprep.subr.bf16.mxu0 %v1351
    %1471 = vmatpush1.bf16.msra.mxu0 %v1350
    %1472 = vmatprep.subr.bf16.mxu0 %v1347
    %1473 = vmatpush1.bf16.msra.mxu0 %v1346
    %1474 = vmatprep.subr.bf16.mxu0 %v1343
    %1475 = vmatpush1.bf16.msra.mxu0 %v1342
    %1476 = vmatprep.subr.bf16.mxu0 %v1339
    %1477 = vmatpush1.bf16.msra.mxu0 %v1338
    %1478 = vmatprep.subr.bf16.mxu0 %v1335
    %1479 = vmatpush1.bf16.msra.mxu0 %v1334
    %1480 = vmatprep.subr.bf16.mxu0 0
    %1481 = vmatpush2.bf16.msra.mxu0 0
    %1482 = vmatprep.subr.bf16.mxu0 0
    %1483 = vmatpush2.bf16.msra.mxu0 0
    %1484 = vmatprep.subr.bf16.mxu0 0
    %1485 = vmatpush2.bf16.msra.mxu0 0
    %1486 = vmatprep.subr.bf16.mxu0 0
    %1487 = vmatpush2.bf16.msra.mxu0 0
    %1488 = vmatprep.subr.bf16.mxu0 0
    %1489 = vmatpush2.bf16.msra.mxu0 0
    %1490 = vmatprep.subr.bf16.mxu0 0
    %1491 = vmatpush2.bf16.msra.mxu0 0
    %1492 = vmatprep.subr.bf16.mxu0 0
    %1493 = vmatpush2.bf16.msra.mxu0 0
    %1494 = vmatprep.subr.bf16.mxu0 %v1367
    %1495 = vmatpush2.bf16.msra.mxu0 %v1366
    %1496 = vmatprep.mubr.bf16.mxu0 %v1406
    %1497 = vmatmul.mubr.bf16.gmra.mxu0 %v1218
    %v1498 = vpop.f32.mrf.mxu0
    %v1499 = vadd.f32 0.0, %v1498
    %v1500 = vpop.f32.mrf.mxu0
    %v1501 = vadd.f32 0.0, %v1500
    %v1502 = vpop.f32.mrf.mxu0
    %v1503 = vadd.f32 0.0, %v1502
    %v1504 = vpop.f32.mrf.mxu0
    %v1505 = vadd.f32 0.0, %v1504
    %1506 = vmatprep.mubr.bf16.mxu0 %v1409
    %1507 = vmatmul.mubr.bf16.gmra.mxu0 %v1220
    %v1508 = vpop.f32.mrf.mxu0
    %v1509 = vadd.f32 0.0, %v1508
    %v1510 = vpop.f32.mrf.mxu0
    %v1511 = vadd.f32 0.0, %v1510
    %v1512 = vpop.f32.mrf.mxu0
    %v1513 = vadd.f32 0.0, %v1512
    %v1514 = vpop.f32.mrf.mxu0
    %v1515 = vadd.f32 0.0, %v1514
    %1516 = vdwg.mxu0
    %v1517 = vadd.f32 %v1446, %v1448
    %v1518 = vadd.f32 %v1517, %v1499
    %v1519 = vadd.f32 %v1518, %v1501
    %1520 = vadd.xlane.f32.xlu0 %v1519
    %v1521 = vpop.xlane.xlu0 %1520
    %v1522 = vadd.f32 %v1521, 0.0
    %v1523 = vmul.f32 %v1446, %v1446
    %v1524 = vmul.f32 %v1448, %v1448
    %v1525 = vmul.f32 %v1499, %v1499
    %v1526 = vmul.f32 %v1501, %v1501
    %v1527 = vadd.f32 %v1523, %v1524
    %v1528 = vadd.f32 %v1527, %v1525
    %v1529 = vadd.f32 %v1528, %v1526
    %1530 = vadd.xlane.f32.xlu0 %v1529
    %v1531 = vpop.xlane.xlu0 %1530
    %v1532 = vadd.f32 %v1531, 0.0
    %v1533 = vadd.f32 %v1450, %v1452
    %v1534 = vadd.f32 %v1533, %v1503
    %v1535 = vadd.f32 %v1534, %v1505
    %1536 = vadd.xlane.f32.xlu0 %v1535
    %v1537 = vpop.xlane.xlu0 %1536
    %v1538 = vadd.f32 %v1522, %v1537
    %v1539 = vmul.f32 %v1450, %v1450
    %v1540 = vmul.f32 %v1452, %v1452
    %v1541 = vmul.f32 %v1503, %v1503
    %v1542 = vmul.f32 %v1505, %v1505
    %v1543 = vadd.f32 %v1539, %v1540
    %v1544 = vadd.f32 %v1543, %v1541
    %v1545 = vadd.f32 %v1544, %v1542
    %1546 = vadd.xlane.f32.xlu0 %v1545
    %v1547 = vpop.xlane.xlu0 %1546
    %v1548 = vadd.f32 %v1532, %v1547
    %v1549 = vadd.f32 %v1456, %v1458
    %v1550 = vadd.f32 %v1549, %v1509
    %v1551 = vadd.f32 %v1550, %v1511
    %1552 = vadd.xlane.f32.xlu0 %v1551
    %v1553 = vpop.xlane.xlu0 %1552
    %v1554 = vadd.f32 %v1538, %v1553
    %v1555 = vmul.f32 %v1456, %v1456
    %v1556 = vmul.f32 %v1458, %v1458
    %v1557 = vmul.f32 %v1509, %v1509
    %v1558 = vmul.f32 %v1511, %v1511
    %v1559 = vadd.f32 %v1555, %v1556
    %v1560 = vadd.f32 %v1559, %v1557
    %v1561 = vadd.f32 %v1560, %v1558
    %1562 = vadd.xlane.f32.xlu0 %v1561
    %v1563 = vpop.xlane.xlu0 %1562
    %v1564 = vadd.f32 %v1548, %v1563
    %v1565 = vadd.f32 %v1460, %v1462
    %v1566 = vadd.f32 %v1565, %v1513
    %v1567 = vadd.f32 %v1566, %v1515
    %1568 = vadd.xlane.f32.xlu0 %v1567
    %v1569 = vpop.xlane.xlu0 %1568
    %v1570 = vadd.f32 %v1554, %v1569
    %v1571 = vmul.f32 %v1460, %v1460
    %v1572 = vmul.f32 %v1462, %v1462
    %v1573 = vmul.f32 %v1513, %v1513
    %v1574 = vmul.f32 %v1515, %v1515
    %v1575 = vadd.f32 %v1571, %v1572
    %v1576 = vadd.f32 %v1575, %v1573
    %v1577 = vadd.f32 %v1576, %v1574
    %1578 = vadd.xlane.f32.xlu0 %v1577
    %v1579 = vpop.xlane.xlu0 %1578
    %v1580 = vadd.f32 %v1564, %v1579
    %v1581 = vmul.f32 %v1570, 0.00048828125
    %v1582 = vmul.f32 %v1580, 0.00048828125
    %v1583 = vmul.f32 %v1581, %v1581
    %v1584 = vsub.f32 %v1582, %v1583
    %v1585 = vmax.f32 %v1584, 0.0
    %v1586 = vld [vmem:[%s3] sm:$0xff]
    %v1587 = vadd.f32 %v1585, 1e-05
    %v1588 = vrsqrt.pop %v1587
    %v1589 = vmul.f32 %v1586, %v1588
    %v1590 = vld [vmem:[%s4] sm:$0xff]
    %v1591 = vmul.f32 %v1581, %v1589
    %v1592 = vsub.f32 %v1590, %v1591
    %1594 = vset.pattern.permute.xlu0 0
    %1595 = vperm.xlu0 %1594, %v1589
    %v1596 = vpop.permute.xlu0 %1595
    %v1598 = vmul.f32 %v1446, %v1596
    %v1599 = vmul.f32 %v1448, %v1596
    %v1600 = vmul.f32 %v1499, %v1596
    %v1601 = vmul.f32 %v1501, %v1596
    %1603 = vset.pattern.permute.xlu0 0
    %1604 = vperm.xlu0 %1603, %v1592
    %v1605 = vpop.permute.xlu0 %1604
    %v1607 = vadd.f32 %v1598, %v1605
    %v1608 = vadd.f32 %v1599, %v1605
    %v1609 = vadd.f32 %v1600, %v1605
    %v1610 = vadd.f32 %v1601, %v1605
    %v1611 = vmax.f32 %v1607, 0.0
    %v1612 = vmax.f32 %v1608, 0.0
    %v1613 = vmax.f32 %v1609, 0.0
    %v1614 = vmax.f32 %v1610, 0.0
    %v1615 = vpack.c.bf16 %v1611, %v1611
    %v1616 = vpack.c.bf16 %v1612, %v1612
    %v1617 = vpack.c.bf16 %v1613, %v1613
    %v1618 = vpack.c.bf16 %v1614, %v1614
    %v1623 = vunpack.c.l.b16 %v1615
    %v1624 = vunpack.c.l.b16 %v1616
    %v1625 = vunpack.c.l.b16 %v1617
    %v1626 = vunpack.c.l.b16 %v1618
    %v1627 = vpack.c.b16 %v1624, %v1623
    %v1628 = vpack.c.b16 %v1626, %v1625
    %1631 = vst [vmem:[%s5] sm:$0xff] %v1627
    %1632 = vst [vmem:[%s5 + $0x8] sm:$0xff] %v1628
    %v1633 = vmul.f32 %v1450, %v1596
    %v1634 = vmul.f32 %v1452, %v1596
    %v1635 = vmul.f32 %v1503, %v1596
    %v1636 = vmul.f32 %v1505, %v1596
    %v1637 = vadd.f32 %v1633, %v1605
    %v1638 = vadd.f32 %v1634, %v1605
    %v1639 = vadd.f32 %v1635, %v1605
    %v1640 = vadd.f32 %v1636, %v1605
    %v1641 = vmax.f32 %v1637, 0.0
    %v1642 = vmax.f32 %v1638, 0.0
    %v1643 = vmax.f32 %v1639, 0.0
    %v1644 = vmax.f32 %v1640, 0.0
    %v1645 = vpack.c.bf16 %v1641, %v1641
    %v1646 = vpack.c.bf16 %v1642, %v1642
    %v1647 = vpack.c.bf16 %v1643, %v1643
    %v1648 = vpack.c.bf16 %v1644, %v1644
    %v1653 = vunpack.c.l.b16 %v1645
    %v1654 = vunpack.c.l.b16 %v1646
    %v1655 = vunpack.c.l.b16 %v1647
    %v1656 = vunpack.c.l.b16 %v1648
    %v1657 = vpack.c.b16 %v1654, %v1653
    %v1658 = vpack.c.b16 %v1656, %v1655
    %s1661 = scalar_lea.vmem %s5, 16
    %1662 = vst [vmem:[%s1661] sm:$0xff] %v1657
    %1663 = vst [vmem:[%s1661 + $0x8] sm:$0xff] %v1658
    %v1664 = vmul.f32 %v1456, %v1596
    %v1665 = vmul.f32 %v1458, %v1596
    %v1666 = vmul.f32 %v1509, %v1596
    %v1667 = vmul.f32 %v1511, %v1596
    %v1668 = vadd.f32 %v1664, %v1605
    %v1669 = vadd.f32 %v1665, %v1605
    %v1670 = vadd.f32 %v1666, %v1605
    %v1671 = vadd.f32 %v1667, %v1605
    %v1672 = vmax.f32 %v1668, 0.0
    %v1673 = vmax.f32 %v1669, 0.0
    %v1674 = vmax.f32 %v1670, 0.0
    %v1675 = vmax.f32 %v1671, 0.0
    %v1676 = vpack.c.bf16 %v1672, %v1672
    %v1677 = vpack.c.bf16 %v1673, %v1673
    %v1678 = vpack.c.bf16 %v1674, %v1674
    %v1679 = vpack.c.bf16 %v1675, %v1675
    %v1684 = vunpack.c.l.b16 %v1676
    %v1685 = vunpack.c.l.b16 %v1677
    %v1686 = vunpack.c.l.b16 %v1678
    %v1687 = vunpack.c.l.b16 %v1679
    %v1688 = vpack.c.b16 %v1685, %v1684
    %v1689 = vpack.c.b16 %v1687, %v1686
    %s1692 = scalar_lea.vmem %s5, 32
    %1693 = vst [vmem:[%s1692] sm:$0xff] %v1688
    %1694 = vst [vmem:[%s1692 + $0x8] sm:$0xff] %v1689
    %v1695 = vmul.f32 %v1460, %v1596
    %v1696 = vmul.f32 %v1462, %v1596
    %v1697 = vmul.f32 %v1513, %v1596
    %v1698 = vmul.f32 %v1515, %v1596
    %v1699 = vadd.f32 %v1695, %v1605
    %v1700 = vadd.f32 %v1696, %v1605
    %v1701 = vadd.f32 %v1697, %v1605
    %v1702 = vadd.f32 %v1698, %v1605
    %v1703 = vmax.f32 %v1699, 0.0
    %v1704 = vmax.f32 %v1700, 0.0
    %v1705 = vmax.f32 %v1701, 0.0
    %v1706 = vmax.f32 %v1702, 0.0
    %v1707 = vpack.c.bf16 %v1703, %v1703
    %v1708 = vpack.c.bf16 %v1704, %v1704
    %v1709 = vpack.c.bf16 %v1705, %v1705
    %v1710 = vpack.c.bf16 %v1706, %v1706
    %v1715 = vunpack.c.l.b16 %v1707
    %v1716 = vunpack.c.l.b16 %v1708
    %v1717 = vunpack.c.l.b16 %v1709
    %v1718 = vunpack.c.l.b16 %v1710
    %v1719 = vpack.c.b16 %v1716, %v1715
    %v1720 = vpack.c.b16 %v1718, %v1717
    %s1723 = scalar_lea.vmem %s5, 48
    %1724 = vst [vmem:[%s1723] sm:$0xff] %v1719
    %1725 = vst [vmem:[%s1723 + $0x8] sm:$0xff] %v1720
    // Predicated region
    $region30: #{gan_generator.8} parent=1 // pred_check
      _
    $region31: #{gan_generator.8} parent=1 // pred_check_branch
      %1727 = sbr.rel (0) target = $region33
    $region32: #{gan_generator.8} parent=1 // pred_region
      _
    $region33: #{gan_generator.8} parent=1 // pred_fallthru
      _
    // Predicated region
    $region34: #{gan_generator.8} parent=1 // pred_check
      _
    $region35: #{gan_generator.8} parent=1 // pred_check_branch
      %1729 = sbr.rel (0) target = $region37
    $region36: #{gan_generator.8} parent=1 // pred_region
      _
    $region37: #{gan_generator.8} parent=1 // pred_fallthru
      _
    %1730 = vsyncpa [#allocation4], 1

// kernel: gan_generator.9
$region0: #{gan_generator.9}
  #allocation0 [shape = 'u32[]', space=smem, size = 0x4, offset = 0x4, fixed_abs, tag = 'smem constant byte address 0x4 - core index']
  #allocation1 [shape = 'u32[144,128]{1,0:T(1,128)}', space=vmem, size = 0x12000, scoped, tag = 'internal scratch']
  #allocation2 [shape = 'bf16[72,1024]{1,0:T(8,128)(2,1)}', space=vmem, size = 0x24000, scoped, tag = 'scratch operand']
  %s0 = inlined_call_operand.vmem [shape: bf16[2,8,1090], index: 0, kind: input, shape index: {}]
  %s1 = inlined_call_operand.hbm [shape: bf16[12,72], index: 1, kind: input, shape index: {}]
  %s2 = inlined_call_operand.vmem [shape: bf16[9,1,1024], index: 2, kind: input, shape index: {}]
  %s3 = inlined_call_operand.vmem [shape: f32[12,1], index: 3, kind: input, shape index: {}]
  %s4 = inlined_call_operand.vmem [shape: f32[2,12,1024], index: 4, kind: output, shape index: {}]
  %s5 = sld [smem:[#allocation0]]
  $region53: #{gan_generator.9} parent=0
    _
  %s7 = ssub.s32 1, %s5
  %s8 = scalar_select 0, %s7, %s5
  $region1: #{gan_generator.9} parent=0
    #allocation3 [shape = 'u8[4096]{0}', space=vmem, size = 0x1000, scoped, tag = 'input window, operand 1, single buffered']
    #allocation4 [shape = 's32[2]{0}', space=sflag, size = 0x8, scoped, tag = 'scoped memory for gan_generator.9']
    %9 = vsyncpa [#allocation4], 0
    loop: start=0, step=1, limit=4
    $region2: #{gan_generator.9} parent=1 // loop_pre_header
      _
    $region3: #{gan_generator.9} parent=1 // loop_header
      %s11 = sphi 0, %s15
      %p12 = scmp.ge.s32.totalorder %s11, 4
      %s21 = sphi 0, %s23
      %s24 = sphi 0, %s21
      %s25 = sphi 0, %s24
      %s41 = sphi 0, %s25
      %s45 = sphi 0, %s45
      %s47 = sphi 0, %s45
      %s48 = sphi 0, %s47
      %s62 = sphi 0, %s48
      %s66 = sphi 0, %s66
      %s68 = sphi 0, %s66
      %s69 = sphi 0, %s68
      %s83 = sphi 0, %s69
      %s87 = sphi 0, %s87
      %s89 = sphi 0, %s87
      %s90 = sphi 0, %s89
      %s104 = sphi 0, %s90
      %s110 = sphi 0, %s112
      %s113 = sphi 0, %s110
      %s114 = sphi 0, %s113
      %s130 = sphi 0, %s114
    $region4: #{gan_generator.9} parent=1 // loop_header_branch
      %14 = sbr.rel (%p12) target = $region8
    $region5: #{gan_generator.9} parent=1 // loop_body
      %s16 = ssub.s32 %s11, 1
      %s17 = ssub.s32 %s11, 2
      %s18 = sadd.s32 %s11, 1
      %s19 = ssub.s32 %s11, %s18
      %p20 = scmp.eq.s32.totalorder %s19, 0
      %s22 = sadd.s32 %s21, 1
      %s23 = scalar_select %p20, %s21, %s22
      %p26 = pneg %p20
      %p27 = scmp.eq.s32.totalorder %s11, 1
      %p28 = por %p26, %p27
      %p29 = scmp.ne.s32.totalorder %s21, %s24
      %p30 = scmp.eq.s32.totalorder %s11, 0
      %p31 = por %p29, %p30
      %p32 = scmp.ne.s32.totalorder %s21, %s24
      %p33 = scmp.eq.s32.totalorder %s16, 1
      %p34 = por %p32, %p33
      %p35 = scmp.ne.s32.totalorder %s24, %s25
      %p36 = scmp.eq.s32.totalorder %s16, 0
      %p37 = por %p35, %p36
      %p38 = scmp.ne.s32.totalorder %s24, %s25
      %p39 = scmp.eq.s32.totalorder %s17, 1
      %p40 = por %p38, %p39
      %p42 = scmp.ne.s32.totalorder %s25, %s41
      %p43 = scmp.eq.s32.totalorder %s17, 0
      %p44 = por %p42, %p43
      %s46 = sadd.s32 %s45, 1
      %p49 = scmp.eq.s32.totalorder %s11, 1
      %p50 = scmp.ne.s32.totalorder %s45, %s47
      %p51 = scmp.eq.s32.totalorder %s11, 0
      %p52 = por %p50, %p51
      %p53 = scmp.ne.s32.totalorder %s45, %s47
      %p54 = scmp.eq.s32.totalorder %s16, 1
      %p55 = por %p53, %p54
      %p56 = scmp.ne.s32.totalorder %s47, %s48
      %p57 = scmp.eq.s32.totalorder %s16, 0
      %p58 = por %p56, %p57
      %p59 = scmp.ne.s32.totalorder %s47, %s48
      %p60 = scmp.eq.s32.totalorder %s17, 1
      %p61 = por %p59, %p60
      %p63 = scmp.ne.s32.totalorder %s48, %s62
      %p64 = scmp.eq.s32.totalorder %s17, 0
      %p65 = por %p63, %p64
      %s67 = sadd.s32 %s66, 1
      %p70 = scmp.eq.s32.totalorder %s11, 1
      %p71 = scmp.ne.s32.totalorder %s66, %s68
      %p72 = scmp.eq.s32.totalorder %s11, 0
      %p73 = por %p71, %p72
      %p74 = scmp.ne.s32.totalorder %s66, %s68
      %p75 = scmp.eq.s32.totalorder %s16, 1
      %p76 = por %p74, %p75
      %p77 = scmp.ne.s32.totalorder %s68, %s69
      %p78 = scmp.eq.s32.totalorder %s16, 0
      %p79 = por %p77, %p78
      %p80 = scmp.ne.s32.totalorder %s68, %s69
      %p81 = scmp.eq.s32.totalorder %s17, 1
      %p82 = por %p80, %p81
      %p84 = scmp.ne.s32.totalorder %s69, %s83
      %p85 = scmp.eq.s32.totalorder %s17, 0
      %p86 = por %p84, %p85
      %s88 = sadd.s32 %s87, 1
      %p91 = scmp.eq.s32.totalorder %s11, 1
      %p92 = scmp.ne.s32.totalorder %s87, %s89
      %p93 = scmp.eq.s32.totalorder %s11, 0
      %p94 = por %p92, %p93
      %p95 = scmp.ne.s32.totalorder %s87, %s89
      %p96 = scmp.eq.s32.totalorder %s16, 1
      %p97 = por %p95, %p96
      %p98 = scmp.ne.s32.totalorder %s89, %s90
      %p99 = scmp.eq.s32.totalorder %s16, 0
      %p100 = por %p98, %p99
      %p101 = scmp.ne.s32.totalorder %s89, %s90
      %p102 = scmp.eq.s32.totalorder %s17, 1
      %p103 = por %p101, %p102
      %p105 = scmp.ne.s32.totalorder %s90, %s104
      %p106 = scmp.eq.s32.totalorder %s17, 0
      %p107 = por %p105, %p106
      %s108 = ssub.s32 %s11, %s18
      %p109 = scmp.eq.s32.totalorder %s108, 0
      %s111 = sadd.s32 %s110, 1
      %s112 = scalar_select %p109, %s110, %s111
      %p115 = pneg %p109
      %p116 = scmp.eq.s32.totalorder %s11, 1
      %p117 = por %p115, %p116
      %p118 = scmp.ne.s32.totalorder %s110, %s113
      %p119 = scmp.eq.s32.totalorder %s11, 0
      %p120 = por %p118, %p119
      %p121 = scmp.ne.s32.totalorder %s110, %s113
      %p122 = scmp.eq.s32.totalorder %s16, 1
      %p123 = por %p121, %p122
      %p124 = scmp.ne.s32.totalorder %s113, %s114
      %p125 = scmp.eq.s32.totalorder %s16, 0
      %p126 = por %p124, %p125
      %p127 = scmp.ne.s32.totalorder %s113, %s114
      %p128 = scmp.eq.s32.totalorder %s17, 1
      %p129 = por %p127, %p128
      %p131 = scmp.ne.s32.totalorder %s114, %s130
      %p132 = scmp.eq.s32.totalorder %s17, 0
      %p133 = por %p131, %p132
      %p134 = scmp.le.s32.totalorder 1, %s11
      %p135 = scmp.lt.s32.totalorder %s11, 3
      %p136 = pnand %p134, %p135
      %p137 = pneg %p136
      // Predicated region
      $region9: #{gan_generator.9} parent=5 // pred_check
        _
      $region10: #{gan_generator.9} parent=5 // pred_check_branch
        %139 = sbr.rel (%p136) target = $region12
      $region11: #{gan_generator.9} parent=5 // pred_region
        %s140 = ssub.s32 %s11, 1
        // Predicated region
        $region13: #{gan_generator.9} parent=11 // pred_check
          %p141 = pneg %p58
        $region14: #{gan_generator.9} parent=11 // pred_check_branch
          %143 = sbr.rel (%p141) target = $region16
        $region15: #{gan_generator.9} parent=11 // pred_region
          %s145 = ssub.s32 128, 128
          %146 = vsyncadd [#allocation4], %s145
          %s147 = sshll.u32 [#allocation3], 4
          %s148 = int_to_ptr.vmem [resolvable:$true] %s147
          %153 = dma.hbm_to_vmem [thread:$0]  %s1, 128, %s148, [#allocation4], 64, 64, 4
        $region16: #{gan_generator.9} parent=11 // pred_fallthru
          _
        // Predicated region
        $region17: #{gan_generator.9} parent=11 // pred_check
          %p154 = pneg %p79
        $region18: #{gan_generator.9} parent=11 // pred_check_branch
          %156 = sbr.rel (%p154) target = $region20
        $region19: #{gan_generator.9} parent=11 // pred_region
          _
        $region20: #{gan_generator.9} parent=11 // pred_fallthru
          _
        // Predicated region
        $region21: #{gan_generator.9} parent=11 // pred_check
          %p157 = pneg %p100
        $region22: #{gan_generator.9} parent=11 // pred_check_branch
          %159 = sbr.rel (%p157) target = $region24
        $region23: #{gan_generator.9} parent=11 // pred_region
          _
        $region24: #{gan_generator.9} parent=11 // pred_fallthru
          _
      $region12: #{gan_generator.9} parent=5 // pred_fallthru
        _
      %p160 = scmp.lt.s32.totalorder %s11, 2
      // Predicated region
      $region25: #{gan_generator.9} parent=5 // pred_check
        %p161 = pneg %p160
      $region26: #{gan_generator.9} parent=5 // pred_check_branch
        %163 = sbr.rel (%p161) target = $region28
      $region27: #{gan_generator.9} parent=5 // pred_region
        // Predicated region
        $region29: #{gan_generator.9} parent=27 // pred_check
          %p164 = pneg %p31
        $region30: #{gan_generator.9} parent=27 // pred_check_branch
          %166 = sbr.rel (%p164) target = $region32
        $region31: #{gan_generator.9} parent=27 // pred_region
          %p167 = scmp.lt.s32.totalorder %s11, 1
          %s168 = scalar_select %p167, %s11, 1
          %s169 = smul.addr %s168, 9
          %s170 = smul.addr %s169, 4
          %s171 = scalar_lea.vmem %s0, %s170
        $region32: #{gan_generator.9} parent=27 // pred_fallthru
          _
      $region28: #{gan_generator.9} parent=5 // pred_fallthru
        _
      %p172 = scmp.le.s32.totalorder 1, %s11
      %p173 = scmp.lt.s32.totalorder %s11, 3
      %p174 = pnand %p172, %p173
      %p175 = pneg %p174
      // Predicated region
      $region33: #{gan_generator.9} parent=5 // pred_check
        _
      $region34: #{gan_generator.9} parent=5 // pred_check_branch
        %177 = sbr.rel (%p174) target = $region36
      $region35: #{gan_generator.9} parent=5 // pred_region
        %s178 = ssub.s32 %s11, 1
        // Predicated region
        $region37: #{gan_generator.9} parent=35 // pred_check
          %p179 = pneg %p58
        $region38: #{gan_generator.9} parent=35 // pred_check_branch
          %181 = sbr.rel (%p179) target = $region40
        $region39: #{gan_generator.9} parent=35 // pred_region
          %182 = dma.done [#allocation4], 128
        $region40: #{gan_generator.9} parent=35 // pred_fallthru
          _
        %p183 = scmp.lt.s32.totalorder %s16, 1
        %s184 = scalar_select %p183, %s16, 1
        %s185 = smul.addr %s184, 9
        %s186 = smul.addr %s185, 4
        %s187 = scalar_lea.vmem %s0, %s186
        %p188 = pneg %p37
        %p189 = pneg %p34
        %p190 = pneg %p58
        %p191 = pneg %p55
        %p192 = pneg %p79
        %p193 = pneg %p76
        %p194 = pneg %p100
        %p195 = pneg %p97
        %p196 = pneg %p126
        %p197 = pneg %p123
        %p198 = scmp.lt.s32.totalorder %s16, 1
        %s199 = scalar_select %p198, %s16, 1
        %s200 = smul.addr %s199, 16
        %s201 = smul.addr %s200, 8
        %s202 = scalar_lea.vmem %s4, %s201
        %p203 = scmp.lt.s32.totalorder %s16, 1
        %s204 = scalar_select %p203, %s16, 1
        %s205 = smul.addr %s204, 9
        %s206 = smul.addr %s205, 4
        %s207 = scalar_lea.vmem %s0, %s206
        %p208 = scmp.lt.s32.totalorder %s16, 1
        %s209 = scalar_select %p208, %s16, 1
        %s210 = smul.addr %s209, 16
        %s211 = smul.addr %s210, 8
        %s212 = scalar_lea.vmem %s4, %s211
        %v214 = vld [vmem:[%s207] sm:$0xff]
        %v215 = vld [vmem:[%s207 + $0x8] sm:$0xff]
        %v216 = vld [vmem:[%s207 + $0x10] sm:$0xff]
        %v217 = vld [vmem:[%s207 + $0x18] sm:$0xff]
        %v218 = vld [vmem:[%s2] sm:$0xff]
        %v220 = vcombine.high %v218, %v218
        %v222 = vunpack.c.l.s4 1966171168
        %v223 = vunpack.c.0.s8 %v222
        %v224 = vlaneseq
        %v225 = vshrl.u32 %v224, 7
        %v226 = vsub.s32 %v223, %v225
        %v227 = vrot.slane %v218, %v226
        %v229 = vunpack.c.l.s4 1966171168
        %v230 = vunpack.c.0.s8 %v229
        %v231 = vlaneseq
        %v232 = vshrl.u32 %v231, 7
        %v233 = vsub.s32 %v230, %v232
        %v234 = vrot.slane %v220, %v233
        %v235 = vcombine.high %v227, %v227
        %v236 = vcombine.high %v234, %v234
        %v238 = vunpack.c.l.s4 1966171168
        %v239 = vunpack.c.0.s8 %v238
        %v240 = vlaneseq
        %v241 = vshrl.u32 %v240, 7
        %v242 = vsub.s32 %v239, %v241
        %v243 = vrot.slane %v227, %v242
        %v245 = vunpack.c.l.s4 1966171168
        %v246 = vunpack.c.0.s8 %v245
        %v247 = vlaneseq
        %v248 = vshrl.u32 %v247, 7
        %v249 = vsub.s32 %v246, %v248
        %v250 = vrot.slane %v234, %v249
        %v252 = vunpack.c.l.s4 1966171168
        %v253 = vunpack.c.0.s8 %v252
        %v254 = vlaneseq
        %v255 = vshrl.u32 %v254, 7
        %v256 = vsub.s32 %v253, %v255
        %v257 = vrot.slane %v235, %v256
        %v259 = vunpack.c.l.s4 1966171168
        %v260 = vunpack.c.0.s8 %v259
        %v261 = vlaneseq
        %v262 = vshrl.u32 %v261, 7
        %v263 = vsub.s32 %v260, %v262
        %v264 = vrot.slane %v236, %v263
        %v265 = vcombine.high %v243, %v243
        %v266 = vcombine.high %v250, %v250
        %v267 = vcombine.high %v257, %v257
        %v268 = vcombine.high %v264, %v264
        %v270 = vpack.i.b16 %v243, %v243
        %v272 = vlaneseq
        %v273 = vshrl.u32 %v272, 7
        %v274 = vsub.s32 0, %v273
        %v275 = vrot.slane %v270, %v274
        %v277 = vpack.i.b16 %v257, %v257
        %v279 = vlaneseq
        %v280 = vshrl.u32 %v279, 7
        %v281 = vsub.s32 0, %v280
        %v282 = vrot.slane %v277, %v281
        %v284 = vpack.i.b16 %v265, %v265
        %v286 = vlaneseq
        %v287 = vshrl.u32 %v286, 7
        %v288 = vsub.s32 0, %v287
        %v289 = vrot.slane %v284, %v288
        %v291 = vpack.i.b16 %v267, %v267
        %v293 = vlaneseq
        %v294 = vshrl.u32 %v293, 7
        %v295 = vsub.s32 0, %v294
        %v296 = vrot.slane %v291, %v295
        %v298 = vpack.i.b16 %v250, %v250
        %v300 = vlaneseq
        %v301 = vshrl.u32 %v300, 7
        %v302 = vsub.s32 0, %v301
        %v303 = vrot.slane %v298, %v302
        %v305 = vpack.i.b16 %v264, %v264
        %v307 = vlaneseq
        %v308 = vshrl.u32 %v307, 7
        %v309 = vsub.s32 0, %v308
        %v310 = vrot.slane %v305, %v309
        %v312 = vpack.i.b16 %v266, %v266
        %v314 = vlaneseq
        %v315 = vshrl.u32 %v314, 7
        %v316 = vsub.s32 0, %v315
        %v317 = vrot.slane %v312, %v316
        %v319 = vpack.i.b16 %v268, %v268
        %v321 = vlaneseq
        %v322 = vshrl.u32 %v321, 7
        %v323 = vsub.s32 0, %v322
        %v324 = vrot.slane %v319, %v323
        %v333 = vunpack.c.l.b16 %v275
        %v334 = vunpack.c.l.b16 %v282
        %v335 = vunpack.c.l.b16 %v289
        %v336 = vunpack.c.l.b16 %v296
        %v337 = vunpack.c.l.b16 %v303
        %v338 = vunpack.c.l.b16 %v310
        %v339 = vunpack.c.l.b16 %v317
        %v340 = vunpack.c.l.b16 %v324
        %v341 = vpack.c.b16 %v334, %v333
        %v342 = vpack.c.b16 %v336, %v335
        %v343 = vpack.c.b16 %v338, %v337
        %v344 = vpack.c.b16 %v340, %v339
        %v349 = vmul.bf16 %v214, %v341
        %v350 = vmul.bf16 %v215, %v342
        %v351 = vmul.bf16 %v216, %v343
        %v352 = vmul.bf16 %v217, %v344
        %353 = vst [vmem:[#allocation2] sm:$0xff] %v349
        %354 = vst [vmem:[#allocation2 + $0x8] sm:$0xff] %v350
        %355 = vst [vmem:[#allocation2 + $0x10] sm:$0xff] %v351
        %356 = vst [vmem:[#allocation2 + $0x18] sm:$0xff] %v352
        %v357 = vld [vmem:[%s207] sm:$0xff]
        %v358 = vld [vmem:[%s207 + $0x8] sm:$0xff]
        %v359 = vld [vmem:[%s207 + $0x10] sm:$0xff]
        %v360 = vld [vmem:[%s207 + $0x18] sm:$0xff]
        %v361 = vld [vmem:[%s207 + $0x20] sm:$0xf]
        %s362 = scalar_lea.vmem %s2, 8
        %v363 = vld [vmem:[%s362] sm:$0xff]
        %v365 = vcombine.high %v363, %v363
        %v367 = vunpack.c.l.s4 1966171168
        %v368 = vunpack.c.0.s8 %v367
        %v369 = vlaneseq
        %v370 = vshrl.u32 %v369, 7
        %v371 = vsub.s32 %v368, %v370
        %v372 = vrot.slane %v363, %v371
        %v374 = vunpack.c.l.s4 1966171168
        %v375 = vunpack.c.0.s8 %v374
        %v376 = vlaneseq
        %v377 = vshrl.u32 %v376, 7
        %v378 = vsub.s32 %v375, %v377
        %v379 = vrot.slane %v365, %v378
        %v380 = vcombine.high %v372, %v372
        %v381 = vcombine.high %v379, %v379
        %v383 = vunpack.c.l.s4 1966171168
        %v384 = vunpack.c.0.s8 %v383
        %v385 = vlaneseq
        %v386 = vshrl.u32 %v385, 7
        %v387 = vsub.s32 %v384, %v386
        %v388 = vrot.slane %v372, %v387
        %v390 = vunpack.c.l.s4 1966171168
        %v391 = vunpack.c.0.s8 %v390
        %v392 = vlaneseq
        %v393 = vshrl.u32 %v392, 7
        %v394 = vsub.s32 %v391, %v393
        %v395 = vrot.slane %v379, %v394
        %v397 = vunpack.c.l.s4 1966171168
        %v398 = vunpack.c.0.s8 %v397
        %v399 = vlaneseq
        %v400 = vshrl.u32 %v399, 7
        %v401 = vsub.s32 %v398, %v400
        %v402 = vrot.slane %v380, %v401
        %v404 = vunpack.c.l.s4 1966171168
        %v405 = vunpack.c.0.s8 %v404
        %v406 = vlaneseq
        %v407 = vshrl.u32 %v406, 7
        %v408 = vsub.s32 %v405, %v407
        %v409 = vrot.slane %v381, %v408
        %v410 = vcombine.high %v388, %v388
        %v411 = vcombine.high %v395, %v395
        %v412 = vcombine.high %v402, %v402
        %v413 = vcombine.high %v409, %v409
        %v415 = vpack.i.b16 %v388, %v388
        %v417 = vlaneseq
        %v418 = vshrl.u32 %v417, 7
        %v419 = vsub.s32 0, %v418
        %v420 = vrot.slane %v415, %v419
        %v422 = vpack.i.b16 %v402, %v402
        %v424 = vlaneseq
        %v425 = vshrl.u32 %v424, 7
        %v426 = vsub.s32 0, %v425
        %v427 = vrot.slane %v422, %v426
        %v429 = vpack.i.b16 %v410, %v410
        %v431 = vlaneseq
        %v432 = vshrl.u32 %v431, 7
        %v433 = vsub.s32 0, %v432
        %v434 = vrot.slane %v429, %v433
        %v436 = vpack.i.b16 %v412, %v412
        %v438 = vlaneseq
        %v439 = vshrl.u32 %v438, 7
        %v440 = vsub.s32 0, %v439
        %v441 = vrot.slane %v436, %v440
        %v443 = vpack.i.b16 %v395, %v395
        %v445 = vlaneseq
        %v446 = vshrl.u32 %v445, 7
        %v447 = vsub.s32 0, %v446
        %v448 = vrot.slane %v443, %v447
        %v450 = vpack.i.b16 %v409, %v409
        %v452 = vlaneseq
        %v453 = vshrl.u32 %v452, 7
        %v454 = vsub.s32 0, %v453
        %v455 = vrot.slane %v450, %v454
        %v457 = vpack.i.b16 %v411, %v411
        %v459 = vlaneseq
        %v460 = vshrl.u32 %v459, 7
        %v461 = vsub.s32 0, %v460
        %v462 = vrot.slane %v457, %v461
        %v464 = vpack.i.b16 %v413, %v413
        %v466 = vlaneseq
        %v467 = vshrl.u32 %v466, 7
        %v468 = vsub.s32 0, %v467
        %v469 = vrot.slane %v464, %v468
        %v478 = vunpack.c.l.b16 %v420
        %v479 = vunpack.c.l.b16 %v427
        %v480 = vunpack.c.l.b16 %v434
        %v481 = vunpack.c.l.b16 %v441
        %v482 = vunpack.c.l.b16 %v448
        %v483 = vunpack.c.l.b16 %v455
        %v484 = vunpack.c.l.b16 %v462
        %v485 = vunpack.c.l.b16 %v469
        %v486 = vpack.c.b16 %v479, %v478
        %v487 = vpack.c.b16 %v481, %v480
        %v488 = vpack.c.b16 %v483, %v482
        %v489 = vpack.c.b16 %v485, %v484
        %490 = vrot.lane.b32.xlu0 %v486, 1
        %v491 = vpop.permute.xlu0 %490
        %492 = vrot.lane.b32.xlu0 %v487, 1
        %v493 = vpop.permute.xlu0 %492
        %494 = vrot.lane.b32.xlu0 %v488, 1
        %v495 = vpop.permute.xlu0 %494
        %496 = vrot.lane.b32.xlu0 %v489, 1
        %v497 = vpop.permute.xlu0 %496
        %v498 = vrot.slane %v491, 4
        %v499 = vrot.slane %v493, 4
        %v500 = vrot.slane %v495, 4
        %v501 = vrot.slane %v497, 4
        %vm502 = vcmask 7168
        %v503 = vsel %vm502, %v498, %v491
        %vm504 = vcmask 1043456
        %v505 = vsel %vm504, %v498, %v499
        %v506 = vsel %vm502, %v505, %v493
        %v507 = vsel %vm504, %v499, %v500
        %v508 = vsel %vm502, %v507, %v495
        %v509 = vsel %vm504, %v500, %v501
        %v510 = vsel %vm502, %v509, %v497
        %v516 = vmul.bf16 %v357, %v503
        %v517 = vmul.bf16 %v358, %v506
        %v518 = vmul.bf16 %v359, %v508
        %v519 = vmul.bf16 %v360, %v510
        %v520 = vmul.bf16 %v361, %v501
        %526 = vrot.lane.b32.xlu0 %v516, 127
        %v527 = vpop.permute.xlu0 %526
        %528 = vrot.lane.b32.xlu0 %v517, 127
        %v529 = vpop.permute.xlu0 %528
        %530 = vrot.lane.b32.xlu0 %v518, 127
        %v531 = vpop.permute.xlu0 %530
        %532 = vrot.lane.b32.xlu0 %v519, 127
        %v533 = vpop.permute.xlu0 %532
        %534 = vrot.lane.b32.xlu0 %v520, 127
        %v535 = vpop.permute.xlu0 %534
        %v536 = vrot.slane %v527, 4
        %v537 = vrot.slane %v529, 4
        %v538 = vrot.slane %v531, 4
        %v539 = vrot.slane %v533, 4
        %v540 = vrot.slane %v535, 4
        %v541 = vsel %vm504, %v536, %v537
        %vm542 = vcmask 1039360
        %v543 = vsel %vm542, %v527, %v541
        %v544 = vsel %vm504, %v537, %v538
        %v545 = vsel %vm542, %v529, %v544
        %v546 = vsel %vm504, %v538, %v539
        %v547 = vsel %vm542, %v531, %v546
        %v548 = vsel %vm504, %v539, %v540
        %v549 = vsel %vm542, %v533, %v548
        %554 = vst [vmem:[#allocation2 + $0x20] sm:$0xff] %v543
        %555 = vst [vmem:[#allocation2 + $0x28] sm:$0xff] %v545
        %556 = vst [vmem:[#allocation2 + $0x30] sm:$0xff] %v547
        %557 = vst [vmem:[#allocation2 + $0x38] sm:$0xff] %v549
        %v558 = vld [vmem:[%s207] sm:$0xff]
        %v559 = vld [vmem:[%s207 + $0x8] sm:$0xff]
        %v560 = vld [vmem:[%s207 + $0x10] sm:$0xff]
        %v561 = vld [vmem:[%s207 + $0x18] sm:$0xff]
        %v562 = vld [vmem:[%s207 + $0x20] sm:$0xf]
        %s563 = scalar_lea.vmem %s2, 16
        %v564 = vld [vmem:[%s563] sm:$0xff]
        %v566 = vcombine.high %v564, %v564
        %v568 = vunpack.c.l.s4 1966171168
        %v569 = vunpack.c.0.s8 %v568
        %v570 = vlaneseq
        %v571 = vshrl.u32 %v570, 7
        %v572 = vsub.s32 %v569, %v571
        %v573 = vrot.slane %v564, %v572
        %v575 = vunpack.c.l.s4 1966171168
        %v576 = vunpack.c.0.s8 %v575
        %v577 = vlaneseq
        %v578 = vshrl.u32 %v577, 7
        %v579 = vsub.s32 %v576, %v578
        %v580 = vrot.slane %v566, %v579
        %v581 = vcombine.high %v573, %v573
        %v582 = vcombine.high %v580, %v580
        %v584 = vunpack.c.l.s4 1966171168
        %v585 = vunpack.c.0.s8 %v584
        %v586 = vlaneseq
        %v587 = vshrl.u32 %v586, 7
        %v588 = vsub.s32 %v585, %v587
        %v589 = vrot.slane %v573, %v588
        %v591 = vunpack.c.l.s4 1966171168
        %v592 = vunpack.c.0.s8 %v591
        %v593 = vlaneseq
        %v594 = vshrl.u32 %v593, 7
        %v595 = vsub.s32 %v592, %v594
        %v596 = vrot.slane %v580, %v595
        %v598 = vunpack.c.l.s4 1966171168
        %v599 = vunpack.c.0.s8 %v598
        %v600 = vlaneseq
        %v601 = vshrl.u32 %v600, 7
        %v602 = vsub.s32 %v599, %v601
        %v603 = vrot.slane %v581, %v602
        %v605 = vunpack.c.l.s4 1966171168
        %v606 = vunpack.c.0.s8 %v605
        %v607 = vlaneseq
        %v608 = vshrl.u32 %v607, 7
        %v609 = vsub.s32 %v606, %v608
        %v610 = vrot.slane %v582, %v609
        %v611 = vcombine.high %v589, %v589
        %v612 = vcombine.high %v596, %v596
        %v613 = vcombine.high %v603, %v603
        %v614 = vcombine.high %v610, %v610
        %v616 = vpack.i.b16 %v589, %v589
        %v618 = vlaneseq
        %v619 = vshrl.u32 %v618, 7
        %v620 = vsub.s32 0, %v619
        %v621 = vrot.slane %v616, %v620
        %v623 = vpack.i.b16 %v603, %v603
        %v625 = vlaneseq
        %v626 = vshrl.u32 %v625, 7
        %v627 = vsub.s32 0, %v626
        %v628 = vrot.slane %v623, %v627
        %v630 = vpack.i.b16 %v611, %v611
        %v632 = vlaneseq
        %v633 = vshrl.u32 %v632, 7
        %v634 = vsub.s32 0, %v633
        %v635 = vrot.slane %v630, %v634
        %v637 = vpack.i.b16 %v613, %v613
        %v639 = vlaneseq
        %v640 = vshrl.u32 %v639, 7
        %v641 = vsub.s32 0, %v640
        %v642 = vrot.slane %v637, %v641
        %v644 = vpack.i.b16 %v596, %v596
        %v646 = vlaneseq
        %v647 = vshrl.u32 %v646, 7
        %v648 = vsub.s32 0, %v647
        %v649 = vrot.slane %v644, %v648
        %v651 = vpack.i.b16 %v610, %v610
        %v653 = vlaneseq
        %v654 = vshrl.u32 %v653, 7
        %v655 = vsub.s32 0, %v654
        %v656 = vrot.slane %v651, %v655
        %v658 = vpack.i.b16 %v612, %v612
        %v660 = vlaneseq
        %v661 = vshrl.u32 %v660, 7
        %v662 = vsub.s32 0, %v661
        %v663 = vrot.slane %v658, %v662
        %v665 = vpack.i.b16 %v614, %v614
        %v667 = vlaneseq
        %v668 = vshrl.u32 %v667, 7
        %v669 = vsub.s32 0, %v668
        %v670 = vrot.slane %v665, %v669
        %v679 = vunpack.c.l.b16 %v621
        %v680 = vunpack.c.l.b16 %v628
        %v681 = vunpack.c.l.b16 %v635
        %v682 = vunpack.c.l.b16 %v642
        %v683 = vunpack.c.l.b16 %v649
        %v684 = vunpack.c.l.b16 %v656
        %v685 = vunpack.c.l.b16 %v663
        %v686 = vunpack.c.l.b16 %v670
        %v687 = vpack.c.b16 %v680, %v679
        %v688 = vpack.c.b16 %v682, %v681
        %v689 = vpack.c.b16 %v684, %v683
        %v690 = vpack.c.b16 %v686, %v685
        %691 = vrot.lane.b32.xlu0 %v687, 2
        %v692 = vpop.permute.xlu0 %691
        %693 = vrot.lane.b32.xlu0 %v688, 2
        %v694 = vpop.permute.xlu0 %693
        %695 = vrot.lane.b32.xlu0 %v689, 2
        %v696 = vpop.permute.xlu0 %695
        %697 = vrot.lane.b32.xlu0 %v690, 2
        %v698 = vpop.permute.xlu0 %697
        %v699 = vrot.slane %v692, 4
        %v700 = vrot.slane %v694, 4
        %v701 = vrot.slane %v696, 4
        %v702 = vrot.slane %v698, 4
        %vm703 = vcmask 15360
        %v704 = vsel %vm703, %v699, %v692
        %v705 = vsel %vm504, %v699, %v700
        %v706 = vsel %vm703, %v705, %v694
        %v707 = vsel %vm504, %v700, %v701
        %v708 = vsel %vm703, %v707, %v696
        %v709 = vsel %vm504, %v701, %v702
        %v710 = vsel %vm703, %v709, %v698
        %v716 = vmul.bf16 %v558, %v704
        %v717 = vmul.bf16 %v559, %v706
        %v718 = vmul.bf16 %v560, %v708
        %v719 = vmul.bf16 %v561, %v710
        %v720 = vmul.bf16 %v562, %v702
        %726 = vrot.lane.b32.xlu0 %v716, 126
        %v727 = vpop.permute.xlu0 %726
        %728 = vrot.lane.b32.xlu0 %v717, 126
        %v729 = vpop.permute.xlu0 %728
        %730 = vrot.lane.b32.xlu0 %v718, 126
        %v731 = vpop.permute.xlu0 %730
        %732 = vrot.lane.b32.xlu0 %v719, 126
        %v733 = vpop.permute.xlu0 %732
        %734 = vrot.lane.b32.xlu0 %v720, 126
        %v735 = vpop.permute.xlu0 %734
        %v736 = vrot.slane %v727, 4
        %v737 = vrot.slane %v729, 4
        %v738 = vrot.slane %v731, 4
        %v739 = vrot.slane %v733, 4
        %v740 = vrot.slane %v735, 4
        %v741 = vsel %vm504, %v736, %v737
        %vm742 = vcmask 1031168
        %v743 = vsel %vm742, %v727, %v741
        %v744 = vsel %vm504, %v737, %v738
        %v745 = vsel %vm742, %v729, %v744
        %v746 = vsel %vm504, %v738, %v739
        %v747 = vsel %vm742, %v731, %v746
        %v748 = vsel %vm504, %v739, %v740
        %v749 = vsel %vm742, %v733, %v748
        %754 = vst [vmem:[#allocation2 + $0x40] sm:$0xff] %v743
        %755 = vst [vmem:[#allocation2 + $0x48] sm:$0xff] %v745
        %756 = vst [vmem:[#allocation2 + $0x50] sm:$0xff] %v747
        %757 = vst [vmem:[#allocation2 + $0x58] sm:$0xff] %v749
        %v758 = vld [vmem:[%s207] sm:$0xff]
        %v759 = vld [vmem:[%s207 + $0x8] sm:$0xff]
        %v760 = vld [vmem:[%s207 + $0x10] sm:$0xff]
        %v761 = vld [vmem:[%s207 + $0x18] sm:$0xff]
        %v762 = vld [vmem:[%s207 + $0x20] sm:$0xf]
        %s763 = scalar_lea.vmem %s2, 24
        %v764 = vld [vmem:[%s763] sm:$0xff]
        %v766 = vcombine.high %v764, %v764
        %v768 = vunpack.c.l.s4 1966171168
        %v769 = vunpack.c.0.s8 %v768
        %v770 = vlaneseq
        %v771 = vshrl.u32 %v770, 7
        %v772 = vsub.s32 %v769, %v771
        %v773 = vrot.slane %v764, %v772
        %v775 = vunpack.c.l.s4 1966171168
        %v776 = vunpack.c.0.s8 %v775
        %v777 = vlaneseq
        %v778 = vshrl.u32 %v777, 7
        %v779 = vsub.s32 %v776, %v778
        %v780 = vrot.slane %v766, %v779
        %v781 = vcombine.high %v773, %v773
        %v782 = vcombine.high %v780, %v780
        %v784 = vunpack.c.l.s4 1966171168
        %v785 = vunpack.c.0.s8 %v784
        %v786 = vlaneseq
        %v787 = vshrl.u32 %v786, 7
        %v788 = vsub.s32 %v785, %v787
        %v789 = vrot.slane %v773, %v788
        %v791 = vunpack.c.l.s4 1966171168
        %v792 = vunpack.c.0.s8 %v791
        %v793 = vlaneseq
        %v794 = vshrl.u32 %v793, 7
        %v795 = vsub.s32 %v792, %v794
        %v796 = vrot.slane %v780, %v795
        %v798 = vunpack.c.l.s4 1966171168
        %v799 = vunpack.c.0.s8 %v798
        %v800 = vlaneseq
        %v801 = vshrl.u32 %v800, 7
        %v802 = vsub.s32 %v799, %v801
        %v803 = vrot.slane %v781, %v802
        %v805 = vunpack.c.l.s4 1966171168
        %v806 = vunpack.c.0.s8 %v805
        %v807 = vlaneseq
        %v808 = vshrl.u32 %v807, 7
        %v809 = vsub.s32 %v806, %v808
        %v810 = vrot.slane %v782, %v809
        %v811 = vcombine.high %v789, %v789
        %v812 = vcombine.high %v796, %v796
        %v813 = vcombine.high %v803, %v803
        %v814 = vcombine.high %v810, %v810
        %v816 = vpack.i.b16 %v789, %v789
        %v818 = vlaneseq
        %v819 = vshrl.u32 %v818, 7
        %v820 = vsub.s32 0, %v819
        %v821 = vrot.slane %v816, %v820
        %v823 = vpack.i.b16 %v803, %v803
        %v825 = vlaneseq
        %v826 = vshrl.u32 %v825, 7
        %v827 = vsub.s32 0, %v826
        %v828 = vrot.slane %v823, %v827
        %v830 = vpack.i.b16 %v811, %v811
        %v832 = vlaneseq
        %v833 = vshrl.u32 %v832, 7
        %v834 = vsub.s32 0, %v833
        %v835 = vrot.slane %v830, %v834
        %v837 = vpack.i.b16 %v813, %v813
        %v839 = vlaneseq
        %v840 = vshrl.u32 %v839, 7
        %v841 = vsub.s32 0, %v840
        %v842 = vrot.slane %v837, %v841
        %v844 = vpack.i.b16 %v796, %v796
        %v846 = vlaneseq
        %v847 = vshrl.u32 %v846, 7
        %v848 = vsub.s32 0, %v847
        %v849 = vrot.slane %v844, %v848
        %v851 = vpack.i.b16 %v810, %v810
        %v853 = vlaneseq
        %v854 = vshrl.u32 %v853, 7
        %v855 = vsub.s32 0, %v854
        %v856 = vrot.slane %v851, %v855
        %v858 = vpack.i.b16 %v812, %v812
        %v860 = vlaneseq
        %v861 = vshrl.u32 %v860, 7
        %v862 = vsub.s32 0, %v861
        %v863 = vrot.slane %v858, %v862
        %v865 = vpack.i.b16 %v814, %v814
        %v867 = vlaneseq
        %v868 = vshrl.u32 %v867, 7
        %v869 = vsub.s32 0, %v868
        %v870 = vrot.slane %v865, %v869
        %v879 = vunpack.c.l.b16 %v821
        %v880 = vunpack.c.l.b16 %v828
        %v881 = vunpack.c.l.b16 %v835
        %v882 = vunpack.c.l.b16 %v842
        %v883 = vunpack.c.l.b16 %v849
        %v884 = vunpack.c.l.b16 %v856
        %v885 = vunpack.c.l.b16 %v863
        %v886 = vunpack.c.l.b16 %v870
        %v887 = vpack.c.b16 %v880, %v879
        %v888 = vpack.c.b16 %v882, %v881
        %v889 = vpack.c.b16 %v884, %v883
        %v890 = vpack.c.b16 %v886, %v885
        %891 = vrot.lane.b32.xlu0 %v887, 32
        %v892 = vpop.permute.xlu0 %891
        %893 = vrot.lane.b32.xlu0 %v888, 32
        %v894 = vpop.permute.xlu0 %893
        %895 = vrot.lane.b32.xlu0 %v889, 32
        %v896 = vpop.permute.xlu0 %895
        %897 = vrot.lane.b32.xlu0 %v890, 32
        %v898 = vpop.permute.xlu0 %897
        %v899 = vrot.slane %v892, 4
        %v900 = vrot.slane %v894, 4
        %v901 = vrot.slane %v896, 4
        %v902 = vrot.slane %v898, 4
        %vm903 = vcmask 261120
        %v904 = vsel %vm903, %v899, %v892
        %v905 = vsel %vm504, %v899, %v900
        %v906 = vsel %vm903, %v905, %v894
        %v907 = vsel %vm504, %v900, %v901
        %v908 = vsel %vm903, %v907, %v896
        %v909 = vsel %vm504, %v901, %v902
        %v910 = vsel %vm903, %v909, %v898
        %v916 = vmul.bf16 %v758, %v904
        %v917 = vmul.bf16 %v759, %v906
        %v918 = vmul.bf16 %v760, %v908
        %v919 = vmul.bf16 %v761, %v910
        %v920 = vmul.bf16 %v762, %v902
        %926 = vrot.lane.b32.xlu0 %v916, 96
        %v927 = vpop.permute.xlu0 %926
        %928 = vrot.lane.b32.xlu0 %v917, 96
        %v929 = vpop.permute.xlu0 %928
        %930 = vrot.lane.b32.xlu0 %v918, 96
        %v931 = vpop.permute.xlu0 %930
        %932 = vrot.lane.b32.xlu0 %v919, 96
        %v933 = vpop.permute.xlu0 %932
        %934 = vrot.lane.b32.xlu0 %v920, 96
        %v935 = vpop.permute.xlu0 %934
        %v936 = vrot.slane %v927, 4
        %v937 = vrot.slane %v929, 4
        %v938 = vrot.slane %v931, 4
        %v939 = vrot.slane %v933, 4
        %v940 = vrot.slane %v935, 4
        %v941 = vsel %vm504, %v936, %v937
        %vm942 = vcmask 785408
        %v943 = vsel %vm942, %v927, %v941
        %v944 = vsel %vm504, %v937, %v938
        %v945 = vsel %vm942, %v929, %v944
        %v946 = vsel %vm504, %v938, %v939
        %v947 = vsel %vm942, %v931, %v946
        %v948 = vsel %vm504, %v939, %v940
        %v949 = vsel %vm942, %v933, %v948
        %954 = vst [vmem:[#allocation2 + $0x60] sm:$0xff] %v943
        %955 = vst [vmem:[#allocation2 + $0x68] sm:$0xff] %v945
        %956 = vst [vmem:[#allocation2 + $0x70] sm:$0xff] %v947
        %957 = vst [vmem:[#allocation2 + $0x78] sm:$0xff] %v949
        %v958 = vld [vmem:[%s207] sm:$0xff]
        %v959 = vld [vmem:[%s207 + $0x8] sm:$0xff]
        %v960 = vld [vmem:[%s207 + $0x10] sm:$0xff]
        %v961 = vld [vmem:[%s207 + $0x18] sm:$0xff]
        %v962 = vld [vmem:[%s207 + $0x20] sm:$0xf]
        %s963 = scalar_lea.vmem %s2, 32
        %v964 = vld [vmem:[%s963] sm:$0xff]
        %v966 = vcombine.high %v964, %v964
        %v968 = vunpack.c.l.s4 1966171168
        %v969 = vunpack.c.0.s8 %v968
        %v970 = vlaneseq
        %v971 = vshrl.u32 %v970, 7
        %v972 = vsub.s32 %v969, %v971
        %v973 = vrot.slane %v964, %v972
        %v975 = vunpack.c.l.s4 1966171168
        %v976 = vunpack.c.0.s8 %v975
        %v977 = vlaneseq
        %v978 = vshrl.u32 %v977, 7
        %v979 = vsub.s32 %v976, %v978
        %v980 = vrot.slane %v966, %v979
        %v981 = vcombine.high %v973, %v973
        %v982 = vcombine.high %v980, %v980
        %v984 = vunpack.c.l.s4 1966171168
        %v985 = vunpack.c.0.s8 %v984
        %v986 = vlaneseq
        %v987 = vshrl.u32 %v986, 7
        %v988 = vsub.s32 %v985, %v987
        %v989 = vrot.slane %v973, %v988
        %v991 = vunpack.c.l.s4 1966171168
        %v992 = vunpack.c.0.s8 %v991
        %v993 = vlaneseq
        %v994 = vshrl.u32 %v993, 7
        %v995 = vsub.s32 %v992, %v994
        %v996 = vrot.slane %v980, %v995
        %v998 = vunpack.c.l.s4 1966171168
        %v999 = vunpack.c.0.s8 %v998
        %v1000 = vlaneseq
        %v1001 = vshrl.u32 %v1000, 7
        %v1002 = vsub.s32 %v999, %v1001
        %v1003 = vrot.slane %v981, %v1002
        %v1005 = vunpack.c.l.s4 1966171168
        %v1006 = vunpack.c.0.s8 %v1005
        %v1007 = vlaneseq
        %v1008 = vshrl.u32 %v1007, 7
        %v1009 = vsub.s32 %v1006, %v1008
        %v1010 = vrot.slane %v982, %v1009
        %v1011 = vcombine.high %v989, %v989
        %v1012 = vcombine.high %v996, %v996
        %v1013 = vcombine.high %v1003, %v1003
        %v1014 = vcombine.high %v1010, %v1010
        %v1016 = vpack.i.b16 %v989, %v989
        %v1018 = vlaneseq
        %v1019 = vshrl.u32 %v1018, 7
        %v1020 = vsub.s32 0, %v1019
        %v1021 = vrot.slane %v1016, %v1020
        %v1023 = vpack.i.b16 %v1003, %v1003
        %v1025 = vlaneseq
        %v1026 = vshrl.u32 %v1025, 7
        %v1027 = vsub.s32 0, %v1026
        %v1028 = vrot.slane %v1023, %v1027
        %v1030 = vpack.i.b16 %v1011, %v1011
        %v1032 = vlaneseq
        %v1033 = vshrl.u32 %v1032, 7
        %v1034 = vsub.s32 0, %v1033
        %v1035 = vrot.slane %v1030, %v1034
        %v1037 = vpack.i.b16 %v1013, %v1013
        %v1039 = vlaneseq
        %v1040 = vshrl.u32 %v1039, 7
        %v1041 = vsub.s32 0, %v1040
        %v1042 = vrot.slane %v1037, %v1041
        %v1044 = vpack.i.b16 %v996, %v996
        %v1046 = vlaneseq
        %v1047 = vshrl.u32 %v1046, 7
        %v1048 = vsub.s32 0, %v1047
        %v1049 = vrot.slane %v1044, %v1048
        %v1051 = vpack.i.b16 %v1010, %v1010
        %v1053 = vlaneseq
        %v1054 = vshrl.u32 %v1053, 7
        %v1055 = vsub.s32 0, %v1054
        %v1056 = vrot.slane %v1051, %v1055
        %v1058 = vpack.i.b16 %v1012, %v1012
        %v1060 = vlaneseq
        %v1061 = vshrl.u32 %v1060, 7
        %v1062 = vsub.s32 0, %v1061
        %v1063 = vrot.slane %v1058, %v1062
        %v1065 = vpack.i.b16 %v1014, %v1014
        %v1067 = vlaneseq
        %v1068 = vshrl.u32 %v1067, 7
        %v1069 = vsub.s32 0, %v1068
        %v1070 = vrot.slane %v1065, %v1069
        %v1079 = vunpack.c.l.b16 %v1021
        %v1080 = vunpack.c.l.b16 %v1028
        %v1081 = vunpack.c.l.b16 %v1035
        %v1082 = vunpack.c.l.b16 %v1042
        %v1083 = vunpack.c.l.b16 %v1049
        %v1084 = vunpack.c.l.b16 %v1056
        %v1085 = vunpack.c.l.b16 %v1063
        %v1086 = vunpack.c.l.b16 %v1070
        %v1087 = vpack.c.b16 %v1080, %v1079
        %v1088 = vpack.c.b16 %v1082, %v1081
        %v1089 = vpack.c.b16 %v1084, %v1083
        %v1090 = vpack.c.b16 %v1086, %v1085
        %1091 = vrot.lane.b32.xlu0 %v1087, 33
        %v1092 = vpop.permute.xlu0 %1091
        %1093 = vrot.lane.b32.xlu0 %v1088, 33
        %v1094 = vpop.permute.xlu0 %1093
        %1095 = vrot.lane.b32.xlu0 %v1089, 33
        %v1096 = vpop.permute.xlu0 %1095
        %1097 = vrot.lane.b32.xlu0 %v1090, 33
        %v1098 = vpop.permute.xlu0 %1097
        %v1099 = vrot.slane %v1092, 4
        %v1100 = vrot.slane %v1094, 4
        %v1101 = vrot.slane %v1096, 4
        %v1102 = vrot.slane %v1098, 4
        %vm1103 = vcmask 269312
        %v1104 = vsel %vm1103, %v1099, %v1092
        %v1105 = vsel %vm504, %v1099, %v1100
        %v1106 = vsel %vm1103, %v1105, %v1094
        %v1107 = vsel %vm504, %v1100, %v1101
        %v1108 = vsel %vm1103, %v1107, %v1096
        %v1109 = vsel %vm504, %v1101, %v1102
        %v1110 = vsel %vm1103, %v1109, %v1098
        %v1116 = vmul.bf16 %v958, %v1104
        %v1117 = vmul.bf16 %v959, %v1106
        %v1118 = vmul.bf16 %v960, %v1108
        %v1119 = vmul.bf16 %v961, %v1110
        %v1120 = vmul.bf16 %v962, %v1102
        %1126 = vrot.lane.b32.xlu0 %v1116, 95
        %v1127 = vpop.permute.xlu0 %1126
        %1128 = vrot.lane.b32.xlu0 %v1117, 95
        %v1129 = vpop.permute.xlu0 %1128
        %1130 = vrot.lane.b32.xlu0 %v1118, 95
        %v1131 = vpop.permute.xlu0 %1130
        %1132 = vrot.lane.b32.xlu0 %v1119, 95
        %v1133 = vpop.permute.xlu0 %1132
        %1134 = vrot.lane.b32.xlu0 %v1120, 95
        %v1135 = vpop.permute.xlu0 %1134
        %v1136 = vrot.slane %v1127, 4
        %v1137 = vrot.slane %v1129, 4
        %v1138 = vrot.slane %v1131, 4
        %v1139 = vrot.slane %v1133, 4
        %v1140 = vrot.slane %v1135, 4
        %v1141 = vsel %vm504, %v1136, %v1137
        %vm1142 = vcmask 777216
        %v1143 = vsel %vm1142, %v1127, %v1141
        %v1144 = vsel %vm504, %v1137, %v1138
        %v1145 = vsel %vm1142, %v1129, %v1144
        %v1146 = vsel %vm504, %v1138, %v1139
        %v1147 = vsel %vm1142, %v1131, %v1146
        %v1148 = vsel %vm504, %v1139, %v1140
        %v1149 = vsel %vm1142, %v1133, %v1148
        %1154 = vst [vmem:[#allocation2 + $0x80] sm:$0xff] %v1143
        %1155 = vst [vmem:[#allocation2 + $0x88] sm:$0xff] %v1145
        %1156 = vst [vmem:[#allocation2 + $0x90] sm:$0xff] %v1147
        %1157 = vst [vmem:[#allocation2 + $0x98] sm:$0xff] %v1149
        %v1158 = vld [vmem:[%s207] sm:$0xff]
        %v1159 = vld [vmem:[%s207 + $0x8] sm:$0xff]
        %v1160 = vld [vmem:[%s207 + $0x10] sm:$0xff]
        %v1161 = vld [vmem:[%s207 + $0x18] sm:$0xff]
        %v1162 = vld [vmem:[%s207 + $0x20] sm:$0xf]
        %s1163 = scalar_lea.vmem %s2, 40
        %v1164 = vld [vmem:[%s1163] sm:$0xff]
        %v1166 = vcombine.high %v1164, %v1164
        %v1168 = vunpack.c.l.s4 1966171168
        %v1169 = vunpack.c.0.s8 %v1168
        %v1170 = vlaneseq
        %v1171 = vshrl.u32 %v1170, 7
        %v1172 = vsub.s32 %v1169, %v1171
        %v1173 = vrot.slane %v1164, %v1172
        %v1175 = vunpack.c.l.s4 1966171168
        %v1176 = vunpack.c.0.s8 %v1175
        %v1177 = vlaneseq
        %v1178 = vshrl.u32 %v1177, 7
        %v1179 = vsub.s32 %v1176, %v1178
        %v1180 = vrot.slane %v1166, %v1179
        %v1181 = vcombine.high %v1173, %v1173
        %v1182 = vcombine.high %v1180, %v1180
        %v1184 = vunpack.c.l.s4 1966171168
        %v1185 = vunpack.c.0.s8 %v1184
        %v1186 = vlaneseq
        %v1187 = vshrl.u32 %v1186, 7
        %v1188 = vsub.s32 %v1185, %v1187
        %v1189 = vrot.slane %v1173, %v1188
        %v1191 = vunpack.c.l.s4 1966171168
        %v1192 = vunpack.c.0.s8 %v1191
        %v1193 = vlaneseq
        %v1194 = vshrl.u32 %v1193, 7
        %v1195 = vsub.s32 %v1192, %v1194
        %v1196 = vrot.slane %v1180, %v1195
        %v1198 = vunpack.c.l.s4 1966171168
        %v1199 = vunpack.c.0.s8 %v1198
        %v1200 = vlaneseq
        %v1201 = vshrl.u32 %v1200, 7
        %v1202 = vsub.s32 %v1199, %v1201
        %v1203 = vrot.slane %v1181, %v1202
        %v1205 = vunpack.c.l.s4 1966171168
        %v1206 = vunpack.c.0.s8 %v1205
        %v1207 = vlaneseq
        %v1208 = vshrl.u32 %v1207, 7
        %v1209 = vsub.s32 %v1206, %v1208
        %v1210 = vrot.slane %v1182, %v1209
        %v1211 = vcombine.high %v1189, %v1189
        %v1212 = vcombine.high %v1196, %v1196
        %v1213 = vcombine.high %v1203, %v1203
        %v1214 = vcombine.high %v1210, %v1210
        %v1216 = vpack.i.b16 %v1189, %v1189
        %v1218 = vlaneseq
        %v1219 = vshrl.u32 %v1218, 7
        %v1220 = vsub.s32 0, %v1219
        %v1221 = vrot.slane %v1216, %v1220
        %v1223 = vpack.i.b16 %v1203, %v1203
        %v1225 = vlaneseq
        %v1226 = vshrl.u32 %v1225, 7
        %v1227 = vsub.s32 0, %v1226
        %v1228 = vrot.slane %v1223, %v1227
        %v1230 = vpack.i.b16 %v1211, %v1211
        %v1232 = vlaneseq
        %v1233 = vshrl.u32 %v1232, 7
        %v1234 = vsub.s32 0, %v1233
        %v1235 = vrot.slane %v1230, %v1234
        %v1237 = vpack.i.b16 %v1213, %v1213
        %v1239 = vlaneseq
        %v1240 = vshrl.u32 %v1239, 7
        %v1241 = vsub.s32 0, %v1240
        %v1242 = vrot.slane %v1237, %v1241
        %v1244 = vpack.i.b16 %v1196, %v1196
        %v1246 = vlaneseq
        %v1247 = vshrl.u32 %v1246, 7
        %v1248 = vsub.s32 0, %v1247
        %v1249 = vrot.slane %v1244, %v1248
        %v1251 = vpack.i.b16 %v1210, %v1210
        %v1253 = vlaneseq
        %v1254 = vshrl.u32 %v1253, 7
        %v1255 = vsub.s32 0, %v1254
        %v1256 = vrot.slane %v1251, %v1255
        %v1258 = vpack.i.b16 %v1212, %v1212
        %v1260 = vlaneseq
        %v1261 = vshrl.u32 %v1260, 7
        %v1262 = vsub.s32 0, %v1261
        %v1263 = vrot.slane %v1258, %v1262
        %v1265 = vpack.i.b16 %v1214, %v1214
        %v1267 = vlaneseq
        %v1268 = vshrl.u32 %v1267, 7
        %v1269 = vsub.s32 0, %v1268
        %v1270 = vrot.slane %v1265, %v1269
        %v1279 = vunpack.c.l.b16 %v1221
        %v1280 = vunpack.c.l.b16 %v1228
        %v1281 = vunpack.c.l.b16 %v1235
        %v1282 = vunpack.c.l.b16 %v1242
        %v1283 = vunpack.c.l.b16 %v1249
        %v1284 = vunpack.c.l.b16 %v1256
        %v1285 = vunpack.c.l.b16 %v1263
        %v1286 = vunpack.c.l.b16 %v1270
        %v1287 = vpack.c.b16 %v1280, %v1279
        %v1288 = vpack.c.b16 %v1282, %v1281
        %v1289 = vpack.c.b16 %v1284, %v1283
        %v1290 = vpack.c.b16 %v1286, %v1285
        %1291 = vrot.lane.b32.xlu0 %v1287, 34
        %v1292 = vpop.permute.xlu0 %1291
        %1293 = vrot.lane.b32.xlu0 %v1288, 34
        %v1294 = vpop.permute.xlu0 %1293
        %1295 = vrot.lane.b32.xlu0 %v1289, 34
        %v1296 = vpop.permute.xlu0 %1295
        %1297 = vrot.lane.b32.xlu0 %v1290, 34
        %v1298 = vpop.permute.xlu0 %1297
        %v1299 = vrot.slane %v1292, 4
        %v1300 = vrot.slane %v1294, 4
        %v1301 = vrot.slane %v1296, 4
        %v1302 = vrot.slane %v1298, 4
        %vm1303 = vcmask 277504
        %v1304 = vsel %vm1303, %v1299, %v1292
        %v1305 = vsel %vm504, %v1299, %v1300
        %v1306 = vsel %vm1303, %v1305, %v1294
        %v1307 = vsel %vm504, %v1300, %v1301
        %v1308 = vsel %vm1303, %v1307, %v1296
        %v1309 = vsel %vm504, %v1301, %v1302
        %v1310 = vsel %vm1303, %v1309, %v1298
        %v1316 = vmul.bf16 %v1158, %v1304
        %v1317 = vmul.bf16 %v1159, %v1306
        %v1318 = vmul.bf16 %v1160, %v1308
        %v1319 = vmul.bf16 %v1161, %v1310
        %v1320 = vmul.bf16 %v1162, %v1302
        %1326 = vrot.lane.b32.xlu0 %v1316, 94
        %v1327 = vpop.permute.xlu0 %1326
        %1328 = vrot.lane.b32.xlu0 %v1317, 94
        %v1329 = vpop.permute.xlu0 %1328
        %1330 = vrot.lane.b32.xlu0 %v1318, 94
        %v1331 = vpop.permute.xlu0 %1330
        %1332 = vrot.lane.b32.xlu0 %v1319, 94
        %v1333 = vpop.permute.xlu0 %1332
        %1334 = vrot.lane.b32.xlu0 %v1320, 94
        %v1335 = vpop.permute.xlu0 %1334
        %v1336 = vrot.slane %v1327, 4
        %v1337 = vrot.slane %v1329, 4
        %v1338 = vrot.slane %v1331, 4
        %v1339 = vrot.slane %v1333, 4
        %v1340 = vrot.slane %v1335, 4
        %v1341 = vsel %vm504, %v1336, %v1337
        %vm1342 = vcmask 769024
        %v1343 = vsel %vm1342, %v1327, %v1341
        %v1344 = vsel %vm504, %v1337, %v1338
        %v1345 = vsel %vm1342, %v1329, %v1344
        %v1346 = vsel %vm504, %v1338, %v1339
        %v1347 = vsel %vm1342, %v1331, %v1346
        %v1348 = vsel %vm504, %v1339, %v1340
        %v1349 = vsel %vm1342, %v1333, %v1348
        %1354 = vst [vmem:[#allocation2 + $0xa0] sm:$0xff] %v1343
        %1355 = vst [vmem:[#allocation2 + $0xa8] sm:$0xff] %v1345
        %1356 = vst [vmem:[#allocation2 + $0xb0] sm:$0xff] %v1347
        %1357 = vst [vmem:[#allocation2 + $0xb8] sm:$0xff] %v1349
        %v1358 = vld [vmem:[%s207] sm:$0xff]
        %v1359 = vld [vmem:[%s207 + $0x8] sm:$0xff]
        %v1360 = vld [vmem:[%s207 + $0x10] sm:$0xff]
        %v1361 = vld [vmem:[%s207 + $0x18] sm:$0xff]
        %v1362 = vld [vmem:[%s207 + $0x20] sm:$0xf]
        %s1363 = scalar_lea.vmem %s2, 48
        %v1364 = vld [vmem:[%s1363] sm:$0xff]
        %v1366 = vcombine.high %v1364, %v1364
        %v1368 = vunpack.c.l.s4 1966171168
        %v1369 = vunpack.c.0.s8 %v1368
        %v1370 = vlaneseq
        %v1371 = vshrl.u32 %v1370, 7
        %v1372 = vsub.s32 %v1369, %v1371
        %v1373 = vrot.slane %v1364, %v1372
        %v1375 = vunpack.c.l.s4 1966171168
        %v1376 = vunpack.c.0.s8 %v1375
        %v1377 = vlaneseq
        %v1378 = vshrl.u32 %v1377, 7
        %v1379 = vsub.s32 %v1376, %v1378
        %v1380 = vrot.slane %v1366, %v1379
        %v1381 = vcombine.high %v1373, %v1373
        %v1382 = vcombine.high %v1380, %v1380
        %v1384 = vunpack.c.l.s4 1966171168
        %v1385 = vunpack.c.0.s8 %v1384
        %v1386 = vlaneseq
        %v1387 = vshrl.u32 %v1386, 7
        %v1388 = vsub.s32 %v1385, %v1387
        %v1389 = vrot.slane %v1373, %v1388
        %v1391 = vunpack.c.l.s4 1966171168
        %v1392 = vunpack.c.0.s8 %v1391
        %v1393 = vlaneseq
        %v1394 = vshrl.u32 %v1393, 7
        %v1395 = vsub.s32 %v1392, %v1394
        %v1396 = vrot.slane %v1380, %v1395
        %v1398 = vunpack.c.l.s4 1966171168
        %v1399 = vunpack.c.0.s8 %v1398
        %v1400 = vlaneseq
        %v1401 = vshrl.u32 %v1400, 7
        %v1402 = vsub.s32 %v1399, %v1401
        %v1403 = vrot.slane %v1381, %v1402
        %v1405 = vunpack.c.l.s4 1966171168
        %v1406 = vunpack.c.0.s8 %v1405
        %v1407 = vlaneseq
        %v1408 = vshrl.u32 %v1407, 7
        %v1409 = vsub.s32 %v1406, %v1408
        %v1410 = vrot.slane %v1382, %v1409
        %v1411 = vcombine.high %v1389, %v1389
        %v1412 = vcombine.high %v1396, %v1396
        %v1413 = vcombine.high %v1403, %v1403
        %v1414 = vcombine.high %v1410, %v1410
        %v1416 = vpack.i.b16 %v1389, %v1389
        %v1418 = vlaneseq
        %v1419 = vshrl.u32 %v1418, 7
        %v1420 = vsub.s32 0, %v1419
        %v1421 = vrot.slane %v1416, %v1420
        %v1423 = vpack.i.b16 %v1403, %v1403
        %v1425 = vlaneseq
        %v1426 = vshrl.u32 %v1425, 7
        %v1427 = vsub.s32 0, %v1426
        %v1428 = vrot.slane %v1423, %v1427
        %v1430 = vpack.i.b16 %v1411, %v1411
        %v1432 = vlaneseq
        %v1433 = vshrl.u32 %v1432, 7
        %v1434 = vsub.s32 0, %v1433
        %v1435 = vrot.slane %v1430, %v1434
        %v1437 = vpack.i.b16 %v1413, %v1413
        %v1439 = vlaneseq
        %v1440 = vshrl.u32 %v1439, 7
        %v1441 = vsub.s32 0, %v1440
        %v1442 = vrot.slane %v1437, %v1441
        %v1444 = vpack.i.b16 %v1396, %v1396
        %v1446 = vlaneseq
        %v1447 = vshrl.u32 %v1446, 7
        %v1448 = vsub.s32 0, %v1447
        %v1449 = vrot.slane %v1444, %v1448
        %v1451 = vpack.i.b16 %v1410, %v1410
        %v1453 = vlaneseq
        %v1454 = vshrl.u32 %v1453, 7
        %v1455 = vsub.s32 0, %v1454
        %v1456 = vrot.slane %v1451, %v1455
        %v1458 = vpack.i.b16 %v1412, %v1412
        %v1460 = vlaneseq
        %v1461 = vshrl.u32 %v1460, 7
        %v1462 = vsub.s32 0, %v1461
        %v1463 = vrot.slane %v1458, %v1462
        %v1465 = vpack.i.b16 %v1414, %v1414
        %v1467 = vlaneseq
        %v1468 = vshrl.u32 %v1467, 7
        %v1469 = vsub.s32 0, %v1468
        %v1470 = vrot.slane %v1465, %v1469
        %v1479 = vunpack.c.l.b16 %v1421
        %v1480 = vunpack.c.l.b16 %v1428
        %v1481 = vunpack.c.l.b16 %v1435
        %v1482 = vunpack.c.l.b16 %v1442
        %v1483 = vunpack.c.l.b16 %v1449
        %v1484 = vunpack.c.l.b16 %v1456
        %v1485 = vunpack.c.l.b16 %v1463
        %v1486 = vunpack.c.l.b16 %v1470
        %v1487 = vpack.c.b16 %v1480, %v1479
        %v1488 = vpack.c.b16 %v1482, %v1481
        %v1489 = vpack.c.b16 %v1484, %v1483
        %v1490 = vpack.c.b16 %v1486, %v1485
        %1491 = vrot.lane.b32.xlu0 %v1487, 64
        %v1492 = vpop.permute.xlu0 %1491
        %1493 = vrot.lane.b32.xlu0 %v1488, 64
        %v1494 = vpop.permute.xlu0 %1493
        %1495 = vrot.lane.b32.xlu0 %v1489, 64
        %v1496 = vpop.permute.xlu0 %1495
        %1497 = vrot.lane.b32.xlu0 %v1490, 64
        %v1498 = vpop.permute.xlu0 %1497
        %v1499 = vrot.slane %v1492, 4
        %v1500 = vrot.slane %v1494, 4
        %v1501 = vrot.slane %v1496, 4
        %v1502 = vrot.slane %v1498, 4
        %vm1503 = vcmask 523264
        %v1504 = vsel %vm1503, %v1499, %v1492
        %v1505 = vsel %vm504, %v1499, %v1500
        %v1506 = vsel %vm1503, %v1505, %v1494
        %v1507 = vsel %vm504, %v1500, %v1501
        %v1508 = vsel %vm1503, %v1507, %v1496
        %v1509 = vsel %vm504, %v1501, %v1502
        %v1510 = vsel %vm1503, %v1509, %v1498
        %v1516 = vmul.bf16 %v1358, %v1504
        %v1517 = vmul.bf16 %v1359, %v1506
        %v1518 = vmul.bf16 %v1360, %v1508
        %v1519 = vmul.bf16 %v1361, %v1510
        %v1520 = vmul.bf16 %v1362, %v1502
        %1526 = vrot.lane.b32.xlu0 %v1516, 64
        %v1527 = vpop.permute.xlu0 %1526
        %1528 = vrot.lane.b32.xlu0 %v1517, 64
        %v1529 = vpop.permute.xlu0 %1528
        %1530 = vrot.lane.b32.xlu0 %v1518, 64
        %v1531 = vpop.permute.xlu0 %1530
        %1532 = vrot.lane.b32.xlu0 %v1519, 64
        %v1533 = vpop.permute.xlu0 %1532
        %1534 = vrot.lane.b32.xlu0 %v1520, 64
        %v1535 = vpop.permute.xlu0 %1534
        %v1536 = vrot.slane %v1527, 4
        %v1537 = vrot.slane %v1529, 4
        %v1538 = vrot.slane %v1531, 4
        %v1539 = vrot.slane %v1533, 4
        %v1540 = vrot.slane %v1535, 4
        %v1541 = vsel %vm504, %v1536, %v1537
        %v1542 = vsel %vm1503, %v1527, %v1541
        %v1543 = vsel %vm504, %v1537, %v1538
        %v1544 = vsel %vm1503, %v1529, %v1543
        %v1545 = vsel %vm504, %v1538, %v1539
        %v1546 = vsel %vm1503, %v1531, %v1545
        %v1547 = vsel %vm504, %v1539, %v1540
        %v1548 = vsel %vm1503, %v1533, %v1547
        %1553 = vst [vmem:[#allocation2 + $0xc0] sm:$0xff] %v1542
        %1554 = vst [vmem:[#allocation2 + $0xc8] sm:$0xff] %v1544
        %1555 = vst [vmem:[#allocation2 + $0xd0] sm:$0xff] %v1546
        %1556 = vst [vmem:[#allocation2 + $0xd8] sm:$0xff] %v1548
        %v1557 = vld [vmem:[%s207] sm:$0xff]
        %v1558 = vld [vmem:[%s207 + $0x8] sm:$0xff]
        %v1559 = vld [vmem:[%s207 + $0x10] sm:$0xff]
        %v1560 = vld [vmem:[%s207 + $0x18] sm:$0xff]
        %v1561 = vld [vmem:[%s207 + $0x20] sm:$0xf]
        %s1562 = scalar_lea.vmem %s2, 56
        %v1563 = vld [vmem:[%s1562] sm:$0xff]
        %v1565 = vcombine.high %v1563, %v1563
        %v1567 = vunpack.c.l.s4 1966171168
        %v1568 = vunpack.c.0.s8 %v1567
        %v1569 = vlaneseq
        %v1570 = vshrl.u32 %v1569, 7
        %v1571 = vsub.s32 %v1568, %v1570
        %v1572 = vrot.slane %v1563, %v1571
        %v1574 = vunpack.c.l.s4 1966171168
        %v1575 = vunpack.c.0.s8 %v1574
        %v1576 = vlaneseq
        %v1577 = vshrl.u32 %v1576, 7
        %v1578 = vsub.s32 %v1575, %v1577
        %v1579 = vrot.slane %v1565, %v1578
        %v1580 = vcombine.high %v1572, %v1572
        %v1581 = vcombine.high %v1579, %v1579
        %v1583 = vunpack.c.l.s4 1966171168
        %v1584 = vunpack.c.0.s8 %v1583
        %v1585 = vlaneseq
        %v1586 = vshrl.u32 %v1585, 7
        %v1587 = vsub.s32 %v1584, %v1586
        %v1588 = vrot.slane %v1572, %v1587
        %v1590 = vunpack.c.l.s4 1966171168
        %v1591 = vunpack.c.0.s8 %v1590
        %v1592 = vlaneseq
        %v1593 = vshrl.u32 %v1592, 7
        %v1594 = vsub.s32 %v1591, %v1593
        %v1595 = vrot.slane %v1579, %v1594
        %v1597 = vunpack.c.l.s4 1966171168
        %v1598 = vunpack.c.0.s8 %v1597
        %v1599 = vlaneseq
        %v1600 = vshrl.u32 %v1599, 7
        %v1601 = vsub.s32 %v1598, %v1600
        %v1602 = vrot.slane %v1580, %v1601
        %v1604 = vunpack.c.l.s4 1966171168
        %v1605 = vunpack.c.0.s8 %v1604
        %v1606 = vlaneseq
        %v1607 = vshrl.u32 %v1606, 7
        %v1608 = vsub.s32 %v1605, %v1607
        %v1609 = vrot.slane %v1581, %v1608
        %v1610 = vcombine.high %v1588, %v1588
        %v1611 = vcombine.high %v1595, %v1595
        %v1612 = vcombine.high %v1602, %v1602
        %v1613 = vcombine.high %v1609, %v1609
        %v1615 = vpack.i.b16 %v1588, %v1588
        %v1617 = vlaneseq
        %v1618 = vshrl.u32 %v1617, 7
        %v1619 = vsub.s32 0, %v1618
        %v1620 = vrot.slane %v1615, %v1619
        %v1622 = vpack.i.b16 %v1602, %v1602
        %v1624 = vlaneseq
        %v1625 = vshrl.u32 %v1624, 7
        %v1626 = vsub.s32 0, %v1625
        %v1627 = vrot.slane %v1622, %v1626
        %v1629 = vpack.i.b16 %v1610, %v1610
        %v1631 = vlaneseq
        %v1632 = vshrl.u32 %v1631, 7
        %v1633 = vsub.s32 0, %v1632
        %v1634 = vrot.slane %v1629, %v1633
        %v1636 = vpack.i.b16 %v1612, %v1612
        %v1638 = vlaneseq
        %v1639 = vshrl.u32 %v1638, 7
        %v1640 = vsub.s32 0, %v1639
        %v1641 = vrot.slane %v1636, %v1640
        %v1643 = vpack.i.b16 %v1595, %v1595
        %v1645 = vlaneseq
        %v1646 = vshrl.u32 %v1645, 7
        %v1647 = vsub.s32 0, %v1646
        %v1648 = vrot.slane %v1643, %v1647
        %v1650 = vpack.i.b16 %v1609, %v1609
        %v1652 = vlaneseq
        %v1653 = vshrl.u32 %v1652, 7
        %v1654 = vsub.s32 0, %v1653
        %v1655 = vrot.slane %v1650, %v1654
        %v1657 = vpack.i.b16 %v1611, %v1611
        %v1659 = vlaneseq
        %v1660 = vshrl.u32 %v1659, 7
        %v1661 = vsub.s32 0, %v1660
        %v1662 = vrot.slane %v1657, %v1661
        %v1664 = vpack.i.b16 %v1613, %v1613
        %v1666 = vlaneseq
        %v1667 = vshrl.u32 %v1666, 7
        %v1668 = vsub.s32 0, %v1667
        %v1669 = vrot.slane %v1664, %v1668
        %v1678 = vunpack.c.l.b16 %v1620
        %v1679 = vunpack.c.l.b16 %v1627
        %v1680 = vunpack.c.l.b16 %v1634
        %v1681 = vunpack.c.l.b16 %v1641
        %v1682 = vunpack.c.l.b16 %v1648
        %v1683 = vunpack.c.l.b16 %v1655
        %v1684 = vunpack.c.l.b16 %v1662
        %v1685 = vunpack.c.l.b16 %v1669
        %v1686 = vpack.c.b16 %v1679, %v1678
        %v1687 = vpack.c.b16 %v1681, %v1680
        %v1688 = vpack.c.b16 %v1683, %v1682
        %v1689 = vpack.c.b16 %v1685, %v1684
        %1690 = vrot.lane.b32.xlu0 %v1686, 65
        %v1691 = vpop.permute.xlu0 %1690
        %1692 = vrot.lane.b32.xlu0 %v1687, 65
        %v1693 = vpop.permute.xlu0 %1692
        %1694 = vrot.lane.b32.xlu0 %v1688, 65
        %v1695 = vpop.permute.xlu0 %1694
        %1696 = vrot.lane.b32.xlu0 %v1689, 65
        %v1697 = vpop.permute.xlu0 %1696
        %v1698 = vrot.slane %v1691, 4
        %v1699 = vrot.slane %v1693, 4
        %v1700 = vrot.slane %v1695, 4
        %v1701 = vrot.slane %v1697, 4
        %vm1702 = vcmask 531456
        %v1703 = vsel %vm1702, %v1698, %v1691
        %v1704 = vsel %vm504, %v1698, %v1699
        %v1705 = vsel %vm1702, %v1704, %v1693
        %v1706 = vsel %vm504, %v1699, %v1700
        %v1707 = vsel %vm1702, %v1706, %v1695
        %v1708 = vsel %vm504, %v1700, %v1701
        %v1709 = vsel %vm1702, %v1708, %v1697
        %v1715 = vmul.bf16 %v1557, %v1703
        %v1716 = vmul.bf16 %v1558, %v1705
        %v1717 = vmul.bf16 %v1559, %v1707
        %v1718 = vmul.bf16 %v1560, %v1709
        %v1719 = vmul.bf16 %v1561, %v1701
        %1725 = vrot.lane.b32.xlu0 %v1715, 63
        %v1726 = vpop.permute.xlu0 %1725
        %1727 = vrot.lane.b32.xlu0 %v1716, 63
        %v1728 = vpop.permute.xlu0 %1727
        %1729 = vrot.lane.b32.xlu0 %v1717, 63
        %v1730 = vpop.permute.xlu0 %1729
        %1731 = vrot.lane.b32.xlu0 %v1718, 63
        %v1732 = vpop.permute.xlu0 %1731
        %1733 = vrot.lane.b32.xlu0 %v1719, 63
        %v1734 = vpop.permute.xlu0 %1733
        %v1735 = vrot.slane %v1726, 4
        %v1736 = vrot.slane %v1728, 4
        %v1737 = vrot.slane %v1730, 4
        %v1738 = vrot.slane %v1732, 4
        %v1739 = vrot.slane %v1734, 4
        %v1740 = vsel %vm504, %v1735, %v1736
        %vm1741 = vcmask 515072
        %v1742 = vsel %vm1741, %v1726, %v1740
        %v1743 = vsel %vm504, %v1736, %v1737
        %v1744 = vsel %vm1741, %v1728, %v1743
        %v1745 = vsel %vm504, %v1737, %v1738
        %v1746 = vsel %vm1741, %v1730, %v1745
        %v1747 = vsel %vm504, %v1738, %v1739
        %v1748 = vsel %vm1741, %v1732, %v1747
        %1753 = vst [vmem:[#allocation2 + $0xe0] sm:$0xff] %v1742
        %1754 = vst [vmem:[#allocation2 + $0xe8] sm:$0xff] %v1744
        %1755 = vst [vmem:[#allocation2 + $0xf0] sm:$0xff] %v1746
        %1756 = vst [vmem:[#allocation2 + $0xf8] sm:$0xff] %v1748
        %v1757 = vld [vmem:[%s207] sm:$0xff]
        %v1758 = vld [vmem:[%s207 + $0x8] sm:$0xff]
        %v1759 = vld [vmem:[%s207 + $0x10] sm:$0xff]
        %v1760 = vld [vmem:[%s207 + $0x18] sm:$0xff]
        %v1761 = vld [vmem:[%s207 + $0x20] sm:$0xf]
        %s1762 = scalar_lea.vmem %s2, 64
        %v1763 = vld [vmem:[%s1762] sm:$0xff]
        %v1765 = vcombine.high %v1763, %v1763
        %v1767 = vunpack.c.l.s4 1966171168
        %v1768 = vunpack.c.0.s8 %v1767
        %v1769 = vlaneseq
        %v1770 = vshrl.u32 %v1769, 7
        %v1771 = vsub.s32 %v1768, %v1770
        %v1772 = vrot.slane %v1763, %v1771
        %v1774 = vunpack.c.l.s4 1966171168
        %v1775 = vunpack.c.0.s8 %v1774
        %v1776 = vlaneseq
        %v1777 = vshrl.u32 %v1776, 7
        %v1778 = vsub.s32 %v1775, %v1777
        %v1779 = vrot.slane %v1765, %v1778
        %v1780 = vcombine.high %v1772, %v1772
        %v1781 = vcombine.high %v1779, %v1779
        %v1783 = vunpack.c.l.s4 1966171168
        %v1784 = vunpack.c.0.s8 %v1783
        %v1785 = vlaneseq
        %v1786 = vshrl.u32 %v1785, 7
        %v1787 = vsub.s32 %v1784, %v1786
        %v1788 = vrot.slane %v1772, %v1787
        %v1790 = vunpack.c.l.s4 1966171168
        %v1791 = vunpack.c.0.s8 %v1790
        %v1792 = vlaneseq
        %v1793 = vshrl.u32 %v1792, 7
        %v1794 = vsub.s32 %v1791, %v1793
        %v1795 = vrot.slane %v1779, %v1794
        %v1797 = vunpack.c.l.s4 1966171168
        %v1798 = vunpack.c.0.s8 %v1797
        %v1799 = vlaneseq
        %v1800 = vshrl.u32 %v1799, 7
        %v1801 = vsub.s32 %v1798, %v1800
        %v1802 = vrot.slane %v1780, %v1801
        %v1804 = vunpack.c.l.s4 1966171168
        %v1805 = vunpack.c.0.s8 %v1804
        %v1806 = vlaneseq
        %v1807 = vshrl.u32 %v1806, 7
        %v1808 = vsub.s32 %v1805, %v1807
        %v1809 = vrot.slane %v1781, %v1808
        %v1810 = vcombine.high %v1788, %v1788
        %v1811 = vcombine.high %v1795, %v1795
        %v1812 = vcombine.high %v1802, %v1802
        %v1813 = vcombine.high %v1809, %v1809
        %v1815 = vpack.i.b16 %v1788, %v1788
        %v1817 = vlaneseq
        %v1818 = vshrl.u32 %v1817, 7
        %v1819 = vsub.s32 0, %v1818
        %v1820 = vrot.slane %v1815, %v1819
        %v1822 = vpack.i.b16 %v1802, %v1802
        %v1824 = vlaneseq
        %v1825 = vshrl.u32 %v1824, 7
        %v1826 = vsub.s32 0, %v1825
        %v1827 = vrot.slane %v1822, %v1826
        %v1829 = vpack.i.b16 %v1810, %v1810
        %v1831 = vlaneseq
        %v1832 = vshrl.u32 %v1831, 7
        %v1833 = vsub.s32 0, %v1832
        %v1834 = vrot.slane %v1829, %v1833
        %v1836 = vpack.i.b16 %v1812, %v1812
        %v1838 = vlaneseq
        %v1839 = vshrl.u32 %v1838, 7
        %v1840 = vsub.s32 0, %v1839
        %v1841 = vrot.slane %v1836, %v1840
        %v1843 = vpack.i.b16 %v1795, %v1795
        %v1845 = vlaneseq
        %v1846 = vshrl.u32 %v1845, 7
        %v1847 = vsub.s32 0, %v1846
        %v1848 = vrot.slane %v1843, %v1847
        %v1850 = vpack.i.b16 %v1809, %v1809
        %v1852 = vlaneseq
        %v1853 = vshrl.u32 %v1852, 7
        %v1854 = vsub.s32 0, %v1853
        %v1855 = vrot.slane %v1850, %v1854
        %v1857 = vpack.i.b16 %v1811, %v1811
        %v1859 = vlaneseq
        %v1860 = vshrl.u32 %v1859, 7
        %v1861 = vsub.s32 0, %v1860
        %v1862 = vrot.slane %v1857, %v1861
        %v1864 = vpack.i.b16 %v1813, %v1813
        %v1866 = vlaneseq
        %v1867 = vshrl.u32 %v1866, 7
        %v1868 = vsub.s32 0, %v1867
        %v1869 = vrot.slane %v1864, %v1868
        %v1878 = vunpack.c.l.b16 %v1820
        %v1879 = vunpack.c.l.b16 %v1827
        %v1880 = vunpack.c.l.b16 %v1834
        %v1881 = vunpack.c.l.b16 %v1841
        %v1882 = vunpack.c.l.b16 %v1848
        %v1883 = vunpack.c.l.b16 %v1855
        %v1884 = vunpack.c.l.b16 %v1862
        %v1885 = vunpack.c.l.b16 %v1869
        %v1886 = vpack.c.b16 %v1879, %v1878
        %v1887 = vpack.c.b16 %v1881, %v1880
        %v1888 = vpack.c.b16 %v1883, %v1882
        %v1889 = vpack.c.b16 %v1885, %v1884
        %1890 = vrot.lane.b32.xlu0 %v1886, 66
        %v1891 = vpop.permute.xlu0 %1890
        %1892 = vrot.lane.b32.xlu0 %v1887, 66
        %v1893 = vpop.permute.xlu0 %1892
        %1894 = vrot.lane.b32.xlu0 %v1888, 66
        %v1895 = vpop.permute.xlu0 %1894
        %1896 = vrot.lane.b32.xlu0 %v1889, 66
        %v1897 = vpop.permute.xlu0 %1896
        %v1898 = vrot.slane %v1891, 4
        %v1899 = vrot.slane %v1893, 4
        %v1900 = vrot.slane %v1895, 4
        %v1901 = vrot.slane %v1897, 4
        %vm1902 = vcmask 539648
        %v1903 = vsel %vm1902, %v1898, %v1891
        %v1904 = vsel %vm504, %v1898, %v1899
        %v1905 = vsel %vm1902, %v1904, %v1893
        %v1906 = vsel %vm504, %v1899, %v1900
        %v1907 = vsel %vm1902, %v1906, %v1895
        %v1908 = vsel %vm504, %v1900, %v1901
        %v1909 = vsel %vm1902, %v1908, %v1897
        %v1915 = vmul.bf16 %v1757, %v1903
        %v1916 = vmul.bf16 %v1758, %v1905
        %v1917 = vmul.bf16 %v1759, %v1907
        %v1918 = vmul.bf16 %v1760, %v1909
        %v1919 = vmul.bf16 %v1761, %v1901
        %1925 = vrot.lane.b32.xlu0 %v1915, 62
        %v1926 = vpop.permute.xlu0 %1925
        %1927 = vrot.lane.b32.xlu0 %v1916, 62
        %v1928 = vpop.permute.xlu0 %1927
        %1929 = vrot.lane.b32.xlu0 %v1917, 62
        %v1930 = vpop.permute.xlu0 %1929
        %1931 = vrot.lane.b32.xlu0 %v1918, 62
        %v1932 = vpop.permute.xlu0 %1931
        %1933 = vrot.lane.b32.xlu0 %v1919, 62
        %v1934 = vpop.permute.xlu0 %1933
        %v1935 = vrot.slane %v1926, 4
        %v1936 = vrot.slane %v1928, 4
        %v1937 = vrot.slane %v1930, 4
        %v1938 = vrot.slane %v1932, 4
        %v1939 = vrot.slane %v1934, 4
        %v1940 = vsel %vm504, %v1935, %v1936
        %vm1941 = vcmask 506880
        %v1942 = vsel %vm1941, %v1926, %v1940
        %v1943 = vsel %vm504, %v1936, %v1937
        %v1944 = vsel %vm1941, %v1928, %v1943
        %v1945 = vsel %vm504, %v1937, %v1938
        %v1946 = vsel %vm1941, %v1930, %v1945
        %v1947 = vsel %vm504, %v1938, %v1939
        %v1948 = vsel %vm1941, %v1932, %v1947
        %1953 = vst [vmem:[#allocation2 + $0x100] sm:$0xff] %v1942
        %1954 = vst [vmem:[#allocation2 + $0x108] sm:$0xff] %v1944
        %1955 = vst [vmem:[#allocation2 + $0x110] sm:$0xff] %v1946
        %1956 = vst [vmem:[#allocation2 + $0x118] sm:$0xff] %v1948
        %v1957 = vld [vmem:[#allocation3] sm:$0xf]
        %v1958 = vld [vmem:[#allocation3 + $0x4] sm:$0x3]
        %v1959 = vld [vmem:[#allocation2] sm:$0xff]
        %v1960 = vld [vmem:[#allocation2 + $0x8] sm:$0xff]
        %v1961 = vld [vmem:[#allocation2 + $0x10] sm:$0xff]
        %v1962 = vld [vmem:[#allocation2 + $0x18] sm:$0xff]
        %v1963 = vld [vmem:[#allocation2 + $0x20] sm:$0xff]
        %v1964 = vld [vmem:[#allocation2 + $0x28] sm:$0xff]
        %v1965 = vld [vmem:[#allocation2 + $0x30] sm:$0xff]
        %v1966 = vld [vmem:[#allocation2 + $0x38] sm:$0xff]
        %v1967 = vld [vmem:[#allocation2 + $0x40] sm:$0xff]
        %v1968 = vld [vmem:[#allocation2 + $0x48] sm:$0xff]
        %v1969 = vld [vmem:[#allocation2 + $0x50] sm:$0xff]
        %v1970 = vld [vmem:[#allocation2 + $0x58] sm:$0xff]
        %v1971 = vld [vmem:[#allocation2 + $0x60] sm:$0xff]
        %v1972 = vld [vmem:[#allocation2 + $0x68] sm:$0xff]
        %v1973 = vld [vmem:[#allocation2 + $0x70] sm:$0xff]
        %v1974 = vld [vmem:[#allocation2 + $0x78] sm:$0xff]
        %v1975 = vld [vmem:[#allocation2 + $0x80] sm:$0xff]
        %v1976 = vld [vmem:[#allocation2 + $0x88] sm:$0xff]
        %v1977 = vld [vmem:[#allocation2 + $0x90] sm:$0xff]
        %v1978 = vld [vmem:[#allocation2 + $0x98] sm:$0xff]
        %v1979 = vld [vmem:[#allocation2 + $0xa0] sm:$0xff]
        %v1980 = vld [vmem:[#allocation2 + $0xa8] sm:$0xff]
        %v1981 = vld [vmem:[#allocation2 + $0xb0] sm:$0xff]
        %v1982 = vld [vmem:[#allocation2 + $0xb8] sm:$0xff]
        %v1983 = vld [vmem:[#allocation2 + $0xc0] sm:$0xff]
        %v1984 = vld [vmem:[#allocation2 + $0xc8] sm:$0xff]
        %v1985 = vld [vmem:[#allocation2 + $0xd0] sm:$0xff]
        %v1986 = vld [vmem:[#allocation2 + $0xd8] sm:$0xff]
        %v1987 = vld [vmem:[#allocation2 + $0xe0] sm:$0xff]
        %v1988 = vld [vmem:[#allocation2 + $0xe8] sm:$0xff]
        %v1989 = vld [vmem:[#allocation2 + $0xf0] sm:$0xff]
        %v1990 = vld [vmem:[#allocation2 + $0xf8] sm:$0xff]
        %v1991 = vld [vmem:[#allocation2 + $0x100] sm:$0xff]
        %v1992 = vld [vmem:[#allocation2 + $0x108] sm:$0xff]
        %v1993 = vld [vmem:[#allocation2 + $0x110] sm:$0xff]
        %v1994 = vld [vmem:[#allocation2 + $0x118] sm:$0xff]
        %v1995 = vld [vmem:[%s3] sm:$0xff]
        %v1996 = vld [vmem:[%s3 + $0x8] sm:$0xf]
        %1998 = vset.pattern.permute.xlu0 0
        %1999 = vperm.xlu0 %1998, %v1995
        %v2000 = vpop.permute.xlu0 %1999
        %2003 = vset.pattern.permute.xlu0 0
        %2004 = vperm.xlu0 %2003, %v1996
        %v2005 = vpop.permute.xlu0 %2004
        %v2009 = vunpack.c.l.b16 %v1957
        %v2010 = vunpack.c.l.b16 %v1958
        %v2011 = vpack.c.b16 %v2010, %v2009
        %v2048 = vunpack.c.l.b16 %v1959
        %v2049 = vunpack.c.h.b16 %v1959
        %v2050 = vunpack.c.l.b16 %v1960
        %v2051 = vunpack.c.h.b16 %v1960
        %v2052 = vunpack.c.l.b16 %v1961
        %v2053 = vunpack.c.h.b16 %v1961
        %v2054 = vunpack.c.l.b16 %v1962
        %v2055 = vunpack.c.h.b16 %v1962
        %v2056 = vunpack.c.l.b16 %v1963
        %v2057 = vunpack.c.h.b16 %v1963
        %v2058 = vunpack.c.l.b16 %v1964
        %v2059 = vunpack.c.h.b16 %v1964
        %v2060 = vunpack.c.l.b16 %v1965
        %v2061 = vunpack.c.h.b16 %v1965
        %v2062 = vunpack.c.l.b16 %v1966
        %v2063 = vunpack.c.h.b16 %v1966
        %v2064 = vunpack.c.l.b16 %v1967
        %v2065 = vunpack.c.h.b16 %v1967
        %v2066 = vunpack.c.l.b16 %v1968
        %v2067 = vunpack.c.h.b16 %v1968
        %v2068 = vunpack.c.l.b16 %v1969
        %v2069 = vunpack.c.h.b16 %v1969
        %v2070 = vunpack.c.l.b16 %v1970
        %v2071 = vunpack.c.h.b16 %v1970
        %v2072 = vunpack.c.l.b16 %v1971
        %v2073 = vunpack.c.h.b16 %v1971
        %v2074 = vunpack.c.l.b16 %v1972
        %v2075 = vunpack.c.h.b16 %v1972
        %v2076 = vunpack.c.l.b16 %v1973
        %v2077 = vunpack.c.h.b16 %v1973
        %v2078 = vunpack.c.l.b16 %v1974
        %v2079 = vunpack.c.h.b16 %v1974
        %v2080 = vunpack.c.l.b16 %v1975
        %v2081 = vunpack.c.h.b16 %v1975
        %v2082 = vunpack.c.l.b16 %v1976
        %v2083 = vunpack.c.h.b16 %v1976
        %v2084 = vunpack.c.l.b16 %v1977
        %v2085 = vunpack.c.h.b16 %v1977
        %v2086 = vunpack.c.l.b16 %v1978
        %v2087 = vunpack.c.h.b16 %v1978
        %v2088 = vunpack.c.l.b16 %v1979
        %v2089 = vunpack.c.h.b16 %v1979
        %v2090 = vunpack.c.l.b16 %v1980
        %v2091 = vunpack.c.h.b16 %v1980
        %v2092 = vunpack.c.l.b16 %v1981
        %v2093 = vunpack.c.h.b16 %v1981
        %v2094 = vunpack.c.l.b16 %v1982
        %v2095 = vunpack.c.h.b16 %v1982
        %v2096 = vunpack.c.l.b16 %v1983
        %v2097 = vunpack.c.h.b16 %v1983
        %v2098 = vunpack.c.l.b16 %v1984
        %v2099 = vunpack.c.h.b16 %v1984
        %v2100 = vunpack.c.l.b16 %v1985
        %v2101 = vunpack.c.h.b16 %v1985
        %v2102 = vunpack.c.l.b16 %v1986
        %v2103 = vunpack.c.h.b16 %v1986
        %v2104 = vunpack.c.l.b16 %v1987
        %v2105 = vunpack.c.h.b16 %v1987
        %v2106 = vunpack.c.l.b16 %v1988
        %v2107 = vunpack.c.h.b16 %v1988
        %v2108 = vunpack.c.l.b16 %v1989
        %v2109 = vunpack.c.h.b16 %v1989
        %v2110 = vunpack.c.l.b16 %v1990
        %v2111 = vunpack.c.h.b16 %v1990
        %v2112 = vunpack.c.l.b16 %v1991
        %v2113 = vunpack.c.h.b16 %v1991
        %v2114 = vunpack.c.l.b16 %v1992
        %v2115 = vunpack.c.h.b16 %v1992
        %v2116 = vunpack.c.l.b16 %v1993
        %v2117 = vunpack.c.h.b16 %v1993
        %v2118 = vunpack.c.l.b16 %v1994
        %v2119 = vunpack.c.h.b16 %v1994
        %v2120 = vpack.c.b16 %v2056, %v2048
        %v2121 = vpack.c.b16 %v2057, %v2049
        %v2122 = vpack.c.b16 %v2058, %v2050
        %v2123 = vpack.c.b16 %v2059, %v2051
        %v2124 = vpack.c.b16 %v2060, %v2052
        %v2125 = vpack.c.b16 %v2061, %v2053
        %v2126 = vpack.c.b16 %v2062, %v2054
        %v2127 = vpack.c.b16 %v2063, %v2055
        %v2128 = vpack.c.b16 %v2072, %v2064
        %v2129 = vpack.c.b16 %v2073, %v2065
        %v2130 = vpack.c.b16 %v2074, %v2066
        %v2131 = vpack.c.b16 %v2075, %v2067
        %v2132 = vpack.c.b16 %v2076, %v2068
        %v2133 = vpack.c.b16 %v2077, %v2069
        %v2134 = vpack.c.b16 %v2078, %v2070
        %v2135 = vpack.c.b16 %v2079, %v2071
        %v2136 = vpack.c.b16 %v2088, %v2080
        %v2137 = vpack.c.b16 %v2089, %v2081
        %v2138 = vpack.c.b16 %v2090, %v2082
        %v2139 = vpack.c.b16 %v2091, %v2083
        %v2140 = vpack.c.b16 %v2092, %v2084
        %v2141 = vpack.c.b16 %v2093, %v2085
        %v2142 = vpack.c.b16 %v2094, %v2086
        %v2143 = vpack.c.b16 %v2095, %v2087
        %v2144 = vpack.c.b16 %v2104, %v2096
        %v2145 = vpack.c.b16 %v2105, %v2097
        %v2146 = vpack.c.b16 %v2106, %v2098
        %v2147 = vpack.c.b16 %v2107, %v2099
        %v2148 = vpack.c.b16 %v2108, %v2100
        %v2149 = vpack.c.b16 %v2109, %v2101
        %v2150 = vpack.c.b16 %v2110, %v2102
        %v2151 = vpack.c.b16 %v2111, %v2103
        %v2152 = vpack.c.b16 %v2112, %v2112
        %v2153 = vpack.c.b16 %v2113, %v2113
        %v2154 = vpack.c.b16 %v2114, %v2114
        %v2155 = vpack.c.b16 %v2115, %v2115
        %v2156 = vpack.c.b16 %v2116, %v2116
        %v2157 = vpack.c.b16 %v2117, %v2117
        %v2158 = vpack.c.b16 %v2118, %v2118
        %v2159 = vpack.c.b16 %v2119, %v2119
        %vm2192 = vcmask 588800
        %v2194 = vsel %vm2192, %v2011, 0
        %vm2196 = vcmask 1043456
        %v2198 = vsel %vm2196, %v2152, 0
        %v2201 = vsel %vm2196, %v2153, 0
        %v2204 = vsel %vm2196, %v2154, 0
        %v2207 = vsel %vm2196, %v2155, 0
        %v2210 = vsel %vm2196, %v2156, 0
        %v2213 = vsel %vm2196, %v2157, 0
        %v2216 = vsel %vm2196, %v2158, 0
        %v2219 = vsel %vm2196, %v2159, 0
        %2221 = vmatprep.subr.bf16.mxu0 0
        %2222 = vmatpush1.bf16.msra.mxu0 0
        %2223 = vmatprep.subr.bf16.mxu0 0
        %2224 = vmatpush1.bf16.msra.mxu0 0
        %2225 = vmatprep.subr.bf16.mxu0 0
        %2226 = vmatpush1.bf16.msra.mxu0 0
        %2227 = vmatprep.subr.bf16.mxu0 %v2201
        %2228 = vmatpush1.bf16.msra.mxu0 %v2198
        %2229 = vmatprep.subr.bf16.mxu0 %v2145
        %2230 = vmatpush1.bf16.msra.mxu0 %v2144
        %2231 = vmatprep.subr.bf16.mxu0 %v2137
        %2232 = vmatpush1.bf16.msra.mxu0 %v2136
        %2233 = vmatprep.subr.bf16.mxu0 %v2129
        %2234 = vmatpush1.bf16.msra.mxu0 %v2128
        %2235 = vmatprep.subr.bf16.mxu0 %v2121
        %2236 = vmatpush1.bf16.msra.mxu0 %v2120
        %2237 = vmatprep.subr.bf16.mxu0 0
        %2238 = vmatpush2.bf16.msra.mxu0 0
        %2239 = vmatprep.subr.bf16.mxu0 0
        %2240 = vmatpush2.bf16.msra.mxu0 0
        %2241 = vmatprep.subr.bf16.mxu0 0
        %2242 = vmatpush2.bf16.msra.mxu0 0
        %2243 = vmatprep.subr.bf16.mxu0 0
        %2244 = vmatpush2.bf16.msra.mxu0 0
        %2245 = vmatprep.subr.bf16.mxu0 0
        %2246 = vmatpush2.bf16.msra.mxu0 0
        %2247 = vmatprep.subr.bf16.mxu0 0
        %2248 = vmatpush2.bf16.msra.mxu0 0
        %2249 = vmatprep.subr.bf16.mxu0 0
        %2250 = vmatpush2.bf16.msra.mxu0 0
        %2251 = vmatprep.subr.bf16.mxu0 0
        %2252 = vmatpush2.bf16.msra.mxu0 0
        %2253 = vmatprep.mubr.bf16.mxu0 0
        %2254 = vmatmul.mubr.bf16.gmra.mxu0 %v2194
        %v2255 = vpop.f32.mrf.mxu0
        %v2256 = vadd.f32 %v2000, %v2255
        %v2257 = vpop.f32.mrf.mxu0
        %v2258 = vadd.f32 %v2000, %v2257
        %v2259 = vpop.f32.mrf.mxu0
        %v2260 = vadd.f32 %v2005, %v2259
        %v2261 = vpop.f32.mrf.mxu0
        %v2262 = vadd.f32 %v2005, %v2261
        %2263 = vdwg.mxu0
        %2264 = vmatprep.subr.bf16.mxu0 0
        %2265 = vmatpush1.bf16.msra.mxu0 0
        %2266 = vmatprep.subr.bf16.mxu0 0
        %2267 = vmatpush1.bf16.msra.mxu0 0
        %2268 = vmatprep.subr.bf16.mxu0 0
        %2269 = vmatpush1.bf16.msra.mxu0 0
        %2270 = vmatprep.subr.bf16.mxu0 %v2207
        %2271 = vmatpush1.bf16.msra.mxu0 %v2204
        %2272 = vmatprep.subr.bf16.mxu0 %v2147
        %2273 = vmatpush1.bf16.msra.mxu0 %v2146
        %2274 = vmatprep.subr.bf16.mxu0 %v2139
        %2275 = vmatpush1.bf16.msra.mxu0 %v2138
        %2276 = vmatprep.subr.bf16.mxu0 %v2131
        %2277 = vmatpush1.bf16.msra.mxu0 %v2130
        %2278 = vmatprep.subr.bf16.mxu0 %v2123
        %2279 = vmatpush1.bf16.msra.mxu0 %v2122
        %2280 = vmatprep.subr.bf16.mxu0 0
        %2281 = vmatpush2.bf16.msra.mxu0 0
        %2282 = vmatprep.subr.bf16.mxu0 0
        %2283 = vmatpush2.bf16.msra.mxu0 0
        %2284 = vmatprep.subr.bf16.mxu0 0
        %2285 = vmatpush2.bf16.msra.mxu0 0
        %2286 = vmatprep.subr.bf16.mxu0 0
        %2287 = vmatpush2.bf16.msra.mxu0 0
        %2288 = vmatprep.subr.bf16.mxu0 0
        %2289 = vmatpush2.bf16.msra.mxu0 0
        %2290 = vmatprep.subr.bf16.mxu0 0
        %2291 = vmatpush2.bf16.msra.mxu0 0
        %2292 = vmatprep.subr.bf16.mxu0 0
        %2293 = vmatpush2.bf16.msra.mxu0 0
        %2294 = vmatprep.subr.bf16.mxu0 0
        %2295 = vmatpush2.bf16.msra.mxu0 0
        %2296 = vmatprep.mubr.bf16.mxu0 0
        %2297 = vmatmul.mubr.bf16.gmra.mxu0 %v2194
        %v2298 = vpop.f32.mrf.mxu0
        %v2299 = vadd.f32 %v2000, %v2298
        %v2300 = vpop.f32.mrf.mxu0
        %v2301 = vadd.f32 %v2000, %v2300
        %v2302 = vpop.f32.mrf.mxu0
        %v2303 = vadd.f32 %v2005, %v2302
        %v2304 = vpop.f32.mrf.mxu0
        %v2305 = vadd.f32 %v2005, %v2304
        %2306 = vdwg.mxu0
        %2307 = vmatprep.subr.bf16.mxu0 0
        %2308 = vmatpush1.bf16.msra.mxu0 0
        %2309 = vmatprep.subr.bf16.mxu0 0
        %2310 = vmatpush1.bf16.msra.mxu0 0
        %2311 = vmatprep.subr.bf16.mxu0 0
        %2312 = vmatpush1.bf16.msra.mxu0 0
        %2313 = vmatprep.subr.bf16.mxu0 %v2213
        %2314 = vmatpush1.bf16.msra.mxu0 %v2210
        %2315 = vmatprep.subr.bf16.mxu0 %v2149
        %2316 = vmatpush1.bf16.msra.mxu0 %v2148
        %2317 = vmatprep.subr.bf16.mxu0 %v2141
        %2318 = vmatpush1.bf16.msra.mxu0 %v2140
        %2319 = vmatprep.subr.bf16.mxu0 %v2133
        %2320 = vmatpush1.bf16.msra.mxu0 %v2132
        %2321 = vmatprep.subr.bf16.mxu0 %v2125
        %2322 = vmatpush1.bf16.msra.mxu0 %v2124
        %2323 = vmatprep.subr.bf16.mxu0 0
        %2324 = vmatpush2.bf16.msra.mxu0 0
        %2325 = vmatprep.subr.bf16.mxu0 0
        %2326 = vmatpush2.bf16.msra.mxu0 0
        %2327 = vmatprep.subr.bf16.mxu0 0
        %2328 = vmatpush2.bf16.msra.mxu0 0
        %2329 = vmatprep.subr.bf16.mxu0 0
        %2330 = vmatpush2.bf16.msra.mxu0 0
        %2331 = vmatprep.subr.bf16.mxu0 0
        %2332 = vmatpush2.bf16.msra.mxu0 0
        %2333 = vmatprep.subr.bf16.mxu0 0
        %2334 = vmatpush2.bf16.msra.mxu0 0
        %2335 = vmatprep.subr.bf16.mxu0 0
        %2336 = vmatpush2.bf16.msra.mxu0 0
        %2337 = vmatprep.subr.bf16.mxu0 0
        %2338 = vmatpush2.bf16.msra.mxu0 0
        %2339 = vmatprep.mubr.bf16.mxu0 0
        %2340 = vmatmul.mubr.bf16.gmra.mxu0 %v2194
        %v2341 = vpop.f32.mrf.mxu0
        %v2342 = vadd.f32 %v2000, %v2341
        %v2343 = vpop.f32.mrf.mxu0
        %v2344 = vadd.f32 %v2000, %v2343
        %v2345 = vpop.f32.mrf.mxu0
        %v2346 = vadd.f32 %v2005, %v2345
        %v2347 = vpop.f32.mrf.mxu0
        %v2348 = vadd.f32 %v2005, %v2347
        %2349 = vdwg.mxu0
        %2350 = vmatprep.subr.bf16.mxu0 0
        %2351 = vmatpush1.bf16.msra.mxu0 0
        %2352 = vmatprep.subr.bf16.mxu0 0
        %2353 = vmatpush1.bf16.msra.mxu0 0
        %2354 = vmatprep.subr.bf16.mxu0 0
        %2355 = vmatpush1.bf16.msra.mxu0 0
        %2356 = vmatprep.subr.bf16.mxu0 %v2219
        %2357 = vmatpush1.bf16.msra.mxu0 %v2216
        %2358 = vmatprep.subr.bf16.mxu0 %v2151
        %2359 = vmatpush1.bf16.msra.mxu0 %v2150
        %2360 = vmatprep.subr.bf16.mxu0 %v2143
        %2361 = vmatpush1.bf16.msra.mxu0 %v2142
        %2362 = vmatprep.subr.bf16.mxu0 %v2135
        %2363 = vmatpush1.bf16.msra.mxu0 %v2134
        %2364 = vmatprep.subr.bf16.mxu0 %v2127
        %2365 = vmatpush1.bf16.msra.mxu0 %v2126
        %2366 = vmatprep.subr.bf16.mxu0 0
        %2367 = vmatpush2.bf16.msra.mxu0 0
        %2368 = vmatprep.subr.bf16.mxu0 0
        %2369 = vmatpush2.bf16.msra.mxu0 0
        %2370 = vmatprep.subr.bf16.mxu0 0
        %2371 = vmatpush2.bf16.msra.mxu0 0
        %2372 = vmatprep.subr.bf16.mxu0 0
        %2373 = vmatpush2.bf16.msra.mxu0 0
        %2374 = vmatprep.subr.bf16.mxu0 0
        %2375 = vmatpush2.bf16.msra.mxu0 0
        %2376 = vmatprep.subr.bf16.mxu0 0
        %2377 = vmatpush2.bf16.msra.mxu0 0
        %2378 = vmatprep.subr.bf16.mxu0 0
        %2379 = vmatpush2.bf16.msra.mxu0 0
        %2380 = vmatprep.subr.bf16.mxu0 0
        %2381 = vmatpush2.bf16.msra.mxu0 0
        %2382 = vmatprep.mubr.bf16.mxu0 0
        %2383 = vmatmul.mubr.bf16.gmra.mxu0 %v2194
        %v2384 = vpop.f32.mrf.mxu0
        %v2385 = vadd.f32 %v2000, %v2384
        %v2386 = vpop.f32.mrf.mxu0
        %v2387 = vadd.f32 %v2000, %v2386
        %v2388 = vpop.f32.mrf.mxu0
        %v2389 = vadd.f32 %v2005, %v2388
        %v2390 = vpop.f32.mrf.mxu0
        %v2391 = vadd.f32 %v2005, %v2390
        %2392 = vdwg.mxu0
        %v2393 = vxor.u32 %v2256, 2147483648
        %v2394 = vxor.u32 %v2258, 2147483648
        %v2395 = vxor.u32 %v2299, 2147483648
        %v2396 = vxor.u32 %v2301, 2147483648
        %v2397 = vxor.u32 %v2342, 2147483648
        %v2398 = vxor.u32 %v2344, 2147483648
        %v2399 = vxor.u32 %v2385, 2147483648
        %v2400 = vxor.u32 %v2387, 2147483648
        %v2401 = vxor.u32 %v2260, 2147483648
        %v2402 = vxor.u32 %v2262, 2147483648
        %v2403 = vxor.u32 %v2303, 2147483648
        %v2404 = vxor.u32 %v2305, 2147483648
        %v2405 = vxor.u32 %v2346, 2147483648
        %v2406 = vxor.u32 %v2348, 2147483648
        %v2407 = vxor.u32 %v2389, 2147483648
        %v2408 = vxor.u32 %v2391, 2147483648
        %v2409 = vmul.f32 %v2393, 1.442695
        %v2410 = vpow.pop %v2409
        %v2411 = vmul.f32 %v2394, 1.442695
        %v2412 = vpow.pop %v2411
        %v2413 = vmul.f32 %v2395, 1.442695
        %v2414 = vpow.pop %v2413
        %v2415 = vmul.f32 %v2396, 1.442695
        %v2416 = vpow.pop %v2415
        %v2417 = vmul.f32 %v2397, 1.442695
        %v2418 = vpow.pop %v2417
        %v2419 = vmul.f32 %v2398, 1.442695
        %v2420 = vpow.pop %v2419
        %v2421 = vmul.f32 %v2399, 1.442695
        %v2422 = vpow.pop %v2421
        %v2423 = vmul.f32 %v2400, 1.442695
        %v2424 = vpow.pop %v2423
        %v2425 = vmul.f32 %v2401, 1.442695
        %v2426 = vpow.pop %v2425
        %v2427 = vmul.f32 %v2402, 1.442695
        %v2428 = vpow.pop %v2427
        %v2429 = vmul.f32 %v2403, 1.442695
        %v2430 = vpow.pop %v2429
        %v2431 = vmul.f32 %v2404, 1.442695
        %v2432 = vpow.pop %v2431
        %v2433 = vmul.f32 %v2405, 1.442695
        %v2434 = vpow.pop %v2433
        %v2435 = vmul.f32 %v2406, 1.442695
        %v2436 = vpow.pop %v2435
        %v2437 = vmul.f32 %v2407, 1.442695
        %v2438 = vpow.pop %v2437
        %v2439 = vmul.f32 %v2408, 1.442695
        %v2440 = vpow.pop %v2439
        %v2441 = vadd.f32 %v2410, 1.0
        %v2442 = vadd.f32 %v2412, 1.0
        %v2443 = vadd.f32 %v2414, 1.0
        %v2444 = vadd.f32 %v2416, 1.0
        %v2445 = vadd.f32 %v2418, 1.0
        %v2446 = vadd.f32 %v2420, 1.0
        %v2447 = vadd.f32 %v2422, 1.0
        %v2448 = vadd.f32 %v2424, 1.0
        %v2449 = vadd.f32 %v2426, 1.0
        %v2450 = vadd.f32 %v2428, 1.0
        %v2451 = vadd.f32 %v2430, 1.0
        %v2452 = vadd.f32 %v2432, 1.0
        %v2453 = vadd.f32 %v2434, 1.0
        %v2454 = vadd.f32 %v2436, 1.0
        %v2455 = vadd.f32 %v2438, 1.0
        %v2456 = vadd.f32 %v2440, 1.0
        %v2457 = vrcp.pop %v2441
        %v2458 = vmul.f32 1.0, %v2457
        %v2459 = vrcp.pop %v2442
        %v2460 = vmul.f32 1.0, %v2459
        %v2461 = vrcp.pop %v2443
        %v2462 = vmul.f32 1.0, %v2461
        %v2463 = vrcp.pop %v2444
        %v2464 = vmul.f32 1.0, %v2463
        %v2465 = vrcp.pop %v2445
        %v2466 = vmul.f32 1.0, %v2465
        %v2467 = vrcp.pop %v2446
        %v2468 = vmul.f32 1.0, %v2467
        %v2469 = vrcp.pop %v2447
        %v2470 = vmul.f32 1.0, %v2469
        %v2471 = vrcp.pop %v2448
        %v2472 = vmul.f32 1.0, %v2471
        %v2473 = vrcp.pop %v2449
        %v2474 = vmul.f32 1.0, %v2473
        %v2475 = vrcp.pop %v2450
        %v2476 = vmul.f32 1.0, %v2475
        %v2477 = vrcp.pop %v2451
        %v2478 = vmul.f32 1.0, %v2477
        %v2479 = vrcp.pop %v2452
        %v2480 = vmul.f32 1.0, %v2479
        %v2481 = vrcp.pop %v2453
        %v2482 = vmul.f32 1.0, %v2481
        %v2483 = vrcp.pop %v2454
        %v2484 = vmul.f32 1.0, %v2483
        %v2485 = vrcp.pop %v2455
        %v2486 = vmul.f32 1.0, %v2485
        %v2487 = vrcp.pop %v2456
        %v2488 = vmul.f32 1.0, %v2487
        %2489 = vst [vmem:[%s212] sm:$0xff] %v2458
        %2490 = vst [vmem:[%s212 + $0x8] sm:$0xff] %v2460
        %2491 = vst [vmem:[%s212 + $0x10] sm:$0xff] %v2462
        %2492 = vst [vmem:[%s212 + $0x18] sm:$0xff] %v2464
        %2493 = vst [vmem:[%s212 + $0x20] sm:$0xff] %v2466
        %2494 = vst [vmem:[%s212 + $0x28] sm:$0xff] %v2468
        %2495 = vst [vmem:[%s212 + $0x30] sm:$0xff] %v2470
        %2496 = vst [vmem:[%s212 + $0x38] sm:$0xff] %v2472
        %2497 = vst [vmem:[%s212 + $0x40] sm:$0xf] %v2474
        %2498 = vst [vmem:[%s212 + $0x48] sm:$0xf] %v2476
        %2499 = vst [vmem:[%s212 + $0x50] sm:$0xf] %v2478
        %2500 = vst [vmem:[%s212 + $0x58] sm:$0xf] %v2480
        %2501 = vst [vmem:[%s212 + $0x60] sm:$0xf] %v2482
        %2502 = vst [vmem:[%s212 + $0x68] sm:$0xf] %v2484
        %2503 = vst [vmem:[%s212 + $0x70] sm:$0xf] %v2486
        %2504 = vst [vmem:[%s212 + $0x78] sm:$0xf] %v2488
        %p2505 = scmp.lt.s32.totalorder %s16, 1
        %s2506 = scalar_select %p2505, %s16, 1
        %s2507 = smul.addr %s2506, 16
        %s2508 = smul.addr %s2507, 8
        %s2509 = scalar_lea.vmem %s4, %s2508
        // Predicated region
        $region41: #{gan_generator.9} parent=35 // pred_check
          %p2510 = pneg %p123
        $region42: #{gan_generator.9} parent=35 // pred_check_branch
          %2512 = sbr.rel (%p2510) target = $region44
        $region43: #{gan_generator.9} parent=35 // pred_region
          _
        $region44: #{gan_generator.9} parent=35 // pred_fallthru
          _
      $region36: #{gan_generator.9} parent=5 // pred_fallthru
        _
      %p2513 = scmp.le.s32.totalorder 2, %s11
      // Predicated region
      $region45: #{gan_generator.9} parent=5 // pred_check
        %p2514 = pneg %p2513
      $region46: #{gan_generator.9} parent=5 // pred_check_branch
        %2516 = sbr.rel (%p2514) target = $region48
      $region47: #{gan_generator.9} parent=5 // pred_region
        %s2517 = ssub.s32 %s11, 2
        // Predicated region
        $region49: #{gan_generator.9} parent=47 // pred_check
          %p2518 = pneg %p129
        $region50: #{gan_generator.9} parent=47 // pred_check_branch
          %2520 = sbr.rel (%p2518) target = $region52
        $region51: #{gan_generator.9} parent=47 // pred_region
          %p2521 = scmp.lt.s32.totalorder %s17, 1
          %s2522 = scalar_select %p2521, %s17, 1
          %s2523 = smul.addr %s2522, 16
          %s2524 = smul.addr %s2523, 8
          %s2525 = scalar_lea.vmem %s4, %s2524
        $region52: #{gan_generator.9} parent=47 // pred_fallthru
          _
      $region48: #{gan_generator.9} parent=5 // pred_fallthru
        _
    $region6: #{gan_generator.9} parent=1 // loop_footer
      %s15 = sadd.s32 1, %s11
    $region7: #{gan_generator.9} parent=1 // loop_footer_branch
      %10 = sbr.rel target = $region3
    $region8: #{gan_generator.9} parent=1 // loop_exit
      _
    %2526 = vsyncpa [#allocation4], 1
    %s2527 = scalar_lea.sflag [#allocation4], 1
    %2528 = vsyncpa %s2527, 1

</llo_original>
